<compile_context>
chip_gen: v7x
topology: tpu7x:2x2x1
jax: 0.10.0
libtpu: 0.0.40
codegen_flags: <defaults>
</compile_context>

<pallas_src>
import jax
import jax.numpy as jnp
from jax import lax
from jax.experimental import pallas as pl
from jax.experimental.pallas import tpu as pltpu

_NEG_SLOPE = 0.01
_BN_EPS = 1e-5
_VMEM_LIMIT = 48 * 1024 * 1024   # > 32MiB scoped default, < v7x physical 64MiB


# ---------------------------------------------------------------------------
# Fused kernel:  [prev-layer BN affine + LeakyReLU + pad re-zero]  ->
#                3x3 conv as 9 accumulating bf16 MXU matmuls (f32 acc)  ->
#                bf16 conv output + per-program BN partial sums.
# ---------------------------------------------------------------------------
def _make_conv_kernel(cins, cout, wp, t_out, base, out_off, out_w):
    """Builds the fused kernel for one conv layer.

    cins    : per-input-group channel counts (1 group, or 2 for the concat layer)
    wp      : padded row width W+2
    t_out   : conv output positions per grid step (lane dim of the matmuls)
    base    : in-window lane index of tap (ky=0, kx=0) for output position 0
    out_off : lane offset where the t_out results land inside the output block
    out_w   : lane width of the output block (t_out, or the full chained row)
    """
    G = len(cins)

    def kernel(*refs):
        xs = refs[0:G]                        # (1,1,Cin_g,l_in) bf16
        ws = refs[G:2 * G]                    # (9,Cout,Cin_g)   bf16
        affs = refs[2 * G:3 * G]              # (Cin_g,3) f32 [scale,shift,slope]
        mi = refs[3 * G][...]                 # (1,l_in)  f32 input validity
        mo = refs[3 * G + 1][...]             # (1,t_out) f32 output validity
        y_ref = refs[3 * G + 2]               # (1,1,Cout,out_w) bf16
        st_ref = refs[3 * G + 3]              # (1,1,Cout,2)     f32
        zs = refs[3 * G + 4:3 * G + 4 + G]    # VMEM scratch (Cin_g,l_in) bf16

        acc = jnp.zeros((cout, t_out), jnp.float32)
        for g in range(G):
            aff = affs[g][...]
            x = xs[g][0, 0].astype(jnp.float32)            # (Cin_g, l_in)
            z = x * aff[:, 0:1] + aff[:, 1:2]              # prev-layer BN affine
            z = jnp.where(z > 0, z, aff[:, 2:3] * z)       # leaky_relu (slope=1 => id)
            # Re-zero padding / halo / stale positions: affine+lrelu of 0 is not 0,
            # and un-normalized garbage lives at pad columns of the previous output.
            z = jnp.where(mi > 0, z, 0.0)
            zs[g][...] = z.astype(jnp.bfloat16)
            for k in range(9):                             # 9 taps -> 9 MXU pushes
                ky, kx = divmod(k, 3)
                off = base + ky * wp + kx                  # static per-tap offset
                acc = acc + jnp.dot(ws[g][k],
                                    zs[g][:, pl.ds(off, t_out)],
                                    preferred_element_type=jnp.float32)

        if out_off == 0 and out_w == t_out:
            y_ref[0, 0] = acc.astype(y_ref.dtype)
        else:
            # chained layout: zero flanks, conv result at a 128-aligned lane offset
            y_ref[0, 0] = jnp.zeros((cout, out_w), y_ref.dtype)
            y_ref[0, 0, :, pl.ds(out_off, t_out)] = acc.astype(y_ref.dtype)

        am = acc * mo                                      # masked once, reused
        st_ref[0, 0] = jnp.concatenate(
            [jnp.sum(am, axis=1, keepdims=True),
             jnp.sum(am * acc, axis=1, keepdims=True)], axis=1)

    return kernel


# ---------------------------------------------------------------------------
# Geometry / tiling plan and layout glue (pure data movement, XLA side)
# ---------------------------------------------------------------------------
def _make_plan(N, H, W, c_out, *, target_lanes=2048, vmem_budget=24 << 20):
    wp = W + 2
    P = (H + 2) * wp
    cin_max = 2 * c_out

    # Adaptive row tile: smallest divisor of H reaching ~target lanes that fits a
    # conservative (v7x-safe) VMEM budget; whole image when the image is small.
    def est_vmem(th_):
        t = th_ * wp
        li = t + 2 * (wp + 1)
        return cin_max * li * (2 * 2 + 2 + 4) + c_out * t * (4 + 2 * 2)

    divs = [d for d in range(1, H + 1) if H % d == 0]
    fits = [d for d in divs if est_vmem(d) <= vmem_budget] or [1]
    th = fits[-1]
    for d in fits:
        if d * wp >= target_lanes:
            th = d
            break
    nt = H // th
    t_out = th * wp

    off = (-(wp + 1)) % 128            # puts the stored conv row at lane offset 0 mod 128
    L = off + P + 2                    # +2: tap slack past the last pad row
    L = ((L + 127) // 128) * 128       # lane-dense row length

    if nt == 1:
        # chained layout: the whole per-image row is one block, output == next input
        l_in, base, out_off, out_w = L, off, off + wp + 1, L
    else:
        # fallback: host-side overlapping row windows
        l_in, base, out_off, out_w = t_out + 2 * (wp + 1), 0, 0, t_out

    # validity of every lane of the full per-image row (rows 1..H, cols 1..W)
    a = jnp.arange(L, dtype=jnp.int32)
    p = a - off
    row, col = p // wp, p % wp
    full = ((p >= 0) & (p < P) & (row >= 1) & (row <= H)
            & (col >= 1) & (col <= W)).astype(jnp.float32)
    if nt == 1:
        msk_in = full[None, :]
    else:
        msk_in = jnp.stack([full[off + r * t_out: off + r * t_out + l_in]
                            for r in range(nt)], axis=0)

    colv = (1 + jnp.arange(t_out, dtype=jnp.int32)) % wp
    msk_out = ((colv >= 1) & (colv <= W)).astype(jnp.float32)[None, :]

    return dict(N=N, H=H, W=W, wp=wp, P=P, OFF=off, L=L, th=th, nt=nt,
                t_out=t_out, l_in=l_in, base=base, out_off=out_off, out_w=out_w,
                msk_in=msk_in, msk_out=msk_out)


def _to_layout(x, plan):
    """(N, C, H, W) f32 -> (N, C, L) bf16 padded-flat rows at lane offset OFF."""
    n, c = x.shape[0], x.shape[1]
    xp = jnp.pad(x, ((0, 0), (0, 0), (1, 1), (1, 1)))
    xf = xp.reshape(n, c, plan["P"])
    xf = jnp.pad(xf, ((0, 0), (0, 0),
                      (plan["OFF"], plan["L"] - plan["OFF"] - plan["P"])))
    return xf.astype(jnp.bfloat16)


def _cut(flat, plan):
    """(N, C, L) -> (N, nt, C, l_in) row-tile windows (no copy when nt == 1)."""
    if plan["nt"] == 1:
        return flat[:, None]
    s0, t_out, l_in = plan["OFF"], plan["t_out"], plan["l_in"]
    # TODO(synk): replace host-side halo replication with in-kernel element-offset
    # / manual-DMA windows for very large images (avoids one extra HBM pass).
    wins = [flat[:, :, s0 + r * t_out: s0 + r * t_out + l_in]
            for r in range(plan["nt"])]
    return jnp.stack(wins, axis=1)


def _rewindow(y, plan):
    """Raw conv output of one layer -> next layer's input windows.
    No-op when the whole image is one tile (output array already is the layout)."""
    if plan["nt"] == 1:
        return y
    n, nt, c, t_out = y.shape
    flat = jnp.transpose(y, (0, 2, 1, 3)).reshape(n, c, nt * t_out)
    start = plan["OFF"] + plan["wp"] + 1
    flat = jnp.pad(flat, ((0, 0), (0, 0),
                          (start, plan["L"] - start - nt * t_out)))
    return _cut(flat, plan)


def _identity_aff(c):
    one = jnp.ones((c,), jnp.float32)
    return jnp.stack([one, jnp.zeros((c,), jnp.float32), one], axis=1)


def _bn_aff(scale, shift, slope=_NEG_SLOPE):
    return jnp.stack([scale, shift, jnp.full_like(scale, slope)],
                     axis=1).astype(jnp.float32)


def _pack_w(w):
    """(Cout, Cin, 3, 3) -> (9, Cout, Cin) bf16, tap index k = ky*3 + kx."""
    return jnp.transpose(w, (2, 3, 0, 1)).reshape(
        9, w.shape[0], w.shape[1]).astype(jnp.bfloat16)


# ---------------------------------------------------------------------------
# One conv layer = one pallas_call (+ tiny host-side BN stat reduction)
# ---------------------------------------------------------------------------
def _conv_bn_layer(x_groups, aff_groups, w_groups, gamma, beta, plan,
                   *, eps=_BN_EPS):
    """Conv(3x3,s1,p1) with the PREVIOUS layer's BN+lrelu fused on the input side.
    Returns (raw conv output in layout, BN scale, BN shift) where scale/shift fold
    this layer's training-mode batch statistics.  Conv bias is dropped: it cancels
    exactly under training-mode BatchNorm."""
    N, nt = plan["N"], plan["nt"]
    t_out, l_in, out_w = plan["t_out"], plan["l_in"], plan["out_w"]
    cins = tuple(int(x.shape[2]) for x in x_groups)
    cout = int(w_groups[0].shape[1])

    kernel = _make_conv_kernel(cins, cout, plan["wp"], t_out, plan["base"],
                               plan["out_off"], out_w)

    in_specs = (
        [pl.BlockSpec((1, 1, c, l_in), lambda n, r: (n, r, 0, 0)) for c in cins]
        + [pl.BlockSpec((9, cout, c), lambda n, r: (0, 0, 0)) for c in cins]
        + [pl.BlockSpec((c, 3), lambda n, r: (0, 0)) for c in cins]
        + [pl.BlockSpec((1, l_in), lambda n, r: (r, 0)),
           pl.BlockSpec((1, t_out), lambda n, r: (0, 0))])

    y, stat = pl.pallas_call(
        kernel,
        out_shape=(jax.ShapeDtypeStruct((N, nt, cout, out_w), jnp.bfloat16),
                   jax.ShapeDtypeStruct((N, nt, cout, 2), jnp.float32)),
        grid=(N, nt),
        in_specs=in_specs,
        out_specs=(
            pl.BlockSpec((1, 1, cout, out_w), lambda n, r: (n, r, 0, 0)),
            pl.BlockSpec((1, 1, cout, 2), lambda n, r: (n, r, 0, 0))),
        scratch_shapes=[pltpu.VMEM((c, l_in), jnp.bfloat16) for c in cins],
        compiler_params=pltpu.CompilerParams(
            dimension_semantics=("parallel", "parallel"),
            vmem_limit_bytes=_VMEM_LIMIT),
    )(*x_groups, *w_groups, *aff_groups, plan["msk_in"], plan["msk_out"])

    # Fold race-free per-program partial sums into training-mode BN scale/shift.
    # TODO(synk): E[x^2]-E[x]^2 in f32 can cancel at very large N*H*W; a
    # Welford-style partial reduction would be numerically safer.
    count = float(N * plan["H"] * plan["W"])
    mean = jnp.sum(stat[..., 0], axis=(0, 1)) / count
    var = jnp.maximum(jnp.sum(stat[..., 1], axis=(0, 1)) / count - mean * mean,
                      0.0)
    scale = gamma / jnp.sqrt(var + eps)
    shift = beta - mean * scale
    return y, scale.astype(jnp.float32), shift.astype(jnp.float32)


def _finalize(y, scale, shift, plan, neg_slope=_NEG_SLOPE):
    """Last layer's BN affine + LeakyReLU and NCHW restore (XLA glue)."""
    N, H, W, wp = plan["N"], plan["H"], plan["W"], plan["wp"]
    if plan["nt"] == 1:
        core = y[:, 0, :, plan["OFF"]:plan["OFF"] + plan["P"]]
        core = core.reshape(N, -1, H + 2, wp)[:, :, 1:H + 1, 1:W + 1]
    else:
        nt, th = plan["nt"], plan["th"]
        core = y.reshape(N, nt, -1, th, wp)[..., :W]
        core = jnp.transpose(core, (0, 2, 1, 3, 4)).reshape(N, -1, H, W)
    z = (core.astype(jnp.float32) * scale[None, :, None, None]
         + shift[None, :, None, None])
    return jnp.where(z > 0, z, neg_slope * z)


def decoder2d_forward(x1, x2, p):
    """Decoder2D.forward: x1 (N, 2C, H/2, W/2), x2 (N, C, H, W) -> (N, C, H, W)."""
    N, c2, H1, W1 = x1.shape
    C = c2 // 2
    H, W = 2 * H1, 2 * W1
    plan = _make_plan(N, H, W, C)

    # nn.Upsample(scale_factor=2) default mode is 'nearest'; repeat + pad + cast
    # fuse into one XLA pass building the bf16 layout below.
    # TODO(synk): fold the nearest-2x upsample into the first conv via the
    # pixel-shuffle identity (4 phase-specific 3x3 kernels at half resolution) to
    # avoid materializing the 4x upsampled activation at all.
    u = jnp.repeat(jnp.repeat(x1, 2, axis=2), 2, axis=3)

    # up: conv(2C->C); its BN + leaky_relu are fused into conv1's input below.
    y_up, sc_up, sh_up = _conv_bn_layer(
        [_cut(_to_layout(u, plan), plan)], [_identity_aff(2 * C)],
        [_pack_w(p["w_up"])], p["g_up"], p["be_up"], plan)

    # CBL1: conv over cat(lrelu(bn(up)), x2) without materializing the concat -
    # two channel groups; the x2 group uses identity affine and slope 1 (no lrelu).
    y1, sc1, sh1 = _conv_bn_layer(
        [_rewindow(y_up, plan), _cut(_to_layout(x2, plan), plan)],
        [_bn_aff(sc_up, sh_up), _identity_aff(C)],
        [_pack_w(p["w1"][:, :C]), _pack_w(p["w1"][:, C:])],
        p["g1"], p["be1"], plan)

    # CBL2: BN1 + lrelu fused on the input side.
    y2, sc2, sh2 = _conv_bn_layer(
        [_rewindow(y1, plan)], [_bn_aff(sc1, sh1)], [_pack_w(p["w2"])],
        p["g2"], p["be2"], plan)

    return _finalize(y2, sc2, sh2, plan)


# ---------------------------------------------------------------------------
# Pure-JAX reference (mirrors PyTorch Decoder2D forward in training mode)
# ---------------------------------------------------------------------------
def _ref_conv_bn_lrelu(x, w, b, gamma, beta, eps=_BN_EPS, slope=_NEG_SLOPE):
    conv = lax.conv_general_dilated(
        x, w, window_strides=(1, 1), padding=((1, 1), (1, 1)),
        dimension_numbers=("NCHW", "OIHW", "NCHW")) + b[None, :, None, None]
    mean = jnp.mean(conv, axis=(0, 2, 3), keepdims=True)
    var = jnp.mean((conv - mean) ** 2, axis=(0, 2, 3), keepdims=True)
    z = (conv - mean) / jnp.sqrt(var + eps)
    z = z * gamma[None, :, None, None] + beta[None, :, None, None]
    return jnp.where(z > 0, z, slope * z)


def _ref_decoder(x1, x2, p):
    u = jnp.repeat(jnp.repeat(x1, 2, axis=2), 2, axis=3)
    y = _ref_conv_bn_lrelu(u, p["w_up"], p["b_up"], p["g_up"], p["be_up"])
    cat = jnp.concatenate([y, x2], axis=1)
    y = _ref_conv_bn_lrelu(cat, p["w1"], p["b1"], p["g1"], p["be1"])
    return _ref_conv_bn_lrelu(y, p["w2"], p["b2"], p["g2"], p["be2"])


if __name__ == "__main__":
    N, C = 2, 8                      # batch, out_chn
    H1, W1 = 8, 8                    # x1 spatial; x2 is the 2x skip connection

    key = jax.random.PRNGKey(0)
    ks = jax.random.split(key, 12)
    x1 = jax.random.normal(ks[0], (N, 2 * C, H1, W1), dtype=jnp.float32)
    x2 = jax.random.normal(ks[1], (N, C, 2 * H1, 2 * W1), dtype=jnp.float32)

    def conv_w(k, cout, cin):
        return 0.1 * jax.random.normal(k, (cout, cin, 3, 3), dtype=jnp.float32)

    params = {
        "w_up": conv_w(ks[2], C, 2 * C),
        "b_up": 0.05 * jax.random.normal(ks[3], (C,), dtype=jnp.float32),
        "g_up": 1.0 + 0.1 * jax.random.normal(ks[4], (C,), dtype=jnp.float32),
        "be_up": 0.1 * jax.random.normal(ks[5], (C,), dtype=jnp.float32),
        "w1": conv_w(ks[6], C, 2 * C),
        "b1": 0.05 * jax.random.normal(ks[7], (C,), dtype=jnp.float32),
        "g1": 1.0 + 0.1 * jax.random.normal(ks[8], (C,), dtype=jnp.float32),
        "be1": 0.1 * jax.random.normal(ks[9], (C,), dtype=jnp.float32),
        "w2": conv_w(ks[10], C, C),
        "b2": 0.05 * jax.random.normal(ks[11], (C,), dtype=jnp.float32),
        "g2": jnp.ones((C,), dtype=jnp.float32),
        "be2": jnp.zeros((C,), dtype=jnp.float32),
    }

    fwd = jax.jit(decoder2d_forward)
    out = jax.block_until_ready(fwd(x1, x2, params))
    assert out.shape == (N, C, 2 * H1, 2 * W1), out.shape

    ref = jax.block_until_ready(_ref_decoder(x1, x2, params))
    err = float(jnp.max(jnp.abs(out - ref)))
    # bf16 MXU inputs + bf16 inter-layer activations across 3 chained layers and
    # BN stats taken from the f32 accumulator (vs bf16 stored conv) => relaxed
    # tolerance against the pure-f32 reference.
    assert err < 5e-2, f"max abs err = {err}"
    print("KERNEL_OK")
</pallas_src>

<mosaic_0001>
module attributes {stable_mosaic.version = 11 : i64} {
  func.func @kernel(%arg0: i32, %arg1: i32, %arg2: memref<1x1x16x512xbf16, #tpu.memory_space<vmem>>, %arg3: memref<9x8x16xbf16, #tpu.memory_space<vmem>>, %arg4: memref<16x3xf32, #tpu.memory_space<vmem>>, %arg5: memref<1x512xf32, #tpu.memory_space<vmem>>, %arg6: memref<1x288xf32, #tpu.memory_space<vmem>>, %arg7: memref<1x1x8x512xbf16, #tpu.memory_space<vmem>>, %arg8: memref<1x1x8x2xf32, #tpu.memory_space<vmem>>, %arg9: memref<16x512xbf16, #tpu.memory_space<vmem>>) attributes {dimension_semantics = [#tpu.dimension_semantics<parallel>, #tpu.dimension_semantics<parallel>], iteration_bounds = array<i64: 2, 1>, scalar_prefetch = 0 : i64, scratch_operands = 1 : i64, tpu.core_type = #tpu.core_type<tc>, window_params = [{transform_indices = @transform_0, window_bounds = array<i64: 1, 1, 16, 512>}, {pipeline_mode = #tpu.pipeline_mode<synchronous>, transform_indices = @transform_1, window_bounds = array<i64: 9, 8, 16>}, {pipeline_mode = #tpu.pipeline_mode<synchronous>, transform_indices = @transform_2, window_bounds = array<i64: 16, 3>}, {transform_indices = @transform_3, window_bounds = array<i64: 1, 512>}, {pipeline_mode = #tpu.pipeline_mode<synchronous>, transform_indices = @transform_4, window_bounds = array<i64: 1, 288>}, {transform_indices = @transform_5, window_bounds = array<i64: 1, 1, 8, 512>}, {transform_indices = @transform_6, window_bounds = array<i64: 1, 1, 8, 2>}]} {
    %c0 = arith.constant 0 : index
    %c0_0 = arith.constant 0 : index
    %0 = vector.load %arg5[%c0, %c0_0] : memref<1x512xf32, #tpu.memory_space<vmem>>, vector<1x512xf32>
    %c0_1 = arith.constant 0 : index
    %c0_2 = arith.constant 0 : index
    %1 = vector.load %arg6[%c0_1, %c0_2] : memref<1x288xf32, #tpu.memory_space<vmem>>, vector<1x288xf32>
    %cst = arith.constant 0.000000e+00 : f32
    %2 = vector.broadcast %cst : f32 to vector<8x288xf32>
    %c0_3 = arith.constant 0 : index
    %c0_4 = arith.constant 0 : index
    %3 = vector.load %arg4[%c0_3, %c0_4] : memref<16x3xf32, #tpu.memory_space<vmem>>, vector<16x3xf32>
    %c0_5 = arith.constant 0 : index
    %c0_6 = arith.constant 0 : index
    %c0_7 = arith.constant 0 : index
    %c0_8 = arith.constant 0 : index
    %4 = vector.load %arg2[%c0_5, %c0_6, %c0_7, %c0_8] : memref<1x1x16x512xbf16, #tpu.memory_space<vmem>>, vector<1x1x16x512xbf16>
    %5 = vector.shape_cast %4 : vector<1x1x16x512xbf16> to vector<16x512xbf16>
    %6 = arith.extf %5 : vector<16x512xbf16> to vector<16x512xf32>
    %7 = vector.extract_strided_slice %3 {offsets = [0, 0], sizes = [16, 1], strides = [1, 1]} : vector<16x3xf32> to vector<16x1xf32>
    %8 = vector.broadcast %7 : vector<16x1xf32> to vector<16x512xf32>
    %9 = arith.mulf %6, %8 : vector<16x512xf32>
    %10 = vector.extract_strided_slice %3 {offsets = [0, 1], sizes = [16, 1], strides = [1, 1]} : vector<16x3xf32> to vector<16x1xf32>
    %11 = vector.broadcast %10 : vector<16x1xf32> to vector<16x512xf32>
    %12 = arith.addf %9, %11 : vector<16x512xf32>
    %cst_9 = arith.constant 0.000000e+00 : f32
    %13 = vector.broadcast %cst_9 : f32 to vector<16x512xf32>
    %14 = arith.cmpf ogt, %12, %13 : vector<16x512xf32>
    %15 = vector.extract_strided_slice %3 {offsets = [0, 2], sizes = [16, 1], strides = [1, 1]} : vector<16x3xf32> to vector<16x1xf32>
    %16 = vector.broadcast %15 : vector<16x1xf32> to vector<16x512xf32>
    %17 = arith.mulf %16, %12 : vector<16x512xf32>
    %18 = arith.select %14, %12, %17 : vector<16x512xi1>, vector<16x512xf32>
    %cst_10 = arith.constant 0.000000e+00 : f32
    %19 = vector.broadcast %cst_10 : f32 to vector<1x512xf32>
    %20 = arith.cmpf ogt, %0, %19 : vector<1x512xf32>
    %cst_11 = arith.constant 0.000000e+00 : f32
    %21 = vector.shape_cast %20 : vector<1x512xi1> to vector<1x512xi1>
    %22 = vector.broadcast %21 : vector<1x512xi1> to vector<16x512xi1>
    %23 = vector.broadcast %cst_11 : f32 to vector<16x512xf32>
    %24 = arith.select %22, %18, %23 : vector<16x512xi1>, vector<16x512xf32>
    %25 = arith.truncf %24 : vector<16x512xf32> to vector<16x512xbf16>
    %c0_12 = arith.constant 0 : index
    %c0_13 = arith.constant 0 : index
    %26 = vector.load %arg9[%c0_12, %c0_13] : memref<16x512xbf16, #tpu.memory_space<vmem>>, vector<16x512xbf16>
    tpu.vector_store %arg9[%c0_12, %c0_13], %25 {strides = array<i32>} : memref<16x512xbf16, #tpu.memory_space<vmem>>, vector<16x512xbf16>,
    %c0_14 = arith.constant 0 : index
    %c0_15 = arith.constant 0 : index
    %c0_16 = arith.constant 0 : index
    %27 = vector.load %arg3[%c0_14, %c0_15, %c0_16] : memref<9x8x16xbf16, #tpu.memory_space<vmem>>, vector<1x8x16xbf16>
    %28 = vector.shape_cast %27 : vector<1x8x16xbf16> to vector<8x16xbf16>
    %c0_17 = arith.constant 0 : index
    %c109 = arith.constant 109 : index
    %29 = vector.load %arg9[%c0_17, %c109] : memref<16x512xbf16, #tpu.memory_space<vmem>>, vector<16x288xbf16>
    %cst_18 = arith.constant dense<0.000000e+00> : vector<8x288xf32>
    %30 = tpu.matmul %28, %29, %cst_18 {dimension_numbers = #tpu.dot_dimension_numbers<[1], [0], [0], [1], [0, 0, 1, 1], [], []>} : vector<8x16xbf16>, vector<16x288xbf16>, vector<8x288xf32> -> vector<8x288xf32>
    %31 = arith.addf %2, %30 : vector<8x288xf32>
    %c1 = arith.constant 1 : index
    %c0_19 = arith.constant 0 : index
    %c0_20 = arith.constant 0 : index
    %32 = vector.load %arg3[%c1, %c0_19, %c0_20] : memref<9x8x16xbf16, #tpu.memory_space<vmem>>, vector<1x8x16xbf16>
    %33 = vector.shape_cast %32 : vector<1x8x16xbf16> to vector<8x16xbf16>
    %c0_21 = arith.constant 0 : index
    %c110 = arith.constant 110 : index
    %34 = vector.load %arg9[%c0_21, %c110] : memref<16x512xbf16, #tpu.memory_space<vmem>>, vector<16x288xbf16>
    %cst_22 = arith.constant dense<0.000000e+00> : vector<8x288xf32>
    %35 = tpu.matmul %33, %34, %cst_22 {dimension_numbers = #tpu.dot_dimension_numbers<[1], [0], [0], [1], [0, 0, 1, 1], [], []>} : vector<8x16xbf16>, vector<16x288xbf16>, vector<8x288xf32> -> vector<8x288xf32>
    %36 = arith.addf %31, %35 : vector<8x288xf32>
    %c2 = arith.constant 2 : index
    %c0_23 = arith.constant 0 : index
    %c0_24 = arith.constant 0 : index
    %37 = vector.load %arg3[%c2, %c0_23, %c0_24] : memref<9x8x16xbf16, #tpu.memory_space<vmem>>, vector<1x8x16xbf16>
    %38 = vector.shape_cast %37 : vector<1x8x16xbf16> to vector<8x16xbf16>
    %c0_25 = arith.constant 0 : index
    %c111 = arith.constant 111 : index
    %39 = vector.load %arg9[%c0_25, %c111] : memref<16x512xbf16, #tpu.memory_space<vmem>>, vector<16x288xbf16>
    %cst_26 = arith.constant dense<0.000000e+00> : vector<8x288xf32>
    %40 = tpu.matmul %38, %39, %cst_26 {dimension_numbers = #tpu.dot_dimension_numbers<[1], [0], [0], [1], [0, 0, 1, 1], [], []>} : vector<8x16xbf16>, vector<16x288xbf16>, vector<8x288xf32> -> vector<8x288xf32>
    %41 = arith.addf %36, %40 : vector<8x288xf32>
    %c3 = arith.constant 3 : index
    %c0_27 = arith.constant 0 : index
    %c0_28 = arith.constant 0 : index
    %42 = vector.load %arg3[%c3, %c0_27, %c0_28] : memref<9x8x16xbf16, #tpu.memory_space<vmem>>, vector<1x8x16xbf16>
    %43 = vector.shape_cast %42 : vector<1x8x16xbf16> to vector<8x16xbf16>
    %c0_29 = arith.constant 0 : index
    %c127 = arith.constant 127 : index
    %44 = vector.load %arg9[%c0_29, %c127] : memref<16x512xbf16, #tpu.memory_space<vmem>>, vector<16x288xbf16>
    %cst_30 = arith.constant dense<0.000000e+00> : vector<8x288xf32>
    %45 = tpu.matmul %43, %44, %cst_30 {dimension_numbers = #tpu.dot_dimension_numbers<[1], [0], [0], [1], [0, 0, 1, 1], [], []>} : vector<8x16xbf16>, vector<16x288xbf16>, vector<8x288xf32> -> vector<8x288xf32>
    %46 = arith.addf %41, %45 : vector<8x288xf32>
    %c4 = arith.constant 4 : index
    %c0_31 = arith.constant 0 : index
    %c0_32 = arith.constant 0 : index
    %47 = vector.load %arg3[%c4, %c0_31, %c0_32] : memref<9x8x16xbf16, #tpu.memory_space<vmem>>, vector<1x8x16xbf16>
    %48 = vector.shape_cast %47 : vector<1x8x16xbf16> to vector<8x16xbf16>
    %c0_33 = arith.constant 0 : index
    %c128 = arith.constant 128 : index
    %49 = vector.load %arg9[%c0_33, %c128] : memref<16x512xbf16, #tpu.memory_space<vmem>>, vector<16x288xbf16>
    %cst_34 = arith.constant dense<0.000000e+00> : vector<8x288xf32>
    %50 = tpu.matmul %48, %49, %cst_34 {dimension_numbers = #tpu.dot_dimension_numbers<[1], [0], [0], [1], [0, 0, 1, 1], [], []>} : vector<8x16xbf16>, vector<16x288xbf16>, vector<8x288xf32> -> vector<8x288xf32>
    %51 = arith.addf %46, %50 : vector<8x288xf32>
    %c5 = arith.constant 5 : index
    %c0_35 = arith.constant 0 : index
    %c0_36 = arith.constant 0 : index
    %52 = vector.load %arg3[%c5, %c0_35, %c0_36] : memref<9x8x16xbf16, #tpu.memory_space<vmem>>, vector<1x8x16xbf16>
    %53 = vector.shape_cast %52 : vector<1x8x16xbf16> to vector<8x16xbf16>
    %c0_37 = arith.constant 0 : index
    %c129 = arith.constant 129 : index
    %54 = vector.load %arg9[%c0_37, %c129] : memref<16x512xbf16, #tpu.memory_space<vmem>>, vector<16x288xbf16>
    %cst_38 = arith.constant dense<0.000000e+00> : vector<8x288xf32>
    %55 = tpu.matmul %53, %54, %cst_38 {dimension_numbers = #tpu.dot_dimension_numbers<[1], [0], [0], [1], [0, 0, 1, 1], [], []>} : vector<8x16xbf16>, vector<16x288xbf16>, vector<8x288xf32> -> vector<8x288xf32>
    %56 = arith.addf %51, %55 : vector<8x288xf32>
    %c6 = arith.constant 6 : index
    %c0_39 = arith.constant 0 : index
    %c0_40 = arith.constant 0 : index
    %57 = vector.load %arg3[%c6, %c0_39, %c0_40] : memref<9x8x16xbf16, #tpu.memory_space<vmem>>, vector<1x8x16xbf16>
    %58 = vector.shape_cast %57 : vector<1x8x16xbf16> to vector<8x16xbf16>
    %c0_41 = arith.constant 0 : index
    %c145 = arith.constant 145 : index
    %59 = vector.load %arg9[%c0_41, %c145] : memref<16x512xbf16, #tpu.memory_space<vmem>>, vector<16x288xbf16>
    %cst_42 = arith.constant dense<0.000000e+00> : vector<8x288xf32>
    %60 = tpu.matmul %58, %59, %cst_42 {dimension_numbers = #tpu.dot_dimension_numbers<[1], [0], [0], [1], [0, 0, 1, 1], [], []>} : vector<8x16xbf16>, vector<16x288xbf16>, vector<8x288xf32> -> vector<8x288xf32>
    %61 = arith.addf %56, %60 : vector<8x288xf32>
    %c7 = arith.constant 7 : index
    %c0_43 = arith.constant 0 : index
    %c0_44 = arith.constant 0 : index
    %62 = vector.load %arg3[%c7, %c0_43, %c0_44] : memref<9x8x16xbf16, #tpu.memory_space<vmem>>, vector<1x8x16xbf16>
    %63 = vector.shape_cast %62 : vector<1x8x16xbf16> to vector<8x16xbf16>
    %c0_45 = arith.constant 0 : index
    %c146 = arith.constant 146 : index
    %64 = vector.load %arg9[%c0_45, %c146] : memref<16x512xbf16, #tpu.memory_space<vmem>>, vector<16x288xbf16>
    %cst_46 = arith.constant dense<0.000000e+00> : vector<8x288xf32>
    %65 = tpu.matmul %63, %64, %cst_46 {dimension_numbers = #tpu.dot_dimension_numbers<[1], [0], [0], [1], [0, 0, 1, 1], [], []>} : vector<8x16xbf16>, vector<16x288xbf16>, vector<8x288xf32> -> vector<8x288xf32>
    %66 = arith.addf %61, %65 : vector<8x288xf32>
    %c8 = arith.constant 8 : index
    %c0_47 = arith.constant 0 : index
    %c0_48 = arith.constant 0 : index
    %67 = vector.load %arg3[%c8, %c0_47, %c0_48] : memref<9x8x16xbf16, #tpu.memory_space<vmem>>, vector<1x8x16xbf16>
    %68 = vector.shape_cast %67 : vector<1x8x16xbf16> to vector<8x16xbf16>
    %c0_49 = arith.constant 0 : index
    %c147 = arith.constant 147 : index
    %69 = vector.load %arg9[%c0_49, %c147] : memref<16x512xbf16, #tpu.memory_space<vmem>>, vector<16x288xbf16>
    %cst_50 = arith.constant dense<0.000000e+00> : vector<8x288xf32>
    %70 = tpu.matmul %68, %69, %cst_50 {dimension_numbers = #tpu.dot_dimension_numbers<[1], [0], [0], [1], [0, 0, 1, 1], [], []>} : vector<8x16xbf16>, vector<16x288xbf16>, vector<8x288xf32> -> vector<8x288xf32>
    %71 = arith.addf %66, %70 : vector<8x288xf32>
    %cst_51 = arith.constant 0.000000e+00 : bf16
    %72 = vector.broadcast %cst_51 : bf16 to vector<8x512xbf16>
    %c0_52 = arith.constant 0 : index
    %c0_53 = arith.constant 0 : index
    %c0_54 = arith.constant 0 : index
    %c0_55 = arith.constant 0 : index
    %73 = vector.load %arg7[%c0_52, %c0_53, %c0_54, %c0_55] : memref<1x1x8x512xbf16, #tpu.memory_space<vmem>>, vector<1x1x8x512xbf16>
    %74 = vector.shape_cast %73 : vector<1x1x8x512xbf16> to vector<8x512xbf16>
    %75 = vector.shape_cast %72 : vector<8x512xbf16> to vector<1x1x8x512xbf16>
    tpu.vector_store %arg7[%c0_52, %c0_53, %c0_54, %c0_55], %75 {strides = array<i32>} : memref<1x1x8x512xbf16, #tpu.memory_space<vmem>>, vector<1x1x8x512xbf16>,
    %76 = arith.truncf %71 : vector<8x288xf32> to vector<8x288xbf16>
    %c0_56 = arith.constant 0 : index
    %c0_57 = arith.constant 0 : index
    %c0_58 = arith.constant 0 : index
    %c128_59 = arith.constant 128 : index
    %77 = vector.load %arg7[%c0_56, %c0_57, %c0_58, %c128_59] : memref<1x1x8x512xbf16, #tpu.memory_space<vmem>>, vector<1x1x8x288xbf16>
    %78 = vector.shape_cast %77 : vector<1x1x8x288xbf16> to vector<8x288xbf16>
    %79 = vector.shape_cast %76 : vector<8x288xbf16> to vector<1x1x8x288xbf16>
    tpu.vector_store %arg7[%c0_56, %c0_57, %c0_58, %c128_59], %79 {strides = array<i32>} : memref<1x1x8x512xbf16, #tpu.memory_space<vmem>>, vector<1x1x8x288xbf16>,
    %80 = vector.broadcast %1 : vector<1x288xf32> to vector<8x288xf32>
    %81 = arith.mulf %71, %80 : vector<8x288xf32>
    %cst_60 = arith.constant dense<0.000000e+00> : vector<8xf32>
    %82 = vector.multi_reduction <add>, %81, %cst_60 [1] : vector<8x288xf32> to vector<8xf32>
    %83 = vector.shape_cast %82 : vector<8xf32> to vector<8x1xf32>
    %84 = arith.mulf %81, %71 : vector<8x288xf32>
    %cst_61 = arith.constant dense<0.000000e+00> : vector<8xf32>
    %85 = vector.multi_reduction <add>, %84, %cst_61 [1] : vector<8x288xf32> to vector<8xf32>
    %86 = vector.shape_cast %85 : vector<8xf32> to vector<8x1xf32>
    %87 = tpu.concatenate %83, %86 in 1 : vector<8x1xf32>, vector<8x1xf32> -> vector<8x2xf32>
    %c0_62 = arith.constant 0 : index
    %c0_63 = arith.constant 0 : index
    %c0_64 = arith.constant 0 : index
    %c0_65 = arith.constant 0 : index
    %88 = vector.load %arg8[%c0_62, %c0_63, %c0_64, %c0_65] : memref<1x1x8x2xf32, #tpu.memory_space<vmem>>, vector<1x1x8x2xf32>
    %89 = vector.shape_cast %88 : vector<1x1x8x2xf32> to vector<8x2xf32>
    %90 = vector.shape_cast %87 : vector<8x2xf32> to vector<1x1x8x2xf32>
    tpu.vector_store %arg8[%c0_62, %c0_63, %c0_64, %c0_65], %90 {strides = array<i32>} : memref<1x1x8x2xf32, #tpu.memory_space<vmem>>, vector<1x1x8x2xf32>,
    return
  }
  func.func @transform_0(%arg0: i32, %arg1: i32) -> (i32, i32, i32, i32) {
    %c0_i32 = arith.constant 0 : i32
    %c0_i32_0 = arith.constant 0 : i32
    %c0_i32_1 = arith.constant 0 : i32
    return %arg0, %arg1, %c0_i32, %c0_i32_0 : i32, i32, i32, i32
  }
  func.func @transform_1(%arg0: i32, %arg1: i32) -> (i32, i32, i32) {
    %c0_i32 = arith.constant 0 : i32
    %c0_i32_0 = arith.constant 0 : i32
    %c0_i32_1 = arith.constant 0 : i32
    %c0_i32_2 = arith.constant 0 : i32
    return %c0_i32, %c0_i32_0, %c0_i32_1 : i32, i32, i32
  }
  func.func @transform_2(%arg0: i32, %arg1: i32) -> (i32, i32) {
    %c0_i32 = arith.constant 0 : i32
    %c0_i32_0 = arith.constant 0 : i32
    %c0_i32_1 = arith.constant 0 : i32
    return %c0_i32, %c0_i32_0 : i32, i32
  }
  func.func @transform_3(%arg0: i32, %arg1: i32) -> (i32, i32) {
    %c0_i32 = arith.constant 0 : i32
    %c0_i32_0 = arith.constant 0 : i32
    return %arg1, %c0_i32 : i32, i32
  }
  func.func @transform_4(%arg0: i32, %arg1: i32) -> (i32, i32) {
    %c0_i32 = arith.constant 0 : i32
    %c0_i32_0 = arith.constant 0 : i32
    %c0_i32_1 = arith.constant 0 : i32
    return %c0_i32, %c0_i32_0 : i32, i32
  }
  func.func @transform_5(%arg0: i32, %arg1: i32) -> (i32, i32, i32, i32) {
    %c0_i32 = arith.constant 0 : i32
    %c0_i32_0 = arith.constant 0 : i32
    %c0_i32_1 = arith.constant 0 : i32
    return %arg0, %arg1, %c0_i32, %c0_i32_0 : i32, i32, i32, i32
  }
  func.func @transform_6(%arg0: i32, %arg1: i32) -> (i32, i32, i32, i32) {
    %c0_i32 = arith.constant 0 : i32
    %c0_i32_0 = arith.constant 0 : i32
    %c0_i32_1 = arith.constant 0 : i32
    return %arg0, %arg1, %c0_i32, %c0_i32_0 : i32, i32, i32, i32
  }
}

module attributes {stable_mosaic.version = 11 : i64} {
  func.func @kernel(%arg0: i32, %arg1: i32, %arg2: memref<1x1x8x512xbf16, #tpu.memory_space<vmem>>, %arg3: memref<9x8x8xbf16, #tpu.memory_space<vmem>>, %arg4: memref<8x3xf32, #tpu.memory_space<vmem>>, %arg5: memref<1x512xf32, #tpu.memory_space<vmem>>, %arg6: memref<1x288xf32, #tpu.memory_space<vmem>>, %arg7: memref<1x1x8x512xbf16, #tpu.memory_space<vmem>>, %arg8: memref<1x1x8x2xf32, #tpu.memory_space<vmem>>, %arg9: memref<8x512xbf16, #tpu.memory_space<vmem>>) attributes {dimension_semantics = [#tpu.dimension_semantics<parallel>, #tpu.dimension_semantics<parallel>], iteration_bounds = array<i64: 2, 1>, scalar_prefetch = 0 : i64, scratch_operands = 1 : i64, tpu.core_type = #tpu.core_type<tc>, window_params = [{transform_indices = @transform_0, window_bounds = array<i64: 1, 1, 8, 512>}, {pipeline_mode = #tpu.pipeline_mode<synchronous>, transform_indices = @transform_1, window_bounds = array<i64: 9, 8, 8>}, {pipeline_mode = #tpu.pipeline_mode<synchronous>, transform_indices = @transform_2, window_bounds = array<i64: 8, 3>}, {transform_indices = @transform_3, window_bounds = array<i64: 1, 512>}, {pipeline_mode = #tpu.pipeline_mode<synchronous>, transform_indices = @transform_4, window_bounds = array<i64: 1, 288>}, {transform_indices = @transform_5, window_bounds = array<i64: 1, 1, 8, 512>}, {transform_indices = @transform_6, window_bounds = array<i64: 1, 1, 8, 2>}]} {
    %c0 = arith.constant 0 : index
    %c0_0 = arith.constant 0 : index
    %0 = vector.load %arg5[%c0, %c0_0] : memref<1x512xf32, #tpu.memory_space<vmem>>, vector<1x512xf32>
    %c0_1 = arith.constant 0 : index
    %c0_2 = arith.constant 0 : index
    %1 = vector.load %arg6[%c0_1, %c0_2] : memref<1x288xf32, #tpu.memory_space<vmem>>, vector<1x288xf32>
    %cst = arith.constant 0.000000e+00 : f32
    %2 = vector.broadcast %cst : f32 to vector<8x288xf32>
    %c0_3 = arith.constant 0 : index
    %c0_4 = arith.constant 0 : index
    %3 = vector.load %arg4[%c0_3, %c0_4] : memref<8x3xf32, #tpu.memory_space<vmem>>, vector<8x3xf32>
    %c0_5 = arith.constant 0 : index
    %c0_6 = arith.constant 0 : index
    %c0_7 = arith.constant 0 : index
    %c0_8 = arith.constant 0 : index
    %4 = vector.load %arg2[%c0_5, %c0_6, %c0_7, %c0_8] : memref<1x1x8x512xbf16, #tpu.memory_space<vmem>>, vector<1x1x8x512xbf16>
    %5 = vector.shape_cast %4 : vector<1x1x8x512xbf16> to vector<8x512xbf16>
    %6 = arith.extf %5 : vector<8x512xbf16> to vector<8x512xf32>
    %7 = vector.extract_strided_slice %3 {offsets = [0, 0], sizes = [8, 1], strides = [1, 1]} : vector<8x3xf32> to vector<8x1xf32>
    %8 = vector.broadcast %7 : vector<8x1xf32> to vector<8x512xf32>
    %9 = arith.mulf %6, %8 : vector<8x512xf32>
    %10 = vector.extract_strided_slice %3 {offsets = [0, 1], sizes = [8, 1], strides = [1, 1]} : vector<8x3xf32> to vector<8x1xf32>
    %11 = vector.broadcast %10 : vector<8x1xf32> to vector<8x512xf32>
    %12 = arith.addf %9, %11 : vector<8x512xf32>
    %cst_9 = arith.constant 0.000000e+00 : f32
    %13 = vector.broadcast %cst_9 : f32 to vector<8x512xf32>
    %14 = arith.cmpf ogt, %12, %13 : vector<8x512xf32>
    %15 = vector.extract_strided_slice %3 {offsets = [0, 2], sizes = [8, 1], strides = [1, 1]} : vector<8x3xf32> to vector<8x1xf32>
    %16 = vector.broadcast %15 : vector<8x1xf32> to vector<8x512xf32>
    %17 = arith.mulf %16, %12 : vector<8x512xf32>
    %18 = arith.select %14, %12, %17 : vector<8x512xi1>, vector<8x512xf32>
    %cst_10 = arith.constant 0.000000e+00 : f32
    %19 = vector.broadcast %cst_10 : f32 to vector<1x512xf32>
    %20 = arith.cmpf ogt, %0, %19 : vector<1x512xf32>
    %cst_11 = arith.constant 0.000000e+00 : f32
    %21 = vector.shape_cast %20 : vector<1x512xi1> to vector<1x512xi1>
    %22 = vector.broadcast %21 : vector<1x512xi1> to vector<8x512xi1>
    %23 = vector.broadcast %cst_11 : f32 to vector<8x512xf32>
    %24 = arith.select %22, %18, %23 : vector<8x512xi1>, vector<8x512xf32>
    %25 = arith.truncf %24 : vector<8x512xf32> to vector<8x512xbf16>
    %c0_12 = arith.constant 0 : index
    %c0_13 = arith.constant 0 : index
    %26 = vector.load %arg9[%c0_12, %c0_13] : memref<8x512xbf16, #tpu.memory_space<vmem>>, vector<8x512xbf16>
    tpu.vector_store %arg9[%c0_12, %c0_13], %25 {strides = array<i32>} : memref<8x512xbf16, #tpu.memory_space<vmem>>, vector<8x512xbf16>,
    %c0_14 = arith.constant 0 : index
    %c0_15 = arith.constant 0 : index
    %c0_16 = arith.constant 0 : index
    %27 = vector.load %arg3[%c0_14, %c0_15, %c0_16] : memref<9x8x8xbf16, #tpu.memory_space<vmem>>, vector<1x8x8xbf16>
    %28 = vector.shape_cast %27 : vector<1x8x8xbf16> to vector<8x8xbf16>
    %c0_17 = arith.constant 0 : index
    %c109 = arith.constant 109 : index
    %29 = vector.load %arg9[%c0_17, %c109] : memref<8x512xbf16, #tpu.memory_space<vmem>>, vector<8x288xbf16>
    %cst_18 = arith.constant dense<0.000000e+00> : vector<8x288xf32>
    %30 = tpu.matmul %28, %29, %cst_18 {dimension_numbers = #tpu.dot_dimension_numbers<[1], [0], [0], [1], [0, 0, 1, 1], [], []>} : vector<8x8xbf16>, vector<8x288xbf16>, vector<8x288xf32> -> vector<8x288xf32>
    %31 = arith.addf %2, %30 : vector<8x288xf32>
    %c1 = arith.constant 1 : index
    %c0_19 = arith.constant 0 : index
    %c0_20 = arith.constant 0 : index
    %32 = vector.load %arg3[%c1, %c0_19, %c0_20] : memref<9x8x8xbf16, #tpu.memory_space<vmem>>, vector<1x8x8xbf16>
    %33 = vector.shape_cast %32 : vector<1x8x8xbf16> to vector<8x8xbf16>
    %c0_21 = arith.constant 0 : index
    %c110 = arith.constant 110 : index
    %34 = vector.load %arg9[%c0_21, %c110] : memref<8x512xbf16, #tpu.memory_space<vmem>>, vector<8x288xbf16>
    %cst_22 = arith.constant dense<0.000000e+00> : vector<8x288xf32>
    %35 = tpu.matmul %33, %34, %cst_22 {dimension_numbers = #tpu.dot_dimension_numbers<[1], [0], [0], [1], [0, 0, 1, 1], [], []>} : vector<8x8xbf16>, vector<8x288xbf16>, vector<8x288xf32> -> vector<8x288xf32>
    %36 = arith.addf %31, %35 : vector<8x288xf32>
    %c2 = arith.constant 2 : index
    %c0_23 = arith.constant 0 : index
    %c0_24 = arith.constant 0 : index
    %37 = vector.load %arg3[%c2, %c0_23, %c0_24] : memref<9x8x8xbf16, #tpu.memory_space<vmem>>, vector<1x8x8xbf16>
    %38 = vector.shape_cast %37 : vector<1x8x8xbf16> to vector<8x8xbf16>
    %c0_25 = arith.constant 0 : index
    %c111 = arith.constant 111 : index
    %39 = vector.load %arg9[%c0_25, %c111] : memref<8x512xbf16, #tpu.memory_space<vmem>>, vector<8x288xbf16>
    %cst_26 = arith.constant dense<0.000000e+00> : vector<8x288xf32>
    %40 = tpu.matmul %38, %39, %cst_26 {dimension_numbers = #tpu.dot_dimension_numbers<[1], [0], [0], [1], [0, 0, 1, 1], [], []>} : vector<8x8xbf16>, vector<8x288xbf16>, vector<8x288xf32> -> vector<8x288xf32>
    %41 = arith.addf %36, %40 : vector<8x288xf32>
    %c3 = arith.constant 3 : index
    %c0_27 = arith.constant 0 : index
    %c0_28 = arith.constant 0 : index
    %42 = vector.load %arg3[%c3, %c0_27, %c0_28] : memref<9x8x8xbf16, #tpu.memory_space<vmem>>, vector<1x8x8xbf16>
    %43 = vector.shape_cast %42 : vector<1x8x8xbf16> to vector<8x8xbf16>
    %c0_29 = arith.constant 0 : index
    %c127 = arith.constant 127 : index
    %44 = vector.load %arg9[%c0_29, %c127] : memref<8x512xbf16, #tpu.memory_space<vmem>>, vector<8x288xbf16>
    %cst_30 = arith.constant dense<0.000000e+00> : vector<8x288xf32>
    %45 = tpu.matmul %43, %44, %cst_30 {dimension_numbers = #tpu.dot_dimension_numbers<[1], [0], [0], [1], [0, 0, 1, 1], [], []>} : vector<8x8xbf16>, vector<8x288xbf16>, vector<8x288xf32> -> vector<8x288xf32>
    %46 = arith.addf %41, %45 : vector<8x288xf32>
    %c4 = arith.constant 4 : index
    %c0_31 = arith.constant 0 : index
    %c0_32 = arith.constant 0 : index
    %47 = vector.load %arg3[%c4, %c0_31, %c0_32] : memref<9x8x8xbf16, #tpu.memory_space<vmem>>, vector<1x8x8xbf16>
    %48 = vector.shape_cast %47 : vector<1x8x8xbf16> to vector<8x8xbf16>
    %c0_33 = arith.constant 0 : index
    %c128 = arith.constant 128 : index
    %49 = vector.load %arg9[%c0_33, %c128] : memref<8x512xbf16, #tpu.memory_space<vmem>>, vector<8x288xbf16>
    %cst_34 = arith.constant dense<0.000000e+00> : vector<8x288xf32>
    %50 = tpu.matmul %48, %49, %cst_34 {dimension_numbers = #tpu.dot_dimension_numbers<[1], [0], [0], [1], [0, 0, 1, 1], [], []>} : vector<8x8xbf16>, vector<8x288xbf16>, vector<8x288xf32> -> vector<8x288xf32>
    %51 = arith.addf %46, %50 : vector<8x288xf32>
    %c5 = arith.constant 5 : index
    %c0_35 = arith.constant 0 : index
    %c0_36 = arith.constant 0 : index
    %52 = vector.load %arg3[%c5, %c0_35, %c0_36] : memref<9x8x8xbf16, #tpu.memory_space<vmem>>, vector<1x8x8xbf16>
    %53 = vector.shape_cast %52 : vector<1x8x8xbf16> to vector<8x8xbf16>
    %c0_37 = arith.constant 0 : index
    %c129 = arith.constant 129 : index
    %54 = vector.load %arg9[%c0_37, %c129] : memref<8x512xbf16, #tpu.memory_space<vmem>>, vector<8x288xbf16>
    %cst_38 = arith.constant dense<0.000000e+00> : vector<8x288xf32>
    %55 = tpu.matmul %53, %54, %cst_38 {dimension_numbers = #tpu.dot_dimension_numbers<[1], [0], [0], [1], [0, 0, 1, 1], [], []>} : vector<8x8xbf16>, vector<8x288xbf16>, vector<8x288xf32> -> vector<8x288xf32>
    %56 = arith.addf %51, %55 : vector<8x288xf32>
    %c6 = arith.constant 6 : index
    %c0_39 = arith.constant 0 : index
    %c0_40 = arith.constant 0 : index
    %57 = vector.load %arg3[%c6, %c0_39, %c0_40] : memref<9x8x8xbf16, #tpu.memory_space<vmem>>, vector<1x8x8xbf16>
    %58 = vector.shape_cast %57 : vector<1x8x8xbf16> to vector<8x8xbf16>
    %c0_41 = arith.constant 0 : index
    %c145 = arith.constant 145 : index
    %59 = vector.load %arg9[%c0_41, %c145] : memref<8x512xbf16, #tpu.memory_space<vmem>>, vector<8x288xbf16>
    %cst_42 = arith.constant dense<0.000000e+00> : vector<8x288xf32>
    %60 = tpu.matmul %58, %59, %cst_42 {dimension_numbers = #tpu.dot_dimension_numbers<[1], [0], [0], [1], [0, 0, 1, 1], [], []>} : vector<8x8xbf16>, vector<8x288xbf16>, vector<8x288xf32> -> vector<8x288xf32>
    %61 = arith.addf %56, %60 : vector<8x288xf32>
    %c7 = arith.constant 7 : index
    %c0_43 = arith.constant 0 : index
    %c0_44 = arith.constant 0 : index
    %62 = vector.load %arg3[%c7, %c0_43, %c0_44] : memref<9x8x8xbf16, #tpu.memory_space<vmem>>, vector<1x8x8xbf16>
    %63 = vector.shape_cast %62 : vector<1x8x8xbf16> to vector<8x8xbf16>
    %c0_45 = arith.constant 0 : index
    %c146 = arith.constant 146 : index
    %64 = vector.load %arg9[%c0_45, %c146] : memref<8x512xbf16, #tpu.memory_space<vmem>>, vector<8x288xbf16>
    %cst_46 = arith.constant dense<0.000000e+00> : vector<8x288xf32>
    %65 = tpu.matmul %63, %64, %cst_46 {dimension_numbers = #tpu.dot_dimension_numbers<[1], [0], [0], [1], [0, 0, 1, 1], [], []>} : vector<8x8xbf16>, vector<8x288xbf16>, vector<8x288xf32> -> vector<8x288xf32>
    %66 = arith.addf %61, %65 : vector<8x288xf32>
    %c8 = arith.constant 8 : index
    %c0_47 = arith.constant 0 : index
    %c0_48 = arith.constant 0 : index
    %67 = vector.load %arg3[%c8, %c0_47, %c0_48] : memref<9x8x8xbf16, #tpu.memory_space<vmem>>, vector<1x8x8xbf16>
    %68 = vector.shape_cast %67 : vector<1x8x8xbf16> to vector<8x8xbf16>
    %c0_49 = arith.constant 0 : index
    %c147 = arith.constant 147 : index
    %69 = vector.load %arg9[%c0_49, %c147] : memref<8x512xbf16, #tpu.memory_space<vmem>>, vector<8x288xbf16>
    %cst_50 = arith.constant dense<0.000000e+00> : vector<8x288xf32>
    %70 = tpu.matmul %68, %69, %cst_50 {dimension_numbers = #tpu.dot_dimension_numbers<[1], [0], [0], [1], [0, 0, 1, 1], [], []>} : vector<8x8xbf16>, vector<8x288xbf16>, vector<8x288xf32> -> vector<8x288xf32>
    %71 = arith.addf %66, %70 : vector<8x288xf32>
    %cst_51 = arith.constant 0.000000e+00 : bf16
    %72 = vector.broadcast %cst_51 : bf16 to vector<8x512xbf16>
    %c0_52 = arith.constant 0 : index
    %c0_53 = arith.constant 0 : index
    %c0_54 = arith.constant 0 : index
    %c0_55 = arith.constant 0 : index
    %73 = vector.load %arg7[%c0_52, %c0_53, %c0_54, %c0_55] : memref<1x1x8x512xbf16, #tpu.memory_space<vmem>>, vector<1x1x8x512xbf16>
    %74 = vector.shape_cast %73 : vector<1x1x8x512xbf16> to vector<8x512xbf16>
    %75 = vector.shape_cast %72 : vector<8x512xbf16> to vector<1x1x8x512xbf16>
    tpu.vector_store %arg7[%c0_52, %c0_53, %c0_54, %c0_55], %75 {strides = array<i32>} : memref<1x1x8x512xbf16, #tpu.memory_space<vmem>>, vector<1x1x8x512xbf16>,
    %76 = arith.truncf %71 : vector<8x288xf32> to vector<8x288xbf16>
    %c0_56 = arith.constant 0 : index
    %c0_57 = arith.constant 0 : index
    %c0_58 = arith.constant 0 : index
    %c128_59 = arith.constant 128 : index
    %77 = vector.load %arg7[%c0_56, %c0_57, %c0_58, %c128_59] : memref<1x1x8x512xbf16, #tpu.memory_space<vmem>>, vector<1x1x8x288xbf16>
    %78 = vector.shape_cast %77 : vector<1x1x8x288xbf16> to vector<8x288xbf16>
    %79 = vector.shape_cast %76 : vector<8x288xbf16> to vector<1x1x8x288xbf16>
    tpu.vector_store %arg7[%c0_56, %c0_57, %c0_58, %c128_59], %79 {strides = array<i32>} : memref<1x1x8x512xbf16, #tpu.memory_space<vmem>>, vector<1x1x8x288xbf16>,
    %80 = vector.broadcast %1 : vector<1x288xf32> to vector<8x288xf32>
    %81 = arith.mulf %71, %80 : vector<8x288xf32>
    %cst_60 = arith.constant dense<0.000000e+00> : vector<8xf32>
    %82 = vector.multi_reduction <add>, %81, %cst_60 [1] : vector<8x288xf32> to vector<8xf32>
    %83 = vector.shape_cast %82 : vector<8xf32> to vector<8x1xf32>
    %84 = arith.mulf %81, %71 : vector<8x288xf32>
    %cst_61 = arith.constant dense<0.000000e+00> : vector<8xf32>
    %85 = vector.multi_reduction <add>, %84, %cst_61 [1] : vector<8x288xf32> to vector<8xf32>
    %86 = vector.shape_cast %85 : vector<8xf32> to vector<8x1xf32>
    %87 = tpu.concatenate %83, %86 in 1 : vector<8x1xf32>, vector<8x1xf32> -> vector<8x2xf32>
    %c0_62 = arith.constant 0 : index
    %c0_63 = arith.constant 0 : index
    %c0_64 = arith.constant 0 : index
    %c0_65 = arith.constant 0 : index
    %88 = vector.load %arg8[%c0_62, %c0_63, %c0_64, %c0_65] : memref<1x1x8x2xf32, #tpu.memory_space<vmem>>, vector<1x1x8x2xf32>
    %89 = vector.shape_cast %88 : vector<1x1x8x2xf32> to vector<8x2xf32>
    %90 = vector.shape_cast %87 : vector<8x2xf32> to vector<1x1x8x2xf32>
    tpu.vector_store %arg8[%c0_62, %c0_63, %c0_64, %c0_65], %90 {strides = array<i32>} : memref<1x1x8x2xf32, #tpu.memory_space<vmem>>, vector<1x1x8x2xf32>,
    return
  }
  func.func @transform_0(%arg0: i32, %arg1: i32) -> (i32, i32, i32, i32) {
    %c0_i32 = arith.constant 0 : i32
    %c0_i32_0 = arith.constant 0 : i32
    %c0_i32_1 = arith.constant 0 : i32
    return %arg0, %arg1, %c0_i32, %c0_i32_0 : i32, i32, i32, i32
  }
  func.func @transform_1(%arg0: i32, %arg1: i32) -> (i32, i32, i32) {
    %c0_i32 = arith.constant 0 : i32
    %c0_i32_0 = arith.constant 0 : i32
    %c0_i32_1 = arith.constant 0 : i32
    %c0_i32_2 = arith.constant 0 : i32
    return %c0_i32, %c0_i32_0, %c0_i32_1 : i32, i32, i32
  }
  func.func @transform_2(%arg0: i32, %arg1: i32) -> (i32, i32) {
    %c0_i32 = arith.constant 0 : i32
    %c0_i32_0 = arith.constant 0 : i32
    %c0_i32_1 = arith.constant 0 : i32
    return %c0_i32, %c0_i32_0 : i32, i32
  }
  func.func @transform_3(%arg0: i32, %arg1: i32) -> (i32, i32) {
    %c0_i32 = arith.constant 0 : i32
    %c0_i32_0 = arith.constant 0 : i32
    return %arg1, %c0_i32 : i32, i32
  }
  func.func @transform_4(%arg0: i32, %arg1: i32) -> (i32, i32) {
    %c0_i32 = arith.constant 0 : i32
    %c0_i32_0 = arith.constant 0 : i32
    %c0_i32_1 = arith.constant 0 : i32
    return %c0_i32, %c0_i32_0 : i32, i32
  }
  func.func @transform_5(%arg0: i32, %arg1: i32) -> (i32, i32, i32, i32) {
    %c0_i32 = arith.constant 0 : i32
    %c0_i32_0 = arith.constant 0 : i32
    %c0_i32_1 = arith.constant 0 : i32
    return %arg0, %arg1, %c0_i32, %c0_i32_0 : i32, i32, i32, i32
  }
  func.func @transform_6(%arg0: i32, %arg1: i32) -> (i32, i32, i32, i32) {
    %c0_i32 = arith.constant 0 : i32
    %c0_i32_0 = arith.constant 0 : i32
    %c0_i32_1 = arith.constant 0 : i32
    return %arg0, %arg1, %c0_i32, %c0_i32_0 : i32, i32, i32, i32
  }
}

module attributes {stable_mosaic.version = 11 : i64} {
  func.func @kernel(%arg0: i32, %arg1: i32, %arg2: memref<1x1x8x512xbf16, #tpu.memory_space<vmem>>, %arg3: memref<1x1x8x512xbf16, #tpu.memory_space<vmem>>, %arg4: memref<9x8x8xbf16, #tpu.memory_space<vmem>>, %arg5: memref<9x8x8xbf16, #tpu.memory_space<vmem>>, %arg6: memref<8x3xf32, #tpu.memory_space<vmem>>, %arg7: memref<8x3xf32, #tpu.memory_space<vmem>>, %arg8: memref<1x512xf32, #tpu.memory_space<vmem>>, %arg9: memref<1x288xf32, #tpu.memory_space<vmem>>, %arg10: memref<1x1x8x512xbf16, #tpu.memory_space<vmem>>, %arg11: memref<1x1x8x2xf32, #tpu.memory_space<vmem>>, %arg12: memref<8x512xbf16, #tpu.memory_space<vmem>>, %arg13: memref<8x512xbf16, #tpu.memory_space<vmem>>) attributes {dimension_semantics = [#tpu.dimension_semantics<parallel>, #tpu.dimension_semantics<parallel>], iteration_bounds = array<i64: 2, 1>, scalar_prefetch = 0 : i64, scratch_operands = 2 : i64, tpu.core_type = #tpu.core_type<tc>, window_params = [{transform_indices = @transform_0, window_bounds = array<i64: 1, 1, 8, 512>}, {transform_indices = @transform_1, window_bounds = array<i64: 1, 1, 8, 512>}, {pipeline_mode = #tpu.pipeline_mode<synchronous>, transform_indices = @transform_2, window_bounds = array<i64: 9, 8, 8>}, {pipeline_mode = #tpu.pipeline_mode<synchronous>, transform_indices = @transform_3, window_bounds = array<i64: 9, 8, 8>}, {pipeline_mode = #tpu.pipeline_mode<synchronous>, transform_indices = @transform_4, window_bounds = array<i64: 8, 3>}, {pipeline_mode = #tpu.pipeline_mode<synchronous>, transform_indices = @transform_5, window_bounds = array<i64: 8, 3>}, {transform_indices = @transform_6, window_bounds = array<i64: 1, 512>}, {pipeline_mode = #tpu.pipeline_mode<synchronous>, transform_indices = @transform_7, window_bounds = array<i64: 1, 288>}, {transform_indices = @transform_8, window_bounds = array<i64: 1, 1, 8, 512>}, {transform_indices = @transform_9, window_bounds = array<i64: 1, 1, 8, 2>}]} {
    %c0 = arith.constant 0 : index
    %c0_0 = arith.constant 0 : index
    %0 = vector.load %arg8[%c0, %c0_0] : memref<1x512xf32, #tpu.memory_space<vmem>>, vector<1x512xf32>
    %c0_1 = arith.constant 0 : index
    %c0_2 = arith.constant 0 : index
    %1 = vector.load %arg9[%c0_1, %c0_2] : memref<1x288xf32, #tpu.memory_space<vmem>>, vector<1x288xf32>
    %cst = arith.constant 0.000000e+00 : f32
    %2 = vector.broadcast %cst : f32 to vector<8x288xf32>
    %c0_3 = arith.constant 0 : index
    %c0_4 = arith.constant 0 : index
    %3 = vector.load %arg6[%c0_3, %c0_4] : memref<8x3xf32, #tpu.memory_space<vmem>>, vector<8x3xf32>
    %c0_5 = arith.constant 0 : index
    %c0_6 = arith.constant 0 : index
    %c0_7 = arith.constant 0 : index
    %c0_8 = arith.constant 0 : index
    %4 = vector.load %arg2[%c0_5, %c0_6, %c0_7, %c0_8] : memref<1x1x8x512xbf16, #tpu.memory_space<vmem>>, vector<1x1x8x512xbf16>
    %5 = vector.shape_cast %4 : vector<1x1x8x512xbf16> to vector<8x512xbf16>
    %6 = arith.extf %5 : vector<8x512xbf16> to vector<8x512xf32>
    %7 = vector.extract_strided_slice %3 {offsets = [0, 0], sizes = [8, 1], strides = [1, 1]} : vector<8x3xf32> to vector<8x1xf32>
    %8 = vector.broadcast %7 : vector<8x1xf32> to vector<8x512xf32>
    %9 = arith.mulf %6, %8 : vector<8x512xf32>
    %10 = vector.extract_strided_slice %3 {offsets = [0, 1], sizes = [8, 1], strides = [1, 1]} : vector<8x3xf32> to vector<8x1xf32>
    %11 = vector.broadcast %10 : vector<8x1xf32> to vector<8x512xf32>
    %12 = arith.addf %9, %11 : vector<8x512xf32>
    %cst_9 = arith.constant 0.000000e+00 : f32
    %13 = vector.broadcast %cst_9 : f32 to vector<8x512xf32>
    %14 = arith.cmpf ogt, %12, %13 : vector<8x512xf32>
    %15 = vector.extract_strided_slice %3 {offsets = [0, 2], sizes = [8, 1], strides = [1, 1]} : vector<8x3xf32> to vector<8x1xf32>
    %16 = vector.broadcast %15 : vector<8x1xf32> to vector<8x512xf32>
    %17 = arith.mulf %16, %12 : vector<8x512xf32>
    %18 = arith.select %14, %12, %17 : vector<8x512xi1>, vector<8x512xf32>
    %cst_10 = arith.constant 0.000000e+00 : f32
    %19 = vector.broadcast %cst_10 : f32 to vector<1x512xf32>
    %20 = arith.cmpf ogt, %0, %19 : vector<1x512xf32>
    %cst_11 = arith.constant 0.000000e+00 : f32
    %21 = vector.shape_cast %20 : vector<1x512xi1> to vector<1x512xi1>
    %22 = vector.broadcast %21 : vector<1x512xi1> to vector<8x512xi1>
    %23 = vector.broadcast %cst_11 : f32 to vector<8x512xf32>
    %24 = arith.select %22, %18, %23 : vector<8x512xi1>, vector<8x512xf32>
    %25 = arith.truncf %24 : vector<8x512xf32> to vector<8x512xbf16>
    %c0_12 = arith.constant 0 : index
    %c0_13 = arith.constant 0 : index
    %26 = vector.load %arg12[%c0_12, %c0_13] : memref<8x512xbf16, #tpu.memory_space<vmem>>, vector<8x512xbf16>
    tpu.vector_store %arg12[%c0_12, %c0_13], %25 {strides = array<i32>} : memref<8x512xbf16, #tpu.memory_space<vmem>>, vector<8x512xbf16>,
    %c0_14 = arith.constant 0 : index
    %c0_15 = arith.constant 0 : index
    %c0_16 = arith.constant 0 : index
    %27 = vector.load %arg4[%c0_14, %c0_15, %c0_16] : memref<9x8x8xbf16, #tpu.memory_space<vmem>>, vector<1x8x8xbf16>
    %28 = vector.shape_cast %27 : vector<1x8x8xbf16> to vector<8x8xbf16>
    %c0_17 = arith.constant 0 : index
    %c109 = arith.constant 109 : index
    %29 = vector.load %arg12[%c0_17, %c109] : memref<8x512xbf16, #tpu.memory_space<vmem>>, vector<8x288xbf16>
    %cst_18 = arith.constant dense<0.000000e+00> : vector<8x288xf32>
    %30 = tpu.matmul %28, %29, %cst_18 {dimension_numbers = #tpu.dot_dimension_numbers<[1], [0], [0], [1], [0, 0, 1, 1], [], []>} : vector<8x8xbf16>, vector<8x288xbf16>, vector<8x288xf32> -> vector<8x288xf32>
    %31 = arith.addf %2, %30 : vector<8x288xf32>
    %c1 = arith.constant 1 : index
    %c0_19 = arith.constant 0 : index
    %c0_20 = arith.constant 0 : index
    %32 = vector.load %arg4[%c1, %c0_19, %c0_20] : memref<9x8x8xbf16, #tpu.memory_space<vmem>>, vector<1x8x8xbf16>
    %33 = vector.shape_cast %32 : vector<1x8x8xbf16> to vector<8x8xbf16>
    %c0_21 = arith.constant 0 : index
    %c110 = arith.constant 110 : index
    %34 = vector.load %arg12[%c0_21, %c110] : memref<8x512xbf16, #tpu.memory_space<vmem>>, vector<8x288xbf16>
    %cst_22 = arith.constant dense<0.000000e+00> : vector<8x288xf32>
    %35 = tpu.matmul %33, %34, %cst_22 {dimension_numbers = #tpu.dot_dimension_numbers<[1], [0], [0], [1], [0, 0, 1, 1], [], []>} : vector<8x8xbf16>, vector<8x288xbf16>, vector<8x288xf32> -> vector<8x288xf32>
    %36 = arith.addf %31, %35 : vector<8x288xf32>
    %c2 = arith.constant 2 : index
    %c0_23 = arith.constant 0 : index
    %c0_24 = arith.constant 0 : index
    %37 = vector.load %arg4[%c2, %c0_23, %c0_24] : memref<9x8x8xbf16, #tpu.memory_space<vmem>>, vector<1x8x8xbf16>
    %38 = vector.shape_cast %37 : vector<1x8x8xbf16> to vector<8x8xbf16>
    %c0_25 = arith.constant 0 : index
    %c111 = arith.constant 111 : index
    %39 = vector.load %arg12[%c0_25, %c111] : memref<8x512xbf16, #tpu.memory_space<vmem>>, vector<8x288xbf16>
    %cst_26 = arith.constant dense<0.000000e+00> : vector<8x288xf32>
    %40 = tpu.matmul %38, %39, %cst_26 {dimension_numbers = #tpu.dot_dimension_numbers<[1], [0], [0], [1], [0, 0, 1, 1], [], []>} : vector<8x8xbf16>, vector<8x288xbf16>, vector<8x288xf32> -> vector<8x288xf32>
    %41 = arith.addf %36, %40 : vector<8x288xf32>
    %c3 = arith.constant 3 : index
    %c0_27 = arith.constant 0 : index
    %c0_28 = arith.constant 0 : index
    %42 = vector.load %arg4[%c3, %c0_27, %c0_28] : memref<9x8x8xbf16, #tpu.memory_space<vmem>>, vector<1x8x8xbf16>
    %43 = vector.shape_cast %42 : vector<1x8x8xbf16> to vector<8x8xbf16>
    %c0_29 = arith.constant 0 : index
    %c127 = arith.constant 127 : index
    %44 = vector.load %arg12[%c0_29, %c127] : memref<8x512xbf16, #tpu.memory_space<vmem>>, vector<8x288xbf16>
    %cst_30 = arith.constant dense<0.000000e+00> : vector<8x288xf32>
    %45 = tpu.matmul %43, %44, %cst_30 {dimension_numbers = #tpu.dot_dimension_numbers<[1], [0], [0], [1], [0, 0, 1, 1], [], []>} : vector<8x8xbf16>, vector<8x288xbf16>, vector<8x288xf32> -> vector<8x288xf32>
    %46 = arith.addf %41, %45 : vector<8x288xf32>
    %c4 = arith.constant 4 : index
    %c0_31 = arith.constant 0 : index
    %c0_32 = arith.constant 0 : index
    %47 = vector.load %arg4[%c4, %c0_31, %c0_32] : memref<9x8x8xbf16, #tpu.memory_space<vmem>>, vector<1x8x8xbf16>
    %48 = vector.shape_cast %47 : vector<1x8x8xbf16> to vector<8x8xbf16>
    %c0_33 = arith.constant 0 : index
    %c128 = arith.constant 128 : index
    %49 = vector.load %arg12[%c0_33, %c128] : memref<8x512xbf16, #tpu.memory_space<vmem>>, vector<8x288xbf16>
    %cst_34 = arith.constant dense<0.000000e+00> : vector<8x288xf32>
    %50 = tpu.matmul %48, %49, %cst_34 {dimension_numbers = #tpu.dot_dimension_numbers<[1], [0], [0], [1], [0, 0, 1, 1], [], []>} : vector<8x8xbf16>, vector<8x288xbf16>, vector<8x288xf32> -> vector<8x288xf32>
    %51 = arith.addf %46, %50 : vector<8x288xf32>
    %c5 = arith.constant 5 : index
    %c0_35 = arith.constant 0 : index
    %c0_36 = arith.constant 0 : index
    %52 = vector.load %arg4[%c5, %c0_35, %c0_36] : memref<9x8x8xbf16, #tpu.memory_space<vmem>>, vector<1x8x8xbf16>
    %53 = vector.shape_cast %52 : vector<1x8x8xbf16> to vector<8x8xbf16>
    %c0_37 = arith.constant 0 : index
    %c129 = arith.constant 129 : index
    %54 = vector.load %arg12[%c0_37, %c129] : memref<8x512xbf16, #tpu.memory_space<vmem>>, vector<8x288xbf16>
    %cst_38 = arith.constant dense<0.000000e+00> : vector<8x288xf32>
    %55 = tpu.matmul %53, %54, %cst_38 {dimension_numbers = #tpu.dot_dimension_numbers<[1], [0], [0], [1], [0, 0, 1, 1], [], []>} : vector<8x8xbf16>, vector<8x288xbf16>, vector<8x288xf32> -> vector<8x288xf32>
    %56 = arith.addf %51, %55 : vector<8x288xf32>
    %c6 = arith.constant 6 : index
    %c0_39 = arith.constant 0 : index
    %c0_40 = arith.constant 0 : index
    %57 = vector.load %arg4[%c6, %c0_39, %c0_40] : memref<9x8x8xbf16, #tpu.memory_space<vmem>>, vector<1x8x8xbf16>
    %58 = vector.shape_cast %57 : vector<1x8x8xbf16> to vector<8x8xbf16>
    %c0_41 = arith.constant 0 : index
    %c145 = arith.constant 145 : index
    %59 = vector.load %arg12[%c0_41, %c145] : memref<8x512xbf16, #tpu.memory_space<vmem>>, vector<8x288xbf16>
    %cst_42 = arith.constant dense<0.000000e+00> : vector<8x288xf32>
    %60 = tpu.matmul %58, %59, %cst_42 {dimension_numbers = #tpu.dot_dimension_numbers<[1], [0], [0], [1], [0, 0, 1, 1], [], []>} : vector<8x8xbf16>, vector<8x288xbf16>, vector<8x288xf32> -> vector<8x288xf32>
    %61 = arith.addf %56, %60 : vector<8x288xf32>
    %c7 = arith.constant 7 : index
    %c0_43 = arith.constant 0 : index
    %c0_44 = arith.constant 0 : index
    %62 = vector.load %arg4[%c7, %c0_43, %c0_44] : memref<9x8x8xbf16, #tpu.memory_space<vmem>>, vector<1x8x8xbf16>
    %63 = vector.shape_cast %62 : vector<1x8x8xbf16> to vector<8x8xbf16>
    %c0_45 = arith.constant 0 : index
    %c146 = arith.constant 146 : index
    %64 = vector.load %arg12[%c0_45, %c146] : memref<8x512xbf16, #tpu.memory_space<vmem>>, vector<8x288xbf16>
    %cst_46 = arith.constant dense<0.000000e+00> : vector<8x288xf32>
    %65 = tpu.matmul %63, %64, %cst_46 {dimension_numbers = #tpu.dot_dimension_numbers<[1], [0], [0], [1], [0, 0, 1, 1], [], []>} : vector<8x8xbf16>, vector<8x288xbf16>, vector<8x288xf32> -> vector<8x288xf32>
    %66 = arith.addf %61, %65 : vector<8x288xf32>
    %c8 = arith.constant 8 : index
    %c0_47 = arith.constant 0 : index
    %c0_48 = arith.constant 0 : index
    %67 = vector.load %arg4[%c8, %c0_47, %c0_48] : memref<9x8x8xbf16, #tpu.memory_space<vmem>>, vector<1x8x8xbf16>
    %68 = vector.shape_cast %67 : vector<1x8x8xbf16> to vector<8x8xbf16>
    %c0_49 = arith.constant 0 : index
    %c147 = arith.constant 147 : index
    %69 = vector.load %arg12[%c0_49, %c147] : memref<8x512xbf16, #tpu.memory_space<vmem>>, vector<8x288xbf16>
    %cst_50 = arith.constant dense<0.000000e+00> : vector<8x288xf32>
    %70 = tpu.matmul %68, %69, %cst_50 {dimension_numbers = #tpu.dot_dimension_numbers<[1], [0], [0], [1], [0, 0, 1, 1], [], []>} : vector<8x8xbf16>, vector<8x288xbf16>, vector<8x288xf32> -> vector<8x288xf32>
    %71 = arith.addf %66, %70 : vector<8x288xf32>
    %c0_51 = arith.constant 0 : index
    %c0_52 = arith.constant 0 : index
    %72 = vector.load %arg7[%c0_51, %c0_52] : memref<8x3xf32, #tpu.memory_space<vmem>>, vector<8x3xf32>
    %c0_53 = arith.constant 0 : index
    %c0_54 = arith.constant 0 : index
    %c0_55 = arith.constant 0 : index
    %c0_56 = arith.constant 0 : index
    %73 = vector.load %arg3[%c0_53, %c0_54, %c0_55, %c0_56] : memref<1x1x8x512xbf16, #tpu.memory_space<vmem>>, vector<1x1x8x512xbf16>
    %74 = vector.shape_cast %73 : vector<1x1x8x512xbf16> to vector<8x512xbf16>
    %75 = arith.extf %74 : vector<8x512xbf16> to vector<8x512xf32>
    %76 = vector.extract_strided_slice %72 {offsets = [0, 0], sizes = [8, 1], strides = [1, 1]} : vector<8x3xf32> to vector<8x1xf32>
    %77 = vector.broadcast %76 : vector<8x1xf32> to vector<8x512xf32>
    %78 = arith.mulf %75, %77 : vector<8x512xf32>
    %79 = vector.extract_strided_slice %72 {offsets = [0, 1], sizes = [8, 1], strides = [1, 1]} : vector<8x3xf32> to vector<8x1xf32>
    %80 = vector.broadcast %79 : vector<8x1xf32> to vector<8x512xf32>
    %81 = arith.addf %78, %80 : vector<8x512xf32>
    %cst_57 = arith.constant 0.000000e+00 : f32
    %82 = vector.broadcast %cst_57 : f32 to vector<8x512xf32>
    %83 = arith.cmpf ogt, %81, %82 : vector<8x512xf32>
    %84 = vector.extract_strided_slice %72 {offsets = [0, 2], sizes = [8, 1], strides = [1, 1]} : vector<8x3xf32> to vector<8x1xf32>
    %85 = vector.broadcast %84 : vector<8x1xf32> to vector<8x512xf32>
    %86 = arith.mulf %85, %81 : vector<8x512xf32>
    %87 = arith.select %83, %81, %86 : vector<8x512xi1>, vector<8x512xf32>
    %cst_58 = arith.constant 0.000000e+00 : f32
    %88 = vector.broadcast %cst_58 : f32 to vector<1x512xf32>
    %89 = arith.cmpf ogt, %0, %88 : vector<1x512xf32>
    %cst_59 = arith.constant 0.000000e+00 : f32
    %90 = vector.shape_cast %89 : vector<1x512xi1> to vector<1x512xi1>
    %91 = vector.broadcast %90 : vector<1x512xi1> to vector<8x512xi1>
    %92 = vector.broadcast %cst_59 : f32 to vector<8x512xf32>
    %93 = arith.select %91, %87, %92 : vector<8x512xi1>, vector<8x512xf32>
    %94 = arith.truncf %93 : vector<8x512xf32> to vector<8x512xbf16>
    %c0_60 = arith.constant 0 : index
    %c0_61 = arith.constant 0 : index
    %95 = vector.load %arg13[%c0_60, %c0_61] : memref<8x512xbf16, #tpu.memory_space<vmem>>, vector<8x512xbf16>
    tpu.vector_store %arg13[%c0_60, %c0_61], %94 {strides = array<i32>} : memref<8x512xbf16, #tpu.memory_space<vmem>>, vector<8x512xbf16>,
    %c0_62 = arith.constant 0 : index
    %c0_63 = arith.constant 0 : index
    %c0_64 = arith.constant 0 : index
    %96 = vector.load %arg5[%c0_62, %c0_63, %c0_64] : memref<9x8x8xbf16, #tpu.memory_space<vmem>>, vector<1x8x8xbf16>
    %97 = vector.shape_cast %96 : vector<1x8x8xbf16> to vector<8x8xbf16>
    %c0_65 = arith.constant 0 : index
    %c109_66 = arith.constant 109 : index
    %98 = vector.load %arg13[%c0_65, %c109_66] : memref<8x512xbf16, #tpu.memory_space<vmem>>, vector<8x288xbf16>
    %cst_67 = arith.constant dense<0.000000e+00> : vector<8x288xf32>
    %99 = tpu.matmul %97, %98, %cst_67 {dimension_numbers = #tpu.dot_dimension_numbers<[1], [0], [0], [1], [0, 0, 1, 1], [], []>} : vector<8x8xbf16>, vector<8x288xbf16>, vector<8x288xf32> -> vector<8x288xf32>
    %100 = arith.addf %71, %99 : vector<8x288xf32>
    %c1_68 = arith.constant 1 : index
    %c0_69 = arith.constant 0 : index
    %c0_70 = arith.constant 0 : index
    %101 = vector.load %arg5[%c1_68, %c0_69, %c0_70] : memref<9x8x8xbf16, #tpu.memory_space<vmem>>, vector<1x8x8xbf16>
    %102 = vector.shape_cast %101 : vector<1x8x8xbf16> to vector<8x8xbf16>
    %c0_71 = arith.constant 0 : index
    %c110_72 = arith.constant 110 : index
    %103 = vector.load %arg13[%c0_71, %c110_72] : memref<8x512xbf16, #tpu.memory_space<vmem>>, vector<8x288xbf16>
    %cst_73 = arith.constant dense<0.000000e+00> : vector<8x288xf32>
    %104 = tpu.matmul %102, %103, %cst_73 {dimension_numbers = #tpu.dot_dimension_numbers<[1], [0], [0], [1], [0, 0, 1, 1], [], []>} : vector<8x8xbf16>, vector<8x288xbf16>, vector<8x288xf32> -> vector<8x288xf32>
    %105 = arith.addf %100, %104 : vector<8x288xf32>
    %c2_74 = arith.constant 2 : index
    %c0_75 = arith.constant 0 : index
    %c0_76 = arith.constant 0 : index
    %106 = vector.load %arg5[%c2_74, %c0_75, %c0_76] : memref<9x8x8xbf16, #tpu.memory_space<vmem>>, vector<1x8x8xbf16>
    %107 = vector.shape_cast %106 : vector<1x8x8xbf16> to vector<8x8xbf16>
    %c0_77 = arith.constant 0 : index
    %c111_78 = arith.constant 111 : index
    %108 = vector.load %arg13[%c0_77, %c111_78] : memref<8x512xbf16, #tpu.memory_space<vmem>>, vector<8x288xbf16>
    %cst_79 = arith.constant dense<0.000000e+00> : vector<8x288xf32>
    %109 = tpu.matmul %107, %108, %cst_79 {dimension_numbers = #tpu.dot_dimension_numbers<[1], [0], [0], [1], [0, 0, 1, 1], [], []>} : vector<8x8xbf16>, vector<8x288xbf16>, vector<8x288xf32> -> vector<8x288xf32>
    %110 = arith.addf %105, %109 : vector<8x288xf32>
    %c3_80 = arith.constant 3 : index
    %c0_81 = arith.constant 0 : index
    %c0_82 = arith.constant 0 : index
    %111 = vector.load %arg5[%c3_80, %c0_81, %c0_82] : memref<9x8x8xbf16, #tpu.memory_space<vmem>>, vector<1x8x8xbf16>
    %112 = vector.shape_cast %111 : vector<1x8x8xbf16> to vector<8x8xbf16>
    %c0_83 = arith.constant 0 : index
    %c127_84 = arith.constant 127 : index
    %113 = vector.load %arg13[%c0_83, %c127_84] : memref<8x512xbf16, #tpu.memory_space<vmem>>, vector<8x288xbf16>
    %cst_85 = arith.constant dense<0.000000e+00> : vector<8x288xf32>
    %114 = tpu.matmul %112, %113, %cst_85 {dimension_numbers = #tpu.dot_dimension_numbers<[1], [0], [0], [1], [0, 0, 1, 1], [], []>} : vector<8x8xbf16>, vector<8x288xbf16>, vector<8x288xf32> -> vector<8x288xf32>
    %115 = arith.addf %110, %114 : vector<8x288xf32>
    %c4_86 = arith.constant 4 : index
    %c0_87 = arith.constant 0 : index
    %c0_88 = arith.constant 0 : index
    %116 = vector.load %arg5[%c4_86, %c0_87, %c0_88] : memref<9x8x8xbf16, #tpu.memory_space<vmem>>, vector<1x8x8xbf16>
    %117 = vector.shape_cast %116 : vector<1x8x8xbf16> to vector<8x8xbf16>
    %c0_89 = arith.constant 0 : index
    %c128_90 = arith.constant 128 : index
    %118 = vector.load %arg13[%c0_89, %c128_90] : memref<8x512xbf16, #tpu.memory_space<vmem>>, vector<8x288xbf16>
    %cst_91 = arith.constant dense<0.000000e+00> : vector<8x288xf32>
    %119 = tpu.matmul %117, %118, %cst_91 {dimension_numbers = #tpu.dot_dimension_numbers<[1], [0], [0], [1], [0, 0, 1, 1], [], []>} : vector<8x8xbf16>, vector<8x288xbf16>, vector<8x288xf32> -> vector<8x288xf32>
    %120 = arith.addf %115, %119 : vector<8x288xf32>
    %c5_92 = arith.constant 5 : index
    %c0_93 = arith.constant 0 : index
    %c0_94 = arith.constant 0 : index
    %121 = vector.load %arg5[%c5_92, %c0_93, %c0_94] : memref<9x8x8xbf16, #tpu.memory_space<vmem>>, vector<1x8x8xbf16>
    %122 = vector.shape_cast %121 : vector<1x8x8xbf16> to vector<8x8xbf16>
    %c0_95 = arith.constant 0 : index
    %c129_96 = arith.constant 129 : index
    %123 = vector.load %arg13[%c0_95, %c129_96] : memref<8x512xbf16, #tpu.memory_space<vmem>>, vector<8x288xbf16>
    %cst_97 = arith.constant dense<0.000000e+00> : vector<8x288xf32>
    %124 = tpu.matmul %122, %123, %cst_97 {dimension_numbers = #tpu.dot_dimension_numbers<[1], [0], [0], [1], [0, 0, 1, 1], [], []>} : vector<8x8xbf16>, vector<8x288xbf16>, vector<8x288xf32> -> vector<8x288xf32>
    %125 = arith.addf %120, %124 : vector<8x288xf32>
    %c6_98 = arith.constant 6 : index
    %c0_99 = arith.constant 0 : index
    %c0_100 = arith.constant 0 : index
    %126 = vector.load %arg5[%c6_98, %c0_99, %c0_100] : memref<9x8x8xbf16, #tpu.memory_space<vmem>>, vector<1x8x8xbf16>
    %127 = vector.shape_cast %126 : vector<1x8x8xbf16> to vector<8x8xbf16>
    %c0_101 = arith.constant 0 : index
    %c145_102 = arith.constant 145 : index
    %128 = vector.load %arg13[%c0_101, %c145_102] : memref<8x512xbf16, #tpu.memory_space<vmem>>, vector<8x288xbf16>
    %cst_103 = arith.constant dense<0.000000e+00> : vector<8x288xf32>
    %129 = tpu.matmul %127, %128, %cst_103 {dimension_numbers = #tpu.dot_dimension_numbers<[1], [0], [0], [1], [0, 0, 1, 1], [], []>} : vector<8x8xbf16>, vector<8x288xbf16>, vector<8x288xf32> -> vector<8x288xf32>
    %130 = arith.addf %125, %129 : vector<8x288xf32>
    %c7_104 = arith.constant 7 : index
    %c0_105 = arith.constant 0 : index
    %c0_106 = arith.constant 0 : index
    %131 = vector.load %arg5[%c7_104, %c0_105, %c0_106] : memref<9x8x8xbf16, #tpu.memory_space<vmem>>, vector<1x8x8xbf16>
    %132 = vector.shape_cast %131 : vector<1x8x8xbf16> to vector<8x8xbf16>
    %c0_107 = arith.constant 0 : index
    %c146_108 = arith.constant 146 : index
    %133 = vector.load %arg13[%c0_107, %c146_108] : memref<8x512xbf16, #tpu.memory_space<vmem>>, vector<8x288xbf16>
    %cst_109 = arith.constant dense<0.000000e+00> : vector<8x288xf32>
    %134 = tpu.matmul %132, %133, %cst_109 {dimension_numbers = #tpu.dot_dimension_numbers<[1], [0], [0], [1], [0, 0, 1, 1], [], []>} : vector<8x8xbf16>, vector<8x288xbf16>, vector<8x288xf32> -> vector<8x288xf32>
    %135 = arith.addf %130, %134 : vector<8x288xf32>
    %c8_110 = arith.constant 8 : index
    %c0_111 = arith.constant 0 : index
    %c0_112 = arith.constant 0 : index
    %136 = vector.load %arg5[%c8_110, %c0_111, %c0_112] : memref<9x8x8xbf16, #tpu.memory_space<vmem>>, vector<1x8x8xbf16>
    %137 = vector.shape_cast %136 : vector<1x8x8xbf16> to vector<8x8xbf16>
    %c0_113 = arith.constant 0 : index
    %c147_114 = arith.constant 147 : index
    %138 = vector.load %arg13[%c0_113, %c147_114] : memref<8x512xbf16, #tpu.memory_space<vmem>>, vector<8x288xbf16>
    %cst_115 = arith.constant dense<0.000000e+00> : vector<8x288xf32>
    %139 = tpu.matmul %137, %138, %cst_115 {dimension_numbers = #tpu.dot_dimension_numbers<[1], [0], [0], [1], [0, 0, 1, 1], [], []>} : vector<8x8xbf16>, vector<8x288xbf16>, vector<8x288xf32> -> vector<8x288xf32>
    %140 = arith.addf %135, %139 : vector<8x288xf32>
    %cst_116 = arith.constant 0.000000e+00 : bf16
    %141 = vector.broadcast %cst_116 : bf16 to vector<8x512xbf16>
    %c0_117 = arith.constant 0 : index
    %c0_118 = arith.constant 0 : index
    %c0_119 = arith.constant 0 : index
    %c0_120 = arith.constant 0 : index
    %142 = vector.load %arg10[%c0_117, %c0_118, %c0_119, %c0_120] : memref<1x1x8x512xbf16, #tpu.memory_space<vmem>>, vector<1x1x8x512xbf16>
    %143 = vector.shape_cast %142 : vector<1x1x8x512xbf16> to vector<8x512xbf16>
    %144 = vector.shape_cast %141 : vector<8x512xbf16> to vector<1x1x8x512xbf16>
    tpu.vector_store %arg10[%c0_117, %c0_118, %c0_119, %c0_120], %144 {strides = array<i32>} : memref<1x1x8x512xbf16, #tpu.memory_space<vmem>>, vector<1x1x8x512xbf16>,
    %145 = arith.truncf %140 : vector<8x288xf32> to vector<8x288xbf16>
    %c0_121 = arith.constant 0 : index
    %c0_122 = arith.constant 0 : index
    %c0_123 = arith.constant 0 : index
    %c128_124 = arith.constant 128 : index
    %146 = vector.load %arg10[%c0_121, %c0_122, %c0_123, %c128_124] : memref<1x1x8x512xbf16, #tpu.memory_space<vmem>>, vector<1x1x8x288xbf16>
    %147 = vector.shape_cast %146 : vector<1x1x8x288xbf16> to vector<8x288xbf16>
    %148 = vector.shape_cast %145 : vector<8x288xbf16> to vector<1x1x8x288xbf16>
    tpu.vector_store %arg10[%c0_121, %c0_122, %c0_123, %c128_124], %148 {strides = array<i32>} : memref<1x1x8x512xbf16, #tpu.memory_space<vmem>>, vector<1x1x8x288xbf16>,
    %149 = vector.broadcast %1 : vector<1x288xf32> to vector<8x288xf32>
    %150 = arith.mulf %140, %149 : vector<8x288xf32>
    %cst_125 = arith.constant dense<0.000000e+00> : vector<8xf32>
    %151 = vector.multi_reduction <add>, %150, %cst_125 [1] : vector<8x288xf32> to vector<8xf32>
    %152 = vector.shape_cast %151 : vector<8xf32> to vector<8x1xf32>
    %153 = arith.mulf %150, %140 : vector<8x288xf32>
    %cst_126 = arith.constant dense<0.000000e+00> : vector<8xf32>
    %154 = vector.multi_reduction <add>, %153, %cst_126 [1] : vector<8x288xf32> to vector<8xf32>
    %155 = vector.shape_cast %154 : vector<8xf32> to vector<8x1xf32>
    %156 = tpu.concatenate %152, %155 in 1 : vector<8x1xf32>, vector<8x1xf32> -> vector<8x2xf32>
    %c0_127 = arith.constant 0 : index
    %c0_128 = arith.constant 0 : index
    %c0_129 = arith.constant 0 : index
    %c0_130 = arith.constant 0 : index
    %157 = vector.load %arg11[%c0_127, %c0_128, %c0_129, %c0_130] : memref<1x1x8x2xf32, #tpu.memory_space<vmem>>, vector<1x1x8x2xf32>
    %158 = vector.shape_cast %157 : vector<1x1x8x2xf32> to vector<8x2xf32>
    %159 = vector.shape_cast %156 : vector<8x2xf32> to vector<1x1x8x2xf32>
    tpu.vector_store %arg11[%c0_127, %c0_128, %c0_129, %c0_130], %159 {strides = array<i32>} : memref<1x1x8x2xf32, #tpu.memory_space<vmem>>, vector<1x1x8x2xf32>,
    return
  }
  func.func @transform_0(%arg0: i32, %arg1: i32) -> (i32, i32, i32, i32) {
    %c0_i32 = arith.constant 0 : i32
    %c0_i32_0 = arith.constant 0 : i32
    %c0_i32_1 = arith.constant 0 : i32
    return %arg0, %arg1, %c0_i32, %c0_i32_0 : i32, i32, i32, i32
  }
  func.func @transform_1(%arg0: i32, %arg1: i32) -> (i32, i32, i32, i32) {
    %c0_i32 = arith.constant 0 : i32
    %c0_i32_0 = arith.constant 0 : i32
    %c0_i32_1 = arith.constant 0 : i32
    return %arg0, %arg1, %c0_i32, %c0_i32_0 : i32, i32, i32, i32
  }
  func.func @transform_2(%arg0: i32, %arg1: i32) -> (i32, i32, i32) {
    %c0_i32 = arith.constant 0 : i32
    %c0_i32_0 = arith.constant 0 : i32
    %c0_i32_1 = arith.constant 0 : i32
    %c0_i32_2 = arith.constant 0 : i32
    return %c0_i32, %c0_i32_0, %c0_i32_1 : i32, i32, i32
  }
  func.func @transform_3(%arg0: i32, %arg1: i32) -> (i32, i32, i32) {
    %c0_i32 = arith.constant 0 : i32
    %c0_i32_0 = arith.constant 0 : i32
    %c0_i32_1 = arith.constant 0 : i32
    %c0_i32_2 = arith.constant 0 : i32
    return %c0_i32, %c0_i32_0, %c0_i32_1 : i32, i32, i32
  }
  func.func @transform_4(%arg0: i32, %arg1: i32) -> (i32, i32) {
    %c0_i32 = arith.constant 0 : i32
    %c0_i32_0 = arith.constant 0 : i32
    %c0_i32_1 = arith.constant 0 : i32
    return %c0_i32, %c0_i32_0 : i32, i32
  }
  func.func @transform_5(%arg0: i32, %arg1: i32) -> (i32, i32) {
    %c0_i32 = arith.constant 0 : i32
    %c0_i32_0 = arith.constant 0 : i32
    %c0_i32_1 = arith.constant 0 : i32
    return %c0_i32, %c0_i32_0 : i32, i32
  }
  func.func @transform_6(%arg0: i32, %arg1: i32) -> (i32, i32) {
    %c0_i32 = arith.constant 0 : i32
    %c0_i32_0 = arith.constant 0 : i32
    return %arg1, %c0_i32 : i32, i32
  }
  func.func @transform_7(%arg0: i32, %arg1: i32) -> (i32, i32) {
    %c0_i32 = arith.constant 0 : i32
    %c0_i32_0 = arith.constant 0 : i32
    %c0_i32_1 = arith.constant 0 : i32
    return %c0_i32, %c0_i32_0 : i32, i32
  }
  func.func @transform_8(%arg0: i32, %arg1: i32) -> (i32, i32, i32, i32) {
    %c0_i32 = arith.constant 0 : i32
    %c0_i32_0 = arith.constant 0 : i32
    %c0_i32_1 = arith.constant 0 : i32
    return %arg0, %arg1, %c0_i32, %c0_i32_0 : i32, i32, i32, i32
  }
  func.func @transform_9(%arg0: i32, %arg1: i32) -> (i32, i32, i32, i32) {
    %c0_i32 = arith.constant 0 : i32
    %c0_i32_0 = arith.constant 0 : i32
    %c0_i32_1 = arith.constant 0 : i32
    return %arg0, %arg1, %c0_i32, %c0_i32_0 : i32, i32, i32, i32
  }
}

</mosaic_0001>

<llo_original>
// kernel: squeeze.13
$region0: #{squeeze.13}
  %s0 = inlined_call_operand.vmem [shape: bf16[2,1,8,324], index: 0, kind: input, shape index: {}]
  %s1 = inlined_call_operand.vmem [shape: bf16[2,8,18,18], index: 1, kind: output, shape index: {}]
  $region1: #{squeeze.13} parent=0
    #allocation0 [shape = 'u8[196608]{0}', space=vmem, size = 0x30000, scoped, tag = 'scoped mem for output reshape']
    #allocation1 [shape = 'u8[24576]{0}', space=vmem, size = 0x6000, scoped, tag = 'scoped mem for input reshape']
    %s3 = smul.u32 4, 2
    %s4 = sshllo.u32 0, %s3
    %s5 = smul.addr 4, 5
    %s6 = scalar_lea.vmem %s0, %s5
    %s7 = sshrl.u32 %s4, 1
    %s8 = sor.u32 %s4, %s7
    %s9 = sand.u32 %s8, 85
    %s10 = sshrl.u32 %s9, 1
    %s11 = sor.u32 %s9, %s10
    %s12 = sand.u32 51, %s11
    %s13 = sshrl.u32 %s12, 2
    %s14 = sor.u32 %s12, %s13
    %s15 = sand.u32 15, %s14
    %v16 = vld [vmem:[%s6] sm:%s15]
    %v17 = vunpack.c.l.bf16 %v16
    %v18 = vunpack.c.h.bf16 %v16
    %s19 = scalar_lea.vmem [#allocation1], 40
    %20 = vst [vmem:[%s19] sm:%s4] %v17
    %s21 = smul.addr 4, 4
    %s22 = scalar_lea.vmem %s0, %s21
    %s23 = sshrl.u32 %s4, 1
    %s24 = sor.u32 %s4, %s23
    %s25 = sand.u32 %s24, 85
    %s26 = sshrl.u32 %s25, 1
    %s27 = sor.u32 %s25, %s26
    %s28 = sand.u32 51, %s27
    %s29 = sshrl.u32 %s28, 2
    %s30 = sor.u32 %s28, %s29
    %s31 = sand.u32 15, %s30
    %v32 = vld [vmem:[%s22] sm:%s31]
    %v33 = vunpack.c.l.bf16 %v32
    %v34 = vunpack.c.h.bf16 %v32
    %s35 = scalar_lea.vmem [#allocation1], 32
    %36 = vst [vmem:[%s35] sm:%s4] %v33
    %s37 = smul.addr 4, 3
    %s38 = scalar_lea.vmem %s0, %s37
    %s39 = sshrl.u32 %s4, 1
    %s40 = sor.u32 %s4, %s39
    %s41 = sand.u32 %s40, 85
    %s42 = sshrl.u32 %s41, 1
    %s43 = sor.u32 %s41, %s42
    %s44 = sand.u32 51, %s43
    %s45 = sshrl.u32 %s44, 2
    %s46 = sor.u32 %s44, %s45
    %s47 = sand.u32 15, %s46
    %v48 = vld [vmem:[%s38] sm:%s47]
    %v49 = vunpack.c.l.bf16 %v48
    %v50 = vunpack.c.h.bf16 %v48
    %s51 = scalar_lea.vmem [#allocation1], 24
    %52 = vst [vmem:[%s51] sm:%s4] %v49
    %s53 = smul.addr 4, 2
    %s54 = scalar_lea.vmem %s0, %s53
    %s55 = sshrl.u32 %s4, 1
    %s56 = sor.u32 %s4, %s55
    %s57 = sand.u32 %s56, 85
    %s58 = sshrl.u32 %s57, 1
    %s59 = sor.u32 %s57, %s58
    %s60 = sand.u32 51, %s59
    %s61 = sshrl.u32 %s60, 2
    %s62 = sor.u32 %s60, %s61
    %s63 = sand.u32 15, %s62
    %v64 = vld [vmem:[%s54] sm:%s63]
    %v65 = vunpack.c.l.bf16 %v64
    %v66 = vunpack.c.h.bf16 %v64
    %s67 = scalar_lea.vmem [#allocation1], 16
    %68 = vst [vmem:[%s67] sm:%s4] %v65
    %s69 = scalar_lea.vmem %s0, 4
    %s70 = sshrl.u32 %s4, 1
    %s71 = sor.u32 %s4, %s70
    %s72 = sand.u32 %s71, 85
    %s73 = sshrl.u32 %s72, 1
    %s74 = sor.u32 %s72, %s73
    %s75 = sand.u32 51, %s74
    %s76 = sshrl.u32 %s75, 2
    %s77 = sor.u32 %s75, %s76
    %s78 = sand.u32 15, %s77
    %v79 = vld [vmem:[%s69] sm:%s78]
    %v80 = vunpack.c.l.bf16 %v79
    %v81 = vunpack.c.h.bf16 %v79
    %s82 = scalar_lea.vmem [#allocation1], 8
    %83 = vst [vmem:[%s82] sm:%s4] %v80
    %s84 = sshrl.u32 %s4, 1
    %s85 = sor.u32 %s4, %s84
    %s86 = sand.u32 %s85, 85
    %s87 = sshrl.u32 %s86, 1
    %s88 = sor.u32 %s86, %s87
    %s89 = sand.u32 51, %s88
    %s90 = sshrl.u32 %s89, 2
    %s91 = sor.u32 %s89, %s90
    %s92 = sand.u32 15, %s91
    %v93 = vld [vmem:[%s0] sm:%s92]
    %v94 = vunpack.c.l.bf16 %v93
    %v95 = vunpack.c.h.bf16 %v93
    %96 = vst [vmem:[#allocation1] sm:%s4] %v94
    %v97 = vld [vmem:[#allocation1] sm:$0xff]
    %vm98 = vcmask 146432
    %99 = vst.msk [vmem:[#allocation0] ss:$24 sm:$0xf] %vm98, %v97
    %100 = vst.msk [vmem:[#allocation0] ss:$24 sm:$0xf0] %vm98, %v97
    %s101 = scalar_lea.vmem [#allocation1], 24
    %v102 = vld [vmem:[%s101] sm:$0xff]
    %vm103 = vcmask 146432
    %s104 = scalar_lea.vmem [#allocation0], 192
    %105 = vst.msk [vmem:[%s104] ss:$24 sm:$0xf] %vm103, %v102
    %s106 = scalar_lea.vmem [#allocation0], 192
    %107 = vst.msk [vmem:[%s106] ss:$24 sm:$0xf0] %vm103, %v102
    %s108 = scalar_lea.vmem [#allocation1], 16
    %v109 = vld.sshfl [vmem:[%s108] sm:$0xff pattern:$0x67452301]
    %110 = vrot.lane.b32.xlu0 %v109, 114
    %v111 = vpop.permute.xlu0 %110
    %vm112 = vcmask 146432
    %s113 = scalar_lea.vmem [#allocation0], 39
    %114 = vst.msk [vmem:[%s113] ss:$-24 sm:$0x3] %vm112, %v111
    %s115 = scalar_lea.vmem [#allocation0], 135
    %116 = vst.msk [vmem:[%s115] ss:$-24 sm:$0xc] %vm112, %v111
    %s117 = scalar_lea.vmem [#allocation0], 231
    %118 = vst.msk [vmem:[%s117] ss:$-24 sm:$0x30] %vm112, %v111
    %s119 = scalar_lea.vmem [#allocation0], 327
    %120 = vst.msk [vmem:[%s119] ss:$-24 sm:$0xc0] %vm112, %v111
    %s121 = scalar_lea.vmem [#allocation1], 40
    %v122 = vld.sshfl [vmem:[%s121] sm:$0xff pattern:$0x67452301]
    %123 = vrot.lane.b32.xlu0 %v122, 114
    %v124 = vpop.permute.xlu0 %123
    %vm125 = vcmask 146432
    %s126 = scalar_lea.vmem [#allocation0], 231
    %127 = vst.msk [vmem:[%s126] ss:$-24 sm:$0x3] %vm125, %v124
    %s128 = scalar_lea.vmem [#allocation0], 327
    %129 = vst.msk [vmem:[%s128] ss:$-24 sm:$0xc] %vm125, %v124
    %s130 = scalar_lea.vmem [#allocation0], 423
    %131 = vst.msk [vmem:[%s130] ss:$-24 sm:$0x30] %vm125, %v124
    %s132 = scalar_lea.vmem [#allocation0], 519
    %133 = vst.msk [vmem:[%s132] ss:$-24 sm:$0xc0] %vm125, %v124
    %s134 = scalar_lea.vmem [#allocation1], 8
    %v135 = vld.sshfl [vmem:[%s134] sm:$0xff pattern:$0x67452301]
    %136 = vrot.lane.b32.xlu0 %v135, 112
    %v137 = vpop.permute.xlu0 %136
    %vm138 = vcmask 146432
    %s139 = scalar_lea.vmem [#allocation0], 32
    %140 = vst.msk [vmem:[%s139] ss:$-24 sm:$0x3] %vm138, %v137
    %s141 = scalar_lea.vmem [#allocation0], 128
    %142 = vst.msk [vmem:[%s141] ss:$-24 sm:$0xc] %vm138, %v137
    %s143 = scalar_lea.vmem [#allocation0], 224
    %144 = vst.msk [vmem:[%s143] ss:$-24 sm:$0x30] %vm138, %v137
    %s145 = scalar_lea.vmem [#allocation0], 320
    %146 = vst.msk [vmem:[%s145] ss:$-24 sm:$0xc0] %vm138, %v137
    %s147 = scalar_lea.vmem [#allocation1], 32
    %v148 = vld.sshfl [vmem:[%s147] sm:$0xff pattern:$0x67452301]
    %149 = vrot.lane.b32.xlu0 %v148, 112
    %v150 = vpop.permute.xlu0 %149
    %vm151 = vcmask 146432
    %s152 = scalar_lea.vmem [#allocation0], 224
    %153 = vst.msk [vmem:[%s152] ss:$-24 sm:$0x3] %vm151, %v150
    %s154 = scalar_lea.vmem [#allocation0], 320
    %155 = vst.msk [vmem:[%s154] ss:$-24 sm:$0xc] %vm151, %v150
    %s156 = scalar_lea.vmem [#allocation0], 416
    %157 = vst.msk [vmem:[%s156] ss:$-24 sm:$0x30] %vm151, %v150
    %s158 = scalar_lea.vmem [#allocation0], 512
    %159 = vst.msk [vmem:[%s158] ss:$-24 sm:$0xc0] %vm151, %v150
    %v160 = vld.sshfl [vmem:[#allocation1] sm:$0xff pattern:$0x56741230]
    %161 = vrot.lane.b32.xlu0 %v160, 110
    %v162 = vpop.permute.xlu0 %161
    %vm163 = vcmask 146432
    %s164 = scalar_lea.vmem [#allocation0], 1
    %165 = vst.msk [vmem:[%s164] ss:$72 sm:$0x3] %vm163, %v162
    %s166 = scalar_lea.vmem [#allocation0], 97
    %167 = vst.msk [vmem:[%s166] ss:$-24 sm:$0xc] %vm163, %v162
    %s168 = scalar_lea.vmem [#allocation0], 4294967105
    %169 = vst.msk [vmem:[%s168] ss:$72 sm:$0x30] %vm163, %v162
    %s170 = scalar_lea.vmem [#allocation0], 289
    %171 = vst.msk [vmem:[%s170] ss:$-24 sm:$0xc0] %vm163, %v162
    %s172 = scalar_lea.vmem [#allocation1], 24
    %v173 = vld.sshfl [vmem:[%s172] sm:$0xff pattern:$0x56741230]
    %174 = vrot.lane.b32.xlu0 %v173, 110
    %v175 = vpop.permute.xlu0 %174
    %vm176 = vcmask 146432
    %s177 = scalar_lea.vmem [#allocation0], 193
    %178 = vst.msk [vmem:[%s177] ss:$72 sm:$0x3] %vm176, %v175
    %s179 = scalar_lea.vmem [#allocation0], 289
    %180 = vst.msk [vmem:[%s179] ss:$-24 sm:$0xc] %vm176, %v175
    %s181 = scalar_lea.vmem [#allocation0], 1
    %182 = vst.msk [vmem:[%s181] ss:$72 sm:$0x30] %vm176, %v175
    %s183 = scalar_lea.vmem [#allocation0], 481
    %184 = vst.msk [vmem:[%s183] ss:$-24 sm:$0xc0] %vm176, %v175
    %s185 = scalar_lea.vmem [#allocation1], 16
    %v186 = vld.sshfl [vmem:[%s185] sm:$0xff pattern:$0x74563012]
    %187 = vrot.lane.b32.xlu0 %v186, 96
    %v188 = vpop.permute.xlu0 %187
    %vm189 = vcmask 146432
    %s190 = scalar_lea.vmem [#allocation0], 64
    %191 = vst.msk [vmem:[%s190] ss:$-24 sm:$0x7] %vm189, %v188
    %s192 = scalar_lea.vmem [#allocation0], 4294967168
    %193 = vst.msk [vmem:[%s192] ss:$72 sm:$0x18] %vm189, %v188
    %s194 = scalar_lea.vmem [#allocation0], 256
    %195 = vst.msk [vmem:[%s194] ss:$-24 sm:$0x60] %vm189, %v188
    %s196 = scalar_lea.vmem [#allocation0], 177
    %197 = vst.msk [vmem:[%s196] sm:$0x80] %vm189, %v188
    %s198 = scalar_lea.vmem [#allocation1], 40
    %v199 = vld.sshfl [vmem:[%s198] sm:$0xff pattern:$0x74563012]
    %200 = vrot.lane.b32.xlu0 %v199, 96
    %v201 = vpop.permute.xlu0 %200
    %vm202 = vcmask 146432
    %s203 = scalar_lea.vmem [#allocation0], 256
    %204 = vst.msk [vmem:[%s203] ss:$-24 sm:$0x7] %vm202, %v201
    %s205 = scalar_lea.vmem [#allocation0], 64
    %206 = vst.msk [vmem:[%s205] ss:$72 sm:$0x18] %vm202, %v201
    %s207 = scalar_lea.vmem [#allocation0], 448
    %208 = vst.msk [vmem:[%s207] ss:$-24 sm:$0x60] %vm202, %v201
    %s209 = scalar_lea.vmem [#allocation0], 369
    %210 = vst.msk [vmem:[%s209] sm:$0x80] %vm202, %v201
    %s211 = scalar_lea.vmem [#allocation1], 8
    %v212 = vld.sshfl [vmem:[%s211] sm:$0xff pattern:$0x67452301]
    %213 = vrot.lane.b32.xlu0 %v212, 94
    %v214 = vpop.permute.xlu0 %213
    %vm215 = vcmask 146432
    %s216 = scalar_lea.vmem [#allocation0], 33
    %217 = vst.msk [vmem:[%s216] ss:$-24 sm:$0x3] %vm215, %v214
    %s218 = scalar_lea.vmem [#allocation0], 129
    %219 = vst.msk [vmem:[%s218] ss:$-24 sm:$0xc] %vm215, %v214
    %s220 = scalar_lea.vmem [#allocation0], 225
    %221 = vst.msk [vmem:[%s220] ss:$-24 sm:$0x30] %vm215, %v214
    %s222 = scalar_lea.vmem [#allocation0], 321
    %223 = vst.msk [vmem:[%s222] ss:$-24 sm:$0xc0] %vm215, %v214
    %s224 = scalar_lea.vmem [#allocation1], 32
    %v225 = vld.sshfl [vmem:[%s224] sm:$0xff pattern:$0x67452301]
    %226 = vrot.lane.b32.xlu0 %v225, 94
    %v227 = vpop.permute.xlu0 %226
    %vm228 = vcmask 146432
    %s229 = scalar_lea.vmem [#allocation0], 225
    %230 = vst.msk [vmem:[%s229] ss:$-24 sm:$0x3] %vm228, %v227
    %s231 = scalar_lea.vmem [#allocation0], 321
    %232 = vst.msk [vmem:[%s231] ss:$-24 sm:$0xc] %vm228, %v227
    %s233 = scalar_lea.vmem [#allocation0], 417
    %234 = vst.msk [vmem:[%s233] ss:$-24 sm:$0x30] %vm228, %v227
    %s235 = scalar_lea.vmem [#allocation0], 513
    %236 = vst.msk [vmem:[%s235] ss:$-24 sm:$0xc0] %vm228, %v227
    %v237 = vld.sshfl [vmem:[#allocation1] sm:$0xff pattern:$0x56741230]
    %238 = vrot.lane.b32.xlu0 %v237, 92
    %v239 = vpop.permute.xlu0 %238
    %vm240 = vcmask 146432
    %s241 = scalar_lea.vmem [#allocation0], 2
    %242 = vst.msk [vmem:[%s241] ss:$72 sm:$0x3] %vm240, %v239
    %s243 = scalar_lea.vmem [#allocation0], 98
    %244 = vst.msk [vmem:[%s243] ss:$-24 sm:$0xc] %vm240, %v239
    %s245 = scalar_lea.vmem [#allocation0], 4294967106
    %246 = vst.msk [vmem:[%s245] ss:$72 sm:$0x30] %vm240, %v239
    %s247 = scalar_lea.vmem [#allocation0], 290
    %248 = vst.msk [vmem:[%s247] ss:$-24 sm:$0xc0] %vm240, %v239
    %s249 = scalar_lea.vmem [#allocation1], 24
    %v250 = vld.sshfl [vmem:[%s249] sm:$0xff pattern:$0x56741230]
    %251 = vrot.lane.b32.xlu0 %v250, 92
    %v252 = vpop.permute.xlu0 %251
    %vm253 = vcmask 146432
    %s254 = scalar_lea.vmem [#allocation0], 194
    %255 = vst.msk [vmem:[%s254] ss:$72 sm:$0x3] %vm253, %v252
    %s256 = scalar_lea.vmem [#allocation0], 290
    %257 = vst.msk [vmem:[%s256] ss:$-24 sm:$0xc] %vm253, %v252
    %s258 = scalar_lea.vmem [#allocation0], 2
    %259 = vst.msk [vmem:[%s258] ss:$72 sm:$0x30] %vm253, %v252
    %s260 = scalar_lea.vmem [#allocation0], 482
    %261 = vst.msk [vmem:[%s260] ss:$-24 sm:$0xc0] %vm253, %v252
    %s262 = scalar_lea.vmem [#allocation1], 16
    %v263 = vld.sshfl [vmem:[%s262] sm:$0xff pattern:$0x74563012]
    %264 = vrot.lane.b32.xlu0 %v263, 78
    %v265 = vpop.permute.xlu0 %264
    %vm266 = vcmask 146432
    %s267 = scalar_lea.vmem [#allocation0], 65
    %268 = vst.msk [vmem:[%s267] ss:$-24 sm:$0x7] %vm266, %v265
    %s269 = scalar_lea.vmem [#allocation0], 4294967169
    %270 = vst.msk [vmem:[%s269] ss:$72 sm:$0x18] %vm266, %v265
    %s271 = scalar_lea.vmem [#allocation0], 257
    %272 = vst.msk [vmem:[%s271] ss:$-24 sm:$0x60] %vm266, %v265
    %s273 = scalar_lea.vmem [#allocation0], 178
    %274 = vst.msk [vmem:[%s273] sm:$0x80] %vm266, %v265
    %s275 = scalar_lea.vmem [#allocation1], 40
    %v276 = vld.sshfl [vmem:[%s275] sm:$0xff pattern:$0x74563012]
    %277 = vrot.lane.b32.xlu0 %v276, 78
    %v278 = vpop.permute.xlu0 %277
    %vm279 = vcmask 146432
    %s280 = scalar_lea.vmem [#allocation0], 257
    %281 = vst.msk [vmem:[%s280] ss:$-24 sm:$0x7] %vm279, %v278
    %s282 = scalar_lea.vmem [#allocation0], 65
    %283 = vst.msk [vmem:[%s282] ss:$72 sm:$0x18] %vm279, %v278
    %s284 = scalar_lea.vmem [#allocation0], 449
    %285 = vst.msk [vmem:[%s284] ss:$-24 sm:$0x60] %vm279, %v278
    %s286 = scalar_lea.vmem [#allocation0], 370
    %287 = vst.msk [vmem:[%s286] sm:$0x80] %vm279, %v278
    %s288 = scalar_lea.vmem [#allocation1], 8
    %v289 = vld.sshfl [vmem:[%s288] sm:$0xff pattern:$0x67452301]
    %290 = vrot.lane.b32.xlu0 %v289, 76
    %v291 = vpop.permute.xlu0 %290
    %vm292 = vcmask 146432
    %s293 = scalar_lea.vmem [#allocation0], 34
    %294 = vst.msk [vmem:[%s293] ss:$-24 sm:$0x3] %vm292, %v291
    %s295 = scalar_lea.vmem [#allocation0], 130
    %296 = vst.msk [vmem:[%s295] ss:$-24 sm:$0xc] %vm292, %v291
    %s297 = scalar_lea.vmem [#allocation0], 226
    %298 = vst.msk [vmem:[%s297] ss:$-24 sm:$0x30] %vm292, %v291
    %s299 = scalar_lea.vmem [#allocation0], 322
    %300 = vst.msk [vmem:[%s299] ss:$-24 sm:$0xc0] %vm292, %v291
    %s301 = scalar_lea.vmem [#allocation1], 32
    %v302 = vld.sshfl [vmem:[%s301] sm:$0xff pattern:$0x67452301]
    %303 = vrot.lane.b32.xlu0 %v302, 76
    %v304 = vpop.permute.xlu0 %303
    %vm305 = vcmask 146432
    %s306 = scalar_lea.vmem [#allocation0], 226
    %307 = vst.msk [vmem:[%s306] ss:$-24 sm:$0x3] %vm305, %v304
    %s308 = scalar_lea.vmem [#allocation0], 322
    %309 = vst.msk [vmem:[%s308] ss:$-24 sm:$0xc] %vm305, %v304
    %s310 = scalar_lea.vmem [#allocation0], 418
    %311 = vst.msk [vmem:[%s310] ss:$-24 sm:$0x30] %vm305, %v304
    %s312 = scalar_lea.vmem [#allocation0], 514
    %313 = vst.msk [vmem:[%s312] ss:$-24 sm:$0xc0] %vm305, %v304
    %v314 = vld.sshfl [vmem:[#allocation1] sm:$0xff pattern:$0x56741230]
    %315 = vrot.lane.b32.xlu0 %v314, 74
    %v316 = vpop.permute.xlu0 %315
    %vm317 = vcmask 146432
    %s318 = scalar_lea.vmem [#allocation0], 3
    %319 = vst.msk [vmem:[%s318] ss:$72 sm:$0x3] %vm317, %v316
    %s320 = scalar_lea.vmem [#allocation0], 99
    %321 = vst.msk [vmem:[%s320] ss:$-24 sm:$0xc] %vm317, %v316
    %s322 = scalar_lea.vmem [#allocation0], 4294967107
    %323 = vst.msk [vmem:[%s322] ss:$72 sm:$0x30] %vm317, %v316
    %s324 = scalar_lea.vmem [#allocation0], 291
    %325 = vst.msk [vmem:[%s324] ss:$-24 sm:$0xc0] %vm317, %v316
    %s326 = scalar_lea.vmem [#allocation1], 24
    %v327 = vld.sshfl [vmem:[%s326] sm:$0xff pattern:$0x56741230]
    %328 = vrot.lane.b32.xlu0 %v327, 74
    %v329 = vpop.permute.xlu0 %328
    %vm330 = vcmask 146432
    %s331 = scalar_lea.vmem [#allocation0], 195
    %332 = vst.msk [vmem:[%s331] ss:$72 sm:$0x3] %vm330, %v329
    %s333 = scalar_lea.vmem [#allocation0], 291
    %334 = vst.msk [vmem:[%s333] ss:$-24 sm:$0xc] %vm330, %v329
    %s335 = scalar_lea.vmem [#allocation0], 3
    %336 = vst.msk [vmem:[%s335] ss:$72 sm:$0x30] %vm330, %v329
    %s337 = scalar_lea.vmem [#allocation0], 483
    %338 = vst.msk [vmem:[%s337] ss:$-24 sm:$0xc0] %vm330, %v329
    %s339 = scalar_lea.vmem [#allocation1], 8
    %v340 = vld.sshfl [vmem:[%s339] sm:$0xff pattern:$0x67452301]
    %341 = vrot.lane.b32.xlu0 %v340, 58
    %v342 = vpop.permute.xlu0 %341
    %vm343 = vcmask 146432
    %s344 = scalar_lea.vmem [#allocation0], 35
    %345 = vst.msk [vmem:[%s344] ss:$-24 sm:$0x3] %vm343, %v342
    %s346 = scalar_lea.vmem [#allocation0], 131
    %347 = vst.msk [vmem:[%s346] ss:$-24 sm:$0xc] %vm343, %v342
    %s348 = scalar_lea.vmem [#allocation0], 227
    %349 = vst.msk [vmem:[%s348] ss:$-24 sm:$0x30] %vm343, %v342
    %s350 = scalar_lea.vmem [#allocation0], 323
    %351 = vst.msk [vmem:[%s350] ss:$-24 sm:$0xc0] %vm343, %v342
    %s352 = scalar_lea.vmem [#allocation1], 32
    %v353 = vld.sshfl [vmem:[%s352] sm:$0xff pattern:$0x67452301]
    %354 = vrot.lane.b32.xlu0 %v353, 58
    %v355 = vpop.permute.xlu0 %354
    %vm356 = vcmask 146432
    %s357 = scalar_lea.vmem [#allocation0], 227
    %358 = vst.msk [vmem:[%s357] ss:$-24 sm:$0x3] %vm356, %v355
    %s359 = scalar_lea.vmem [#allocation0], 323
    %360 = vst.msk [vmem:[%s359] ss:$-24 sm:$0xc] %vm356, %v355
    %s361 = scalar_lea.vmem [#allocation0], 419
    %362 = vst.msk [vmem:[%s361] ss:$-24 sm:$0x30] %vm356, %v355
    %s363 = scalar_lea.vmem [#allocation0], 515
    %364 = vst.msk [vmem:[%s363] ss:$-24 sm:$0xc0] %vm356, %v355
    %v365 = vld.sshfl [vmem:[#allocation1] sm:$0xff pattern:$0x56741230]
    %366 = vrot.lane.b32.xlu0 %v365, 56
    %v367 = vpop.permute.xlu0 %366
    %vm368 = vcmask 146432
    %s369 = scalar_lea.vmem [#allocation0], 4
    %370 = vst.msk [vmem:[%s369] ss:$72 sm:$0x3] %vm368, %v367
    %s371 = scalar_lea.vmem [#allocation0], 100
    %372 = vst.msk [vmem:[%s371] ss:$-24 sm:$0xc] %vm368, %v367
    %s373 = scalar_lea.vmem [#allocation0], 4294967108
    %374 = vst.msk [vmem:[%s373] ss:$72 sm:$0x30] %vm368, %v367
    %s375 = scalar_lea.vmem [#allocation0], 292
    %376 = vst.msk [vmem:[%s375] ss:$-24 sm:$0xc0] %vm368, %v367
    %s377 = scalar_lea.vmem [#allocation1], 24
    %v378 = vld.sshfl [vmem:[%s377] sm:$0xff pattern:$0x56741230]
    %379 = vrot.lane.b32.xlu0 %v378, 56
    %v380 = vpop.permute.xlu0 %379
    %vm381 = vcmask 146432
    %s382 = scalar_lea.vmem [#allocation0], 196
    %383 = vst.msk [vmem:[%s382] ss:$72 sm:$0x3] %vm381, %v380
    %s384 = scalar_lea.vmem [#allocation0], 292
    %385 = vst.msk [vmem:[%s384] ss:$-24 sm:$0xc] %vm381, %v380
    %s386 = scalar_lea.vmem [#allocation0], 4
    %387 = vst.msk [vmem:[%s386] ss:$72 sm:$0x30] %vm381, %v380
    %s388 = scalar_lea.vmem [#allocation0], 484
    %389 = vst.msk [vmem:[%s388] ss:$-24 sm:$0xc0] %vm381, %v380
    %s390 = scalar_lea.vmem [#allocation1], 8
    %v391 = vld.sshfl [vmem:[%s390] sm:$0xff pattern:$0x67452301]
    %392 = vrot.lane.b32.xlu0 %v391, 40
    %v393 = vpop.permute.xlu0 %392
    %vm394 = vcmask 146432
    %s395 = scalar_lea.vmem [#allocation0], 36
    %396 = vst.msk [vmem:[%s395] ss:$-24 sm:$0x3] %vm394, %v393
    %s397 = scalar_lea.vmem [#allocation0], 132
    %398 = vst.msk [vmem:[%s397] ss:$-24 sm:$0xc] %vm394, %v393
    %s399 = scalar_lea.vmem [#allocation0], 228
    %400 = vst.msk [vmem:[%s399] ss:$-24 sm:$0x30] %vm394, %v393
    %s401 = scalar_lea.vmem [#allocation0], 324
    %402 = vst.msk [vmem:[%s401] ss:$-24 sm:$0xc0] %vm394, %v393
    %s403 = scalar_lea.vmem [#allocation1], 32
    %v404 = vld.sshfl [vmem:[%s403] sm:$0xff pattern:$0x67452301]
    %405 = vrot.lane.b32.xlu0 %v404, 40
    %v406 = vpop.permute.xlu0 %405
    %vm407 = vcmask 146432
    %s408 = scalar_lea.vmem [#allocation0], 228
    %409 = vst.msk [vmem:[%s408] ss:$-24 sm:$0x3] %vm407, %v406
    %s410 = scalar_lea.vmem [#allocation0], 324
    %411 = vst.msk [vmem:[%s410] ss:$-24 sm:$0xc] %vm407, %v406
    %s412 = scalar_lea.vmem [#allocation0], 420
    %413 = vst.msk [vmem:[%s412] ss:$-24 sm:$0x30] %vm407, %v406
    %s414 = scalar_lea.vmem [#allocation0], 516
    %415 = vst.msk [vmem:[%s414] ss:$-24 sm:$0xc0] %vm407, %v406
    %v416 = vld.sshfl [vmem:[#allocation1] sm:$0xff pattern:$0x56741230]
    %417 = vrot.lane.b32.xlu0 %v416, 38
    %v418 = vpop.permute.xlu0 %417
    %vm419 = vcmask 146432
    %s420 = scalar_lea.vmem [#allocation0], 5
    %421 = vst.msk [vmem:[%s420] ss:$72 sm:$0x3] %vm419, %v418
    %s422 = scalar_lea.vmem [#allocation0], 101
    %423 = vst.msk [vmem:[%s422] ss:$-24 sm:$0xc] %vm419, %v418
    %s424 = scalar_lea.vmem [#allocation0], 4294967109
    %425 = vst.msk [vmem:[%s424] ss:$72 sm:$0x30] %vm419, %v418
    %s426 = scalar_lea.vmem [#allocation0], 293
    %427 = vst.msk [vmem:[%s426] ss:$-24 sm:$0xc0] %vm419, %v418
    %s428 = scalar_lea.vmem [#allocation1], 24
    %v429 = vld.sshfl [vmem:[%s428] sm:$0xff pattern:$0x56741230]
    %430 = vrot.lane.b32.xlu0 %v429, 38
    %v431 = vpop.permute.xlu0 %430
    %vm432 = vcmask 146432
    %s433 = scalar_lea.vmem [#allocation0], 197
    %434 = vst.msk [vmem:[%s433] ss:$72 sm:$0x3] %vm432, %v431
    %s435 = scalar_lea.vmem [#allocation0], 293
    %436 = vst.msk [vmem:[%s435] ss:$-24 sm:$0xc] %vm432, %v431
    %s437 = scalar_lea.vmem [#allocation0], 5
    %438 = vst.msk [vmem:[%s437] ss:$72 sm:$0x30] %vm432, %v431
    %s439 = scalar_lea.vmem [#allocation0], 485
    %440 = vst.msk [vmem:[%s439] ss:$-24 sm:$0xc0] %vm432, %v431
    %s441 = scalar_lea.vmem [#allocation1], 8
    %v442 = vld.sshfl [vmem:[%s441] sm:$0xff pattern:$0x67452301]
    %443 = vrot.lane.b32.xlu0 %v442, 22
    %v444 = vpop.permute.xlu0 %443
    %vm445 = vcmask 146432
    %s446 = scalar_lea.vmem [#allocation0], 37
    %447 = vst.msk [vmem:[%s446] ss:$-24 sm:$0x3] %vm445, %v444
    %s448 = scalar_lea.vmem [#allocation0], 133
    %449 = vst.msk [vmem:[%s448] ss:$-24 sm:$0xc] %vm445, %v444
    %s450 = scalar_lea.vmem [#allocation0], 229
    %451 = vst.msk [vmem:[%s450] ss:$-24 sm:$0x30] %vm445, %v444
    %s452 = scalar_lea.vmem [#allocation0], 325
    %453 = vst.msk [vmem:[%s452] ss:$-24 sm:$0xc0] %vm445, %v444
    %s454 = scalar_lea.vmem [#allocation1], 32
    %v455 = vld.sshfl [vmem:[%s454] sm:$0xff pattern:$0x67452301]
    %456 = vrot.lane.b32.xlu0 %v455, 22
    %v457 = vpop.permute.xlu0 %456
    %vm458 = vcmask 146432
    %s459 = scalar_lea.vmem [#allocation0], 229
    %460 = vst.msk [vmem:[%s459] ss:$-24 sm:$0x3] %vm458, %v457
    %s461 = scalar_lea.vmem [#allocation0], 325
    %462 = vst.msk [vmem:[%s461] ss:$-24 sm:$0xc] %vm458, %v457
    %s463 = scalar_lea.vmem [#allocation0], 421
    %464 = vst.msk [vmem:[%s463] ss:$-24 sm:$0x30] %vm458, %v457
    %s465 = scalar_lea.vmem [#allocation0], 517
    %466 = vst.msk [vmem:[%s465] ss:$-24 sm:$0xc0] %vm458, %v457
    %v467 = vld.sshfl [vmem:[#allocation1] sm:$0xff pattern:$0x56741230]
    %468 = vrot.lane.b32.xlu0 %v467, 20
    %v469 = vpop.permute.xlu0 %468
    %vm470 = vcmask 146432
    %s471 = scalar_lea.vmem [#allocation0], 6
    %472 = vst.msk [vmem:[%s471] ss:$72 sm:$0x3] %vm470, %v469
    %s473 = scalar_lea.vmem [#allocation0], 102
    %474 = vst.msk [vmem:[%s473] ss:$-24 sm:$0xc] %vm470, %v469
    %s475 = scalar_lea.vmem [#allocation0], 4294967110
    %476 = vst.msk [vmem:[%s475] ss:$72 sm:$0x30] %vm470, %v469
    %s477 = scalar_lea.vmem [#allocation0], 294
    %478 = vst.msk [vmem:[%s477] ss:$-24 sm:$0xc0] %vm470, %v469
    %s479 = scalar_lea.vmem [#allocation1], 24
    %v480 = vld.sshfl [vmem:[%s479] sm:$0xff pattern:$0x56741230]
    %481 = vrot.lane.b32.xlu0 %v480, 20
    %v482 = vpop.permute.xlu0 %481
    %vm483 = vcmask 146432
    %s484 = scalar_lea.vmem [#allocation0], 198
    %485 = vst.msk [vmem:[%s484] ss:$72 sm:$0x3] %vm483, %v482
    %s486 = scalar_lea.vmem [#allocation0], 294
    %487 = vst.msk [vmem:[%s486] ss:$-24 sm:$0xc] %vm483, %v482
    %s488 = scalar_lea.vmem [#allocation0], 6
    %489 = vst.msk [vmem:[%s488] ss:$72 sm:$0x30] %vm483, %v482
    %s490 = scalar_lea.vmem [#allocation0], 486
    %491 = vst.msk [vmem:[%s490] ss:$-24 sm:$0xc0] %vm483, %v482
    %s492 = scalar_lea.vmem [#allocation1], 8
    %v493 = vld.sshfl [vmem:[%s492] sm:$0xff pattern:$0x67452301]
    %s494 = scalar_lea.vmem [#allocation1], 16
    %v495 = vld.sshfl [vmem:[%s494] sm:$0xff pattern:$0x67452301]
    %vm496 = vcmask 1014784
    %v497 = vsel %vm496, %v495, %v493
    %498 = vrot.lane.b32.xlu0 %v497, 4
    %v499 = vpop.permute.xlu0 %498
    %vm500 = vcmask 31744
    %s501 = scalar_lea.vmem [#allocation0], 38
    %502 = vst.msk [vmem:[%s501] ss:$-24 sm:$0x3] %vm500, %v499
    %s503 = scalar_lea.vmem [#allocation0], 134
    %504 = vst.msk [vmem:[%s503] ss:$-24 sm:$0xc] %vm500, %v499
    %s505 = scalar_lea.vmem [#allocation0], 230
    %506 = vst.msk [vmem:[%s505] ss:$-24 sm:$0x30] %vm500, %v499
    %s507 = scalar_lea.vmem [#allocation0], 326
    %508 = vst.msk [vmem:[%s507] ss:$-24 sm:$0xc0] %vm500, %v499
    %vm509 = vcmask 146464
    %s510 = scalar_lea.vmem [#allocation0], 38
    %511 = vst.msk [vmem:[%s510] ss:$-24 sm:$0x3] %vm509, %v499
    %s512 = scalar_lea.vmem [#allocation0], 134
    %513 = vst.msk [vmem:[%s512] ss:$-24 sm:$0xc] %vm509, %v499
    %s514 = scalar_lea.vmem [#allocation0], 230
    %515 = vst.msk [vmem:[%s514] ss:$-24 sm:$0x30] %vm509, %v499
    %s516 = scalar_lea.vmem [#allocation0], 326
    %517 = vst.msk [vmem:[%s516] ss:$-24 sm:$0xc0] %vm509, %v499
    %s518 = scalar_lea.vmem [#allocation1], 32
    %v519 = vld.sshfl [vmem:[%s518] sm:$0xff pattern:$0x67452301]
    %s520 = scalar_lea.vmem [#allocation1], 40
    %v521 = vld.sshfl [vmem:[%s520] sm:$0xff pattern:$0x67452301]
    %vm522 = vcmask 1014784
    %v523 = vsel %vm522, %v521, %v519
    %524 = vrot.lane.b32.xlu0 %v523, 4
    %v525 = vpop.permute.xlu0 %524
    %vm526 = vcmask 31744
    %s527 = scalar_lea.vmem [#allocation0], 230
    %528 = vst.msk [vmem:[%s527] ss:$-24 sm:$0x3] %vm526, %v525
    %s529 = scalar_lea.vmem [#allocation0], 326
    %530 = vst.msk [vmem:[%s529] ss:$-24 sm:$0xc] %vm526, %v525
    %s531 = scalar_lea.vmem [#allocation0], 422
    %532 = vst.msk [vmem:[%s531] ss:$-24 sm:$0x30] %vm526, %v525
    %s533 = scalar_lea.vmem [#allocation0], 518
    %534 = vst.msk [vmem:[%s533] ss:$-24 sm:$0xc0] %vm526, %v525
    %vm535 = vcmask 146464
    %s536 = scalar_lea.vmem [#allocation0], 230
    %537 = vst.msk [vmem:[%s536] ss:$-24 sm:$0x3] %vm535, %v525
    %s538 = scalar_lea.vmem [#allocation0], 326
    %539 = vst.msk [vmem:[%s538] ss:$-24 sm:$0xc] %vm535, %v525
    %s540 = scalar_lea.vmem [#allocation0], 422
    %541 = vst.msk [vmem:[%s540] ss:$-24 sm:$0x30] %vm535, %v525
    %s542 = scalar_lea.vmem [#allocation0], 518
    %543 = vst.msk [vmem:[%s542] ss:$-24 sm:$0xc0] %vm535, %v525
    %v544 = vld.sshfl [vmem:[#allocation1] sm:$0xff pattern:$0x56741230]
    %s545 = scalar_lea.vmem [#allocation1], 8
    %v546 = vld.sshfl [vmem:[%s545] sm:$0xff pattern:$0x56741230]
    %vm547 = vcmask 1031168
    %v548 = vsel %vm547, %v546, %v544
    %549 = vrot.lane.b32.xlu0 %v548, 2
    %v550 = vpop.permute.xlu0 %549
    %vm551 = vcmask 15360
    %s552 = scalar_lea.vmem [#allocation0], 7
    %553 = vst.msk [vmem:[%s552] ss:$72 sm:$0x3] %vm551, %v550
    %s554 = scalar_lea.vmem [#allocation0], 103
    %555 = vst.msk [vmem:[%s554] ss:$-24 sm:$0xc] %vm551, %v550
    %s556 = scalar_lea.vmem [#allocation0], 4294967111
    %557 = vst.msk [vmem:[%s556] ss:$72 sm:$0x30] %vm551, %v550
    %s558 = scalar_lea.vmem [#allocation0], 295
    %559 = vst.msk [vmem:[%s558] ss:$-24 sm:$0xc0] %vm551, %v550
    %vm560 = vcmask 146448
    %s561 = scalar_lea.vmem [#allocation0], 7
    %562 = vst.msk [vmem:[%s561] ss:$72 sm:$0x3] %vm560, %v550
    %s563 = scalar_lea.vmem [#allocation0], 103
    %564 = vst.msk [vmem:[%s563] ss:$-24 sm:$0xc] %vm560, %v550
    %s565 = scalar_lea.vmem [#allocation0], 4294967111
    %566 = vst.msk [vmem:[%s565] ss:$72 sm:$0x30] %vm560, %v550
    %s567 = scalar_lea.vmem [#allocation0], 295
    %568 = vst.msk [vmem:[%s567] ss:$-24 sm:$0xc0] %vm560, %v550
    %s569 = scalar_lea.vmem [#allocation1], 24
    %v570 = vld.sshfl [vmem:[%s569] sm:$0xff pattern:$0x56741230]
    %s571 = scalar_lea.vmem [#allocation1], 32
    %v572 = vld.sshfl [vmem:[%s571] sm:$0xff pattern:$0x56741230]
    %vm573 = vcmask 1031168
    %v574 = vsel %vm573, %v572, %v570
    %575 = vrot.lane.b32.xlu0 %v574, 2
    %v576 = vpop.permute.xlu0 %575
    %vm577 = vcmask 15360
    %s578 = scalar_lea.vmem [#allocation0], 199
    %579 = vst.msk [vmem:[%s578] ss:$72 sm:$0x3] %vm577, %v576
    %s580 = scalar_lea.vmem [#allocation0], 295
    %581 = vst.msk [vmem:[%s580] ss:$-24 sm:$0xc] %vm577, %v576
    %s582 = scalar_lea.vmem [#allocation0], 7
    %583 = vst.msk [vmem:[%s582] ss:$72 sm:$0x30] %vm577, %v576
    %s584 = scalar_lea.vmem [#allocation0], 487
    %585 = vst.msk [vmem:[%s584] ss:$-24 sm:$0xc0] %vm577, %v576
    %vm586 = vcmask 146448
    %s587 = scalar_lea.vmem [#allocation0], 199
    %588 = vst.msk [vmem:[%s587] ss:$72 sm:$0x3] %vm586, %v576
    %s589 = scalar_lea.vmem [#allocation0], 295
    %590 = vst.msk [vmem:[%s589] ss:$-24 sm:$0xc] %vm586, %v576
    %s591 = scalar_lea.vmem [#allocation0], 7
    %592 = vst.msk [vmem:[%s591] ss:$72 sm:$0x30] %vm586, %v576
    %s593 = scalar_lea.vmem [#allocation0], 487
    %594 = vst.msk [vmem:[%s593] ss:$-24 sm:$0xc0] %vm586, %v576
    %s596 = smul.u32 4, 2
    %s597 = sshllo.u32 0, %s596
    %s598 = sshrl.u32 %s596, 1
    %v599 = vld [vmem:[#allocation0] sm:%s597]
    %v600 = vpack.c.bf16 0.0, %v599
    %s601 = sshllo.u32 0, %s598
    %602 = vst [vmem:[%s1] sm:%s601] %v600
    %s603 = scalar_lea.vmem [#allocation0], 8
    %v604 = vld [vmem:[%s603] sm:%s597]
    %v605 = vpack.c.bf16 0.0, %v604
    %s606 = sshllo.u32 0, %s598
    %s607 = scalar_lea.vmem %s1, 4
    %608 = vst [vmem:[%s607] sm:%s606] %v605
    %s609 = scalar_lea.vmem [#allocation0], 16
    %v610 = vld [vmem:[%s609] sm:%s597]
    %v611 = vpack.c.bf16 0.0, %v610
    %s612 = sshllo.u32 0, %s598
    %s613 = smul.addr 4, 2
    %s614 = scalar_lea.vmem %s1, %s613
    %615 = vst [vmem:[%s614] sm:%s612] %v611
    %s616 = scalar_lea.vmem [#allocation0], 24
    %v617 = vld [vmem:[%s616] sm:%s597]
    %v618 = vpack.c.bf16 0.0, %v617
    %s619 = sshllo.u32 0, %s598
    %s620 = smul.addr 4, 3
    %s621 = scalar_lea.vmem %s1, %s620
    %622 = vst [vmem:[%s621] sm:%s619] %v618
    %s623 = scalar_lea.vmem [#allocation0], 32
    %v624 = vld [vmem:[%s623] sm:%s597]
    %v625 = vpack.c.bf16 0.0, %v624
    %s626 = sshllo.u32 0, %s598
    %s627 = smul.addr 4, 4
    %s628 = scalar_lea.vmem %s1, %s627
    %629 = vst [vmem:[%s628] sm:%s626] %v625
    %s630 = scalar_lea.vmem [#allocation0], 40
    %v631 = vld [vmem:[%s630] sm:%s597]
    %v632 = vpack.c.bf16 0.0, %v631
    %s633 = sshllo.u32 0, %s598
    %s634 = smul.addr 4, 5
    %s635 = scalar_lea.vmem %s1, %s634
    %636 = vst [vmem:[%s635] sm:%s633] %v632
    %s637 = scalar_lea.vmem [#allocation0], 48
    %v638 = vld [vmem:[%s637] sm:%s597]
    %v639 = vpack.c.bf16 0.0, %v638
    %s640 = sshllo.u32 0, %s598
    %s641 = smul.addr 4, 6
    %s642 = scalar_lea.vmem %s1, %s641
    %643 = vst [vmem:[%s642] sm:%s640] %v639
    %s644 = scalar_lea.vmem [#allocation0], 56
    %v645 = vld [vmem:[%s644] sm:%s597]
    %v646 = vpack.c.bf16 0.0, %v645
    %s647 = sshllo.u32 0, %s598
    %s648 = smul.addr 4, 7
    %s649 = scalar_lea.vmem %s1, %s648
    %650 = vst [vmem:[%s649] sm:%s647] %v646
    %s651 = scalar_lea.vmem [#allocation0], 64
    %v652 = vld [vmem:[%s651] sm:%s597]
    %v653 = vpack.c.bf16 0.0, %v652
    %s654 = sshllo.u32 0, %s598
    %s655 = smul.addr 4, 8
    %s656 = scalar_lea.vmem %s1, %s655
    %657 = vst [vmem:[%s656] sm:%s654] %v653
    %s658 = scalar_lea.vmem [#allocation0], 72
    %v659 = vld [vmem:[%s658] sm:%s597]
    %v660 = vpack.c.bf16 0.0, %v659
    %s661 = sshllo.u32 0, %s598
    %s662 = smul.addr 4, 9
    %s663 = scalar_lea.vmem %s1, %s662
    %664 = vst [vmem:[%s663] sm:%s661] %v660
    %s665 = scalar_lea.vmem [#allocation0], 80
    %v666 = vld [vmem:[%s665] sm:%s597]
    %v667 = vpack.c.bf16 0.0, %v666
    %s668 = sshllo.u32 0, %s598
    %s669 = smul.addr 4, 10
    %s670 = scalar_lea.vmem %s1, %s669
    %671 = vst [vmem:[%s670] sm:%s668] %v667
    %s672 = scalar_lea.vmem [#allocation0], 88
    %v673 = vld [vmem:[%s672] sm:%s597]
    %v674 = vpack.c.bf16 0.0, %v673
    %s675 = sshllo.u32 0, %s598
    %s676 = smul.addr 4, 11
    %s677 = scalar_lea.vmem %s1, %s676
    %678 = vst [vmem:[%s677] sm:%s675] %v674
    %s679 = scalar_lea.vmem [#allocation0], 96
    %v680 = vld [vmem:[%s679] sm:%s597]
    %v681 = vpack.c.bf16 0.0, %v680
    %s682 = sshllo.u32 0, %s598
    %s683 = smul.addr 4, 12
    %s684 = scalar_lea.vmem %s1, %s683
    %685 = vst [vmem:[%s684] sm:%s682] %v681
    %s686 = scalar_lea.vmem [#allocation0], 104
    %v687 = vld [vmem:[%s686] sm:%s597]
    %v688 = vpack.c.bf16 0.0, %v687
    %s689 = sshllo.u32 0, %s598
    %s690 = smul.addr 4, 13
    %s691 = scalar_lea.vmem %s1, %s690
    %692 = vst [vmem:[%s691] sm:%s689] %v688
    %s693 = scalar_lea.vmem [#allocation0], 112
    %v694 = vld [vmem:[%s693] sm:%s597]
    %v695 = vpack.c.bf16 0.0, %v694
    %s696 = sshllo.u32 0, %s598
    %s697 = smul.addr 4, 14
    %s698 = scalar_lea.vmem %s1, %s697
    %699 = vst [vmem:[%s698] sm:%s696] %v695
    %s700 = scalar_lea.vmem [#allocation0], 120
    %v701 = vld [vmem:[%s700] sm:%s597]
    %v702 = vpack.c.bf16 0.0, %v701
    %s703 = sshllo.u32 0, %s598
    %s704 = smul.addr 4, 15
    %s705 = scalar_lea.vmem %s1, %s704
    %706 = vst [vmem:[%s705] sm:%s703] %v702
    %s707 = scalar_lea.vmem [#allocation0], 128
    %v708 = vld [vmem:[%s707] sm:%s597]
    %v709 = vpack.c.bf16 0.0, %v708
    %s710 = sshllo.u32 0, %s598
    %s711 = smul.addr 4, 16
    %s712 = scalar_lea.vmem %s1, %s711
    %713 = vst [vmem:[%s712] sm:%s710] %v709
    %s714 = scalar_lea.vmem [#allocation0], 136
    %v715 = vld [vmem:[%s714] sm:%s597]
    %v716 = vpack.c.bf16 0.0, %v715
    %s717 = sshllo.u32 0, %s598
    %s718 = smul.addr 4, 17
    %s719 = scalar_lea.vmem %s1, %s718
    %720 = vst [vmem:[%s719] sm:%s717] %v716
    %s721 = scalar_lea.vmem [#allocation0], 144
    %v722 = vld [vmem:[%s721] sm:%s597]
    %v723 = vpack.c.bf16 0.0, %v722
    %s724 = sshllo.u32 0, %s598
    %s725 = smul.addr 4, 18
    %s726 = scalar_lea.vmem %s1, %s725
    %727 = vst [vmem:[%s726] sm:%s724] %v723
    %s728 = scalar_lea.vmem [#allocation0], 152
    %v729 = vld [vmem:[%s728] sm:%s597]
    %v730 = vpack.c.bf16 0.0, %v729
    %s731 = sshllo.u32 0, %s598
    %s732 = smul.addr 4, 19
    %s733 = scalar_lea.vmem %s1, %s732
    %734 = vst [vmem:[%s733] sm:%s731] %v730
    %s735 = scalar_lea.vmem [#allocation0], 160
    %v736 = vld [vmem:[%s735] sm:%s597]
    %v737 = vpack.c.bf16 0.0, %v736
    %s738 = sshllo.u32 0, %s598
    %s739 = smul.addr 4, 20
    %s740 = scalar_lea.vmem %s1, %s739
    %741 = vst [vmem:[%s740] sm:%s738] %v737
    %s742 = scalar_lea.vmem [#allocation0], 168
    %v743 = vld [vmem:[%s742] sm:%s597]
    %v744 = vpack.c.bf16 0.0, %v743
    %s745 = sshllo.u32 0, %s598
    %s746 = smul.addr 4, 21
    %s747 = scalar_lea.vmem %s1, %s746
    %748 = vst [vmem:[%s747] sm:%s745] %v744
    %s749 = scalar_lea.vmem [#allocation0], 176
    %v750 = vld [vmem:[%s749] sm:%s597]
    %v751 = vpack.c.bf16 0.0, %v750
    %s752 = sshllo.u32 0, %s598
    %s753 = smul.addr 4, 22
    %s754 = scalar_lea.vmem %s1, %s753
    %755 = vst [vmem:[%s754] sm:%s752] %v751
    %s756 = scalar_lea.vmem [#allocation0], 184
    %v757 = vld [vmem:[%s756] sm:%s597]
    %v758 = vpack.c.bf16 0.0, %v757
    %s759 = sshllo.u32 0, %s598
    %s760 = smul.addr 4, 23
    %s761 = scalar_lea.vmem %s1, %s760
    %762 = vst [vmem:[%s761] sm:%s759] %v758
    %s763 = scalar_lea.vmem [#allocation0], 192
    %v764 = vld [vmem:[%s763] sm:%s597]
    %v765 = vpack.c.bf16 0.0, %v764
    %s766 = sshllo.u32 0, %s598
    %s767 = smul.addr 4, 24
    %s768 = scalar_lea.vmem %s1, %s767
    %769 = vst [vmem:[%s768] sm:%s766] %v765
    %s770 = scalar_lea.vmem [#allocation0], 200
    %v771 = vld [vmem:[%s770] sm:%s597]
    %v772 = vpack.c.bf16 0.0, %v771
    %s773 = sshllo.u32 0, %s598
    %s774 = smul.addr 4, 25
    %s775 = scalar_lea.vmem %s1, %s774
    %776 = vst [vmem:[%s775] sm:%s773] %v772
    %s777 = scalar_lea.vmem [#allocation0], 208
    %v778 = vld [vmem:[%s777] sm:%s597]
    %v779 = vpack.c.bf16 0.0, %v778
    %s780 = sshllo.u32 0, %s598
    %s781 = smul.addr 4, 26
    %s782 = scalar_lea.vmem %s1, %s781
    %783 = vst [vmem:[%s782] sm:%s780] %v779
    %s784 = scalar_lea.vmem [#allocation0], 216
    %v785 = vld [vmem:[%s784] sm:%s597]
    %v786 = vpack.c.bf16 0.0, %v785
    %s787 = sshllo.u32 0, %s598
    %s788 = smul.addr 4, 27
    %s789 = scalar_lea.vmem %s1, %s788
    %790 = vst [vmem:[%s789] sm:%s787] %v786
    %s791 = scalar_lea.vmem [#allocation0], 224
    %v792 = vld [vmem:[%s791] sm:%s597]
    %v793 = vpack.c.bf16 0.0, %v792
    %s794 = sshllo.u32 0, %s598
    %s795 = smul.addr 4, 28
    %s796 = scalar_lea.vmem %s1, %s795
    %797 = vst [vmem:[%s796] sm:%s794] %v793
    %s798 = scalar_lea.vmem [#allocation0], 232
    %v799 = vld [vmem:[%s798] sm:%s597]
    %v800 = vpack.c.bf16 0.0, %v799
    %s801 = sshllo.u32 0, %s598
    %s802 = smul.addr 4, 29
    %s803 = scalar_lea.vmem %s1, %s802
    %804 = vst [vmem:[%s803] sm:%s801] %v800
    %s805 = scalar_lea.vmem [#allocation0], 240
    %v806 = vld [vmem:[%s805] sm:%s597]
    %v807 = vpack.c.bf16 0.0, %v806
    %s808 = sshllo.u32 0, %s598
    %s809 = smul.addr 4, 30
    %s810 = scalar_lea.vmem %s1, %s809
    %811 = vst [vmem:[%s810] sm:%s808] %v807
    %s812 = scalar_lea.vmem [#allocation0], 248
    %v813 = vld [vmem:[%s812] sm:%s597]
    %v814 = vpack.c.bf16 0.0, %v813
    %s815 = sshllo.u32 0, %s598
    %s816 = smul.addr 4, 31
    %s817 = scalar_lea.vmem %s1, %s816
    %818 = vst [vmem:[%s817] sm:%s815] %v814
    %s819 = scalar_lea.vmem [#allocation0], 256
    %v820 = vld [vmem:[%s819] sm:%s597]
    %v821 = vpack.c.bf16 0.0, %v820
    %s822 = sshllo.u32 0, %s598
    %s823 = smul.addr 4, 32
    %s824 = scalar_lea.vmem %s1, %s823
    %825 = vst [vmem:[%s824] sm:%s822] %v821
    %s826 = scalar_lea.vmem [#allocation0], 264
    %v827 = vld [vmem:[%s826] sm:%s597]
    %v828 = vpack.c.bf16 0.0, %v827
    %s829 = sshllo.u32 0, %s598
    %s830 = smul.addr 4, 33
    %s831 = scalar_lea.vmem %s1, %s830
    %832 = vst [vmem:[%s831] sm:%s829] %v828
    %s833 = scalar_lea.vmem [#allocation0], 272
    %v834 = vld [vmem:[%s833] sm:%s597]
    %v835 = vpack.c.bf16 0.0, %v834
    %s836 = sshllo.u32 0, %s598
    %s837 = smul.addr 4, 34
    %s838 = scalar_lea.vmem %s1, %s837
    %839 = vst [vmem:[%s838] sm:%s836] %v835
    %s840 = scalar_lea.vmem [#allocation0], 280
    %v841 = vld [vmem:[%s840] sm:%s597]
    %v842 = vpack.c.bf16 0.0, %v841
    %s843 = sshllo.u32 0, %s598
    %s844 = smul.addr 4, 35
    %s845 = scalar_lea.vmem %s1, %s844
    %846 = vst [vmem:[%s845] sm:%s843] %v842
    %s847 = scalar_lea.vmem [#allocation0], 288
    %v848 = vld [vmem:[%s847] sm:%s597]
    %v849 = vpack.c.bf16 0.0, %v848
    %s850 = sshllo.u32 0, %s598
    %s851 = smul.addr 4, 36
    %s852 = scalar_lea.vmem %s1, %s851
    %853 = vst [vmem:[%s852] sm:%s850] %v849
    %s854 = scalar_lea.vmem [#allocation0], 296
    %v855 = vld [vmem:[%s854] sm:%s597]
    %v856 = vpack.c.bf16 0.0, %v855
    %s857 = sshllo.u32 0, %s598
    %s858 = smul.addr 4, 37
    %s859 = scalar_lea.vmem %s1, %s858
    %860 = vst [vmem:[%s859] sm:%s857] %v856
    %s861 = scalar_lea.vmem [#allocation0], 304
    %v862 = vld [vmem:[%s861] sm:%s597]
    %v863 = vpack.c.bf16 0.0, %v862
    %s864 = sshllo.u32 0, %s598
    %s865 = smul.addr 4, 38
    %s866 = scalar_lea.vmem %s1, %s865
    %867 = vst [vmem:[%s866] sm:%s864] %v863
    %s868 = scalar_lea.vmem [#allocation0], 312
    %v869 = vld [vmem:[%s868] sm:%s597]
    %v870 = vpack.c.bf16 0.0, %v869
    %s871 = sshllo.u32 0, %s598
    %s872 = smul.addr 4, 39
    %s873 = scalar_lea.vmem %s1, %s872
    %874 = vst [vmem:[%s873] sm:%s871] %v870
    %s875 = scalar_lea.vmem [#allocation0], 320
    %v876 = vld [vmem:[%s875] sm:%s597]
    %v877 = vpack.c.bf16 0.0, %v876
    %s878 = sshllo.u32 0, %s598
    %s879 = smul.addr 4, 40
    %s880 = scalar_lea.vmem %s1, %s879
    %881 = vst [vmem:[%s880] sm:%s878] %v877
    %s882 = scalar_lea.vmem [#allocation0], 328
    %v883 = vld [vmem:[%s882] sm:%s597]
    %v884 = vpack.c.bf16 0.0, %v883
    %s885 = sshllo.u32 0, %s598
    %s886 = smul.addr 4, 41
    %s887 = scalar_lea.vmem %s1, %s886
    %888 = vst [vmem:[%s887] sm:%s885] %v884
    %s889 = scalar_lea.vmem [#allocation0], 336
    %v890 = vld [vmem:[%s889] sm:%s597]
    %v891 = vpack.c.bf16 0.0, %v890
    %s892 = sshllo.u32 0, %s598
    %s893 = smul.addr 4, 42
    %s894 = scalar_lea.vmem %s1, %s893
    %895 = vst [vmem:[%s894] sm:%s892] %v891
    %s896 = scalar_lea.vmem [#allocation0], 344
    %v897 = vld [vmem:[%s896] sm:%s597]
    %v898 = vpack.c.bf16 0.0, %v897
    %s899 = sshllo.u32 0, %s598
    %s900 = smul.addr 4, 43
    %s901 = scalar_lea.vmem %s1, %s900
    %902 = vst [vmem:[%s901] sm:%s899] %v898
    %s903 = scalar_lea.vmem [#allocation0], 352
    %v904 = vld [vmem:[%s903] sm:%s597]
    %v905 = vpack.c.bf16 0.0, %v904
    %s906 = sshllo.u32 0, %s598
    %s907 = smul.addr 4, 44
    %s908 = scalar_lea.vmem %s1, %s907
    %909 = vst [vmem:[%s908] sm:%s906] %v905
    %s910 = scalar_lea.vmem [#allocation0], 360
    %v911 = vld [vmem:[%s910] sm:%s597]
    %v912 = vpack.c.bf16 0.0, %v911
    %s913 = sshllo.u32 0, %s598
    %s914 = smul.addr 4, 45
    %s915 = scalar_lea.vmem %s1, %s914
    %916 = vst [vmem:[%s915] sm:%s913] %v912
    %s917 = scalar_lea.vmem [#allocation0], 368
    %v918 = vld [vmem:[%s917] sm:%s597]
    %v919 = vpack.c.bf16 0.0, %v918
    %s920 = sshllo.u32 0, %s598
    %s921 = smul.addr 4, 46
    %s922 = scalar_lea.vmem %s1, %s921
    %923 = vst [vmem:[%s922] sm:%s920] %v919
    %s924 = scalar_lea.vmem [#allocation0], 376
    %v925 = vld [vmem:[%s924] sm:%s597]
    %v926 = vpack.c.bf16 0.0, %v925
    %s927 = sshllo.u32 0, %s598
    %s928 = smul.addr 4, 47
    %s929 = scalar_lea.vmem %s1, %s928
    %930 = vst [vmem:[%s929] sm:%s927] %v926

// kernel: decoder2d_forward.3
$region0: #{decoder2d_forward.3}
  #allocation0 [shape = 'u32[]', space=smem, size = 0x4, offset = 0x4, fixed_abs, tag = 'smem constant byte address 0x4 - core index']
  #allocation1 [shape = 'u32[144,128]{1,0:T(1,128)}', space=vmem, size = 0x12000, scoped, tag = 'internal scratch']
  #allocation2 [shape = 'bf16[16,512]{1,0:T(16,128)(2,1)}', space=vmem, size = 0x4000, scoped, tag = 'scratch operand']
  %s0 = inlined_call_operand.vmem [shape: bf16[2,1,16,512], index: 0, kind: input, shape index: {}]
  %s1 = inlined_call_operand.vmem [shape: bf16[9,8,16], index: 1, kind: input, shape index: {}]
  %s2 = inlined_call_operand.vmem [shape: f32[16,3], index: 2, kind: input, shape index: {}]
  %s3 = inlined_call_operand.vmem [shape: f32[1,512], index: 3, kind: input, shape index: {}]
  %s4 = inlined_call_operand.vmem [shape: f32[1,288], index: 4, kind: input, shape index: {}]
  %s5 = inlined_call_operand.vmem [shape: bf16[2,1,8,512], index: 5, kind: output, shape index: {0}]
  %s6 = inlined_call_operand.vmem [shape: f32[2,1,8,2], index: 6, kind: output, shape index: {1}]
  %7 = xla_tuple %s5, %s6
  %s8 = sld [smem:[#allocation0]]
  $region61: #{decoder2d_forward.3} parent=0
    _
  %s10 = ssub.s32 1, %s8
  %s11 = scalar_select 0, %s10, %s8
  loop: start=0, step=1, limit=4
  $region2: #{decoder2d_forward.3} parent=0 // loop_pre_header
    _
  $region3: #{decoder2d_forward.3} parent=0 // loop_header
    %s13 = sphi 0, %s17
    %p14 = scmp.ge.s32.totalorder %s13, 4
    %s20 = sphi 0, %s32
    %s21 = sphi 0, %s28
    %s22 = sphi 0, %s20
    %s23 = sphi 0, %s21
    %s24 = sphi 0, %s22
    %s25 = sphi 0, %s23
    %s37 = sphi 0, %s39
    %s40 = sphi 0, %s37
    %s41 = sphi 0, %s40
    %s57 = sphi 0, %s41
    %s61 = sphi 0, %s61
    %s63 = sphi 0, %s61
    %s64 = sphi 0, %s63
    %s78 = sphi 0, %s64
    %s82 = sphi 0, %s82
    %s84 = sphi 0, %s82
    %s85 = sphi 0, %s84
    %s99 = sphi 0, %s85
    %s105 = sphi 0, %s107
    %s108 = sphi 0, %s105
    %s109 = sphi 0, %s108
    %s125 = sphi 0, %s109
    %s129 = sphi 0, %s129
    %s131 = sphi 0, %s129
    %s132 = sphi 0, %s131
    %s146 = sphi 0, %s132
    %s154 = sphi 0, %s156
    %s157 = sphi 0, %s154
    %s158 = sphi 0, %s157
    %s174 = sphi 0, %s158
    %s182 = sphi 0, %s184
    %s185 = sphi 0, %s182
    %s186 = sphi 0, %s185
    %s202 = sphi 0, %s186
  $region4: #{decoder2d_forward.3} parent=0 // loop_header_branch
    %16 = sbr.rel (%p14) target = $region8
  $region5: #{decoder2d_forward.3} parent=0 // loop_body
    %s18 = ssub.s32 %s13, 1
    %s19 = ssub.s32 %s13, 2
    %s26 = sadd.s32 1, %s21
    %p27 = scmp.ge.s32.totalorder %s26, 1
    %s28 = scalar_select %p27, 0, %s26
    %s29 = sadd.s32 1, %s20
    %s30 = scalar_select %p27, %s29, %s20
    %p31 = scmp.ge.s32.totalorder %s30, 2
    %s32 = scalar_select %p31, 0, %s30
    %s33 = ssub.s32 %s20, %s32
    %s34 = ssub.s32 %s21, %s28
    %s35 = sor.u32 %s33, %s34
    %p36 = scmp.eq.s32.totalorder %s35, 0
    %s38 = sadd.s32 %s37, 1
    %s39 = scalar_select %p36, %s37, %s38
    %p42 = pneg %p36
    %p43 = scmp.eq.s32.totalorder %s13, 1
    %p44 = por %p42, %p43
    %p45 = scmp.ne.s32.totalorder %s37, %s40
    %p46 = scmp.eq.s32.totalorder %s13, 0
    %p47 = por %p45, %p46
    %p48 = scmp.ne.s32.totalorder %s37, %s40
    %p49 = scmp.eq.s32.totalorder %s18, 1
    %p50 = por %p48, %p49
    %p51 = scmp.ne.s32.totalorder %s40, %s41
    %p52 = scmp.eq.s32.totalorder %s18, 0
    %p53 = por %p51, %p52
    %p54 = scmp.ne.s32.totalorder %s40, %s41
    %p55 = scmp.eq.s32.totalorder %s19, 1
    %p56 = por %p54, %p55
    %p58 = scmp.ne.s32.totalorder %s41, %s57
    %p59 = scmp.eq.s32.totalorder %s19, 0
    %p60 = por %p58, %p59
    %s62 = sadd.s32 %s61, 1
    %p65 = scmp.eq.s32.totalorder %s13, 1
    %p66 = scmp.ne.s32.totalorder %s61, %s63
    %p67 = scmp.eq.s32.totalorder %s13, 0
    %p68 = por %p66, %p67
    %p69 = scmp.ne.s32.totalorder %s61, %s63
    %p70 = scmp.eq.s32.totalorder %s18, 1
    %p71 = por %p69, %p70
    %p72 = scmp.ne.s32.totalorder %s63, %s64
    %p73 = scmp.eq.s32.totalorder %s18, 0
    %p74 = por %p72, %p73
    %p75 = scmp.ne.s32.totalorder %s63, %s64
    %p76 = scmp.eq.s32.totalorder %s19, 1
    %p77 = por %p75, %p76
    %p79 = scmp.ne.s32.totalorder %s64, %s78
    %p80 = scmp.eq.s32.totalorder %s19, 0
    %p81 = por %p79, %p80
    %s83 = sadd.s32 %s82, 1
    %p86 = scmp.eq.s32.totalorder %s13, 1
    %p87 = scmp.ne.s32.totalorder %s82, %s84
    %p88 = scmp.eq.s32.totalorder %s13, 0
    %p89 = por %p87, %p88
    %p90 = scmp.ne.s32.totalorder %s82, %s84
    %p91 = scmp.eq.s32.totalorder %s18, 1
    %p92 = por %p90, %p91
    %p93 = scmp.ne.s32.totalorder %s84, %s85
    %p94 = scmp.eq.s32.totalorder %s18, 0
    %p95 = por %p93, %p94
    %p96 = scmp.ne.s32.totalorder %s84, %s85
    %p97 = scmp.eq.s32.totalorder %s19, 1
    %p98 = por %p96, %p97
    %p100 = scmp.ne.s32.totalorder %s85, %s99
    %p101 = scmp.eq.s32.totalorder %s19, 0
    %p102 = por %p100, %p101
    %s103 = ssub.s32 %s21, %s28
    %p104 = scmp.eq.s32.totalorder %s103, 0
    %s106 = sadd.s32 %s105, 1
    %s107 = scalar_select %p104, %s105, %s106
    %p110 = pneg %p104
    %p111 = scmp.eq.s32.totalorder %s13, 1
    %p112 = por %p110, %p111
    %p113 = scmp.ne.s32.totalorder %s105, %s108
    %p114 = scmp.eq.s32.totalorder %s13, 0
    %p115 = por %p113, %p114
    %p116 = scmp.ne.s32.totalorder %s105, %s108
    %p117 = scmp.eq.s32.totalorder %s18, 1
    %p118 = por %p116, %p117
    %p119 = scmp.ne.s32.totalorder %s108, %s109
    %p120 = scmp.eq.s32.totalorder %s18, 0
    %p121 = por %p119, %p120
    %p122 = scmp.ne.s32.totalorder %s108, %s109
    %p123 = scmp.eq.s32.totalorder %s19, 1
    %p124 = por %p122, %p123
    %p126 = scmp.ne.s32.totalorder %s109, %s125
    %p127 = scmp.eq.s32.totalorder %s19, 0
    %p128 = por %p126, %p127
    %s130 = sadd.s32 %s129, 1
    %p133 = scmp.eq.s32.totalorder %s13, 1
    %p134 = scmp.ne.s32.totalorder %s129, %s131
    %p135 = scmp.eq.s32.totalorder %s13, 0
    %p136 = por %p134, %p135
    %p137 = scmp.ne.s32.totalorder %s129, %s131
    %p138 = scmp.eq.s32.totalorder %s18, 1
    %p139 = por %p137, %p138
    %p140 = scmp.ne.s32.totalorder %s131, %s132
    %p141 = scmp.eq.s32.totalorder %s18, 0
    %p142 = por %p140, %p141
    %p143 = scmp.ne.s32.totalorder %s131, %s132
    %p144 = scmp.eq.s32.totalorder %s19, 1
    %p145 = por %p143, %p144
    %p147 = scmp.ne.s32.totalorder %s132, %s146
    %p148 = scmp.eq.s32.totalorder %s19, 0
    %p149 = por %p147, %p148
    %s150 = ssub.s32 %s20, %s32
    %s151 = ssub.s32 %s21, %s28
    %s152 = sor.u32 %s150, %s151
    %p153 = scmp.eq.s32.totalorder %s152, 0
    %s155 = sadd.s32 %s154, 1
    %s156 = scalar_select %p153, %s154, %s155
    %p159 = pneg %p153
    %p160 = scmp.eq.s32.totalorder %s13, 1
    %p161 = por %p159, %p160
    %p162 = scmp.ne.s32.totalorder %s154, %s157
    %p163 = scmp.eq.s32.totalorder %s13, 0
    %p164 = por %p162, %p163
    %p165 = scmp.ne.s32.totalorder %s154, %s157
    %p166 = scmp.eq.s32.totalorder %s18, 1
    %p167 = por %p165, %p166
    %p168 = scmp.ne.s32.totalorder %s157, %s158
    %p169 = scmp.eq.s32.totalorder %s18, 0
    %p170 = por %p168, %p169
    %p171 = scmp.ne.s32.totalorder %s157, %s158
    %p172 = scmp.eq.s32.totalorder %s19, 1
    %p173 = por %p171, %p172
    %p175 = scmp.ne.s32.totalorder %s158, %s174
    %p176 = scmp.eq.s32.totalorder %s19, 0
    %p177 = por %p175, %p176
    %s178 = ssub.s32 %s20, %s32
    %s179 = ssub.s32 %s21, %s28
    %s180 = sor.u32 %s178, %s179
    %p181 = scmp.eq.s32.totalorder %s180, 0
    %s183 = sadd.s32 %s182, 1
    %s184 = scalar_select %p181, %s182, %s183
    %p187 = pneg %p181
    %p188 = scmp.eq.s32.totalorder %s13, 1
    %p189 = por %p187, %p188
    %p190 = scmp.ne.s32.totalorder %s182, %s185
    %p191 = scmp.eq.s32.totalorder %s13, 0
    %p192 = por %p190, %p191
    %p193 = scmp.ne.s32.totalorder %s182, %s185
    %p194 = scmp.eq.s32.totalorder %s18, 1
    %p195 = por %p193, %p194
    %p196 = scmp.ne.s32.totalorder %s185, %s186
    %p197 = scmp.eq.s32.totalorder %s18, 0
    %p198 = por %p196, %p197
    %p199 = scmp.ne.s32.totalorder %s185, %s186
    %p200 = scmp.eq.s32.totalorder %s19, 1
    %p201 = por %p199, %p200
    %p203 = scmp.ne.s32.totalorder %s186, %s202
    %p204 = scmp.eq.s32.totalorder %s19, 0
    %p205 = por %p203, %p204
    %p206 = scmp.le.s32.totalorder 1, %s13
    %p207 = scmp.lt.s32.totalorder %s13, 3
    %p208 = pnand %p206, %p207
    %p209 = pneg %p208
    // Predicated region
    $region9: #{decoder2d_forward.3} parent=5 // pred_check
      _
    $region10: #{decoder2d_forward.3} parent=5 // pred_check_branch
      %211 = sbr.rel (%p208) target = $region12
    $region11: #{decoder2d_forward.3} parent=5 // pred_region
      %s212 = ssub.s32 %s13, 1
      // Predicated region
      $region13: #{decoder2d_forward.3} parent=11 // pred_check
        %p213 = pneg %p74
      $region14: #{decoder2d_forward.3} parent=11 // pred_check_branch
        %215 = sbr.rel (%p213) target = $region16
      $region15: #{decoder2d_forward.3} parent=11 // pred_region
        _
      $region16: #{decoder2d_forward.3} parent=11 // pred_fallthru
        _
      // Predicated region
      $region17: #{decoder2d_forward.3} parent=11 // pred_check
        %p216 = pneg %p95
      $region18: #{decoder2d_forward.3} parent=11 // pred_check_branch
        %218 = sbr.rel (%p216) target = $region20
      $region19: #{decoder2d_forward.3} parent=11 // pred_region
        _
      $region20: #{decoder2d_forward.3} parent=11 // pred_fallthru
        _
      // Predicated region
      $region21: #{decoder2d_forward.3} parent=11 // pred_check
        %p219 = pneg %p121
      $region22: #{decoder2d_forward.3} parent=11 // pred_check_branch
        %221 = sbr.rel (%p219) target = $region24
      $region23: #{decoder2d_forward.3} parent=11 // pred_region
        %p222 = scmp.lt.s32.totalorder %s23, 0
        %s223 = scalar_select %p222, %s23, 0
        %s224 = smul.addr %s223, 4
        %s225 = scalar_lea.vmem %s3, %s224
      $region24: #{decoder2d_forward.3} parent=11 // pred_fallthru
        _
      // Predicated region
      $region25: #{decoder2d_forward.3} parent=11 // pred_check
        %p226 = pneg %p142
      $region26: #{decoder2d_forward.3} parent=11 // pred_check_branch
        %228 = sbr.rel (%p226) target = $region28
      $region27: #{decoder2d_forward.3} parent=11 // pred_region
        _
      $region28: #{decoder2d_forward.3} parent=11 // pred_fallthru
        _
    $region12: #{decoder2d_forward.3} parent=5 // pred_fallthru
      _
    %p229 = scmp.lt.s32.totalorder %s13, 2
    // Predicated region
    $region29: #{decoder2d_forward.3} parent=5 // pred_check
      %p230 = pneg %p229
    $region30: #{decoder2d_forward.3} parent=5 // pred_check_branch
      %232 = sbr.rel (%p230) target = $region32
    $region31: #{decoder2d_forward.3} parent=5 // pred_region
      // Predicated region
      $region33: #{decoder2d_forward.3} parent=31 // pred_check
        %p233 = pneg %p47
      $region34: #{decoder2d_forward.3} parent=31 // pred_check_branch
        %235 = sbr.rel (%p233) target = $region36
      $region35: #{decoder2d_forward.3} parent=31 // pred_region
        %p236 = scmp.lt.s32.totalorder %s20, 1
        %s237 = scalar_select %p236, %s20, 1
        %p238 = scmp.lt.s32.totalorder %s21, 0
        %s239 = scalar_select %p238, %s21, 0
        %s240 = smul.addr %s239, 8
        %s241 = smul.addr %s237, 8
        %s242 = sadd.s32 %s240, %s241
        %s243 = smul.addr %s242, 4
        %s244 = scalar_lea.vmem %s0, %s243
      $region36: #{decoder2d_forward.3} parent=31 // pred_fallthru
        _
    $region32: #{decoder2d_forward.3} parent=5 // pred_fallthru
      _
    %p245 = scmp.le.s32.totalorder 1, %s13
    %p246 = scmp.lt.s32.totalorder %s13, 3
    %p247 = pnand %p245, %p246
    %p248 = pneg %p247
    // Predicated region
    $region37: #{decoder2d_forward.3} parent=5 // pred_check
      _
    $region38: #{decoder2d_forward.3} parent=5 // pred_check_branch
      %250 = sbr.rel (%p247) target = $region40
    $region39: #{decoder2d_forward.3} parent=5 // pred_region
      %s251 = ssub.s32 %s13, 1
      %p252 = scmp.lt.s32.totalorder %s22, 1
      %s253 = scalar_select %p252, %s22, 1
      %p254 = scmp.lt.s32.totalorder %s23, 0
      %s255 = scalar_select %p254, %s23, 0
      %s256 = smul.addr %s255, 8
      %s257 = smul.addr %s253, 8
      %s258 = sadd.s32 %s256, %s257
      %s259 = smul.addr %s258, 4
      %s260 = scalar_lea.vmem %s0, %s259
      %p261 = pneg %p53
      %p262 = pneg %p50
      %p263 = pneg %p74
      %p264 = pneg %p71
      %p265 = pneg %p95
      %p266 = pneg %p92
      %p267 = scmp.lt.s32.totalorder %s23, 0
      %s268 = scalar_select %p267, %s23, 0
      %s269 = smul.addr %s268, 4
      %s270 = scalar_lea.vmem %s3, %s269
      %p271 = pneg %p121
      %p272 = pneg %p118
      %p273 = pneg %p142
      %p274 = pneg %p139
      %p275 = pneg %p170
      %p276 = pneg %p167
      %p277 = scmp.lt.s32.totalorder %s22, 1
      %s278 = scalar_select %p277, %s22, 1
      %p279 = scmp.lt.s32.totalorder %s23, 0
      %s280 = scalar_select %p279, %s23, 0
      %s281 = smul.addr %s280, 4
      %s282 = smul.addr %s278, 4
      %s283 = sadd.s32 %s281, %s282
      %s284 = smul.addr %s283, 4
      %s285 = scalar_lea.vmem %s5, %s284
      %p286 = pneg %p198
      %p287 = pneg %p195
      %p288 = scmp.lt.s32.totalorder %s22, 1
      %s289 = scalar_select %p288, %s22, 1
      %p290 = scmp.lt.s32.totalorder %s23, 0
      %s291 = scalar_select %p290, %s23, 0
      %s292 = sadd.s32 %s291, %s289
      %s293 = smul.addr %s292, 8
      %s294 = scalar_lea.vmem %s6, %s293
      %p295 = scmp.lt.s32.totalorder %s22, 1
      %s296 = scalar_select %p295, %s22, 1
      %p297 = scmp.lt.s32.totalorder %s23, 0
      %s298 = scalar_select %p297, %s23, 0
      %s299 = smul.addr %s298, 8
      %s300 = smul.addr %s296, 8
      %s301 = sadd.s32 %s299, %s300
      %s302 = smul.addr %s301, 4
      %s303 = scalar_lea.vmem %s0, %s302
      %p304 = scmp.lt.s32.totalorder %s23, 0
      %s305 = scalar_select %p304, %s23, 0
      %s306 = smul.addr %s305, 4
      %s307 = scalar_lea.vmem %s3, %s306
      %p308 = scmp.lt.s32.totalorder %s22, 1
      %s309 = scalar_select %p308, %s22, 1
      %p310 = scmp.lt.s32.totalorder %s23, 0
      %s311 = scalar_select %p310, %s23, 0
      %s312 = smul.addr %s311, 4
      %s313 = smul.addr %s309, 4
      %s314 = sadd.s32 %s312, %s313
      %s315 = smul.addr %s314, 4
      %s316 = scalar_lea.vmem %s5, %s315
      %p317 = scmp.lt.s32.totalorder %s22, 1
      %s318 = scalar_select %p317, %s22, 1
      %p319 = scmp.lt.s32.totalorder %s23, 0
      %s320 = scalar_select %p319, %s23, 0
      %s321 = sadd.s32 %s320, %s318
      %s322 = smul.addr %s321, 8
      %s323 = scalar_lea.vmem %s6, %s322
      %v325 = vld [vmem:[%s307] sm:$0xf]
      %v326 = vld [vmem:[%s4] sm:$0x7]
      %v327 = vld [vmem:[%s2] sm:$0xff]
      %v328 = vld [vmem:[%s2 + $0x8] sm:$0xff]
      %v329 = vld [vmem:[%s303] sm:$0xff]
      %v330 = vld [vmem:[%s303 + $0x8] sm:$0xff]
      %v331 = vld [vmem:[%s303 + $0x10] sm:$0xff]
      %v332 = vld [vmem:[%s303 + $0x18] sm:$0xff]
      %v333 = vunpack.c.l.bf16 %v329
      %v334 = vunpack.c.h.bf16 %v329
      %v335 = vunpack.c.l.bf16 %v330
      %v336 = vunpack.c.h.bf16 %v330
      %v337 = vunpack.c.l.bf16 %v331
      %v338 = vunpack.c.h.bf16 %v331
      %v339 = vunpack.c.l.bf16 %v332
      %v340 = vunpack.c.h.bf16 %v332
      %342 = vset.pattern.permute.xlu0 0
      %343 = vperm.xlu0 %342, %v327
      %v344 = vpop.permute.xlu0 %343
      %347 = vset.pattern.permute.xlu0 0
      %348 = vperm.xlu0 %347, %v328
      %v349 = vpop.permute.xlu0 %348
      %v351 = vmul.f32 %v333, %v344
      %v352 = vmul.f32 %v334, %v344
      %v353 = vmul.f32 %v335, %v344
      %v354 = vmul.f32 %v336, %v344
      %v355 = vmul.f32 %v337, %v349
      %v356 = vmul.f32 %v338, %v349
      %v357 = vmul.f32 %v339, %v349
      %v358 = vmul.f32 %v340, %v349
      %359 = vset.pattern.permute.xlu0 1
      %360 = vperm.xlu0 %359, %v327
      %v361 = vpop.permute.xlu0 %360
      %363 = vset.pattern.permute.xlu0 1
      %364 = vperm.xlu0 %363, %v328
      %v365 = vpop.permute.xlu0 %364
      %v367 = vadd.f32 %v351, %v361
      %v368 = vadd.f32 %v352, %v361
      %v369 = vadd.f32 %v353, %v361
      %v370 = vadd.f32 %v354, %v361
      %v371 = vadd.f32 %v355, %v365
      %v372 = vadd.f32 %v356, %v365
      %v373 = vadd.f32 %v357, %v365
      %v374 = vadd.f32 %v358, %v365
      %vm375 = vcmp.gt.f32.partialorder %v367, 0.0
      %vm376 = vcmp.gt.f32.partialorder %v368, 0.0
      %vm377 = vcmp.gt.f32.partialorder %v369, 0.0
      %vm378 = vcmp.gt.f32.partialorder %v370, 0.0
      %vm379 = vcmp.gt.f32.partialorder %v371, 0.0
      %vm380 = vcmp.gt.f32.partialorder %v372, 0.0
      %vm381 = vcmp.gt.f32.partialorder %v373, 0.0
      %vm382 = vcmp.gt.f32.partialorder %v374, 0.0
      %383 = vset.pattern.permute.xlu0 2
      %384 = vperm.xlu0 %383, %v327
      %v385 = vpop.permute.xlu0 %384
      %387 = vset.pattern.permute.xlu0 2
      %388 = vperm.xlu0 %387, %v328
      %v389 = vpop.permute.xlu0 %388
      %v391 = vmul.f32 %v385, %v367
      %v392 = vmul.f32 %v385, %v368
      %v393 = vmul.f32 %v385, %v369
      %v394 = vmul.f32 %v385, %v370
      %v395 = vmul.f32 %v389, %v371
      %v396 = vmul.f32 %v389, %v372
      %v397 = vmul.f32 %v389, %v373
      %v398 = vmul.f32 %v389, %v374
      %v399 = vsel %vm375, %v367, %v391
      %v400 = vsel %vm376, %v368, %v392
      %v401 = vsel %vm377, %v369, %v393
      %v402 = vsel %vm378, %v370, %v394
      %v403 = vsel %vm379, %v371, %v395
      %v404 = vsel %vm380, %v372, %v396
      %v405 = vsel %vm381, %v373, %v397
      %v406 = vsel %vm382, %v374, %v398
      %vm407 = vcmp.gt.f32.partialorder %v325, 0.0
      %v408 = vsel %vm407, 1, 0
      %v409 = vlaneseq
      %v410 = vshrl.u32 %v409, 7
      %v411 = vsub.s32 0, %v410
      %v412 = vrot.slane %v408, %v411
      %v413 = vlaneseq
      %v414 = vshrl.u32 %v413, 7
      %v415 = vsub.s32 1, %v414
      %v416 = vrot.slane %v408, %v415
      %v417 = vlaneseq
      %v418 = vshrl.u32 %v417, 7
      %v419 = vsub.s32 2, %v418
      %v420 = vrot.slane %v408, %v419
      %v421 = vlaneseq
      %v422 = vshrl.u32 %v421, 7
      %v423 = vsub.s32 3, %v422
      %v424 = vrot.slane %v408, %v423
      %vm425 = vcmp.eq.s32.totalorder %v412, 1
      %vm426 = vcmp.eq.s32.totalorder %v416, 1
      %vm427 = vcmp.eq.s32.totalorder %v420, 1
      %vm428 = vcmp.eq.s32.totalorder %v424, 1
      %v429 = vsel %vm425, %v399, 0.0
      %v430 = vsel %vm426, %v400, 0.0
      %v431 = vsel %vm427, %v401, 0.0
      %v432 = vsel %vm428, %v402, 0.0
      %v433 = vsel %vm425, %v403, 0.0
      %v434 = vsel %vm426, %v404, 0.0
      %v435 = vsel %vm427, %v405, 0.0
      %v436 = vsel %vm428, %v406, 0.0
      %v437 = vpack.c.bf16 %v433, %v429
      %v438 = vpack.c.bf16 %v434, %v430
      %v439 = vpack.c.bf16 %v435, %v431
      %v440 = vpack.c.bf16 %v436, %v432
      %441 = vst [vmem:[#allocation2] sm:$0xff] %v437
      %442 = vst [vmem:[#allocation2 + $0x8] sm:$0xff] %v438
      %443 = vst [vmem:[#allocation2 + $0x10] sm:$0xff] %v439
      %444 = vst [vmem:[#allocation2 + $0x18] sm:$0xff] %v440
      %v445 = vld [vmem:[%s1] sm:$0xf]
      %v446 = vld [vmem:[#allocation2] sm:$0xff]
      %v447 = vld [vmem:[#allocation2 + $0x8] sm:$0xff]
      %v448 = vld [vmem:[#allocation2 + $0x10] sm:$0xff]
      %v449 = vld [vmem:[#allocation2 + $0x18] sm:$0xff]
      %s450 = scalar_lea.vmem %s1, 4
      %v451 = vld [vmem:[%s450] sm:$0xf]
      %456 = vrot.lane.b32.xlu0 %v446, 18
      %v457 = vpop.permute.xlu0 %456
      %458 = vrot.lane.b32.xlu0 %v447, 18
      %v459 = vpop.permute.xlu0 %458
      %460 = vrot.lane.b32.xlu0 %v448, 18
      %v461 = vpop.permute.xlu0 %460
      %462 = vrot.lane.b32.xlu0 %v449, 18
      %v463 = vpop.permute.xlu0 %462
      %vm464 = vcmask 146432
      %v465 = vsel %vm464, %v457, %v459
      %v466 = vsel %vm464, %v459, %v461
      %v467 = vsel %vm464, %v461, %v463
      %vm471 = vcmask 130048
      %v473 = vsel %vm471, %v451, 0
      %475 = vmatprep.subr.bf16.mxu0 %v466
      %476 = vmatpush1.bf16.msra.mxu0 %v465
      %477 = vmatprep.subr.bf16.mxu0 0
      %478 = vmatpush1.bf16.msra.mxu0 0
      %479 = vmatprep.subr.bf16.mxu0 0
      %480 = vmatpush1.bf16.msra.mxu0 0
      %481 = vmatprep.subr.bf16.mxu0 0
      %482 = vmatpush1.bf16.msra.mxu0 0
      %483 = vmatprep.subr.bf16.mxu0 0
      %484 = vmatpush1.bf16.msra.mxu0 0
      %485 = vmatprep.subr.bf16.mxu0 0
      %486 = vmatpush1.bf16.msra.mxu0 0
      %487 = vmatprep.subr.bf16.mxu0 0
      %488 = vmatpush1.bf16.msra.mxu0 0
      %489 = vmatprep.subr.bf16.mxu0 0
      %490 = vmatpush1.bf16.msra.mxu0 0
      %491 = vmatprep.subr.bf16.mxu0 0
      %492 = vmatpush1.bf16.msra.mxu0 0
      %493 = vmatprep.subr.bf16.mxu0 0
      %494 = vmatpush1.bf16.msra.mxu0 0
      %495 = vmatprep.subr.bf16.mxu0 0
      %496 = vmatpush1.bf16.msra.mxu0 0
      %497 = vmatprep.subr.bf16.mxu0 0
      %498 = vmatpush1.bf16.msra.mxu0 0
      %499 = vmatprep.subr.bf16.mxu0 0
      %500 = vmatpush1.bf16.msra.mxu0 0
      %501 = vmatprep.subr.bf16.mxu0 0
      %502 = vmatpush1.bf16.msra.mxu0 0
      %503 = vmatprep.subr.bf16.mxu0 0
      %504 = vmatpush1.bf16.msra.mxu0 0
      %505 = vmatprep.subr.bf16.mxu0 0
      %506 = vmatpush1.bf16.msra.mxu0 0
      %507 = vmatprep.mubr.bf16.mxu0 0
      %508 = vmatmul.mubr.bf16.gmra.mrb[0].mxu0 %v473
      %v509 = vpop.f32.mrb[0].mxu0
      %v510 = vadd.f32 0.0, %v509
      %v511 = vpop.f32.mrb[0].mxu0
      %v512 = vadd.f32 0.0, %v511
      %v513 = vpop.f32.mrb[0].mxu0
      %v514 = vpop.f32.mrb[0].mxu0
      %515 = vdwg.mxu0
      %516 = vmatprep.subr.bf16.mxu0 0
      %517 = vmatpush1.bf16.msra.mxu0 %v467
      %518 = vmatprep.subr.bf16.mxu0 0
      %519 = vmatpush1.bf16.msra.mxu0 0
      %520 = vmatprep.subr.bf16.mxu0 0
      %521 = vmatpush1.bf16.msra.mxu0 0
      %522 = vmatprep.subr.bf16.mxu0 0
      %523 = vmatpush1.bf16.msra.mxu0 0
      %524 = vmatprep.subr.bf16.mxu0 0
      %525 = vmatpush1.bf16.msra.mxu0 0
      %526 = vmatprep.subr.bf16.mxu0 0
      %527 = vmatpush1.bf16.msra.mxu0 0
      %528 = vmatprep.subr.bf16.mxu0 0
      %529 = vmatpush1.bf16.msra.mxu0 0
      %530 = vmatprep.subr.bf16.mxu0 0
      %531 = vmatpush1.bf16.msra.mxu0 0
      %532 = vmatprep.subr.bf16.mxu0 0
      %533 = vmatpush1.bf16.msra.mxu0 0
      %534 = vmatprep.subr.bf16.mxu0 0
      %535 = vmatpush1.bf16.msra.mxu0 0
      %536 = vmatprep.subr.bf16.mxu0 0
      %537 = vmatpush1.bf16.msra.mxu0 0
      %538 = vmatprep.subr.bf16.mxu0 0
      %539 = vmatpush1.bf16.msra.mxu0 0
      %540 = vmatprep.subr.bf16.mxu0 0
      %541 = vmatpush1.bf16.msra.mxu0 0
      %542 = vmatprep.subr.bf16.mxu0 0
      %543 = vmatpush1.bf16.msra.mxu0 0
      %544 = vmatprep.subr.bf16.mxu0 0
      %545 = vmatpush1.bf16.msra.mxu0 0
      %546 = vmatprep.subr.bf16.mxu0 0
      %547 = vmatpush1.bf16.msra.mxu0 0
      %548 = vmatprep.mubr.bf16.mxu0 0
      %549 = vmatmul.mubr.bf16.gmra.mrb[0].mxu0 %v473
      %v550 = vpop.f32.mrb[0].mxu0
      %v551 = vadd.f32 0.0, %v550
      %v552 = vpop.f32.mrb[0].mxu0
      %v553 = vpop.f32.mrb[0].mxu0
      %v554 = vpop.f32.mrb[0].mxu0
      %555 = vdwg.mxu0
      %556 = vrot.lane.b32.xlu0 %v446, 19
      %v557 = vpop.permute.xlu0 %556
      %558 = vrot.lane.b32.xlu0 %v447, 19
      %v559 = vpop.permute.xlu0 %558
      %560 = vrot.lane.b32.xlu0 %v448, 19
      %v561 = vpop.permute.xlu0 %560
      %562 = vrot.lane.b32.xlu0 %v449, 19
      %v563 = vpop.permute.xlu0 %562
      %vm564 = vcmask 154624
      %v565 = vsel %vm564, %v557, %v559
      %v566 = vsel %vm564, %v559, %v561
      %v567 = vsel %vm564, %v561, %v563
      %v572 = vsel %vm471, %v445, 0
      %574 = vmatprep.subr.bf16.mxu0 %v566
      %575 = vmatpush1.bf16.msra.mxu0 %v565
      %576 = vmatprep.subr.bf16.mxu0 0
      %577 = vmatpush1.bf16.msra.mxu0 0
      %578 = vmatprep.subr.bf16.mxu0 0
      %579 = vmatpush1.bf16.msra.mxu0 0
      %580 = vmatprep.subr.bf16.mxu0 0
      %581 = vmatpush1.bf16.msra.mxu0 0
      %582 = vmatprep.subr.bf16.mxu0 0
      %583 = vmatpush1.bf16.msra.mxu0 0
      %584 = vmatprep.subr.bf16.mxu0 0
      %585 = vmatpush1.bf16.msra.mxu0 0
      %586 = vmatprep.subr.bf16.mxu0 0
      %587 = vmatpush1.bf16.msra.mxu0 0
      %588 = vmatprep.subr.bf16.mxu0 0
      %589 = vmatpush1.bf16.msra.mxu0 0
      %590 = vmatprep.subr.bf16.mxu0 0
      %591 = vmatpush1.bf16.msra.mxu0 0
      %592 = vmatprep.subr.bf16.mxu0 0
      %593 = vmatpush1.bf16.msra.mxu0 0
      %594 = vmatprep.subr.bf16.mxu0 0
      %595 = vmatpush1.bf16.msra.mxu0 0
      %596 = vmatprep.subr.bf16.mxu0 0
      %597 = vmatpush1.bf16.msra.mxu0 0
      %598 = vmatprep.subr.bf16.mxu0 0
      %599 = vmatpush1.bf16.msra.mxu0 0
      %600 = vmatprep.subr.bf16.mxu0 0
      %601 = vmatpush1.bf16.msra.mxu0 0
      %602 = vmatprep.subr.bf16.mxu0 0
      %603 = vmatpush1.bf16.msra.mxu0 0
      %604 = vmatprep.subr.bf16.mxu0 0
      %605 = vmatpush1.bf16.msra.mxu0 0
      %606 = vmatprep.mubr.bf16.mxu0 0
      %607 = vmatmul.mubr.bf16.gmra.mrb[0].mxu0 %v572
      %v608 = vpop.f32.mrb[0].mxu0
      %v609 = vadd.f32 %v510, %v608
      %v610 = vpop.f32.mrb[0].mxu0
      %v611 = vadd.f32 %v512, %v610
      %v612 = vpop.f32.mrb[0].mxu0
      %v613 = vpop.f32.mrb[0].mxu0
      %614 = vdwg.mxu0
      %615 = vmatprep.subr.bf16.mxu0 0
      %616 = vmatpush1.bf16.msra.mxu0 %v567
      %617 = vmatprep.subr.bf16.mxu0 0
      %618 = vmatpush1.bf16.msra.mxu0 0
      %619 = vmatprep.subr.bf16.mxu0 0
      %620 = vmatpush1.bf16.msra.mxu0 0
      %621 = vmatprep.subr.bf16.mxu0 0
      %622 = vmatpush1.bf16.msra.mxu0 0
      %623 = vmatprep.subr.bf16.mxu0 0
      %624 = vmatpush1.bf16.msra.mxu0 0
      %625 = vmatprep.subr.bf16.mxu0 0
      %626 = vmatpush1.bf16.msra.mxu0 0
      %627 = vmatprep.subr.bf16.mxu0 0
      %628 = vmatpush1.bf16.msra.mxu0 0
      %629 = vmatprep.subr.bf16.mxu0 0
      %630 = vmatpush1.bf16.msra.mxu0 0
      %631 = vmatprep.subr.bf16.mxu0 0
      %632 = vmatpush1.bf16.msra.mxu0 0
      %633 = vmatprep.subr.bf16.mxu0 0
      %634 = vmatpush1.bf16.msra.mxu0 0
      %635 = vmatprep.subr.bf16.mxu0 0
      %636 = vmatpush1.bf16.msra.mxu0 0
      %637 = vmatprep.subr.bf16.mxu0 0
      %638 = vmatpush1.bf16.msra.mxu0 0
      %639 = vmatprep.subr.bf16.mxu0 0
      %640 = vmatpush1.bf16.msra.mxu0 0
      %641 = vmatprep.subr.bf16.mxu0 0
      %642 = vmatpush1.bf16.msra.mxu0 0
      %643 = vmatprep.subr.bf16.mxu0 0
      %644 = vmatpush1.bf16.msra.mxu0 0
      %645 = vmatprep.subr.bf16.mxu0 0
      %646 = vmatpush1.bf16.msra.mxu0 0
      %647 = vmatprep.mubr.bf16.mxu0 0
      %648 = vmatmul.mubr.bf16.gmra.mrb[0].mxu0 %v572
      %v649 = vpop.f32.mrb[0].mxu0
      %v650 = vadd.f32 %v551, %v649
      %v651 = vpop.f32.mrb[0].mxu0
      %v652 = vpop.f32.mrb[0].mxu0
      %v653 = vpop.f32.mrb[0].mxu0
      %654 = vdwg.mxu0
      %s655 = scalar_lea.vmem %s1, 8
      %v656 = vld [vmem:[%s655] sm:$0xf]
      %657 = vrot.lane.b32.xlu0 %v446, 17
      %v658 = vpop.permute.xlu0 %657
      %659 = vrot.lane.b32.xlu0 %v447, 17
      %v660 = vpop.permute.xlu0 %659
      %661 = vrot.lane.b32.xlu0 %v448, 17
      %v662 = vpop.permute.xlu0 %661
      %663 = vrot.lane.b32.xlu0 %v449, 17
      %v664 = vpop.permute.xlu0 %663
      %vm665 = vcmask 138240
      %v666 = vsel %vm665, %v658, %v660
      %v667 = vsel %vm665, %v660, %v662
      %v668 = vsel %vm665, %v662, %v664
      %v673 = vsel %vm471, %v656, 0
      %675 = vmatprep.subr.bf16.mxu0 %v667
      %676 = vmatpush1.bf16.msra.mxu0 %v666
      %677 = vmatprep.subr.bf16.mxu0 0
      %678 = vmatpush1.bf16.msra.mxu0 0
      %679 = vmatprep.subr.bf16.mxu0 0
      %680 = vmatpush1.bf16.msra.mxu0 0
      %681 = vmatprep.subr.bf16.mxu0 0
      %682 = vmatpush1.bf16.msra.mxu0 0
      %683 = vmatprep.subr.bf16.mxu0 0
      %684 = vmatpush1.bf16.msra.mxu0 0
      %685 = vmatprep.subr.bf16.mxu0 0
      %686 = vmatpush1.bf16.msra.mxu0 0
      %687 = vmatprep.subr.bf16.mxu0 0
      %688 = vmatpush1.bf16.msra.mxu0 0
      %689 = vmatprep.subr.bf16.mxu0 0
      %690 = vmatpush1.bf16.msra.mxu0 0
      %691 = vmatprep.subr.bf16.mxu0 0
      %692 = vmatpush1.bf16.msra.mxu0 0
      %693 = vmatprep.subr.bf16.mxu0 0
      %694 = vmatpush1.bf16.msra.mxu0 0
      %695 = vmatprep.subr.bf16.mxu0 0
      %696 = vmatpush1.bf16.msra.mxu0 0
      %697 = vmatprep.subr.bf16.mxu0 0
      %698 = vmatpush1.bf16.msra.mxu0 0
      %699 = vmatprep.subr.bf16.mxu0 0
      %700 = vmatpush1.bf16.msra.mxu0 0
      %701 = vmatprep.subr.bf16.mxu0 0
      %702 = vmatpush1.bf16.msra.mxu0 0
      %703 = vmatprep.subr.bf16.mxu0 0
      %704 = vmatpush1.bf16.msra.mxu0 0
      %705 = vmatprep.subr.bf16.mxu0 0
      %706 = vmatpush1.bf16.msra.mxu0 0
      %707 = vmatprep.mubr.bf16.mxu0 0
      %708 = vmatmul.mubr.bf16.gmra.mrb[0].mxu0 %v673
      %v709 = vpop.f32.mrb[0].mxu0
      %v710 = vadd.f32 0.0, %v709
      %v711 = vpop.f32.mrb[0].mxu0
      %v712 = vadd.f32 0.0, %v711
      %v713 = vpop.f32.mrb[0].mxu0
      %v714 = vpop.f32.mrb[0].mxu0
      %715 = vdwg.mxu0
      %716 = vmatprep.subr.bf16.mxu0 0
      %717 = vmatpush1.bf16.msra.mxu0 %v668
      %718 = vmatprep.subr.bf16.mxu0 0
      %719 = vmatpush1.bf16.msra.mxu0 0
      %720 = vmatprep.subr.bf16.mxu0 0
      %721 = vmatpush1.bf16.msra.mxu0 0
      %722 = vmatprep.subr.bf16.mxu0 0
      %723 = vmatpush1.bf16.msra.mxu0 0
      %724 = vmatprep.subr.bf16.mxu0 0
      %725 = vmatpush1.bf16.msra.mxu0 0
      %726 = vmatprep.subr.bf16.mxu0 0
      %727 = vmatpush1.bf16.msra.mxu0 0
      %728 = vmatprep.subr.bf16.mxu0 0
      %729 = vmatpush1.bf16.msra.mxu0 0
      %730 = vmatprep.subr.bf16.mxu0 0
      %731 = vmatpush1.bf16.msra.mxu0 0
      %732 = vmatprep.subr.bf16.mxu0 0
      %733 = vmatpush1.bf16.msra.mxu0 0
      %734 = vmatprep.subr.bf16.mxu0 0
      %735 = vmatpush1.bf16.msra.mxu0 0
      %736 = vmatprep.subr.bf16.mxu0 0
      %737 = vmatpush1.bf16.msra.mxu0 0
      %738 = vmatprep.subr.bf16.mxu0 0
      %739 = vmatpush1.bf16.msra.mxu0 0
      %740 = vmatprep.subr.bf16.mxu0 0
      %741 = vmatpush1.bf16.msra.mxu0 0
      %742 = vmatprep.subr.bf16.mxu0 0
      %743 = vmatpush1.bf16.msra.mxu0 0
      %744 = vmatprep.subr.bf16.mxu0 0
      %745 = vmatpush1.bf16.msra.mxu0 0
      %746 = vmatprep.subr.bf16.mxu0 0
      %747 = vmatpush1.bf16.msra.mxu0 0
      %748 = vmatprep.mubr.bf16.mxu0 0
      %749 = vmatmul.mubr.bf16.gmra.mrb[0].mxu0 %v673
      %v750 = vpop.f32.mrb[0].mxu0
      %v751 = vadd.f32 0.0, %v750
      %v752 = vpop.f32.mrb[0].mxu0
      %v753 = vpop.f32.mrb[0].mxu0
      %v754 = vpop.f32.mrb[0].mxu0
      %755 = vdwg.mxu0
      %v756 = vadd.f32 %v609, %v710
      %v757 = vadd.f32 %v611, %v712
      %v758 = vadd.f32 %v650, %v751
      %s759 = scalar_lea.vmem %s1, 12
      %v760 = vld [vmem:[%s759] sm:$0xf]
      %761 = vrot.lane.b32.xlu0 %v446, 1
      %v762 = vpop.permute.xlu0 %761
      %763 = vrot.lane.b32.xlu0 %v447, 1
      %v764 = vpop.permute.xlu0 %763
      %765 = vrot.lane.b32.xlu0 %v448, 1
      %v766 = vpop.permute.xlu0 %765
      %767 = vrot.lane.b32.xlu0 %v449, 1
      %v768 = vpop.permute.xlu0 %767
      %vm769 = vcmask 7168
      %v770 = vsel %vm769, %v762, %v764
      %v771 = vsel %vm769, %v764, %v766
      %v772 = vsel %vm769, %v766, %v768
      %v777 = vsel %vm471, %v760, 0
      %779 = vmatprep.subr.bf16.mxu0 %v771
      %780 = vmatpush1.bf16.msra.mxu0 %v770
      %781 = vmatprep.subr.bf16.mxu0 0
      %782 = vmatpush1.bf16.msra.mxu0 0
      %783 = vmatprep.subr.bf16.mxu0 0
      %784 = vmatpush1.bf16.msra.mxu0 0
      %785 = vmatprep.subr.bf16.mxu0 0
      %786 = vmatpush1.bf16.msra.mxu0 0
      %787 = vmatprep.subr.bf16.mxu0 0
      %788 = vmatpush1.bf16.msra.mxu0 0
      %789 = vmatprep.subr.bf16.mxu0 0
      %790 = vmatpush1.bf16.msra.mxu0 0
      %791 = vmatprep.subr.bf16.mxu0 0
      %792 = vmatpush1.bf16.msra.mxu0 0
      %793 = vmatprep.subr.bf16.mxu0 0
      %794 = vmatpush1.bf16.msra.mxu0 0
      %795 = vmatprep.subr.bf16.mxu0 0
      %796 = vmatpush1.bf16.msra.mxu0 0
      %797 = vmatprep.subr.bf16.mxu0 0
      %798 = vmatpush1.bf16.msra.mxu0 0
      %799 = vmatprep.subr.bf16.mxu0 0
      %800 = vmatpush1.bf16.msra.mxu0 0
      %801 = vmatprep.subr.bf16.mxu0 0
      %802 = vmatpush1.bf16.msra.mxu0 0
      %803 = vmatprep.subr.bf16.mxu0 0
      %804 = vmatpush1.bf16.msra.mxu0 0
      %805 = vmatprep.subr.bf16.mxu0 0
      %806 = vmatpush1.bf16.msra.mxu0 0
      %807 = vmatprep.subr.bf16.mxu0 0
      %808 = vmatpush1.bf16.msra.mxu0 0
      %809 = vmatprep.subr.bf16.mxu0 0
      %810 = vmatpush1.bf16.msra.mxu0 0
      %811 = vmatprep.mubr.bf16.mxu0 0
      %812 = vmatmul.mubr.bf16.gmra.mrb[0].mxu0 %v777
      %v813 = vpop.f32.mrb[0].mxu0
      %v814 = vadd.f32 0.0, %v813
      %v815 = vpop.f32.mrb[0].mxu0
      %v816 = vadd.f32 0.0, %v815
      %v817 = vpop.f32.mrb[0].mxu0
      %v818 = vpop.f32.mrb[0].mxu0
      %819 = vdwg.mxu0
      %820 = vmatprep.subr.bf16.mxu0 0
      %821 = vmatpush1.bf16.msra.mxu0 %v772
      %822 = vmatprep.subr.bf16.mxu0 0
      %823 = vmatpush1.bf16.msra.mxu0 0
      %824 = vmatprep.subr.bf16.mxu0 0
      %825 = vmatpush1.bf16.msra.mxu0 0
      %826 = vmatprep.subr.bf16.mxu0 0
      %827 = vmatpush1.bf16.msra.mxu0 0
      %828 = vmatprep.subr.bf16.mxu0 0
      %829 = vmatpush1.bf16.msra.mxu0 0
      %830 = vmatprep.subr.bf16.mxu0 0
      %831 = vmatpush1.bf16.msra.mxu0 0
      %832 = vmatprep.subr.bf16.mxu0 0
      %833 = vmatpush1.bf16.msra.mxu0 0
      %834 = vmatprep.subr.bf16.mxu0 0
      %835 = vmatpush1.bf16.msra.mxu0 0
      %836 = vmatprep.subr.bf16.mxu0 0
      %837 = vmatpush1.bf16.msra.mxu0 0
      %838 = vmatprep.subr.bf16.mxu0 0
      %839 = vmatpush1.bf16.msra.mxu0 0
      %840 = vmatprep.subr.bf16.mxu0 0
      %841 = vmatpush1.bf16.msra.mxu0 0
      %842 = vmatprep.subr.bf16.mxu0 0
      %843 = vmatpush1.bf16.msra.mxu0 0
      %844 = vmatprep.subr.bf16.mxu0 0
      %845 = vmatpush1.bf16.msra.mxu0 0
      %846 = vmatprep.subr.bf16.mxu0 0
      %847 = vmatpush1.bf16.msra.mxu0 0
      %848 = vmatprep.subr.bf16.mxu0 0
      %849 = vmatpush1.bf16.msra.mxu0 0
      %850 = vmatprep.subr.bf16.mxu0 0
      %851 = vmatpush1.bf16.msra.mxu0 0
      %852 = vmatprep.mubr.bf16.mxu0 0
      %853 = vmatmul.mubr.bf16.gmra.mrb[0].mxu0 %v777
      %v854 = vpop.f32.mrb[0].mxu0
      %v855 = vadd.f32 0.0, %v854
      %v856 = vpop.f32.mrb[0].mxu0
      %v857 = vpop.f32.mrb[0].mxu0
      %v858 = vpop.f32.mrb[0].mxu0
      %859 = vdwg.mxu0
      %v860 = vadd.f32 %v756, %v814
      %v861 = vadd.f32 %v757, %v816
      %v862 = vadd.f32 %v758, %v855
      %s863 = scalar_lea.vmem %s1, 16
      %v864 = vld [vmem:[%s863] sm:$0xf]
      %v866 = vsel %vm471, %v864, 0
      %868 = vmatprep.subr.bf16.mxu0 %v448
      %869 = vmatpush1.bf16.msra.mxu0 %v447
      %870 = vmatprep.subr.bf16.mxu0 0
      %871 = vmatpush1.bf16.msra.mxu0 0
      %872 = vmatprep.subr.bf16.mxu0 0
      %873 = vmatpush1.bf16.msra.mxu0 0
      %874 = vmatprep.subr.bf16.mxu0 0
      %875 = vmatpush1.bf16.msra.mxu0 0
      %876 = vmatprep.subr.bf16.mxu0 0
      %877 = vmatpush1.bf16.msra.mxu0 0
      %878 = vmatprep.subr.bf16.mxu0 0
      %879 = vmatpush1.bf16.msra.mxu0 0
      %880 = vmatprep.subr.bf16.mxu0 0
      %881 = vmatpush1.bf16.msra.mxu0 0
      %882 = vmatprep.subr.bf16.mxu0 0
      %883 = vmatpush1.bf16.msra.mxu0 0
      %884 = vmatprep.subr.bf16.mxu0 0
      %885 = vmatpush1.bf16.msra.mxu0 0
      %886 = vmatprep.subr.bf16.mxu0 0
      %887 = vmatpush1.bf16.msra.mxu0 0
      %888 = vmatprep.subr.bf16.mxu0 0
      %889 = vmatpush1.bf16.msra.mxu0 0
      %890 = vmatprep.subr.bf16.mxu0 0
      %891 = vmatpush1.bf16.msra.mxu0 0
      %892 = vmatprep.subr.bf16.mxu0 0
      %893 = vmatpush1.bf16.msra.mxu0 0
      %894 = vmatprep.subr.bf16.mxu0 0
      %895 = vmatpush1.bf16.msra.mxu0 0
      %896 = vmatprep.subr.bf16.mxu0 0
      %897 = vmatpush1.bf16.msra.mxu0 0
      %898 = vmatprep.subr.bf16.mxu0 0
      %899 = vmatpush1.bf16.msra.mxu0 0
      %900 = vmatprep.mubr.bf16.mxu0 0
      %901 = vmatmul.mubr.bf16.gmra.mrb[0].mxu0 %v866
      %v902 = vpop.f32.mrb[0].mxu0
      %v903 = vadd.f32 0.0, %v902
      %v904 = vpop.f32.mrb[0].mxu0
      %v905 = vadd.f32 0.0, %v904
      %v906 = vpop.f32.mrb[0].mxu0
      %v907 = vpop.f32.mrb[0].mxu0
      %908 = vdwg.mxu0
      %909 = vmatprep.subr.bf16.mxu0 0
      %910 = vmatpush1.bf16.msra.mxu0 %v449
      %911 = vmatprep.subr.bf16.mxu0 0
      %912 = vmatpush1.bf16.msra.mxu0 0
      %913 = vmatprep.subr.bf16.mxu0 0
      %914 = vmatpush1.bf16.msra.mxu0 0
      %915 = vmatprep.subr.bf16.mxu0 0
      %916 = vmatpush1.bf16.msra.mxu0 0
      %917 = vmatprep.subr.bf16.mxu0 0
      %918 = vmatpush1.bf16.msra.mxu0 0
      %919 = vmatprep.subr.bf16.mxu0 0
      %920 = vmatpush1.bf16.msra.mxu0 0
      %921 = vmatprep.subr.bf16.mxu0 0
      %922 = vmatpush1.bf16.msra.mxu0 0
      %923 = vmatprep.subr.bf16.mxu0 0
      %924 = vmatpush1.bf16.msra.mxu0 0
      %925 = vmatprep.subr.bf16.mxu0 0
      %926 = vmatpush1.bf16.msra.mxu0 0
      %927 = vmatprep.subr.bf16.mxu0 0
      %928 = vmatpush1.bf16.msra.mxu0 0
      %929 = vmatprep.subr.bf16.mxu0 0
      %930 = vmatpush1.bf16.msra.mxu0 0
      %931 = vmatprep.subr.bf16.mxu0 0
      %932 = vmatpush1.bf16.msra.mxu0 0
      %933 = vmatprep.subr.bf16.mxu0 0
      %934 = vmatpush1.bf16.msra.mxu0 0
      %935 = vmatprep.subr.bf16.mxu0 0
      %936 = vmatpush1.bf16.msra.mxu0 0
      %937 = vmatprep.subr.bf16.mxu0 0
      %938 = vmatpush1.bf16.msra.mxu0 0
      %939 = vmatprep.subr.bf16.mxu0 0
      %940 = vmatpush1.bf16.msra.mxu0 0
      %941 = vmatprep.mubr.bf16.mxu0 0
      %942 = vmatmul.mubr.bf16.gmra.mrb[0].mxu0 %v866
      %v943 = vpop.f32.mrb[0].mxu0
      %v944 = vadd.f32 0.0, %v943
      %v945 = vpop.f32.mrb[0].mxu0
      %v946 = vpop.f32.mrb[0].mxu0
      %v947 = vpop.f32.mrb[0].mxu0
      %948 = vdwg.mxu0
      %v949 = vadd.f32 %v860, %v903
      %v950 = vadd.f32 %v861, %v905
      %v951 = vadd.f32 %v862, %v944
      %s952 = scalar_lea.vmem %s1, 20
      %v953 = vld [vmem:[%s952] sm:$0xf]
      %954 = vrot.lane.b32.xlu0 %v447, 127
      %v955 = vpop.permute.xlu0 %954
      %956 = vrot.lane.b32.xlu0 %v448, 127
      %v957 = vpop.permute.xlu0 %956
      %958 = vrot.lane.b32.xlu0 %v449, 127
      %v959 = vpop.permute.xlu0 %958
      %vm960 = vcmask 1039360
      %v961 = vsel %vm960, %v955, %v957
      %v962 = vsel %vm960, %v957, %v959
      %v967 = vsel %vm471, %v953, 0
      %969 = vmatprep.subr.bf16.mxu0 %v962
      %970 = vmatpush1.bf16.msra.mxu0 %v961
      %971 = vmatprep.subr.bf16.mxu0 0
      %972 = vmatpush1.bf16.msra.mxu0 0
      %973 = vmatprep.subr.bf16.mxu0 0
      %974 = vmatpush1.bf16.msra.mxu0 0
      %975 = vmatprep.subr.bf16.mxu0 0
      %976 = vmatpush1.bf16.msra.mxu0 0
      %977 = vmatprep.subr.bf16.mxu0 0
      %978 = vmatpush1.bf16.msra.mxu0 0
      %979 = vmatprep.subr.bf16.mxu0 0
      %980 = vmatpush1.bf16.msra.mxu0 0
      %981 = vmatprep.subr.bf16.mxu0 0
      %982 = vmatpush1.bf16.msra.mxu0 0
      %983 = vmatprep.subr.bf16.mxu0 0
      %984 = vmatpush1.bf16.msra.mxu0 0
      %985 = vmatprep.subr.bf16.mxu0 0
      %986 = vmatpush1.bf16.msra.mxu0 0
      %987 = vmatprep.subr.bf16.mxu0 0
      %988 = vmatpush1.bf16.msra.mxu0 0
      %989 = vmatprep.subr.bf16.mxu0 0
      %990 = vmatpush1.bf16.msra.mxu0 0
      %991 = vmatprep.subr.bf16.mxu0 0
      %992 = vmatpush1.bf16.msra.mxu0 0
      %993 = vmatprep.subr.bf16.mxu0 0
      %994 = vmatpush1.bf16.msra.mxu0 0
      %995 = vmatprep.subr.bf16.mxu0 0
      %996 = vmatpush1.bf16.msra.mxu0 0
      %997 = vmatprep.subr.bf16.mxu0 0
      %998 = vmatpush1.bf16.msra.mxu0 0
      %999 = vmatprep.subr.bf16.mxu0 0
      %1000 = vmatpush1.bf16.msra.mxu0 0
      %1001 = vmatprep.mubr.bf16.mxu0 0
      %1002 = vmatmul.mubr.bf16.gmra.mrb[0].mxu0 %v967
      %v1003 = vpop.f32.mrb[0].mxu0
      %v1004 = vadd.f32 0.0, %v1003
      %v1005 = vpop.f32.mrb[0].mxu0
      %v1006 = vadd.f32 0.0, %v1005
      %v1007 = vpop.f32.mrb[0].mxu0
      %v1008 = vpop.f32.mrb[0].mxu0
      %1009 = vdwg.mxu0
      %1010 = vmatprep.subr.bf16.mxu0 0
      %1011 = vmatpush1.bf16.msra.mxu0 %v959
      %1012 = vmatprep.subr.bf16.mxu0 0
      %1013 = vmatpush1.bf16.msra.mxu0 0
      %1014 = vmatprep.subr.bf16.mxu0 0
      %1015 = vmatpush1.bf16.msra.mxu0 0
      %1016 = vmatprep.subr.bf16.mxu0 0
      %1017 = vmatpush1.bf16.msra.mxu0 0
      %1018 = vmatprep.subr.bf16.mxu0 0
      %1019 = vmatpush1.bf16.msra.mxu0 0
      %1020 = vmatprep.subr.bf16.mxu0 0
      %1021 = vmatpush1.bf16.msra.mxu0 0
      %1022 = vmatprep.subr.bf16.mxu0 0
      %1023 = vmatpush1.bf16.msra.mxu0 0
      %1024 = vmatprep.subr.bf16.mxu0 0
      %1025 = vmatpush1.bf16.msra.mxu0 0
      %1026 = vmatprep.subr.bf16.mxu0 0
      %1027 = vmatpush1.bf16.msra.mxu0 0
      %1028 = vmatprep.subr.bf16.mxu0 0
      %1029 = vmatpush1.bf16.msra.mxu0 0
      %1030 = vmatprep.subr.bf16.mxu0 0
      %1031 = vmatpush1.bf16.msra.mxu0 0
      %1032 = vmatprep.subr.bf16.mxu0 0
      %1033 = vmatpush1.bf16.msra.mxu0 0
      %1034 = vmatprep.subr.bf16.mxu0 0
      %1035 = vmatpush1.bf16.msra.mxu0 0
      %1036 = vmatprep.subr.bf16.mxu0 0
      %1037 = vmatpush1.bf16.msra.mxu0 0
      %1038 = vmatprep.subr.bf16.mxu0 0
      %1039 = vmatpush1.bf16.msra.mxu0 0
      %1040 = vmatprep.subr.bf16.mxu0 0
      %1041 = vmatpush1.bf16.msra.mxu0 0
      %1042 = vmatprep.mubr.bf16.mxu0 0
      %1043 = vmatmul.mubr.bf16.gmra.mrb[0].mxu0 %v967
      %v1044 = vpop.f32.mrb[0].mxu0
      %v1045 = vadd.f32 0.0, %v1044
      %v1046 = vpop.f32.mrb[0].mxu0
      %v1047 = vpop.f32.mrb[0].mxu0
      %v1048 = vpop.f32.mrb[0].mxu0
      %1049 = vdwg.mxu0
      %v1050 = vadd.f32 %v949, %v1004
      %v1051 = vadd.f32 %v950, %v1006
      %v1052 = vadd.f32 %v951, %v1045
      %s1053 = scalar_lea.vmem %s1, 24
      %v1054 = vld [vmem:[%s1053] sm:$0xf]
      %1055 = vrot.lane.b32.xlu0 %v447, 111
      %v1056 = vpop.permute.xlu0 %1055
      %1057 = vrot.lane.b32.xlu0 %v448, 111
      %v1058 = vpop.permute.xlu0 %1057
      %1059 = vrot.lane.b32.xlu0 %v449, 111
      %v1060 = vpop.permute.xlu0 %1059
      %vm1061 = vcmask 908288
      %v1062 = vsel %vm1061, %v1056, %v1058
      %v1063 = vsel %vm1061, %v1058, %v1060
      %v1068 = vsel %vm471, %v1054, 0
      %1070 = vmatprep.subr.bf16.mxu0 %v1063
      %1071 = vmatpush1.bf16.msra.mxu0 %v1062
      %1072 = vmatprep.subr.bf16.mxu0 0
      %1073 = vmatpush1.bf16.msra.mxu0 0
      %1074 = vmatprep.subr.bf16.mxu0 0
      %1075 = vmatpush1.bf16.msra.mxu0 0
      %1076 = vmatprep.subr.bf16.mxu0 0
      %1077 = vmatpush1.bf16.msra.mxu0 0
      %1078 = vmatprep.subr.bf16.mxu0 0
      %1079 = vmatpush1.bf16.msra.mxu0 0
      %1080 = vmatprep.subr.bf16.mxu0 0
      %1081 = vmatpush1.bf16.msra.mxu0 0
      %1082 = vmatprep.subr.bf16.mxu0 0
      %1083 = vmatpush1.bf16.msra.mxu0 0
      %1084 = vmatprep.subr.bf16.mxu0 0
      %1085 = vmatpush1.bf16.msra.mxu0 0
      %1086 = vmatprep.subr.bf16.mxu0 0
      %1087 = vmatpush1.bf16.msra.mxu0 0
      %1088 = vmatprep.subr.bf16.mxu0 0
      %1089 = vmatpush1.bf16.msra.mxu0 0
      %1090 = vmatprep.subr.bf16.mxu0 0
      %1091 = vmatpush1.bf16.msra.mxu0 0
      %1092 = vmatprep.subr.bf16.mxu0 0
      %1093 = vmatpush1.bf16.msra.mxu0 0
      %1094 = vmatprep.subr.bf16.mxu0 0
      %1095 = vmatpush1.bf16.msra.mxu0 0
      %1096 = vmatprep.subr.bf16.mxu0 0
      %1097 = vmatpush1.bf16.msra.mxu0 0
      %1098 = vmatprep.subr.bf16.mxu0 0
      %1099 = vmatpush1.bf16.msra.mxu0 0
      %1100 = vmatprep.subr.bf16.mxu0 0
      %1101 = vmatpush1.bf16.msra.mxu0 0
      %1102 = vmatprep.mubr.bf16.mxu0 0
      %1103 = vmatmul.mubr.bf16.gmra.mrb[0].mxu0 %v1068
      %v1104 = vpop.f32.mrb[0].mxu0
      %v1105 = vadd.f32 0.0, %v1104
      %v1106 = vpop.f32.mrb[0].mxu0
      %v1107 = vadd.f32 0.0, %v1106
      %v1108 = vpop.f32.mrb[0].mxu0
      %v1109 = vpop.f32.mrb[0].mxu0
      %1110 = vdwg.mxu0
      %1111 = vmatprep.subr.bf16.mxu0 0
      %1112 = vmatpush1.bf16.msra.mxu0 %v1060
      %1113 = vmatprep.subr.bf16.mxu0 0
      %1114 = vmatpush1.bf16.msra.mxu0 0
      %1115 = vmatprep.subr.bf16.mxu0 0
      %1116 = vmatpush1.bf16.msra.mxu0 0
      %1117 = vmatprep.subr.bf16.mxu0 0
      %1118 = vmatpush1.bf16.msra.mxu0 0
      %1119 = vmatprep.subr.bf16.mxu0 0
      %1120 = vmatpush1.bf16.msra.mxu0 0
      %1121 = vmatprep.subr.bf16.mxu0 0
      %1122 = vmatpush1.bf16.msra.mxu0 0
      %1123 = vmatprep.subr.bf16.mxu0 0
      %1124 = vmatpush1.bf16.msra.mxu0 0
      %1125 = vmatprep.subr.bf16.mxu0 0
      %1126 = vmatpush1.bf16.msra.mxu0 0
      %1127 = vmatprep.subr.bf16.mxu0 0
      %1128 = vmatpush1.bf16.msra.mxu0 0
      %1129 = vmatprep.subr.bf16.mxu0 0
      %1130 = vmatpush1.bf16.msra.mxu0 0
      %1131 = vmatprep.subr.bf16.mxu0 0
      %1132 = vmatpush1.bf16.msra.mxu0 0
      %1133 = vmatprep.subr.bf16.mxu0 0
      %1134 = vmatpush1.bf16.msra.mxu0 0
      %1135 = vmatprep.subr.bf16.mxu0 0
      %1136 = vmatpush1.bf16.msra.mxu0 0
      %1137 = vmatprep.subr.bf16.mxu0 0
      %1138 = vmatpush1.bf16.msra.mxu0 0
      %1139 = vmatprep.subr.bf16.mxu0 0
      %1140 = vmatpush1.bf16.msra.mxu0 0
      %1141 = vmatprep.subr.bf16.mxu0 0
      %1142 = vmatpush1.bf16.msra.mxu0 0
      %1143 = vmatprep.mubr.bf16.mxu0 0
      %1144 = vmatmul.mubr.bf16.gmra.mrb[0].mxu0 %v1068
      %v1145 = vpop.f32.mrb[0].mxu0
      %v1146 = vadd.f32 0.0, %v1145
      %v1147 = vpop.f32.mrb[0].mxu0
      %v1148 = vpop.f32.mrb[0].mxu0
      %v1149 = vpop.f32.mrb[0].mxu0
      %1150 = vdwg.mxu0
      %v1151 = vadd.f32 %v1050, %v1105
      %v1152 = vadd.f32 %v1051, %v1107
      %v1153 = vadd.f32 %v1052, %v1146
      %s1154 = scalar_lea.vmem %s1, 28
      %v1155 = vld [vmem:[%s1154] sm:$0xf]
      %1156 = vrot.lane.b32.xlu0 %v447, 110
      %v1157 = vpop.permute.xlu0 %1156
      %1158 = vrot.lane.b32.xlu0 %v448, 110
      %v1159 = vpop.permute.xlu0 %1158
      %1160 = vrot.lane.b32.xlu0 %v449, 110
      %v1161 = vpop.permute.xlu0 %1160
      %vm1162 = vcmask 900096
      %v1163 = vsel %vm1162, %v1157, %v1159
      %v1164 = vsel %vm1162, %v1159, %v1161
      %v1169 = vsel %vm471, %v1155, 0
      %1171 = vmatprep.subr.bf16.mxu0 %v1164
      %1172 = vmatpush1.bf16.msra.mxu0 %v1163
      %1173 = vmatprep.subr.bf16.mxu0 0
      %1174 = vmatpush1.bf16.msra.mxu0 0
      %1175 = vmatprep.subr.bf16.mxu0 0
      %1176 = vmatpush1.bf16.msra.mxu0 0
      %1177 = vmatprep.subr.bf16.mxu0 0
      %1178 = vmatpush1.bf16.msra.mxu0 0
      %1179 = vmatprep.subr.bf16.mxu0 0
      %1180 = vmatpush1.bf16.msra.mxu0 0
      %1181 = vmatprep.subr.bf16.mxu0 0
      %1182 = vmatpush1.bf16.msra.mxu0 0
      %1183 = vmatprep.subr.bf16.mxu0 0
      %1184 = vmatpush1.bf16.msra.mxu0 0
      %1185 = vmatprep.subr.bf16.mxu0 0
      %1186 = vmatpush1.bf16.msra.mxu0 0
      %1187 = vmatprep.subr.bf16.mxu0 0
      %1188 = vmatpush1.bf16.msra.mxu0 0
      %1189 = vmatprep.subr.bf16.mxu0 0
      %1190 = vmatpush1.bf16.msra.mxu0 0
      %1191 = vmatprep.subr.bf16.mxu0 0
      %1192 = vmatpush1.bf16.msra.mxu0 0
      %1193 = vmatprep.subr.bf16.mxu0 0
      %1194 = vmatpush1.bf16.msra.mxu0 0
      %1195 = vmatprep.subr.bf16.mxu0 0
      %1196 = vmatpush1.bf16.msra.mxu0 0
      %1197 = vmatprep.subr.bf16.mxu0 0
      %1198 = vmatpush1.bf16.msra.mxu0 0
      %1199 = vmatprep.subr.bf16.mxu0 0
      %1200 = vmatpush1.bf16.msra.mxu0 0
      %1201 = vmatprep.subr.bf16.mxu0 0
      %1202 = vmatpush1.bf16.msra.mxu0 0
      %1203 = vmatprep.mubr.bf16.mxu0 0
      %1204 = vmatmul.mubr.bf16.gmra.mrb[0].mxu0 %v1169
      %v1205 = vpop.f32.mrb[0].mxu0
      %v1206 = vadd.f32 0.0, %v1205
      %v1207 = vpop.f32.mrb[0].mxu0
      %v1208 = vadd.f32 0.0, %v1207
      %v1209 = vpop.f32.mrb[0].mxu0
      %v1210 = vpop.f32.mrb[0].mxu0
      %1211 = vdwg.mxu0
      %1212 = vmatprep.subr.bf16.mxu0 0
      %1213 = vmatpush1.bf16.msra.mxu0 %v1161
      %1214 = vmatprep.subr.bf16.mxu0 0
      %1215 = vmatpush1.bf16.msra.mxu0 0
      %1216 = vmatprep.subr.bf16.mxu0 0
      %1217 = vmatpush1.bf16.msra.mxu0 0
      %1218 = vmatprep.subr.bf16.mxu0 0
      %1219 = vmatpush1.bf16.msra.mxu0 0
      %1220 = vmatprep.subr.bf16.mxu0 0
      %1221 = vmatpush1.bf16.msra.mxu0 0
      %1222 = vmatprep.subr.bf16.mxu0 0
      %1223 = vmatpush1.bf16.msra.mxu0 0
      %1224 = vmatprep.subr.bf16.mxu0 0
      %1225 = vmatpush1.bf16.msra.mxu0 0
      %1226 = vmatprep.subr.bf16.mxu0 0
      %1227 = vmatpush1.bf16.msra.mxu0 0
      %1228 = vmatprep.subr.bf16.mxu0 0
      %1229 = vmatpush1.bf16.msra.mxu0 0
      %1230 = vmatprep.subr.bf16.mxu0 0
      %1231 = vmatpush1.bf16.msra.mxu0 0
      %1232 = vmatprep.subr.bf16.mxu0 0
      %1233 = vmatpush1.bf16.msra.mxu0 0
      %1234 = vmatprep.subr.bf16.mxu0 0
      %1235 = vmatpush1.bf16.msra.mxu0 0
      %1236 = vmatprep.subr.bf16.mxu0 0
      %1237 = vmatpush1.bf16.msra.mxu0 0
      %1238 = vmatprep.subr.bf16.mxu0 0
      %1239 = vmatpush1.bf16.msra.mxu0 0
      %1240 = vmatprep.subr.bf16.mxu0 0
      %1241 = vmatpush1.bf16.msra.mxu0 0
      %1242 = vmatprep.subr.bf16.mxu0 0
      %1243 = vmatpush1.bf16.msra.mxu0 0
      %1244 = vmatprep.mubr.bf16.mxu0 0
      %1245 = vmatmul.mubr.bf16.gmra.mrb[0].mxu0 %v1169
      %v1246 = vpop.f32.mrb[0].mxu0
      %v1247 = vadd.f32 0.0, %v1246
      %v1248 = vpop.f32.mrb[0].mxu0
      %v1249 = vpop.f32.mrb[0].mxu0
      %v1250 = vpop.f32.mrb[0].mxu0
      %1251 = vdwg.mxu0
      %v1252 = vadd.f32 %v1151, %v1206
      %v1253 = vadd.f32 %v1152, %v1208
      %v1254 = vadd.f32 %v1153, %v1247
      %s1255 = scalar_lea.vmem %s1, 32
      %v1256 = vld [vmem:[%s1255] sm:$0xf]
      %1257 = vrot.lane.b32.xlu0 %v447, 109
      %v1258 = vpop.permute.xlu0 %1257
      %1259 = vrot.lane.b32.xlu0 %v448, 109
      %v1260 = vpop.permute.xlu0 %1259
      %1261 = vrot.lane.b32.xlu0 %v449, 109
      %v1262 = vpop.permute.xlu0 %1261
      %vm1263 = vcmask 891904
      %v1264 = vsel %vm1263, %v1258, %v1260
      %v1265 = vsel %vm1263, %v1260, %v1262
      %v1270 = vsel %vm471, %v1256, 0
      %1272 = vmatprep.subr.bf16.mxu0 %v1265
      %1273 = vmatpush1.bf16.msra.mxu0 %v1264
      %1274 = vmatprep.subr.bf16.mxu0 0
      %1275 = vmatpush1.bf16.msra.mxu0 0
      %1276 = vmatprep.subr.bf16.mxu0 0
      %1277 = vmatpush1.bf16.msra.mxu0 0
      %1278 = vmatprep.subr.bf16.mxu0 0
      %1279 = vmatpush1.bf16.msra.mxu0 0
      %1280 = vmatprep.subr.bf16.mxu0 0
      %1281 = vmatpush1.bf16.msra.mxu0 0
      %1282 = vmatprep.subr.bf16.mxu0 0
      %1283 = vmatpush1.bf16.msra.mxu0 0
      %1284 = vmatprep.subr.bf16.mxu0 0
      %1285 = vmatpush1.bf16.msra.mxu0 0
      %1286 = vmatprep.subr.bf16.mxu0 0
      %1287 = vmatpush1.bf16.msra.mxu0 0
      %1288 = vmatprep.subr.bf16.mxu0 0
      %1289 = vmatpush1.bf16.msra.mxu0 0
      %1290 = vmatprep.subr.bf16.mxu0 0
      %1291 = vmatpush1.bf16.msra.mxu0 0
      %1292 = vmatprep.subr.bf16.mxu0 0
      %1293 = vmatpush1.bf16.msra.mxu0 0
      %1294 = vmatprep.subr.bf16.mxu0 0
      %1295 = vmatpush1.bf16.msra.mxu0 0
      %1296 = vmatprep.subr.bf16.mxu0 0
      %1297 = vmatpush1.bf16.msra.mxu0 0
      %1298 = vmatprep.subr.bf16.mxu0 0
      %1299 = vmatpush1.bf16.msra.mxu0 0
      %1300 = vmatprep.subr.bf16.mxu0 0
      %1301 = vmatpush1.bf16.msra.mxu0 0
      %1302 = vmatprep.subr.bf16.mxu0 0
      %1303 = vmatpush1.bf16.msra.mxu0 0
      %1304 = vmatprep.mubr.bf16.mxu0 0
      %1305 = vmatmul.mubr.bf16.gmra.mrb[0].mxu0 %v1270
      %v1306 = vpop.f32.mrb[0].mxu0
      %v1307 = vadd.f32 0.0, %v1306
      %v1308 = vpop.f32.mrb[0].mxu0
      %v1309 = vadd.f32 0.0, %v1308
      %v1310 = vpop.f32.mrb[0].mxu0
      %v1311 = vpop.f32.mrb[0].mxu0
      %1312 = vdwg.mxu0
      %1313 = vmatprep.subr.bf16.mxu0 0
      %1314 = vmatpush1.bf16.msra.mxu0 %v1262
      %1315 = vmatprep.subr.bf16.mxu0 0
      %1316 = vmatpush1.bf16.msra.mxu0 0
      %1317 = vmatprep.subr.bf16.mxu0 0
      %1318 = vmatpush1.bf16.msra.mxu0 0
      %1319 = vmatprep.subr.bf16.mxu0 0
      %1320 = vmatpush1.bf16.msra.mxu0 0
      %1321 = vmatprep.subr.bf16.mxu0 0
      %1322 = vmatpush1.bf16.msra.mxu0 0
      %1323 = vmatprep.subr.bf16.mxu0 0
      %1324 = vmatpush1.bf16.msra.mxu0 0
      %1325 = vmatprep.subr.bf16.mxu0 0
      %1326 = vmatpush1.bf16.msra.mxu0 0
      %1327 = vmatprep.subr.bf16.mxu0 0
      %1328 = vmatpush1.bf16.msra.mxu0 0
      %1329 = vmatprep.subr.bf16.mxu0 0
      %1330 = vmatpush1.bf16.msra.mxu0 0
      %1331 = vmatprep.subr.bf16.mxu0 0
      %1332 = vmatpush1.bf16.msra.mxu0 0
      %1333 = vmatprep.subr.bf16.mxu0 0
      %1334 = vmatpush1.bf16.msra.mxu0 0
      %1335 = vmatprep.subr.bf16.mxu0 0
      %1336 = vmatpush1.bf16.msra.mxu0 0
      %1337 = vmatprep.subr.bf16.mxu0 0
      %1338 = vmatpush1.bf16.msra.mxu0 0
      %1339 = vmatprep.subr.bf16.mxu0 0
      %1340 = vmatpush1.bf16.msra.mxu0 0
      %1341 = vmatprep.subr.bf16.mxu0 0
      %1342 = vmatpush1.bf16.msra.mxu0 0
      %1343 = vmatprep.subr.bf16.mxu0 0
      %1344 = vmatpush1.bf16.msra.mxu0 0
      %1345 = vmatprep.mubr.bf16.mxu0 0
      %1346 = vmatmul.mubr.bf16.gmra.mrb[0].mxu0 %v1270
      %v1347 = vpop.f32.mrb[0].mxu0
      %v1348 = vadd.f32 0.0, %v1347
      %v1349 = vpop.f32.mrb[0].mxu0
      %v1350 = vpop.f32.mrb[0].mxu0
      %v1351 = vpop.f32.mrb[0].mxu0
      %1352 = vdwg.mxu0
      %v1353 = vadd.f32 %v1252, %v1307
      %v1354 = vadd.f32 %v1253, %v1309
      %v1355 = vadd.f32 %v1254, %v1348
      %1356 = vst [vmem:[%s316] sm:$0xff] 0
      %1357 = vst [vmem:[%s316 + $0x8] sm:$0xff] 0
      %v1358 = vpack.c.bf16 %v1353, %v1353
      %v1359 = vpack.c.bf16 %v1354, %v1354
      %v1360 = vpack.c.bf16 %v1355, %v1355
      %v1364 = vunpack.c.l.b16 %v1358
      %v1365 = vunpack.c.l.b16 %v1359
      %v1366 = vunpack.c.l.b16 %v1360
      %v1367 = vpack.c.b16 %v1365, %v1364
      %v1368 = vpack.c.b16 %v1366, %v1366
      %1371 = vst [vmem:[%s316 + $0x4] sm:$0xff] %v1367
      %vm1372 = vcmask 257024
      %1373 = vst.msk [vmem:[%s316 + $0xc] sm:$0xf] %vm1372, %v1368
      %v1375 = vlaneseq
      %v1376 = vshrl.u32 %v1375, 7
      %v1377 = vsub.s32 0, %v1376
      %v1378 = vrot.slane %v326, %v1377
      %v1379 = vlaneseq
      %v1380 = vshrl.u32 %v1379, 7
      %v1381 = vsub.s32 1, %v1380
      %v1382 = vrot.slane %v326, %v1381
      %v1383 = vlaneseq
      %v1384 = vshrl.u32 %v1383, 7
      %v1385 = vsub.s32 2, %v1384
      %v1386 = vrot.slane %v326, %v1385
      %v1390 = vmul.f32 %v1353, %v1378
      %v1391 = vmul.f32 %v1354, %v1382
      %v1392 = vmul.f32 %v1355, %v1386
      %v1393 = vadd.f32 %v1390, %v1391
      %vm1394 = vcmask 261120
      %v1395 = vsel %vm1394, %v1392, 0.0
      %v1396 = vadd.f32 %v1393, %v1395
      %1397 = vadd.xlane.f32.xlu0 %v1396
      %v1398 = vpop.xlane.xlu0 %1397
      %v1399 = vmul.f32 %v1390, %v1353
      %v1400 = vmul.f32 %v1391, %v1354
      %v1401 = vmul.f32 %v1392, %v1355
      %v1402 = vadd.f32 %v1399, %v1400
      %v1403 = vsel %vm1394, %v1401, 0.0
      %v1404 = vadd.f32 %v1402, %v1403
      %1405 = vadd.xlane.f32.xlu0 %v1404
      %v1406 = vpop.xlane.xlu0 %1405
      %vm1407 = vcmask 7168
      %v1408 = vsel %vm1407, %v1398, %v1406
      %vm1409 = vcmask 15360
      %1410 = vst.msk [vmem:[%s323] sm:$0xff] %vm1409, %v1408
      %p1411 = scmp.lt.s32.totalorder %s22, 1
      %s1412 = scalar_select %p1411, %s22, 1
      %p1413 = scmp.lt.s32.totalorder %s23, 0
      %s1414 = scalar_select %p1413, %s23, 0
      %s1415 = smul.addr %s1414, 4
      %s1416 = smul.addr %s1412, 4
      %s1417 = sadd.s32 %s1415, %s1416
      %s1418 = smul.addr %s1417, 4
      %s1419 = scalar_lea.vmem %s5, %s1418
      %p1420 = scmp.lt.s32.totalorder %s22, 1
      %s1421 = scalar_select %p1420, %s22, 1
      %p1422 = scmp.lt.s32.totalorder %s23, 0
      %s1423 = scalar_select %p1422, %s23, 0
      %s1424 = sadd.s32 %s1423, %s1421
      %s1425 = smul.addr %s1424, 8
      %s1426 = scalar_lea.vmem %s6, %s1425
      // Predicated region
      $region41: #{decoder2d_forward.3} parent=39 // pred_check
        %p1427 = pneg %p167
      $region42: #{decoder2d_forward.3} parent=39 // pred_check_branch
        %1429 = sbr.rel (%p1427) target = $region44
      $region43: #{decoder2d_forward.3} parent=39 // pred_region
        _
      $region44: #{decoder2d_forward.3} parent=39 // pred_fallthru
        _
      // Predicated region
      $region45: #{decoder2d_forward.3} parent=39 // pred_check
        %p1430 = pneg %p195
      $region46: #{decoder2d_forward.3} parent=39 // pred_check_branch
        %1432 = sbr.rel (%p1430) target = $region48
      $region47: #{decoder2d_forward.3} parent=39 // pred_region
        _
      $region48: #{decoder2d_forward.3} parent=39 // pred_fallthru
        _
    $region40: #{decoder2d_forward.3} parent=5 // pred_fallthru
      _
    %p1433 = scmp.le.s32.totalorder 2, %s13
    // Predicated region
    $region49: #{decoder2d_forward.3} parent=5 // pred_check
      %p1434 = pneg %p1433
    $region50: #{decoder2d_forward.3} parent=5 // pred_check_branch
      %1436 = sbr.rel (%p1434) target = $region52
    $region51: #{decoder2d_forward.3} parent=5 // pred_region
      %s1437 = ssub.s32 %s13, 2
      // Predicated region
      $region53: #{decoder2d_forward.3} parent=51 // pred_check
        %p1438 = pneg %p173
      $region54: #{decoder2d_forward.3} parent=51 // pred_check_branch
        %1440 = sbr.rel (%p1438) target = $region56
      $region55: #{decoder2d_forward.3} parent=51 // pred_region
        %p1441 = scmp.lt.s32.totalorder %s24, 1
        %s1442 = scalar_select %p1441, %s24, 1
        %p1443 = scmp.lt.s32.totalorder %s25, 0
        %s1444 = scalar_select %p1443, %s25, 0
        %s1445 = smul.addr %s1444, 4
        %s1446 = smul.addr %s1442, 4
        %s1447 = sadd.s32 %s1445, %s1446
        %s1448 = smul.addr %s1447, 4
        %s1449 = scalar_lea.vmem %s5, %s1448
      $region56: #{decoder2d_forward.3} parent=51 // pred_fallthru
        _
      // Predicated region
      $region57: #{decoder2d_forward.3} parent=51 // pred_check
        %p1450 = pneg %p201
      $region58: #{decoder2d_forward.3} parent=51 // pred_check_branch
        %1452 = sbr.rel (%p1450) target = $region60
      $region59: #{decoder2d_forward.3} parent=51 // pred_region
        %p1453 = scmp.lt.s32.totalorder %s24, 1
        %s1454 = scalar_select %p1453, %s24, 1
        %p1455 = scmp.lt.s32.totalorder %s25, 0
        %s1456 = scalar_select %p1455, %s25, 0
        %s1457 = sadd.s32 %s1456, %s1454
        %s1458 = smul.addr %s1457, 8
        %s1459 = scalar_lea.vmem %s6, %s1458
      $region60: #{decoder2d_forward.3} parent=51 // pred_fallthru
        _
    $region52: #{decoder2d_forward.3} parent=5 // pred_fallthru
      _
  $region6: #{decoder2d_forward.3} parent=0 // loop_footer
    %s17 = sadd.s32 1, %s13
  $region7: #{decoder2d_forward.3} parent=0 // loop_footer_branch
    %12 = sbr.rel target = $region3
  $region8: #{decoder2d_forward.3} parent=0 // loop_exit
    _

// kernel: decoder2d_forward.5
$region0: #{decoder2d_forward.5}
  #allocation0 [shape = 'u32[]', space=smem, size = 0x4, offset = 0x4, fixed_abs, tag = 'smem constant byte address 0x4 - core index']
  #allocation1 [shape = 'u32[144,128]{1,0:T(1,128)}', space=vmem, size = 0x12000, scoped, tag = 'internal scratch']
  #allocation2 [shape = 'bf16[8,512]{1,0:T(8,128)(2,1)}', space=vmem, size = 0x2000, scoped, tag = 'scratch operand']
  %s0 = inlined_call_operand.vmem [shape: bf16[2,1,8,512], index: 0, kind: input, shape index: {}]
  %s1 = inlined_call_operand.vmem [shape: bf16[9,8,8], index: 1, kind: input, shape index: {}]
  %s2 = inlined_call_operand.vmem [shape: f32[8,3], index: 2, kind: input, shape index: {}]
  %s3 = inlined_call_operand.vmem [shape: f32[1,512], index: 3, kind: input, shape index: {}]
  %s4 = inlined_call_operand.vmem [shape: f32[1,288], index: 4, kind: input, shape index: {}]
  %s5 = inlined_call_operand.vmem [shape: bf16[2,1,8,512], index: 5, kind: output, shape index: {0}]
  %s6 = inlined_call_operand.vmem [shape: f32[2,1,8,2], index: 6, kind: output, shape index: {1}]
  %7 = xla_tuple %s5, %s6
  %s8 = sld [smem:[#allocation0]]
  $region61: #{decoder2d_forward.5} parent=0
    _
  %s10 = ssub.s32 1, %s8
  %s11 = scalar_select 0, %s10, %s8
  loop: start=0, step=1, limit=4
  $region2: #{decoder2d_forward.5} parent=0 // loop_pre_header
    _
  $region3: #{decoder2d_forward.5} parent=0 // loop_header
    %s13 = sphi 0, %s17
    %p14 = scmp.ge.s32.totalorder %s13, 4
    %s20 = sphi 0, %s32
    %s21 = sphi 0, %s28
    %s22 = sphi 0, %s20
    %s23 = sphi 0, %s21
    %s24 = sphi 0, %s22
    %s25 = sphi 0, %s23
    %s37 = sphi 0, %s39
    %s40 = sphi 0, %s37
    %s41 = sphi 0, %s40
    %s57 = sphi 0, %s41
    %s61 = sphi 0, %s61
    %s63 = sphi 0, %s61
    %s64 = sphi 0, %s63
    %s78 = sphi 0, %s64
    %s82 = sphi 0, %s82
    %s84 = sphi 0, %s82
    %s85 = sphi 0, %s84
    %s99 = sphi 0, %s85
    %s105 = sphi 0, %s107
    %s108 = sphi 0, %s105
    %s109 = sphi 0, %s108
    %s125 = sphi 0, %s109
    %s129 = sphi 0, %s129
    %s131 = sphi 0, %s129
    %s132 = sphi 0, %s131
    %s146 = sphi 0, %s132
    %s154 = sphi 0, %s156
    %s157 = sphi 0, %s154
    %s158 = sphi 0, %s157
    %s174 = sphi 0, %s158
    %s182 = sphi 0, %s184
    %s185 = sphi 0, %s182
    %s186 = sphi 0, %s185
    %s202 = sphi 0, %s186
  $region4: #{decoder2d_forward.5} parent=0 // loop_header_branch
    %16 = sbr.rel (%p14) target = $region8
  $region5: #{decoder2d_forward.5} parent=0 // loop_body
    %s18 = ssub.s32 %s13, 1
    %s19 = ssub.s32 %s13, 2
    %s26 = sadd.s32 1, %s21
    %p27 = scmp.ge.s32.totalorder %s26, 1
    %s28 = scalar_select %p27, 0, %s26
    %s29 = sadd.s32 1, %s20
    %s30 = scalar_select %p27, %s29, %s20
    %p31 = scmp.ge.s32.totalorder %s30, 2
    %s32 = scalar_select %p31, 0, %s30
    %s33 = ssub.s32 %s20, %s32
    %s34 = ssub.s32 %s21, %s28
    %s35 = sor.u32 %s33, %s34
    %p36 = scmp.eq.s32.totalorder %s35, 0
    %s38 = sadd.s32 %s37, 1
    %s39 = scalar_select %p36, %s37, %s38
    %p42 = pneg %p36
    %p43 = scmp.eq.s32.totalorder %s13, 1
    %p44 = por %p42, %p43
    %p45 = scmp.ne.s32.totalorder %s37, %s40
    %p46 = scmp.eq.s32.totalorder %s13, 0
    %p47 = por %p45, %p46
    %p48 = scmp.ne.s32.totalorder %s37, %s40
    %p49 = scmp.eq.s32.totalorder %s18, 1
    %p50 = por %p48, %p49
    %p51 = scmp.ne.s32.totalorder %s40, %s41
    %p52 = scmp.eq.s32.totalorder %s18, 0
    %p53 = por %p51, %p52
    %p54 = scmp.ne.s32.totalorder %s40, %s41
    %p55 = scmp.eq.s32.totalorder %s19, 1
    %p56 = por %p54, %p55
    %p58 = scmp.ne.s32.totalorder %s41, %s57
    %p59 = scmp.eq.s32.totalorder %s19, 0
    %p60 = por %p58, %p59
    %s62 = sadd.s32 %s61, 1
    %p65 = scmp.eq.s32.totalorder %s13, 1
    %p66 = scmp.ne.s32.totalorder %s61, %s63
    %p67 = scmp.eq.s32.totalorder %s13, 0
    %p68 = por %p66, %p67
    %p69 = scmp.ne.s32.totalorder %s61, %s63
    %p70 = scmp.eq.s32.totalorder %s18, 1
    %p71 = por %p69, %p70
    %p72 = scmp.ne.s32.totalorder %s63, %s64
    %p73 = scmp.eq.s32.totalorder %s18, 0
    %p74 = por %p72, %p73
    %p75 = scmp.ne.s32.totalorder %s63, %s64
    %p76 = scmp.eq.s32.totalorder %s19, 1
    %p77 = por %p75, %p76
    %p79 = scmp.ne.s32.totalorder %s64, %s78
    %p80 = scmp.eq.s32.totalorder %s19, 0
    %p81 = por %p79, %p80
    %s83 = sadd.s32 %s82, 1
    %p86 = scmp.eq.s32.totalorder %s13, 1
    %p87 = scmp.ne.s32.totalorder %s82, %s84
    %p88 = scmp.eq.s32.totalorder %s13, 0
    %p89 = por %p87, %p88
    %p90 = scmp.ne.s32.totalorder %s82, %s84
    %p91 = scmp.eq.s32.totalorder %s18, 1
    %p92 = por %p90, %p91
    %p93 = scmp.ne.s32.totalorder %s84, %s85
    %p94 = scmp.eq.s32.totalorder %s18, 0
    %p95 = por %p93, %p94
    %p96 = scmp.ne.s32.totalorder %s84, %s85
    %p97 = scmp.eq.s32.totalorder %s19, 1
    %p98 = por %p96, %p97
    %p100 = scmp.ne.s32.totalorder %s85, %s99
    %p101 = scmp.eq.s32.totalorder %s19, 0
    %p102 = por %p100, %p101
    %s103 = ssub.s32 %s21, %s28
    %p104 = scmp.eq.s32.totalorder %s103, 0
    %s106 = sadd.s32 %s105, 1
    %s107 = scalar_select %p104, %s105, %s106
    %p110 = pneg %p104
    %p111 = scmp.eq.s32.totalorder %s13, 1
    %p112 = por %p110, %p111
    %p113 = scmp.ne.s32.totalorder %s105, %s108
    %p114 = scmp.eq.s32.totalorder %s13, 0
    %p115 = por %p113, %p114
    %p116 = scmp.ne.s32.totalorder %s105, %s108
    %p117 = scmp.eq.s32.totalorder %s18, 1
    %p118 = por %p116, %p117
    %p119 = scmp.ne.s32.totalorder %s108, %s109
    %p120 = scmp.eq.s32.totalorder %s18, 0
    %p121 = por %p119, %p120
    %p122 = scmp.ne.s32.totalorder %s108, %s109
    %p123 = scmp.eq.s32.totalorder %s19, 1
    %p124 = por %p122, %p123
    %p126 = scmp.ne.s32.totalorder %s109, %s125
    %p127 = scmp.eq.s32.totalorder %s19, 0
    %p128 = por %p126, %p127
    %s130 = sadd.s32 %s129, 1
    %p133 = scmp.eq.s32.totalorder %s13, 1
    %p134 = scmp.ne.s32.totalorder %s129, %s131
    %p135 = scmp.eq.s32.totalorder %s13, 0
    %p136 = por %p134, %p135
    %p137 = scmp.ne.s32.totalorder %s129, %s131
    %p138 = scmp.eq.s32.totalorder %s18, 1
    %p139 = por %p137, %p138
    %p140 = scmp.ne.s32.totalorder %s131, %s132
    %p141 = scmp.eq.s32.totalorder %s18, 0
    %p142 = por %p140, %p141
    %p143 = scmp.ne.s32.totalorder %s131, %s132
    %p144 = scmp.eq.s32.totalorder %s19, 1
    %p145 = por %p143, %p144
    %p147 = scmp.ne.s32.totalorder %s132, %s146
    %p148 = scmp.eq.s32.totalorder %s19, 0
    %p149 = por %p147, %p148
    %s150 = ssub.s32 %s20, %s32
    %s151 = ssub.s32 %s21, %s28
    %s152 = sor.u32 %s150, %s151
    %p153 = scmp.eq.s32.totalorder %s152, 0
    %s155 = sadd.s32 %s154, 1
    %s156 = scalar_select %p153, %s154, %s155
    %p159 = pneg %p153
    %p160 = scmp.eq.s32.totalorder %s13, 1
    %p161 = por %p159, %p160
    %p162 = scmp.ne.s32.totalorder %s154, %s157
    %p163 = scmp.eq.s32.totalorder %s13, 0
    %p164 = por %p162, %p163
    %p165 = scmp.ne.s32.totalorder %s154, %s157
    %p166 = scmp.eq.s32.totalorder %s18, 1
    %p167 = por %p165, %p166
    %p168 = scmp.ne.s32.totalorder %s157, %s158
    %p169 = scmp.eq.s32.totalorder %s18, 0
    %p170 = por %p168, %p169
    %p171 = scmp.ne.s32.totalorder %s157, %s158
    %p172 = scmp.eq.s32.totalorder %s19, 1
    %p173 = por %p171, %p172
    %p175 = scmp.ne.s32.totalorder %s158, %s174
    %p176 = scmp.eq.s32.totalorder %s19, 0
    %p177 = por %p175, %p176
    %s178 = ssub.s32 %s20, %s32
    %s179 = ssub.s32 %s21, %s28
    %s180 = sor.u32 %s178, %s179
    %p181 = scmp.eq.s32.totalorder %s180, 0
    %s183 = sadd.s32 %s182, 1
    %s184 = scalar_select %p181, %s182, %s183
    %p187 = pneg %p181
    %p188 = scmp.eq.s32.totalorder %s13, 1
    %p189 = por %p187, %p188
    %p190 = scmp.ne.s32.totalorder %s182, %s185
    %p191 = scmp.eq.s32.totalorder %s13, 0
    %p192 = por %p190, %p191
    %p193 = scmp.ne.s32.totalorder %s182, %s185
    %p194 = scmp.eq.s32.totalorder %s18, 1
    %p195 = por %p193, %p194
    %p196 = scmp.ne.s32.totalorder %s185, %s186
    %p197 = scmp.eq.s32.totalorder %s18, 0
    %p198 = por %p196, %p197
    %p199 = scmp.ne.s32.totalorder %s185, %s186
    %p200 = scmp.eq.s32.totalorder %s19, 1
    %p201 = por %p199, %p200
    %p203 = scmp.ne.s32.totalorder %s186, %s202
    %p204 = scmp.eq.s32.totalorder %s19, 0
    %p205 = por %p203, %p204
    %p206 = scmp.le.s32.totalorder 1, %s13
    %p207 = scmp.lt.s32.totalorder %s13, 3
    %p208 = pnand %p206, %p207
    %p209 = pneg %p208
    // Predicated region
    $region9: #{decoder2d_forward.5} parent=5 // pred_check
      _
    $region10: #{decoder2d_forward.5} parent=5 // pred_check_branch
      %211 = sbr.rel (%p208) target = $region12
    $region11: #{decoder2d_forward.5} parent=5 // pred_region
      %s212 = ssub.s32 %s13, 1
      // Predicated region
      $region13: #{decoder2d_forward.5} parent=11 // pred_check
        %p213 = pneg %p74
      $region14: #{decoder2d_forward.5} parent=11 // pred_check_branch
        %215 = sbr.rel (%p213) target = $region16
      $region15: #{decoder2d_forward.5} parent=11 // pred_region
        _
      $region16: #{decoder2d_forward.5} parent=11 // pred_fallthru
        _
      // Predicated region
      $region17: #{decoder2d_forward.5} parent=11 // pred_check
        %p216 = pneg %p95
      $region18: #{decoder2d_forward.5} parent=11 // pred_check_branch
        %218 = sbr.rel (%p216) target = $region20
      $region19: #{decoder2d_forward.5} parent=11 // pred_region
        _
      $region20: #{decoder2d_forward.5} parent=11 // pred_fallthru
        _
      // Predicated region
      $region21: #{decoder2d_forward.5} parent=11 // pred_check
        %p219 = pneg %p121
      $region22: #{decoder2d_forward.5} parent=11 // pred_check_branch
        %221 = sbr.rel (%p219) target = $region24
      $region23: #{decoder2d_forward.5} parent=11 // pred_region
        %p222 = scmp.lt.s32.totalorder %s23, 0
        %s223 = scalar_select %p222, %s23, 0
        %s224 = smul.addr %s223, 4
        %s225 = scalar_lea.vmem %s3, %s224
      $region24: #{decoder2d_forward.5} parent=11 // pred_fallthru
        _
      // Predicated region
      $region25: #{decoder2d_forward.5} parent=11 // pred_check
        %p226 = pneg %p142
      $region26: #{decoder2d_forward.5} parent=11 // pred_check_branch
        %228 = sbr.rel (%p226) target = $region28
      $region27: #{decoder2d_forward.5} parent=11 // pred_region
        _
      $region28: #{decoder2d_forward.5} parent=11 // pred_fallthru
        _
    $region12: #{decoder2d_forward.5} parent=5 // pred_fallthru
      _
    %p229 = scmp.lt.s32.totalorder %s13, 2
    // Predicated region
    $region29: #{decoder2d_forward.5} parent=5 // pred_check
      %p230 = pneg %p229
    $region30: #{decoder2d_forward.5} parent=5 // pred_check_branch
      %232 = sbr.rel (%p230) target = $region32
    $region31: #{decoder2d_forward.5} parent=5 // pred_region
      // Predicated region
      $region33: #{decoder2d_forward.5} parent=31 // pred_check
        %p233 = pneg %p47
      $region34: #{decoder2d_forward.5} parent=31 // pred_check_branch
        %235 = sbr.rel (%p233) target = $region36
      $region35: #{decoder2d_forward.5} parent=31 // pred_region
        %p236 = scmp.lt.s32.totalorder %s20, 1
        %s237 = scalar_select %p236, %s20, 1
        %p238 = scmp.lt.s32.totalorder %s21, 0
        %s239 = scalar_select %p238, %s21, 0
        %s240 = smul.addr %s239, 4
        %s241 = smul.addr %s237, 4
        %s242 = sadd.s32 %s240, %s241
        %s243 = smul.addr %s242, 4
        %s244 = scalar_lea.vmem %s0, %s243
      $region36: #{decoder2d_forward.5} parent=31 // pred_fallthru
        _
    $region32: #{decoder2d_forward.5} parent=5 // pred_fallthru
      _
    %p245 = scmp.le.s32.totalorder 1, %s13
    %p246 = scmp.lt.s32.totalorder %s13, 3
    %p247 = pnand %p245, %p246
    %p248 = pneg %p247
    // Predicated region
    $region37: #{decoder2d_forward.5} parent=5 // pred_check
      _
    $region38: #{decoder2d_forward.5} parent=5 // pred_check_branch
      %250 = sbr.rel (%p247) target = $region40
    $region39: #{decoder2d_forward.5} parent=5 // pred_region
      %s251 = ssub.s32 %s13, 1
      %p252 = scmp.lt.s32.totalorder %s22, 1
      %s253 = scalar_select %p252, %s22, 1
      %p254 = scmp.lt.s32.totalorder %s23, 0
      %s255 = scalar_select %p254, %s23, 0
      %s256 = smul.addr %s255, 4
      %s257 = smul.addr %s253, 4
      %s258 = sadd.s32 %s256, %s257
      %s259 = smul.addr %s258, 4
      %s260 = scalar_lea.vmem %s0, %s259
      %p261 = pneg %p53
      %p262 = pneg %p50
      %p263 = pneg %p74
      %p264 = pneg %p71
      %p265 = pneg %p95
      %p266 = pneg %p92
      %p267 = scmp.lt.s32.totalorder %s23, 0
      %s268 = scalar_select %p267, %s23, 0
      %s269 = smul.addr %s268, 4
      %s270 = scalar_lea.vmem %s3, %s269
      %p271 = pneg %p121
      %p272 = pneg %p118
      %p273 = pneg %p142
      %p274 = pneg %p139
      %p275 = pneg %p170
      %p276 = pneg %p167
      %p277 = scmp.lt.s32.totalorder %s22, 1
      %s278 = scalar_select %p277, %s22, 1
      %p279 = scmp.lt.s32.totalorder %s23, 0
      %s280 = scalar_select %p279, %s23, 0
      %s281 = smul.addr %s280, 4
      %s282 = smul.addr %s278, 4
      %s283 = sadd.s32 %s281, %s282
      %s284 = smul.addr %s283, 4
      %s285 = scalar_lea.vmem %s5, %s284
      %p286 = pneg %p198
      %p287 = pneg %p195
      %p288 = scmp.lt.s32.totalorder %s22, 1
      %s289 = scalar_select %p288, %s22, 1
      %p290 = scmp.lt.s32.totalorder %s23, 0
      %s291 = scalar_select %p290, %s23, 0
      %s292 = sadd.s32 %s291, %s289
      %s293 = smul.addr %s292, 8
      %s294 = scalar_lea.vmem %s6, %s293
      %p295 = scmp.lt.s32.totalorder %s22, 1
      %s296 = scalar_select %p295, %s22, 1
      %p297 = scmp.lt.s32.totalorder %s23, 0
      %s298 = scalar_select %p297, %s23, 0
      %s299 = smul.addr %s298, 4
      %s300 = smul.addr %s296, 4
      %s301 = sadd.s32 %s299, %s300
      %s302 = smul.addr %s301, 4
      %s303 = scalar_lea.vmem %s0, %s302
      %p304 = scmp.lt.s32.totalorder %s23, 0
      %s305 = scalar_select %p304, %s23, 0
      %s306 = smul.addr %s305, 4
      %s307 = scalar_lea.vmem %s3, %s306
      %p308 = scmp.lt.s32.totalorder %s22, 1
      %s309 = scalar_select %p308, %s22, 1
      %p310 = scmp.lt.s32.totalorder %s23, 0
      %s311 = scalar_select %p310, %s23, 0
      %s312 = smul.addr %s311, 4
      %s313 = smul.addr %s309, 4
      %s314 = sadd.s32 %s312, %s313
      %s315 = smul.addr %s314, 4
      %s316 = scalar_lea.vmem %s5, %s315
      %p317 = scmp.lt.s32.totalorder %s22, 1
      %s318 = scalar_select %p317, %s22, 1
      %p319 = scmp.lt.s32.totalorder %s23, 0
      %s320 = scalar_select %p319, %s23, 0
      %s321 = sadd.s32 %s320, %s318
      %s322 = smul.addr %s321, 8
      %s323 = scalar_lea.vmem %s6, %s322
      %v325 = vld [vmem:[%s307] sm:$0xf]
      %v326 = vld [vmem:[%s4] sm:$0x7]
      %v327 = vld [vmem:[%s2] sm:$0xff]
      %v328 = vld [vmem:[%s303] sm:$0xff]
      %v329 = vld [vmem:[%s303 + $0x8] sm:$0xff]
      %v330 = vunpack.c.l.bf16 %v328
      %v331 = vunpack.c.h.bf16 %v328
      %v332 = vunpack.c.l.bf16 %v329
      %v333 = vunpack.c.h.bf16 %v329
      %335 = vset.pattern.permute.xlu0 0
      %336 = vperm.xlu0 %335, %v327
      %v337 = vpop.permute.xlu0 %336
      %v339 = vmul.f32 %v330, %v337
      %v340 = vmul.f32 %v331, %v337
      %v341 = vmul.f32 %v332, %v337
      %v342 = vmul.f32 %v333, %v337
      %343 = vset.pattern.permute.xlu0 1
      %344 = vperm.xlu0 %343, %v327
      %v345 = vpop.permute.xlu0 %344
      %v347 = vadd.f32 %v339, %v345
      %v348 = vadd.f32 %v340, %v345
      %v349 = vadd.f32 %v341, %v345
      %v350 = vadd.f32 %v342, %v345
      %vm351 = vcmp.gt.f32.partialorder %v347, 0.0
      %vm352 = vcmp.gt.f32.partialorder %v348, 0.0
      %vm353 = vcmp.gt.f32.partialorder %v349, 0.0
      %vm354 = vcmp.gt.f32.partialorder %v350, 0.0
      %355 = vset.pattern.permute.xlu0 2
      %356 = vperm.xlu0 %355, %v327
      %v357 = vpop.permute.xlu0 %356
      %v359 = vmul.f32 %v357, %v347
      %v360 = vmul.f32 %v357, %v348
      %v361 = vmul.f32 %v357, %v349
      %v362 = vmul.f32 %v357, %v350
      %v363 = vsel %vm351, %v347, %v359
      %v364 = vsel %vm352, %v348, %v360
      %v365 = vsel %vm353, %v349, %v361
      %v366 = vsel %vm354, %v350, %v362
      %vm367 = vcmp.gt.f32.partialorder %v325, 0.0
      %v368 = vsel %vm367, 1, 0
      %v369 = vlaneseq
      %v370 = vshrl.u32 %v369, 7
      %v371 = vsub.s32 0, %v370
      %v372 = vrot.slane %v368, %v371
      %v373 = vlaneseq
      %v374 = vshrl.u32 %v373, 7
      %v375 = vsub.s32 1, %v374
      %v376 = vrot.slane %v368, %v375
      %v377 = vlaneseq
      %v378 = vshrl.u32 %v377, 7
      %v379 = vsub.s32 2, %v378
      %v380 = vrot.slane %v368, %v379
      %v381 = vlaneseq
      %v382 = vshrl.u32 %v381, 7
      %v383 = vsub.s32 3, %v382
      %v384 = vrot.slane %v368, %v383
      %vm385 = vcmp.eq.s32.totalorder %v372, 1
      %vm386 = vcmp.eq.s32.totalorder %v376, 1
      %vm387 = vcmp.eq.s32.totalorder %v380, 1
      %vm388 = vcmp.eq.s32.totalorder %v384, 1
      %v389 = vsel %vm385, %v363, 0.0
      %v390 = vsel %vm386, %v364, 0.0
      %v391 = vsel %vm387, %v365, 0.0
      %v392 = vsel %vm388, %v366, 0.0
      %v393 = vpack.c.bf16 %v389, %v389
      %v394 = vpack.c.bf16 %v390, %v390
      %v395 = vpack.c.bf16 %v391, %v391
      %v396 = vpack.c.bf16 %v392, %v392
      %v401 = vunpack.c.l.b16 %v393
      %v402 = vunpack.c.l.b16 %v394
      %v403 = vunpack.c.l.b16 %v395
      %v404 = vunpack.c.l.b16 %v396
      %v405 = vpack.c.b16 %v402, %v401
      %v406 = vpack.c.b16 %v404, %v403
      %409 = vst [vmem:[#allocation2] sm:$0xff] %v405
      %410 = vst [vmem:[#allocation2 + $0x8] sm:$0xff] %v406
      %v411 = vld [vmem:[%s1] sm:$0xf]
      %v412 = vld [vmem:[#allocation2] sm:$0xff]
      %v413 = vld [vmem:[#allocation2 + $0x8] sm:$0xff]
      %s414 = scalar_lea.vmem %s1, 4
      %v415 = vld [vmem:[%s414] sm:$0xf]
      %v418 = vunpack.c.l.b16 %v412
      %v419 = vunpack.c.h.b16 %v412
      %v420 = vunpack.c.l.b16 %v413
      %v421 = vunpack.c.h.b16 %v413
      %v422 = vpack.c.b16 %v418, %v418
      %v423 = vpack.c.b16 %v419, %v419
      %v424 = vpack.c.b16 %v420, %v420
      %v425 = vpack.c.b16 %v421, %v421
      %426 = vrot.lane.b32.xlu0 %v422, 18
      %v427 = vpop.permute.xlu0 %426
      %428 = vrot.lane.b32.xlu0 %v423, 18
      %v429 = vpop.permute.xlu0 %428
      %430 = vrot.lane.b32.xlu0 %v424, 18
      %v431 = vpop.permute.xlu0 %430
      %432 = vrot.lane.b32.xlu0 %v425, 18
      %v433 = vpop.permute.xlu0 %432
      %vm434 = vcmask 146432
      %v435 = vsel %vm434, %v427, %v429
      %v436 = vsel %vm434, %v429, %v431
      %v437 = vsel %vm434, %v431, %v433
      %vm438 = vcmask 64512
      %v440 = vsel %vm438, %v415, 0
      %vm442 = vcmask 1043456
      %v444 = vsel %vm442, %v435, 0
      %v447 = vsel %vm442, %v436, 0
      %v450 = vsel %vm442, %v437, 0
      %452 = vmatprep.subr.bf16.mxu0 %v447
      %453 = vmatpush1.bf16.msra.mxu0 %v444
      %454 = vmatprep.subr.bf16.mxu0 0
      %455 = vmatpush1.bf16.msra.mxu0 0
      %456 = vmatprep.subr.bf16.mxu0 0
      %457 = vmatpush1.bf16.msra.mxu0 0
      %458 = vmatprep.subr.bf16.mxu0 0
      %459 = vmatpush1.bf16.msra.mxu0 0
      %460 = vmatprep.subr.bf16.mxu0 0
      %461 = vmatpush1.bf16.msra.mxu0 0
      %462 = vmatprep.subr.bf16.mxu0 0
      %463 = vmatpush1.bf16.msra.mxu0 0
      %464 = vmatprep.subr.bf16.mxu0 0
      %465 = vmatpush1.bf16.msra.mxu0 0
      %466 = vmatprep.subr.bf16.mxu0 0
      %467 = vmatpush1.bf16.msra.mxu0 0
      %468 = vmatprep.subr.bf16.mxu0 0
      %469 = vmatpush1.bf16.msra.mxu0 0
      %470 = vmatprep.subr.bf16.mxu0 0
      %471 = vmatpush1.bf16.msra.mxu0 0
      %472 = vmatprep.subr.bf16.mxu0 0
      %473 = vmatpush1.bf16.msra.mxu0 0
      %474 = vmatprep.subr.bf16.mxu0 0
      %475 = vmatpush1.bf16.msra.mxu0 0
      %476 = vmatprep.subr.bf16.mxu0 0
      %477 = vmatpush1.bf16.msra.mxu0 0
      %478 = vmatprep.subr.bf16.mxu0 0
      %479 = vmatpush1.bf16.msra.mxu0 0
      %480 = vmatprep.subr.bf16.mxu0 0
      %481 = vmatpush1.bf16.msra.mxu0 0
      %482 = vmatprep.subr.bf16.mxu0 0
      %483 = vmatpush1.bf16.msra.mxu0 0
      %484 = vmatprep.mubr.bf16.mxu0 0
      %485 = vmatmul.mubr.bf16.gmra.mrb[0].mxu0 %v440
      %v486 = vpop.f32.mrb[0].mxu0
      %v487 = vadd.f32 0.0, %v486
      %v488 = vpop.f32.mrb[0].mxu0
      %v489 = vadd.f32 0.0, %v488
      %v490 = vpop.f32.mrb[0].mxu0
      %v491 = vpop.f32.mrb[0].mxu0
      %492 = vdwg.mxu0
      %493 = vmatprep.subr.bf16.mxu0 0
      %494 = vmatpush1.bf16.msra.mxu0 %v450
      %495 = vmatprep.subr.bf16.mxu0 0
      %496 = vmatpush1.bf16.msra.mxu0 0
      %497 = vmatprep.subr.bf16.mxu0 0
      %498 = vmatpush1.bf16.msra.mxu0 0
      %499 = vmatprep.subr.bf16.mxu0 0
      %500 = vmatpush1.bf16.msra.mxu0 0
      %501 = vmatprep.subr.bf16.mxu0 0
      %502 = vmatpush1.bf16.msra.mxu0 0
      %503 = vmatprep.subr.bf16.mxu0 0
      %504 = vmatpush1.bf16.msra.mxu0 0
      %505 = vmatprep.subr.bf16.mxu0 0
      %506 = vmatpush1.bf16.msra.mxu0 0
      %507 = vmatprep.subr.bf16.mxu0 0
      %508 = vmatpush1.bf16.msra.mxu0 0
      %509 = vmatprep.subr.bf16.mxu0 0
      %510 = vmatpush1.bf16.msra.mxu0 0
      %511 = vmatprep.subr.bf16.mxu0 0
      %512 = vmatpush1.bf16.msra.mxu0 0
      %513 = vmatprep.subr.bf16.mxu0 0
      %514 = vmatpush1.bf16.msra.mxu0 0
      %515 = vmatprep.subr.bf16.mxu0 0
      %516 = vmatpush1.bf16.msra.mxu0 0
      %517 = vmatprep.subr.bf16.mxu0 0
      %518 = vmatpush1.bf16.msra.mxu0 0
      %519 = vmatprep.subr.bf16.mxu0 0
      %520 = vmatpush1.bf16.msra.mxu0 0
      %521 = vmatprep.subr.bf16.mxu0 0
      %522 = vmatpush1.bf16.msra.mxu0 0
      %523 = vmatprep.subr.bf16.mxu0 0
      %524 = vmatpush1.bf16.msra.mxu0 0
      %525 = vmatprep.mubr.bf16.mxu0 0
      %526 = vmatmul.mubr.bf16.gmra.mrb[0].mxu0 %v440
      %v527 = vpop.f32.mrb[0].mxu0
      %v528 = vadd.f32 0.0, %v527
      %v529 = vpop.f32.mrb[0].mxu0
      %v530 = vpop.f32.mrb[0].mxu0
      %v531 = vpop.f32.mrb[0].mxu0
      %532 = vdwg.mxu0
      %533 = vrot.lane.b32.xlu0 %v422, 19
      %v534 = vpop.permute.xlu0 %533
      %535 = vrot.lane.b32.xlu0 %v423, 19
      %v536 = vpop.permute.xlu0 %535
      %537 = vrot.lane.b32.xlu0 %v424, 19
      %v538 = vpop.permute.xlu0 %537
      %539 = vrot.lane.b32.xlu0 %v425, 19
      %v540 = vpop.permute.xlu0 %539
      %vm541 = vcmask 154624
      %v542 = vsel %vm541, %v534, %v536
      %v543 = vsel %vm541, %v536, %v538
      %v544 = vsel %vm541, %v538, %v540
      %v546 = vsel %vm438, %v411, 0
      %v549 = vsel %vm442, %v542, 0
      %v552 = vsel %vm442, %v543, 0
      %v555 = vsel %vm442, %v544, 0
      %557 = vmatprep.subr.bf16.mxu0 %v552
      %558 = vmatpush1.bf16.msra.mxu0 %v549
      %559 = vmatprep.subr.bf16.mxu0 0
      %560 = vmatpush1.bf16.msra.mxu0 0
      %561 = vmatprep.subr.bf16.mxu0 0
      %562 = vmatpush1.bf16.msra.mxu0 0
      %563 = vmatprep.subr.bf16.mxu0 0
      %564 = vmatpush1.bf16.msra.mxu0 0
      %565 = vmatprep.subr.bf16.mxu0 0
      %566 = vmatpush1.bf16.msra.mxu0 0
      %567 = vmatprep.subr.bf16.mxu0 0
      %568 = vmatpush1.bf16.msra.mxu0 0
      %569 = vmatprep.subr.bf16.mxu0 0
      %570 = vmatpush1.bf16.msra.mxu0 0
      %571 = vmatprep.subr.bf16.mxu0 0
      %572 = vmatpush1.bf16.msra.mxu0 0
      %573 = vmatprep.subr.bf16.mxu0 0
      %574 = vmatpush1.bf16.msra.mxu0 0
      %575 = vmatprep.subr.bf16.mxu0 0
      %576 = vmatpush1.bf16.msra.mxu0 0
      %577 = vmatprep.subr.bf16.mxu0 0
      %578 = vmatpush1.bf16.msra.mxu0 0
      %579 = vmatprep.subr.bf16.mxu0 0
      %580 = vmatpush1.bf16.msra.mxu0 0
      %581 = vmatprep.subr.bf16.mxu0 0
      %582 = vmatpush1.bf16.msra.mxu0 0
      %583 = vmatprep.subr.bf16.mxu0 0
      %584 = vmatpush1.bf16.msra.mxu0 0
      %585 = vmatprep.subr.bf16.mxu0 0
      %586 = vmatpush1.bf16.msra.mxu0 0
      %587 = vmatprep.subr.bf16.mxu0 0
      %588 = vmatpush1.bf16.msra.mxu0 0
      %589 = vmatprep.mubr.bf16.mxu0 0
      %590 = vmatmul.mubr.bf16.gmra.mrb[0].mxu0 %v546
      %v591 = vpop.f32.mrb[0].mxu0
      %v592 = vadd.f32 %v487, %v591
      %v593 = vpop.f32.mrb[0].mxu0
      %v594 = vadd.f32 %v489, %v593
      %v595 = vpop.f32.mrb[0].mxu0
      %v596 = vpop.f32.mrb[0].mxu0
      %597 = vdwg.mxu0
      %598 = vmatprep.subr.bf16.mxu0 0
      %599 = vmatpush1.bf16.msra.mxu0 %v555
      %600 = vmatprep.subr.bf16.mxu0 0
      %601 = vmatpush1.bf16.msra.mxu0 0
      %602 = vmatprep.subr.bf16.mxu0 0
      %603 = vmatpush1.bf16.msra.mxu0 0
      %604 = vmatprep.subr.bf16.mxu0 0
      %605 = vmatpush1.bf16.msra.mxu0 0
      %606 = vmatprep.subr.bf16.mxu0 0
      %607 = vmatpush1.bf16.msra.mxu0 0
      %608 = vmatprep.subr.bf16.mxu0 0
      %609 = vmatpush1.bf16.msra.mxu0 0
      %610 = vmatprep.subr.bf16.mxu0 0
      %611 = vmatpush1.bf16.msra.mxu0 0
      %612 = vmatprep.subr.bf16.mxu0 0
      %613 = vmatpush1.bf16.msra.mxu0 0
      %614 = vmatprep.subr.bf16.mxu0 0
      %615 = vmatpush1.bf16.msra.mxu0 0
      %616 = vmatprep.subr.bf16.mxu0 0
      %617 = vmatpush1.bf16.msra.mxu0 0
      %618 = vmatprep.subr.bf16.mxu0 0
      %619 = vmatpush1.bf16.msra.mxu0 0
      %620 = vmatprep.subr.bf16.mxu0 0
      %621 = vmatpush1.bf16.msra.mxu0 0
      %622 = vmatprep.subr.bf16.mxu0 0
      %623 = vmatpush1.bf16.msra.mxu0 0
      %624 = vmatprep.subr.bf16.mxu0 0
      %625 = vmatpush1.bf16.msra.mxu0 0
      %626 = vmatprep.subr.bf16.mxu0 0
      %627 = vmatpush1.bf16.msra.mxu0 0
      %628 = vmatprep.subr.bf16.mxu0 0
      %629 = vmatpush1.bf16.msra.mxu0 0
      %630 = vmatprep.mubr.bf16.mxu0 0
      %631 = vmatmul.mubr.bf16.gmra.mrb[0].mxu0 %v546
      %v632 = vpop.f32.mrb[0].mxu0
      %v633 = vadd.f32 %v528, %v632
      %v634 = vpop.f32.mrb[0].mxu0
      %v635 = vpop.f32.mrb[0].mxu0
      %v636 = vpop.f32.mrb[0].mxu0
      %637 = vdwg.mxu0
      %s638 = scalar_lea.vmem %s1, 8
      %v639 = vld [vmem:[%s638] sm:$0xf]
      %640 = vrot.lane.b32.xlu0 %v422, 17
      %v641 = vpop.permute.xlu0 %640
      %642 = vrot.lane.b32.xlu0 %v423, 17
      %v643 = vpop.permute.xlu0 %642
      %644 = vrot.lane.b32.xlu0 %v424, 17
      %v645 = vpop.permute.xlu0 %644
      %646 = vrot.lane.b32.xlu0 %v425, 17
      %v647 = vpop.permute.xlu0 %646
      %vm648 = vcmask 138240
      %v649 = vsel %vm648, %v641, %v643
      %v650 = vsel %vm648, %v643, %v645
      %v651 = vsel %vm648, %v645, %v647
      %v653 = vsel %vm438, %v639, 0
      %v656 = vsel %vm442, %v649, 0
      %v659 = vsel %vm442, %v650, 0
      %v662 = vsel %vm442, %v651, 0
      %664 = vmatprep.subr.bf16.mxu0 %v659
      %665 = vmatpush1.bf16.msra.mxu0 %v656
      %666 = vmatprep.subr.bf16.mxu0 0
      %667 = vmatpush1.bf16.msra.mxu0 0
      %668 = vmatprep.subr.bf16.mxu0 0
      %669 = vmatpush1.bf16.msra.mxu0 0
      %670 = vmatprep.subr.bf16.mxu0 0
      %671 = vmatpush1.bf16.msra.mxu0 0
      %672 = vmatprep.subr.bf16.mxu0 0
      %673 = vmatpush1.bf16.msra.mxu0 0
      %674 = vmatprep.subr.bf16.mxu0 0
      %675 = vmatpush1.bf16.msra.mxu0 0
      %676 = vmatprep.subr.bf16.mxu0 0
      %677 = vmatpush1.bf16.msra.mxu0 0
      %678 = vmatprep.subr.bf16.mxu0 0
      %679 = vmatpush1.bf16.msra.mxu0 0
      %680 = vmatprep.subr.bf16.mxu0 0
      %681 = vmatpush1.bf16.msra.mxu0 0
      %682 = vmatprep.subr.bf16.mxu0 0
      %683 = vmatpush1.bf16.msra.mxu0 0
      %684 = vmatprep.subr.bf16.mxu0 0
      %685 = vmatpush1.bf16.msra.mxu0 0
      %686 = vmatprep.subr.bf16.mxu0 0
      %687 = vmatpush1.bf16.msra.mxu0 0
      %688 = vmatprep.subr.bf16.mxu0 0
      %689 = vmatpush1.bf16.msra.mxu0 0
      %690 = vmatprep.subr.bf16.mxu0 0
      %691 = vmatpush1.bf16.msra.mxu0 0
      %692 = vmatprep.subr.bf16.mxu0 0
      %693 = vmatpush1.bf16.msra.mxu0 0
      %694 = vmatprep.subr.bf16.mxu0 0
      %695 = vmatpush1.bf16.msra.mxu0 0
      %696 = vmatprep.mubr.bf16.mxu0 0
      %697 = vmatmul.mubr.bf16.gmra.mrb[0].mxu0 %v653
      %v698 = vpop.f32.mrb[0].mxu0
      %v699 = vadd.f32 0.0, %v698
      %v700 = vpop.f32.mrb[0].mxu0
      %v701 = vadd.f32 0.0, %v700
      %v702 = vpop.f32.mrb[0].mxu0
      %v703 = vpop.f32.mrb[0].mxu0
      %704 = vdwg.mxu0
      %705 = vmatprep.subr.bf16.mxu0 0
      %706 = vmatpush1.bf16.msra.mxu0 %v662
      %707 = vmatprep.subr.bf16.mxu0 0
      %708 = vmatpush1.bf16.msra.mxu0 0
      %709 = vmatprep.subr.bf16.mxu0 0
      %710 = vmatpush1.bf16.msra.mxu0 0
      %711 = vmatprep.subr.bf16.mxu0 0
      %712 = vmatpush1.bf16.msra.mxu0 0
      %713 = vmatprep.subr.bf16.mxu0 0
      %714 = vmatpush1.bf16.msra.mxu0 0
      %715 = vmatprep.subr.bf16.mxu0 0
      %716 = vmatpush1.bf16.msra.mxu0 0
      %717 = vmatprep.subr.bf16.mxu0 0
      %718 = vmatpush1.bf16.msra.mxu0 0
      %719 = vmatprep.subr.bf16.mxu0 0
      %720 = vmatpush1.bf16.msra.mxu0 0
      %721 = vmatprep.subr.bf16.mxu0 0
      %722 = vmatpush1.bf16.msra.mxu0 0
      %723 = vmatprep.subr.bf16.mxu0 0
      %724 = vmatpush1.bf16.msra.mxu0 0
      %725 = vmatprep.subr.bf16.mxu0 0
      %726 = vmatpush1.bf16.msra.mxu0 0
      %727 = vmatprep.subr.bf16.mxu0 0
      %728 = vmatpush1.bf16.msra.mxu0 0
      %729 = vmatprep.subr.bf16.mxu0 0
      %730 = vmatpush1.bf16.msra.mxu0 0
      %731 = vmatprep.subr.bf16.mxu0 0
      %732 = vmatpush1.bf16.msra.mxu0 0
      %733 = vmatprep.subr.bf16.mxu0 0
      %734 = vmatpush1.bf16.msra.mxu0 0
      %735 = vmatprep.subr.bf16.mxu0 0
      %736 = vmatpush1.bf16.msra.mxu0 0
      %737 = vmatprep.mubr.bf16.mxu0 0
      %738 = vmatmul.mubr.bf16.gmra.mrb[0].mxu0 %v653
      %v739 = vpop.f32.mrb[0].mxu0
      %v740 = vadd.f32 0.0, %v739
      %v741 = vpop.f32.mrb[0].mxu0
      %v742 = vpop.f32.mrb[0].mxu0
      %v743 = vpop.f32.mrb[0].mxu0
      %744 = vdwg.mxu0
      %v745 = vadd.f32 %v592, %v699
      %v746 = vadd.f32 %v594, %v701
      %v747 = vadd.f32 %v633, %v740
      %s748 = scalar_lea.vmem %s1, 12
      %v749 = vld [vmem:[%s748] sm:$0xf]
      %750 = vrot.lane.b32.xlu0 %v422, 1
      %v751 = vpop.permute.xlu0 %750
      %752 = vrot.lane.b32.xlu0 %v423, 1
      %v753 = vpop.permute.xlu0 %752
      %754 = vrot.lane.b32.xlu0 %v424, 1
      %v755 = vpop.permute.xlu0 %754
      %756 = vrot.lane.b32.xlu0 %v425, 1
      %v757 = vpop.permute.xlu0 %756
      %vm758 = vcmask 7168
      %v759 = vsel %vm758, %v751, %v753
      %v760 = vsel %vm758, %v753, %v755
      %v761 = vsel %vm758, %v755, %v757
      %v763 = vsel %vm438, %v749, 0
      %v766 = vsel %vm442, %v759, 0
      %v769 = vsel %vm442, %v760, 0
      %v772 = vsel %vm442, %v761, 0
      %774 = vmatprep.subr.bf16.mxu0 %v769
      %775 = vmatpush1.bf16.msra.mxu0 %v766
      %776 = vmatprep.subr.bf16.mxu0 0
      %777 = vmatpush1.bf16.msra.mxu0 0
      %778 = vmatprep.subr.bf16.mxu0 0
      %779 = vmatpush1.bf16.msra.mxu0 0
      %780 = vmatprep.subr.bf16.mxu0 0
      %781 = vmatpush1.bf16.msra.mxu0 0
      %782 = vmatprep.subr.bf16.mxu0 0
      %783 = vmatpush1.bf16.msra.mxu0 0
      %784 = vmatprep.subr.bf16.mxu0 0
      %785 = vmatpush1.bf16.msra.mxu0 0
      %786 = vmatprep.subr.bf16.mxu0 0
      %787 = vmatpush1.bf16.msra.mxu0 0
      %788 = vmatprep.subr.bf16.mxu0 0
      %789 = vmatpush1.bf16.msra.mxu0 0
      %790 = vmatprep.subr.bf16.mxu0 0
      %791 = vmatpush1.bf16.msra.mxu0 0
      %792 = vmatprep.subr.bf16.mxu0 0
      %793 = vmatpush1.bf16.msra.mxu0 0
      %794 = vmatprep.subr.bf16.mxu0 0
      %795 = vmatpush1.bf16.msra.mxu0 0
      %796 = vmatprep.subr.bf16.mxu0 0
      %797 = vmatpush1.bf16.msra.mxu0 0
      %798 = vmatprep.subr.bf16.mxu0 0
      %799 = vmatpush1.bf16.msra.mxu0 0
      %800 = vmatprep.subr.bf16.mxu0 0
      %801 = vmatpush1.bf16.msra.mxu0 0
      %802 = vmatprep.subr.bf16.mxu0 0
      %803 = vmatpush1.bf16.msra.mxu0 0
      %804 = vmatprep.subr.bf16.mxu0 0
      %805 = vmatpush1.bf16.msra.mxu0 0
      %806 = vmatprep.mubr.bf16.mxu0 0
      %807 = vmatmul.mubr.bf16.gmra.mrb[0].mxu0 %v763
      %v808 = vpop.f32.mrb[0].mxu0
      %v809 = vadd.f32 0.0, %v808
      %v810 = vpop.f32.mrb[0].mxu0
      %v811 = vadd.f32 0.0, %v810
      %v812 = vpop.f32.mrb[0].mxu0
      %v813 = vpop.f32.mrb[0].mxu0
      %814 = vdwg.mxu0
      %815 = vmatprep.subr.bf16.mxu0 0
      %816 = vmatpush1.bf16.msra.mxu0 %v772
      %817 = vmatprep.subr.bf16.mxu0 0
      %818 = vmatpush1.bf16.msra.mxu0 0
      %819 = vmatprep.subr.bf16.mxu0 0
      %820 = vmatpush1.bf16.msra.mxu0 0
      %821 = vmatprep.subr.bf16.mxu0 0
      %822 = vmatpush1.bf16.msra.mxu0 0
      %823 = vmatprep.subr.bf16.mxu0 0
      %824 = vmatpush1.bf16.msra.mxu0 0
      %825 = vmatprep.subr.bf16.mxu0 0
      %826 = vmatpush1.bf16.msra.mxu0 0
      %827 = vmatprep.subr.bf16.mxu0 0
      %828 = vmatpush1.bf16.msra.mxu0 0
      %829 = vmatprep.subr.bf16.mxu0 0
      %830 = vmatpush1.bf16.msra.mxu0 0
      %831 = vmatprep.subr.bf16.mxu0 0
      %832 = vmatpush1.bf16.msra.mxu0 0
      %833 = vmatprep.subr.bf16.mxu0 0
      %834 = vmatpush1.bf16.msra.mxu0 0
      %835 = vmatprep.subr.bf16.mxu0 0
      %836 = vmatpush1.bf16.msra.mxu0 0
      %837 = vmatprep.subr.bf16.mxu0 0
      %838 = vmatpush1.bf16.msra.mxu0 0
      %839 = vmatprep.subr.bf16.mxu0 0
      %840 = vmatpush1.bf16.msra.mxu0 0
      %841 = vmatprep.subr.bf16.mxu0 0
      %842 = vmatpush1.bf16.msra.mxu0 0
      %843 = vmatprep.subr.bf16.mxu0 0
      %844 = vmatpush1.bf16.msra.mxu0 0
      %845 = vmatprep.subr.bf16.mxu0 0
      %846 = vmatpush1.bf16.msra.mxu0 0
      %847 = vmatprep.mubr.bf16.mxu0 0
      %848 = vmatmul.mubr.bf16.gmra.mrb[0].mxu0 %v763
      %v849 = vpop.f32.mrb[0].mxu0
      %v850 = vadd.f32 0.0, %v849
      %v851 = vpop.f32.mrb[0].mxu0
      %v852 = vpop.f32.mrb[0].mxu0
      %v853 = vpop.f32.mrb[0].mxu0
      %854 = vdwg.mxu0
      %v855 = vadd.f32 %v745, %v809
      %v856 = vadd.f32 %v746, %v811
      %v857 = vadd.f32 %v747, %v850
      %s858 = scalar_lea.vmem %s1, 16
      %v859 = vld [vmem:[%s858] sm:$0xf]
      %v860 = vld [vmem:[#allocation2 + $0x4] sm:$0xff]
      %v861 = vld [vmem:[#allocation2 + $0xc] sm:$0xf]
      %v864 = vunpack.c.l.b16 %v860
      %v865 = vunpack.c.h.b16 %v860
      %v866 = vunpack.c.l.b16 %v861
      %v867 = vpack.c.b16 %v864, %v864
      %v868 = vpack.c.b16 %v865, %v865
      %v869 = vpack.c.b16 %v866, %v866
      %v871 = vsel %vm438, %v859, 0
      %v874 = vsel %vm442, %v867, 0
      %v877 = vsel %vm442, %v868, 0
      %v880 = vsel %vm442, %v869, 0
      %882 = vmatprep.subr.bf16.mxu0 %v877
      %883 = vmatpush1.bf16.msra.mxu0 %v874
      %884 = vmatprep.subr.bf16.mxu0 0
      %885 = vmatpush1.bf16.msra.mxu0 0
      %886 = vmatprep.subr.bf16.mxu0 0
      %887 = vmatpush1.bf16.msra.mxu0 0
      %888 = vmatprep.subr.bf16.mxu0 0
      %889 = vmatpush1.bf16.msra.mxu0 0
      %890 = vmatprep.subr.bf16.mxu0 0
      %891 = vmatpush1.bf16.msra.mxu0 0
      %892 = vmatprep.subr.bf16.mxu0 0
      %893 = vmatpush1.bf16.msra.mxu0 0
      %894 = vmatprep.subr.bf16.mxu0 0
      %895 = vmatpush1.bf16.msra.mxu0 0
      %896 = vmatprep.subr.bf16.mxu0 0
      %897 = vmatpush1.bf16.msra.mxu0 0
      %898 = vmatprep.subr.bf16.mxu0 0
      %899 = vmatpush1.bf16.msra.mxu0 0
      %900 = vmatprep.subr.bf16.mxu0 0
      %901 = vmatpush1.bf16.msra.mxu0 0
      %902 = vmatprep.subr.bf16.mxu0 0
      %903 = vmatpush1.bf16.msra.mxu0 0
      %904 = vmatprep.subr.bf16.mxu0 0
      %905 = vmatpush1.bf16.msra.mxu0 0
      %906 = vmatprep.subr.bf16.mxu0 0
      %907 = vmatpush1.bf16.msra.mxu0 0
      %908 = vmatprep.subr.bf16.mxu0 0
      %909 = vmatpush1.bf16.msra.mxu0 0
      %910 = vmatprep.subr.bf16.mxu0 0
      %911 = vmatpush1.bf16.msra.mxu0 0
      %912 = vmatprep.subr.bf16.mxu0 0
      %913 = vmatpush1.bf16.msra.mxu0 0
      %914 = vmatprep.mubr.bf16.mxu0 0
      %915 = vmatmul.mubr.bf16.gmra.mrb[0].mxu0 %v871
      %v916 = vpop.f32.mrb[0].mxu0
      %v917 = vadd.f32 0.0, %v916
      %v918 = vpop.f32.mrb[0].mxu0
      %v919 = vadd.f32 0.0, %v918
      %v920 = vpop.f32.mrb[0].mxu0
      %v921 = vpop.f32.mrb[0].mxu0
      %922 = vdwg.mxu0
      %923 = vmatprep.subr.bf16.mxu0 0
      %924 = vmatpush1.bf16.msra.mxu0 %v880
      %925 = vmatprep.subr.bf16.mxu0 0
      %926 = vmatpush1.bf16.msra.mxu0 0
      %927 = vmatprep.subr.bf16.mxu0 0
      %928 = vmatpush1.bf16.msra.mxu0 0
      %929 = vmatprep.subr.bf16.mxu0 0
      %930 = vmatpush1.bf16.msra.mxu0 0
      %931 = vmatprep.subr.bf16.mxu0 0
      %932 = vmatpush1.bf16.msra.mxu0 0
      %933 = vmatprep.subr.bf16.mxu0 0
      %934 = vmatpush1.bf16.msra.mxu0 0
      %935 = vmatprep.subr.bf16.mxu0 0
      %936 = vmatpush1.bf16.msra.mxu0 0
      %937 = vmatprep.subr.bf16.mxu0 0
      %938 = vmatpush1.bf16.msra.mxu0 0
      %939 = vmatprep.subr.bf16.mxu0 0
      %940 = vmatpush1.bf16.msra.mxu0 0
      %941 = vmatprep.subr.bf16.mxu0 0
      %942 = vmatpush1.bf16.msra.mxu0 0
      %943 = vmatprep.subr.bf16.mxu0 0
      %944 = vmatpush1.bf16.msra.mxu0 0
      %945 = vmatprep.subr.bf16.mxu0 0
      %946 = vmatpush1.bf16.msra.mxu0 0
      %947 = vmatprep.subr.bf16.mxu0 0
      %948 = vmatpush1.bf16.msra.mxu0 0
      %949 = vmatprep.subr.bf16.mxu0 0
      %950 = vmatpush1.bf16.msra.mxu0 0
      %951 = vmatprep.subr.bf16.mxu0 0
      %952 = vmatpush1.bf16.msra.mxu0 0
      %953 = vmatprep.subr.bf16.mxu0 0
      %954 = vmatpush1.bf16.msra.mxu0 0
      %955 = vmatprep.mubr.bf16.mxu0 0
      %956 = vmatmul.mubr.bf16.gmra.mrb[0].mxu0 %v871
      %v957 = vpop.f32.mrb[0].mxu0
      %v958 = vadd.f32 0.0, %v957
      %v959 = vpop.f32.mrb[0].mxu0
      %v960 = vpop.f32.mrb[0].mxu0
      %v961 = vpop.f32.mrb[0].mxu0
      %962 = vdwg.mxu0
      %v963 = vadd.f32 %v855, %v917
      %v964 = vadd.f32 %v856, %v919
      %v965 = vadd.f32 %v857, %v958
      %s966 = scalar_lea.vmem %s1, 20
      %v967 = vld [vmem:[%s966] sm:$0xf]
      %968 = vrot.lane.b32.xlu0 %v867, 127
      %v969 = vpop.permute.xlu0 %968
      %970 = vrot.lane.b32.xlu0 %v868, 127
      %v971 = vpop.permute.xlu0 %970
      %972 = vrot.lane.b32.xlu0 %v869, 127
      %v973 = vpop.permute.xlu0 %972
      %vm974 = vcmask 1039360
      %v975 = vsel %vm974, %v969, %v971
      %v976 = vsel %vm974, %v971, %v973
      %v978 = vsel %vm438, %v967, 0
      %v981 = vsel %vm442, %v975, 0
      %v984 = vsel %vm442, %v976, 0
      %v987 = vsel %vm442, %v973, 0
      %989 = vmatprep.subr.bf16.mxu0 %v984
      %990 = vmatpush1.bf16.msra.mxu0 %v981
      %991 = vmatprep.subr.bf16.mxu0 0
      %992 = vmatpush1.bf16.msra.mxu0 0
      %993 = vmatprep.subr.bf16.mxu0 0
      %994 = vmatpush1.bf16.msra.mxu0 0
      %995 = vmatprep.subr.bf16.mxu0 0
      %996 = vmatpush1.bf16.msra.mxu0 0
      %997 = vmatprep.subr.bf16.mxu0 0
      %998 = vmatpush1.bf16.msra.mxu0 0
      %999 = vmatprep.subr.bf16.mxu0 0
      %1000 = vmatpush1.bf16.msra.mxu0 0
      %1001 = vmatprep.subr.bf16.mxu0 0
      %1002 = vmatpush1.bf16.msra.mxu0 0
      %1003 = vmatprep.subr.bf16.mxu0 0
      %1004 = vmatpush1.bf16.msra.mxu0 0
      %1005 = vmatprep.subr.bf16.mxu0 0
      %1006 = vmatpush1.bf16.msra.mxu0 0
      %1007 = vmatprep.subr.bf16.mxu0 0
      %1008 = vmatpush1.bf16.msra.mxu0 0
      %1009 = vmatprep.subr.bf16.mxu0 0
      %1010 = vmatpush1.bf16.msra.mxu0 0
      %1011 = vmatprep.subr.bf16.mxu0 0
      %1012 = vmatpush1.bf16.msra.mxu0 0
      %1013 = vmatprep.subr.bf16.mxu0 0
      %1014 = vmatpush1.bf16.msra.mxu0 0
      %1015 = vmatprep.subr.bf16.mxu0 0
      %1016 = vmatpush1.bf16.msra.mxu0 0
      %1017 = vmatprep.subr.bf16.mxu0 0
      %1018 = vmatpush1.bf16.msra.mxu0 0
      %1019 = vmatprep.subr.bf16.mxu0 0
      %1020 = vmatpush1.bf16.msra.mxu0 0
      %1021 = vmatprep.mubr.bf16.mxu0 0
      %1022 = vmatmul.mubr.bf16.gmra.mrb[0].mxu0 %v978
      %v1023 = vpop.f32.mrb[0].mxu0
      %v1024 = vadd.f32 0.0, %v1023
      %v1025 = vpop.f32.mrb[0].mxu0
      %v1026 = vadd.f32 0.0, %v1025
      %v1027 = vpop.f32.mrb[0].mxu0
      %v1028 = vpop.f32.mrb[0].mxu0
      %1029 = vdwg.mxu0
      %1030 = vmatprep.subr.bf16.mxu0 0
      %1031 = vmatpush1.bf16.msra.mxu0 %v987
      %1032 = vmatprep.subr.bf16.mxu0 0
      %1033 = vmatpush1.bf16.msra.mxu0 0
      %1034 = vmatprep.subr.bf16.mxu0 0
      %1035 = vmatpush1.bf16.msra.mxu0 0
      %1036 = vmatprep.subr.bf16.mxu0 0
      %1037 = vmatpush1.bf16.msra.mxu0 0
      %1038 = vmatprep.subr.bf16.mxu0 0
      %1039 = vmatpush1.bf16.msra.mxu0 0
      %1040 = vmatprep.subr.bf16.mxu0 0
      %1041 = vmatpush1.bf16.msra.mxu0 0
      %1042 = vmatprep.subr.bf16.mxu0 0
      %1043 = vmatpush1.bf16.msra.mxu0 0
      %1044 = vmatprep.subr.bf16.mxu0 0
      %1045 = vmatpush1.bf16.msra.mxu0 0
      %1046 = vmatprep.subr.bf16.mxu0 0
      %1047 = vmatpush1.bf16.msra.mxu0 0
      %1048 = vmatprep.subr.bf16.mxu0 0
      %1049 = vmatpush1.bf16.msra.mxu0 0
      %1050 = vmatprep.subr.bf16.mxu0 0
      %1051 = vmatpush1.bf16.msra.mxu0 0
      %1052 = vmatprep.subr.bf16.mxu0 0
      %1053 = vmatpush1.bf16.msra.mxu0 0
      %1054 = vmatprep.subr.bf16.mxu0 0
      %1055 = vmatpush1.bf16.msra.mxu0 0
      %1056 = vmatprep.subr.bf16.mxu0 0
      %1057 = vmatpush1.bf16.msra.mxu0 0
      %1058 = vmatprep.subr.bf16.mxu0 0
      %1059 = vmatpush1.bf16.msra.mxu0 0
      %1060 = vmatprep.subr.bf16.mxu0 0
      %1061 = vmatpush1.bf16.msra.mxu0 0
      %1062 = vmatprep.mubr.bf16.mxu0 0
      %1063 = vmatmul.mubr.bf16.gmra.mrb[0].mxu0 %v978
      %v1064 = vpop.f32.mrb[0].mxu0
      %v1065 = vadd.f32 0.0, %v1064
      %v1066 = vpop.f32.mrb[0].mxu0
      %v1067 = vpop.f32.mrb[0].mxu0
      %v1068 = vpop.f32.mrb[0].mxu0
      %1069 = vdwg.mxu0
      %v1070 = vadd.f32 %v963, %v1024
      %v1071 = vadd.f32 %v964, %v1026
      %v1072 = vadd.f32 %v965, %v1065
      %s1073 = scalar_lea.vmem %s1, 24
      %v1074 = vld [vmem:[%s1073] sm:$0xf]
      %1075 = vrot.lane.b32.xlu0 %v867, 111
      %v1076 = vpop.permute.xlu0 %1075
      %1077 = vrot.lane.b32.xlu0 %v868, 111
      %v1078 = vpop.permute.xlu0 %1077
      %1079 = vrot.lane.b32.xlu0 %v869, 111
      %v1080 = vpop.permute.xlu0 %1079
      %vm1081 = vcmask 908288
      %v1082 = vsel %vm1081, %v1076, %v1078
      %v1083 = vsel %vm1081, %v1078, %v1080
      %v1085 = vsel %vm438, %v1074, 0
      %v1088 = vsel %vm442, %v1082, 0
      %v1091 = vsel %vm442, %v1083, 0
      %v1094 = vsel %vm442, %v1080, 0
      %1096 = vmatprep.subr.bf16.mxu0 %v1091
      %1097 = vmatpush1.bf16.msra.mxu0 %v1088
      %1098 = vmatprep.subr.bf16.mxu0 0
      %1099 = vmatpush1.bf16.msra.mxu0 0
      %1100 = vmatprep.subr.bf16.mxu0 0
      %1101 = vmatpush1.bf16.msra.mxu0 0
      %1102 = vmatprep.subr.bf16.mxu0 0
      %1103 = vmatpush1.bf16.msra.mxu0 0
      %1104 = vmatprep.subr.bf16.mxu0 0
      %1105 = vmatpush1.bf16.msra.mxu0 0
      %1106 = vmatprep.subr.bf16.mxu0 0
      %1107 = vmatpush1.bf16.msra.mxu0 0
      %1108 = vmatprep.subr.bf16.mxu0 0
      %1109 = vmatpush1.bf16.msra.mxu0 0
      %1110 = vmatprep.subr.bf16.mxu0 0
      %1111 = vmatpush1.bf16.msra.mxu0 0
      %1112 = vmatprep.subr.bf16.mxu0 0
      %1113 = vmatpush1.bf16.msra.mxu0 0
      %1114 = vmatprep.subr.bf16.mxu0 0
      %1115 = vmatpush1.bf16.msra.mxu0 0
      %1116 = vmatprep.subr.bf16.mxu0 0
      %1117 = vmatpush1.bf16.msra.mxu0 0
      %1118 = vmatprep.subr.bf16.mxu0 0
      %1119 = vmatpush1.bf16.msra.mxu0 0
      %1120 = vmatprep.subr.bf16.mxu0 0
      %1121 = vmatpush1.bf16.msra.mxu0 0
      %1122 = vmatprep.subr.bf16.mxu0 0
      %1123 = vmatpush1.bf16.msra.mxu0 0
      %1124 = vmatprep.subr.bf16.mxu0 0
      %1125 = vmatpush1.bf16.msra.mxu0 0
      %1126 = vmatprep.subr.bf16.mxu0 0
      %1127 = vmatpush1.bf16.msra.mxu0 0
      %1128 = vmatprep.mubr.bf16.mxu0 0
      %1129 = vmatmul.mubr.bf16.gmra.mrb[0].mxu0 %v1085
      %v1130 = vpop.f32.mrb[0].mxu0
      %v1131 = vadd.f32 0.0, %v1130
      %v1132 = vpop.f32.mrb[0].mxu0
      %v1133 = vadd.f32 0.0, %v1132
      %v1134 = vpop.f32.mrb[0].mxu0
      %v1135 = vpop.f32.mrb[0].mxu0
      %1136 = vdwg.mxu0
      %1137 = vmatprep.subr.bf16.mxu0 0
      %1138 = vmatpush1.bf16.msra.mxu0 %v1094
      %1139 = vmatprep.subr.bf16.mxu0 0
      %1140 = vmatpush1.bf16.msra.mxu0 0
      %1141 = vmatprep.subr.bf16.mxu0 0
      %1142 = vmatpush1.bf16.msra.mxu0 0
      %1143 = vmatprep.subr.bf16.mxu0 0
      %1144 = vmatpush1.bf16.msra.mxu0 0
      %1145 = vmatprep.subr.bf16.mxu0 0
      %1146 = vmatpush1.bf16.msra.mxu0 0
      %1147 = vmatprep.subr.bf16.mxu0 0
      %1148 = vmatpush1.bf16.msra.mxu0 0
      %1149 = vmatprep.subr.bf16.mxu0 0
      %1150 = vmatpush1.bf16.msra.mxu0 0
      %1151 = vmatprep.subr.bf16.mxu0 0
      %1152 = vmatpush1.bf16.msra.mxu0 0
      %1153 = vmatprep.subr.bf16.mxu0 0
      %1154 = vmatpush1.bf16.msra.mxu0 0
      %1155 = vmatprep.subr.bf16.mxu0 0
      %1156 = vmatpush1.bf16.msra.mxu0 0
      %1157 = vmatprep.subr.bf16.mxu0 0
      %1158 = vmatpush1.bf16.msra.mxu0 0
      %1159 = vmatprep.subr.bf16.mxu0 0
      %1160 = vmatpush1.bf16.msra.mxu0 0
      %1161 = vmatprep.subr.bf16.mxu0 0
      %1162 = vmatpush1.bf16.msra.mxu0 0
      %1163 = vmatprep.subr.bf16.mxu0 0
      %1164 = vmatpush1.bf16.msra.mxu0 0
      %1165 = vmatprep.subr.bf16.mxu0 0
      %1166 = vmatpush1.bf16.msra.mxu0 0
      %1167 = vmatprep.subr.bf16.mxu0 0
      %1168 = vmatpush1.bf16.msra.mxu0 0
      %1169 = vmatprep.mubr.bf16.mxu0 0
      %1170 = vmatmul.mubr.bf16.gmra.mrb[0].mxu0 %v1085
      %v1171 = vpop.f32.mrb[0].mxu0
      %v1172 = vadd.f32 0.0, %v1171
      %v1173 = vpop.f32.mrb[0].mxu0
      %v1174 = vpop.f32.mrb[0].mxu0
      %v1175 = vpop.f32.mrb[0].mxu0
      %1176 = vdwg.mxu0
      %v1177 = vadd.f32 %v1070, %v1131
      %v1178 = vadd.f32 %v1071, %v1133
      %v1179 = vadd.f32 %v1072, %v1172
      %s1180 = scalar_lea.vmem %s1, 28
      %v1181 = vld [vmem:[%s1180] sm:$0xf]
      %1182 = vrot.lane.b32.xlu0 %v867, 110
      %v1183 = vpop.permute.xlu0 %1182
      %1184 = vrot.lane.b32.xlu0 %v868, 110
      %v1185 = vpop.permute.xlu0 %1184
      %1186 = vrot.lane.b32.xlu0 %v869, 110
      %v1187 = vpop.permute.xlu0 %1186
      %vm1188 = vcmask 900096
      %v1189 = vsel %vm1188, %v1183, %v1185
      %v1190 = vsel %vm1188, %v1185, %v1187
      %v1192 = vsel %vm438, %v1181, 0
      %v1195 = vsel %vm442, %v1189, 0
      %v1198 = vsel %vm442, %v1190, 0
      %v1201 = vsel %vm442, %v1187, 0
      %1203 = vmatprep.subr.bf16.mxu0 %v1198
      %1204 = vmatpush1.bf16.msra.mxu0 %v1195
      %1205 = vmatprep.subr.bf16.mxu0 0
      %1206 = vmatpush1.bf16.msra.mxu0 0
      %1207 = vmatprep.subr.bf16.mxu0 0
      %1208 = vmatpush1.bf16.msra.mxu0 0
      %1209 = vmatprep.subr.bf16.mxu0 0
      %1210 = vmatpush1.bf16.msra.mxu0 0
      %1211 = vmatprep.subr.bf16.mxu0 0
      %1212 = vmatpush1.bf16.msra.mxu0 0
      %1213 = vmatprep.subr.bf16.mxu0 0
      %1214 = vmatpush1.bf16.msra.mxu0 0
      %1215 = vmatprep.subr.bf16.mxu0 0
      %1216 = vmatpush1.bf16.msra.mxu0 0
      %1217 = vmatprep.subr.bf16.mxu0 0
      %1218 = vmatpush1.bf16.msra.mxu0 0
      %1219 = vmatprep.subr.bf16.mxu0 0
      %1220 = vmatpush1.bf16.msra.mxu0 0
      %1221 = vmatprep.subr.bf16.mxu0 0
      %1222 = vmatpush1.bf16.msra.mxu0 0
      %1223 = vmatprep.subr.bf16.mxu0 0
      %1224 = vmatpush1.bf16.msra.mxu0 0
      %1225 = vmatprep.subr.bf16.mxu0 0
      %1226 = vmatpush1.bf16.msra.mxu0 0
      %1227 = vmatprep.subr.bf16.mxu0 0
      %1228 = vmatpush1.bf16.msra.mxu0 0
      %1229 = vmatprep.subr.bf16.mxu0 0
      %1230 = vmatpush1.bf16.msra.mxu0 0
      %1231 = vmatprep.subr.bf16.mxu0 0
      %1232 = vmatpush1.bf16.msra.mxu0 0
      %1233 = vmatprep.subr.bf16.mxu0 0
      %1234 = vmatpush1.bf16.msra.mxu0 0
      %1235 = vmatprep.mubr.bf16.mxu0 0
      %1236 = vmatmul.mubr.bf16.gmra.mrb[0].mxu0 %v1192
      %v1237 = vpop.f32.mrb[0].mxu0
      %v1238 = vadd.f32 0.0, %v1237
      %v1239 = vpop.f32.mrb[0].mxu0
      %v1240 = vadd.f32 0.0, %v1239
      %v1241 = vpop.f32.mrb[0].mxu0
      %v1242 = vpop.f32.mrb[0].mxu0
      %1243 = vdwg.mxu0
      %1244 = vmatprep.subr.bf16.mxu0 0
      %1245 = vmatpush1.bf16.msra.mxu0 %v1201
      %1246 = vmatprep.subr.bf16.mxu0 0
      %1247 = vmatpush1.bf16.msra.mxu0 0
      %1248 = vmatprep.subr.bf16.mxu0 0
      %1249 = vmatpush1.bf16.msra.mxu0 0
      %1250 = vmatprep.subr.bf16.mxu0 0
      %1251 = vmatpush1.bf16.msra.mxu0 0
      %1252 = vmatprep.subr.bf16.mxu0 0
      %1253 = vmatpush1.bf16.msra.mxu0 0
      %1254 = vmatprep.subr.bf16.mxu0 0
      %1255 = vmatpush1.bf16.msra.mxu0 0
      %1256 = vmatprep.subr.bf16.mxu0 0
      %1257 = vmatpush1.bf16.msra.mxu0 0
      %1258 = vmatprep.subr.bf16.mxu0 0
      %1259 = vmatpush1.bf16.msra.mxu0 0
      %1260 = vmatprep.subr.bf16.mxu0 0
      %1261 = vmatpush1.bf16.msra.mxu0 0
      %1262 = vmatprep.subr.bf16.mxu0 0
      %1263 = vmatpush1.bf16.msra.mxu0 0
      %1264 = vmatprep.subr.bf16.mxu0 0
      %1265 = vmatpush1.bf16.msra.mxu0 0
      %1266 = vmatprep.subr.bf16.mxu0 0
      %1267 = vmatpush1.bf16.msra.mxu0 0
      %1268 = vmatprep.subr.bf16.mxu0 0
      %1269 = vmatpush1.bf16.msra.mxu0 0
      %1270 = vmatprep.subr.bf16.mxu0 0
      %1271 = vmatpush1.bf16.msra.mxu0 0
      %1272 = vmatprep.subr.bf16.mxu0 0
      %1273 = vmatpush1.bf16.msra.mxu0 0
      %1274 = vmatprep.subr.bf16.mxu0 0
      %1275 = vmatpush1.bf16.msra.mxu0 0
      %1276 = vmatprep.mubr.bf16.mxu0 0
      %1277 = vmatmul.mubr.bf16.gmra.mrb[0].mxu0 %v1192
      %v1278 = vpop.f32.mrb[0].mxu0
      %v1279 = vadd.f32 0.0, %v1278
      %v1280 = vpop.f32.mrb[0].mxu0
      %v1281 = vpop.f32.mrb[0].mxu0
      %v1282 = vpop.f32.mrb[0].mxu0
      %1283 = vdwg.mxu0
      %v1284 = vadd.f32 %v1177, %v1238
      %v1285 = vadd.f32 %v1178, %v1240
      %v1286 = vadd.f32 %v1179, %v1279
      %s1287 = scalar_lea.vmem %s1, 32
      %v1288 = vld [vmem:[%s1287] sm:$0xf]
      %1289 = vrot.lane.b32.xlu0 %v867, 109
      %v1290 = vpop.permute.xlu0 %1289
      %1291 = vrot.lane.b32.xlu0 %v868, 109
      %v1292 = vpop.permute.xlu0 %1291
      %1293 = vrot.lane.b32.xlu0 %v869, 109
      %v1294 = vpop.permute.xlu0 %1293
      %vm1295 = vcmask 891904
      %v1296 = vsel %vm1295, %v1290, %v1292
      %v1297 = vsel %vm1295, %v1292, %v1294
      %v1299 = vsel %vm438, %v1288, 0
      %v1302 = vsel %vm442, %v1296, 0
      %v1305 = vsel %vm442, %v1297, 0
      %v1308 = vsel %vm442, %v1294, 0
      %1310 = vmatprep.subr.bf16.mxu0 %v1305
      %1311 = vmatpush1.bf16.msra.mxu0 %v1302
      %1312 = vmatprep.subr.bf16.mxu0 0
      %1313 = vmatpush1.bf16.msra.mxu0 0
      %1314 = vmatprep.subr.bf16.mxu0 0
      %1315 = vmatpush1.bf16.msra.mxu0 0
      %1316 = vmatprep.subr.bf16.mxu0 0
      %1317 = vmatpush1.bf16.msra.mxu0 0
      %1318 = vmatprep.subr.bf16.mxu0 0
      %1319 = vmatpush1.bf16.msra.mxu0 0
      %1320 = vmatprep.subr.bf16.mxu0 0
      %1321 = vmatpush1.bf16.msra.mxu0 0
      %1322 = vmatprep.subr.bf16.mxu0 0
      %1323 = vmatpush1.bf16.msra.mxu0 0
      %1324 = vmatprep.subr.bf16.mxu0 0
      %1325 = vmatpush1.bf16.msra.mxu0 0
      %1326 = vmatprep.subr.bf16.mxu0 0
      %1327 = vmatpush1.bf16.msra.mxu0 0
      %1328 = vmatprep.subr.bf16.mxu0 0
      %1329 = vmatpush1.bf16.msra.mxu0 0
      %1330 = vmatprep.subr.bf16.mxu0 0
      %1331 = vmatpush1.bf16.msra.mxu0 0
      %1332 = vmatprep.subr.bf16.mxu0 0
      %1333 = vmatpush1.bf16.msra.mxu0 0
      %1334 = vmatprep.subr.bf16.mxu0 0
      %1335 = vmatpush1.bf16.msra.mxu0 0
      %1336 = vmatprep.subr.bf16.mxu0 0
      %1337 = vmatpush1.bf16.msra.mxu0 0
      %1338 = vmatprep.subr.bf16.mxu0 0
      %1339 = vmatpush1.bf16.msra.mxu0 0
      %1340 = vmatprep.subr.bf16.mxu0 0
      %1341 = vmatpush1.bf16.msra.mxu0 0
      %1342 = vmatprep.mubr.bf16.mxu0 0
      %1343 = vmatmul.mubr.bf16.gmra.mrb[0].mxu0 %v1299
      %v1344 = vpop.f32.mrb[0].mxu0
      %v1345 = vadd.f32 0.0, %v1344
      %v1346 = vpop.f32.mrb[0].mxu0
      %v1347 = vadd.f32 0.0, %v1346
      %v1348 = vpop.f32.mrb[0].mxu0
      %v1349 = vpop.f32.mrb[0].mxu0
      %1350 = vdwg.mxu0
      %1351 = vmatprep.subr.bf16.mxu0 0
      %1352 = vmatpush1.bf16.msra.mxu0 %v1308
      %1353 = vmatprep.subr.bf16.mxu0 0
      %1354 = vmatpush1.bf16.msra.mxu0 0
      %1355 = vmatprep.subr.bf16.mxu0 0
      %1356 = vmatpush1.bf16.msra.mxu0 0
      %1357 = vmatprep.subr.bf16.mxu0 0
      %1358 = vmatpush1.bf16.msra.mxu0 0
      %1359 = vmatprep.subr.bf16.mxu0 0
      %1360 = vmatpush1.bf16.msra.mxu0 0
      %1361 = vmatprep.subr.bf16.mxu0 0
      %1362 = vmatpush1.bf16.msra.mxu0 0
      %1363 = vmatprep.subr.bf16.mxu0 0
      %1364 = vmatpush1.bf16.msra.mxu0 0
      %1365 = vmatprep.subr.bf16.mxu0 0
      %1366 = vmatpush1.bf16.msra.mxu0 0
      %1367 = vmatprep.subr.bf16.mxu0 0
      %1368 = vmatpush1.bf16.msra.mxu0 0
      %1369 = vmatprep.subr.bf16.mxu0 0
      %1370 = vmatpush1.bf16.msra.mxu0 0
      %1371 = vmatprep.subr.bf16.mxu0 0
      %1372 = vmatpush1.bf16.msra.mxu0 0
      %1373 = vmatprep.subr.bf16.mxu0 0
      %1374 = vmatpush1.bf16.msra.mxu0 0
      %1375 = vmatprep.subr.bf16.mxu0 0
      %1376 = vmatpush1.bf16.msra.mxu0 0
      %1377 = vmatprep.subr.bf16.mxu0 0
      %1378 = vmatpush1.bf16.msra.mxu0 0
      %1379 = vmatprep.subr.bf16.mxu0 0
      %1380 = vmatpush1.bf16.msra.mxu0 0
      %1381 = vmatprep.subr.bf16.mxu0 0
      %1382 = vmatpush1.bf16.msra.mxu0 0
      %1383 = vmatprep.mubr.bf16.mxu0 0
      %1384 = vmatmul.mubr.bf16.gmra.mrb[0].mxu0 %v1299
      %v1385 = vpop.f32.mrb[0].mxu0
      %v1386 = vadd.f32 0.0, %v1385
      %v1387 = vpop.f32.mrb[0].mxu0
      %v1388 = vpop.f32.mrb[0].mxu0
      %v1389 = vpop.f32.mrb[0].mxu0
      %1390 = vdwg.mxu0
      %v1391 = vadd.f32 %v1284, %v1345
      %v1392 = vadd.f32 %v1285, %v1347
      %v1393 = vadd.f32 %v1286, %v1386
      %1394 = vst [vmem:[%s316] sm:$0xff] 0
      %1395 = vst [vmem:[%s316 + $0x8] sm:$0xff] 0
      %v1396 = vpack.c.bf16 %v1391, %v1391
      %v1397 = vpack.c.bf16 %v1392, %v1392
      %v1398 = vpack.c.bf16 %v1393, %v1393
      %v1402 = vunpack.c.l.b16 %v1396
      %v1403 = vunpack.c.l.b16 %v1397
      %v1404 = vunpack.c.l.b16 %v1398
      %v1405 = vpack.c.b16 %v1403, %v1402
      %v1406 = vpack.c.b16 %v1404, %v1404
      %1409 = vst [vmem:[%s316 + $0x4] sm:$0xff] %v1405
      %vm1410 = vcmask 257024
      %1411 = vst.msk [vmem:[%s316 + $0xc] sm:$0xf] %vm1410, %v1406
      %v1413 = vlaneseq
      %v1414 = vshrl.u32 %v1413, 7
      %v1415 = vsub.s32 0, %v1414
      %v1416 = vrot.slane %v326, %v1415
      %v1417 = vlaneseq
      %v1418 = vshrl.u32 %v1417, 7
      %v1419 = vsub.s32 1, %v1418
      %v1420 = vrot.slane %v326, %v1419
      %v1421 = vlaneseq
      %v1422 = vshrl.u32 %v1421, 7
      %v1423 = vsub.s32 2, %v1422
      %v1424 = vrot.slane %v326, %v1423
      %v1428 = vmul.f32 %v1391, %v1416
      %v1429 = vmul.f32 %v1392, %v1420
      %v1430 = vmul.f32 %v1393, %v1424
      %v1431 = vadd.f32 %v1428, %v1429
      %vm1432 = vcmask 261120
      %v1433 = vsel %vm1432, %v1430, 0.0
      %v1434 = vadd.f32 %v1431, %v1433
      %1435 = vadd.xlane.f32.xlu0 %v1434
      %v1436 = vpop.xlane.xlu0 %1435
      %v1437 = vmul.f32 %v1428, %v1391
      %v1438 = vmul.f32 %v1429, %v1392
      %v1439 = vmul.f32 %v1430, %v1393
      %v1440 = vadd.f32 %v1437, %v1438
      %v1441 = vsel %vm1432, %v1439, 0.0
      %v1442 = vadd.f32 %v1440, %v1441
      %1443 = vadd.xlane.f32.xlu0 %v1442
      %v1444 = vpop.xlane.xlu0 %1443
      %vm1445 = vcmask 7168
      %v1446 = vsel %vm1445, %v1436, %v1444
      %vm1447 = vcmask 15360
      %1448 = vst.msk [vmem:[%s323] sm:$0xff] %vm1447, %v1446
      %p1449 = scmp.lt.s32.totalorder %s22, 1
      %s1450 = scalar_select %p1449, %s22, 1
      %p1451 = scmp.lt.s32.totalorder %s23, 0
      %s1452 = scalar_select %p1451, %s23, 0
      %s1453 = smul.addr %s1452, 4
      %s1454 = smul.addr %s1450, 4
      %s1455 = sadd.s32 %s1453, %s1454
      %s1456 = smul.addr %s1455, 4
      %s1457 = scalar_lea.vmem %s5, %s1456
      %p1458 = scmp.lt.s32.totalorder %s22, 1
      %s1459 = scalar_select %p1458, %s22, 1
      %p1460 = scmp.lt.s32.totalorder %s23, 0
      %s1461 = scalar_select %p1460, %s23, 0
      %s1462 = sadd.s32 %s1461, %s1459
      %s1463 = smul.addr %s1462, 8
      %s1464 = scalar_lea.vmem %s6, %s1463
      // Predicated region
      $region41: #{decoder2d_forward.5} parent=39 // pred_check
        %p1465 = pneg %p167
      $region42: #{decoder2d_forward.5} parent=39 // pred_check_branch
        %1467 = sbr.rel (%p1465) target = $region44
      $region43: #{decoder2d_forward.5} parent=39 // pred_region
        _
      $region44: #{decoder2d_forward.5} parent=39 // pred_fallthru
        _
      // Predicated region
      $region45: #{decoder2d_forward.5} parent=39 // pred_check
        %p1468 = pneg %p195
      $region46: #{decoder2d_forward.5} parent=39 // pred_check_branch
        %1470 = sbr.rel (%p1468) target = $region48
      $region47: #{decoder2d_forward.5} parent=39 // pred_region
        _
      $region48: #{decoder2d_forward.5} parent=39 // pred_fallthru
        _
    $region40: #{decoder2d_forward.5} parent=5 // pred_fallthru
      _
    %p1471 = scmp.le.s32.totalorder 2, %s13
    // Predicated region
    $region49: #{decoder2d_forward.5} parent=5 // pred_check
      %p1472 = pneg %p1471
    $region50: #{decoder2d_forward.5} parent=5 // pred_check_branch
      %1474 = sbr.rel (%p1472) target = $region52
    $region51: #{decoder2d_forward.5} parent=5 // pred_region
      %s1475 = ssub.s32 %s13, 2
      // Predicated region
      $region53: #{decoder2d_forward.5} parent=51 // pred_check
        %p1476 = pneg %p173
      $region54: #{decoder2d_forward.5} parent=51 // pred_check_branch
        %1478 = sbr.rel (%p1476) target = $region56
      $region55: #{decoder2d_forward.5} parent=51 // pred_region
        %p1479 = scmp.lt.s32.totalorder %s24, 1
        %s1480 = scalar_select %p1479, %s24, 1
        %p1481 = scmp.lt.s32.totalorder %s25, 0
        %s1482 = scalar_select %p1481, %s25, 0
        %s1483 = smul.addr %s1482, 4
        %s1484 = smul.addr %s1480, 4
        %s1485 = sadd.s32 %s1483, %s1484
        %s1486 = smul.addr %s1485, 4
        %s1487 = scalar_lea.vmem %s5, %s1486
      $region56: #{decoder2d_forward.5} parent=51 // pred_fallthru
        _
      // Predicated region
      $region57: #{decoder2d_forward.5} parent=51 // pred_check
        %p1488 = pneg %p201
      $region58: #{decoder2d_forward.5} parent=51 // pred_check_branch
        %1490 = sbr.rel (%p1488) target = $region60
      $region59: #{decoder2d_forward.5} parent=51 // pred_region
        %p1491 = scmp.lt.s32.totalorder %s24, 1
        %s1492 = scalar_select %p1491, %s24, 1
        %p1493 = scmp.lt.s32.totalorder %s25, 0
        %s1494 = scalar_select %p1493, %s25, 0
        %s1495 = sadd.s32 %s1494, %s1492
        %s1496 = smul.addr %s1495, 8
        %s1497 = scalar_lea.vmem %s6, %s1496
      $region60: #{decoder2d_forward.5} parent=51 // pred_fallthru
        _
    $region52: #{decoder2d_forward.5} parent=5 // pred_fallthru
      _
  $region6: #{decoder2d_forward.5} parent=0 // loop_footer
    %s17 = sadd.s32 1, %s13
  $region7: #{decoder2d_forward.5} parent=0 // loop_footer_branch
    %12 = sbr.rel target = $region3
  $region8: #{decoder2d_forward.5} parent=0 // loop_exit
    _

// kernel: decoder2d_forward.4
$region0: #{decoder2d_forward.4}
  #allocation0 [shape = 'u32[]', space=smem, size = 0x4, offset = 0x4, fixed_abs, tag = 'smem constant byte address 0x4 - core index']
  #allocation1 [shape = 'u32[144,128]{1,0:T(1,128)}', space=vmem, size = 0x12000, scoped, tag = 'internal scratch']
  #allocation2 [shape = 'bf16[8,512]{1,0:T(8,128)(2,1)}', space=vmem, size = 0x2000, scoped, tag = 'scratch operand']
  #allocation3 [shape = 'bf16[8,512]{1,0:T(8,128)(2,1)}', space=vmem, size = 0x2000, scoped, tag = 'scratch operand']
  %s0 = inlined_call_operand.vmem [shape: bf16[2,1,8,512], index: 0, kind: input, shape index: {}]
  %s1 = inlined_call_operand.vmem [shape: bf16[2,1,8,512], index: 1, kind: input, shape index: {}]
  %s2 = inlined_call_operand.vmem [shape: bf16[9,8,8], index: 2, kind: input, shape index: {}]
  %s3 = inlined_call_operand.vmem [shape: bf16[9,8,8], index: 3, kind: input, shape index: {}]
  %s4 = inlined_call_operand.vmem [shape: f32[8,3], index: 4, kind: input, shape index: {}]
  %s5 = inlined_call_operand.vmem [shape: f32[8,3], index: 5, kind: input, shape index: {}]
  %s6 = inlined_call_operand.vmem [shape: f32[1,512], index: 6, kind: input, shape index: {}]
  %s7 = inlined_call_operand.vmem [shape: f32[1,288], index: 7, kind: input, shape index: {}]
  %s8 = inlined_call_operand.vmem [shape: bf16[2,1,8,512], index: 8, kind: output, shape index: {0}]
  %s9 = inlined_call_operand.vmem [shape: f32[2,1,8,2], index: 9, kind: output, shape index: {1}]
  %10 = xla_tuple %s8, %s9
  %s11 = sld [smem:[#allocation0]]
  $region73: #{decoder2d_forward.4} parent=0
    _
  %s13 = ssub.s32 1, %s11
  %s14 = scalar_select 0, %s13, %s11
  loop: start=0, step=1, limit=4
  $region2: #{decoder2d_forward.4} parent=0 // loop_pre_header
    _
  $region3: #{decoder2d_forward.4} parent=0 // loop_header
    %s16 = sphi 0, %s20
    %p17 = scmp.ge.s32.totalorder %s16, 4
    %s23 = sphi 0, %s35
    %s24 = sphi 0, %s31
    %s25 = sphi 0, %s23
    %s26 = sphi 0, %s24
    %s27 = sphi 0, %s25
    %s28 = sphi 0, %s26
    %s40 = sphi 0, %s42
    %s43 = sphi 0, %s40
    %s44 = sphi 0, %s43
    %s60 = sphi 0, %s44
    %s68 = sphi 0, %s70
    %s71 = sphi 0, %s68
    %s72 = sphi 0, %s71
    %s88 = sphi 0, %s72
    %s92 = sphi 0, %s92
    %s94 = sphi 0, %s92
    %s95 = sphi 0, %s94
    %s109 = sphi 0, %s95
    %s113 = sphi 0, %s113
    %s115 = sphi 0, %s113
    %s116 = sphi 0, %s115
    %s130 = sphi 0, %s116
    %s134 = sphi 0, %s134
    %s136 = sphi 0, %s134
    %s137 = sphi 0, %s136
    %s151 = sphi 0, %s137
    %s155 = sphi 0, %s155
    %s157 = sphi 0, %s155
    %s158 = sphi 0, %s157
    %s172 = sphi 0, %s158
    %s178 = sphi 0, %s180
    %s181 = sphi 0, %s178
    %s182 = sphi 0, %s181
    %s198 = sphi 0, %s182
    %s202 = sphi 0, %s202
    %s204 = sphi 0, %s202
    %s205 = sphi 0, %s204
    %s219 = sphi 0, %s205
    %s227 = sphi 0, %s229
    %s230 = sphi 0, %s227
    %s231 = sphi 0, %s230
    %s247 = sphi 0, %s231
    %s255 = sphi 0, %s257
    %s258 = sphi 0, %s255
    %s259 = sphi 0, %s258
    %s275 = sphi 0, %s259
  $region4: #{decoder2d_forward.4} parent=0 // loop_header_branch
    %19 = sbr.rel (%p17) target = $region8
  $region5: #{decoder2d_forward.4} parent=0 // loop_body
    %s21 = ssub.s32 %s16, 1
    %s22 = ssub.s32 %s16, 2
    %s29 = sadd.s32 1, %s24
    %p30 = scmp.ge.s32.totalorder %s29, 1
    %s31 = scalar_select %p30, 0, %s29
    %s32 = sadd.s32 1, %s23
    %s33 = scalar_select %p30, %s32, %s23
    %p34 = scmp.ge.s32.totalorder %s33, 2
    %s35 = scalar_select %p34, 0, %s33
    %s36 = ssub.s32 %s23, %s35
    %s37 = ssub.s32 %s24, %s31
    %s38 = sor.u32 %s36, %s37
    %p39 = scmp.eq.s32.totalorder %s38, 0
    %s41 = sadd.s32 %s40, 1
    %s42 = scalar_select %p39, %s40, %s41
    %p45 = pneg %p39
    %p46 = scmp.eq.s32.totalorder %s16, 1
    %p47 = por %p45, %p46
    %p48 = scmp.ne.s32.totalorder %s40, %s43
    %p49 = scmp.eq.s32.totalorder %s16, 0
    %p50 = por %p48, %p49
    %p51 = scmp.ne.s32.totalorder %s40, %s43
    %p52 = scmp.eq.s32.totalorder %s21, 1
    %p53 = por %p51, %p52
    %p54 = scmp.ne.s32.totalorder %s43, %s44
    %p55 = scmp.eq.s32.totalorder %s21, 0
    %p56 = por %p54, %p55
    %p57 = scmp.ne.s32.totalorder %s43, %s44
    %p58 = scmp.eq.s32.totalorder %s22, 1
    %p59 = por %p57, %p58
    %p61 = scmp.ne.s32.totalorder %s44, %s60
    %p62 = scmp.eq.s32.totalorder %s22, 0
    %p63 = por %p61, %p62
    %s64 = ssub.s32 %s23, %s35
    %s65 = ssub.s32 %s24, %s31
    %s66 = sor.u32 %s64, %s65
    %p67 = scmp.eq.s32.totalorder %s66, 0
    %s69 = sadd.s32 %s68, 1
    %s70 = scalar_select %p67, %s68, %s69
    %p73 = pneg %p67
    %p74 = scmp.eq.s32.totalorder %s16, 1
    %p75 = por %p73, %p74
    %p76 = scmp.ne.s32.totalorder %s68, %s71
    %p77 = scmp.eq.s32.totalorder %s16, 0
    %p78 = por %p76, %p77
    %p79 = scmp.ne.s32.totalorder %s68, %s71
    %p80 = scmp.eq.s32.totalorder %s21, 1
    %p81 = por %p79, %p80
    %p82 = scmp.ne.s32.totalorder %s71, %s72
    %p83 = scmp.eq.s32.totalorder %s21, 0
    %p84 = por %p82, %p83
    %p85 = scmp.ne.s32.totalorder %s71, %s72
    %p86 = scmp.eq.s32.totalorder %s22, 1
    %p87 = por %p85, %p86
    %p89 = scmp.ne.s32.totalorder %s72, %s88
    %p90 = scmp.eq.s32.totalorder %s22, 0
    %p91 = por %p89, %p90
    %s93 = sadd.s32 %s92, 1
    %p96 = scmp.eq.s32.totalorder %s16, 1
    %p97 = scmp.ne.s32.totalorder %s92, %s94
    %p98 = scmp.eq.s32.totalorder %s16, 0
    %p99 = por %p97, %p98
    %p100 = scmp.ne.s32.totalorder %s92, %s94
    %p101 = scmp.eq.s32.totalorder %s21, 1
    %p102 = por %p100, %p101
    %p103 = scmp.ne.s32.totalorder %s94, %s95
    %p104 = scmp.eq.s32.totalorder %s21, 0
    %p105 = por %p103, %p104
    %p106 = scmp.ne.s32.totalorder %s94, %s95
    %p107 = scmp.eq.s32.totalorder %s22, 1
    %p108 = por %p106, %p107
    %p110 = scmp.ne.s32.totalorder %s95, %s109
    %p111 = scmp.eq.s32.totalorder %s22, 0
    %p112 = por %p110, %p111
    %s114 = sadd.s32 %s113, 1
    %p117 = scmp.eq.s32.totalorder %s16, 1
    %p118 = scmp.ne.s32.totalorder %s113, %s115
    %p119 = scmp.eq.s32.totalorder %s16, 0
    %p120 = por %p118, %p119
    %p121 = scmp.ne.s32.totalorder %s113, %s115
    %p122 = scmp.eq.s32.totalorder %s21, 1
    %p123 = por %p121, %p122
    %p124 = scmp.ne.s32.totalorder %s115, %s116
    %p125 = scmp.eq.s32.totalorder %s21, 0
    %p126 = por %p124, %p125
    %p127 = scmp.ne.s32.totalorder %s115, %s116
    %p128 = scmp.eq.s32.totalorder %s22, 1
    %p129 = por %p127, %p128
    %p131 = scmp.ne.s32.totalorder %s116, %s130
    %p132 = scmp.eq.s32.totalorder %s22, 0
    %p133 = por %p131, %p132
    %s135 = sadd.s32 %s134, 1
    %p138 = scmp.eq.s32.totalorder %s16, 1
    %p139 = scmp.ne.s32.totalorder %s134, %s136
    %p140 = scmp.eq.s32.totalorder %s16, 0
    %p141 = por %p139, %p140
    %p142 = scmp.ne.s32.totalorder %s134, %s136
    %p143 = scmp.eq.s32.totalorder %s21, 1
    %p144 = por %p142, %p143
    %p145 = scmp.ne.s32.totalorder %s136, %s137
    %p146 = scmp.eq.s32.totalorder %s21, 0
    %p147 = por %p145, %p146
    %p148 = scmp.ne.s32.totalorder %s136, %s137
    %p149 = scmp.eq.s32.totalorder %s22, 1
    %p150 = por %p148, %p149
    %p152 = scmp.ne.s32.totalorder %s137, %s151
    %p153 = scmp.eq.s32.totalorder %s22, 0
    %p154 = por %p152, %p153
    %s156 = sadd.s32 %s155, 1
    %p159 = scmp.eq.s32.totalorder %s16, 1
    %p160 = scmp.ne.s32.totalorder %s155, %s157
    %p161 = scmp.eq.s32.totalorder %s16, 0
    %p162 = por %p160, %p161
    %p163 = scmp.ne.s32.totalorder %s155, %s157
    %p164 = scmp.eq.s32.totalorder %s21, 1
    %p165 = por %p163, %p164
    %p166 = scmp.ne.s32.totalorder %s157, %s158
    %p167 = scmp.eq.s32.totalorder %s21, 0
    %p168 = por %p166, %p167
    %p169 = scmp.ne.s32.totalorder %s157, %s158
    %p170 = scmp.eq.s32.totalorder %s22, 1
    %p171 = por %p169, %p170
    %p173 = scmp.ne.s32.totalorder %s158, %s172
    %p174 = scmp.eq.s32.totalorder %s22, 0
    %p175 = por %p173, %p174
    %s176 = ssub.s32 %s24, %s31
    %p177 = scmp.eq.s32.totalorder %s176, 0
    %s179 = sadd.s32 %s178, 1
    %s180 = scalar_select %p177, %s178, %s179
    %p183 = pneg %p177
    %p184 = scmp.eq.s32.totalorder %s16, 1
    %p185 = por %p183, %p184
    %p186 = scmp.ne.s32.totalorder %s178, %s181
    %p187 = scmp.eq.s32.totalorder %s16, 0
    %p188 = por %p186, %p187
    %p189 = scmp.ne.s32.totalorder %s178, %s181
    %p190 = scmp.eq.s32.totalorder %s21, 1
    %p191 = por %p189, %p190
    %p192 = scmp.ne.s32.totalorder %s181, %s182
    %p193 = scmp.eq.s32.totalorder %s21, 0
    %p194 = por %p192, %p193
    %p195 = scmp.ne.s32.totalorder %s181, %s182
    %p196 = scmp.eq.s32.totalorder %s22, 1
    %p197 = por %p195, %p196
    %p199 = scmp.ne.s32.totalorder %s182, %s198
    %p200 = scmp.eq.s32.totalorder %s22, 0
    %p201 = por %p199, %p200
    %s203 = sadd.s32 %s202, 1
    %p206 = scmp.eq.s32.totalorder %s16, 1
    %p207 = scmp.ne.s32.totalorder %s202, %s204
    %p208 = scmp.eq.s32.totalorder %s16, 0
    %p209 = por %p207, %p208
    %p210 = scmp.ne.s32.totalorder %s202, %s204
    %p211 = scmp.eq.s32.totalorder %s21, 1
    %p212 = por %p210, %p211
    %p213 = scmp.ne.s32.totalorder %s204, %s205
    %p214 = scmp.eq.s32.totalorder %s21, 0
    %p215 = por %p213, %p214
    %p216 = scmp.ne.s32.totalorder %s204, %s205
    %p217 = scmp.eq.s32.totalorder %s22, 1
    %p218 = por %p216, %p217
    %p220 = scmp.ne.s32.totalorder %s205, %s219
    %p221 = scmp.eq.s32.totalorder %s22, 0
    %p222 = por %p220, %p221
    %s223 = ssub.s32 %s23, %s35
    %s224 = ssub.s32 %s24, %s31
    %s225 = sor.u32 %s223, %s224
    %p226 = scmp.eq.s32.totalorder %s225, 0
    %s228 = sadd.s32 %s227, 1
    %s229 = scalar_select %p226, %s227, %s228
    %p232 = pneg %p226
    %p233 = scmp.eq.s32.totalorder %s16, 1
    %p234 = por %p232, %p233
    %p235 = scmp.ne.s32.totalorder %s227, %s230
    %p236 = scmp.eq.s32.totalorder %s16, 0
    %p237 = por %p235, %p236
    %p238 = scmp.ne.s32.totalorder %s227, %s230
    %p239 = scmp.eq.s32.totalorder %s21, 1
    %p240 = por %p238, %p239
    %p241 = scmp.ne.s32.totalorder %s230, %s231
    %p242 = scmp.eq.s32.totalorder %s21, 0
    %p243 = por %p241, %p242
    %p244 = scmp.ne.s32.totalorder %s230, %s231
    %p245 = scmp.eq.s32.totalorder %s22, 1
    %p246 = por %p244, %p245
    %p248 = scmp.ne.s32.totalorder %s231, %s247
    %p249 = scmp.eq.s32.totalorder %s22, 0
    %p250 = por %p248, %p249
    %s251 = ssub.s32 %s23, %s35
    %s252 = ssub.s32 %s24, %s31
    %s253 = sor.u32 %s251, %s252
    %p254 = scmp.eq.s32.totalorder %s253, 0
    %s256 = sadd.s32 %s255, 1
    %s257 = scalar_select %p254, %s255, %s256
    %p260 = pneg %p254
    %p261 = scmp.eq.s32.totalorder %s16, 1
    %p262 = por %p260, %p261
    %p263 = scmp.ne.s32.totalorder %s255, %s258
    %p264 = scmp.eq.s32.totalorder %s16, 0
    %p265 = por %p263, %p264
    %p266 = scmp.ne.s32.totalorder %s255, %s258
    %p267 = scmp.eq.s32.totalorder %s21, 1
    %p268 = por %p266, %p267
    %p269 = scmp.ne.s32.totalorder %s258, %s259
    %p270 = scmp.eq.s32.totalorder %s21, 0
    %p271 = por %p269, %p270
    %p272 = scmp.ne.s32.totalorder %s258, %s259
    %p273 = scmp.eq.s32.totalorder %s22, 1
    %p274 = por %p272, %p273
    %p276 = scmp.ne.s32.totalorder %s259, %s275
    %p277 = scmp.eq.s32.totalorder %s22, 0
    %p278 = por %p276, %p277
    %p279 = scmp.le.s32.totalorder 1, %s16
    %p280 = scmp.lt.s32.totalorder %s16, 3
    %p281 = pnand %p279, %p280
    %p282 = pneg %p281
    // Predicated region
    $region9: #{decoder2d_forward.4} parent=5 // pred_check
      _
    $region10: #{decoder2d_forward.4} parent=5 // pred_check_branch
      %284 = sbr.rel (%p281) target = $region12
    $region11: #{decoder2d_forward.4} parent=5 // pred_region
      %s285 = ssub.s32 %s16, 1
      // Predicated region
      $region13: #{decoder2d_forward.4} parent=11 // pred_check
        %p286 = pneg %p105
      $region14: #{decoder2d_forward.4} parent=11 // pred_check_branch
        %288 = sbr.rel (%p286) target = $region16
      $region15: #{decoder2d_forward.4} parent=11 // pred_region
        _
      $region16: #{decoder2d_forward.4} parent=11 // pred_fallthru
        _
      // Predicated region
      $region17: #{decoder2d_forward.4} parent=11 // pred_check
        %p289 = pneg %p126
      $region18: #{decoder2d_forward.4} parent=11 // pred_check_branch
        %291 = sbr.rel (%p289) target = $region20
      $region19: #{decoder2d_forward.4} parent=11 // pred_region
        _
      $region20: #{decoder2d_forward.4} parent=11 // pred_fallthru
        _
      // Predicated region
      $region21: #{decoder2d_forward.4} parent=11 // pred_check
        %p292 = pneg %p147
      $region22: #{decoder2d_forward.4} parent=11 // pred_check_branch
        %294 = sbr.rel (%p292) target = $region24
      $region23: #{decoder2d_forward.4} parent=11 // pred_region
        _
      $region24: #{decoder2d_forward.4} parent=11 // pred_fallthru
        _
      // Predicated region
      $region25: #{decoder2d_forward.4} parent=11 // pred_check
        %p295 = pneg %p168
      $region26: #{decoder2d_forward.4} parent=11 // pred_check_branch
        %297 = sbr.rel (%p295) target = $region28
      $region27: #{decoder2d_forward.4} parent=11 // pred_region
        _
      $region28: #{decoder2d_forward.4} parent=11 // pred_fallthru
        _
      // Predicated region
      $region29: #{decoder2d_forward.4} parent=11 // pred_check
        %p298 = pneg %p194
      $region30: #{decoder2d_forward.4} parent=11 // pred_check_branch
        %300 = sbr.rel (%p298) target = $region32
      $region31: #{decoder2d_forward.4} parent=11 // pred_region
        %p301 = scmp.lt.s32.totalorder %s26, 0
        %s302 = scalar_select %p301, %s26, 0
        %s303 = smul.addr %s302, 4
        %s304 = scalar_lea.vmem %s6, %s303
      $region32: #{decoder2d_forward.4} parent=11 // pred_fallthru
        _
      // Predicated region
      $region33: #{decoder2d_forward.4} parent=11 // pred_check
        %p305 = pneg %p215
      $region34: #{decoder2d_forward.4} parent=11 // pred_check_branch
        %307 = sbr.rel (%p305) target = $region36
      $region35: #{decoder2d_forward.4} parent=11 // pred_region
        _
      $region36: #{decoder2d_forward.4} parent=11 // pred_fallthru
        _
    $region12: #{decoder2d_forward.4} parent=5 // pred_fallthru
      _
    %p308 = scmp.lt.s32.totalorder %s16, 2
    // Predicated region
    $region37: #{decoder2d_forward.4} parent=5 // pred_check
      %p309 = pneg %p308
    $region38: #{decoder2d_forward.4} parent=5 // pred_check_branch
      %311 = sbr.rel (%p309) target = $region40
    $region39: #{decoder2d_forward.4} parent=5 // pred_region
      // Predicated region
      $region41: #{decoder2d_forward.4} parent=39 // pred_check
        %p312 = pneg %p50
      $region42: #{decoder2d_forward.4} parent=39 // pred_check_branch
        %314 = sbr.rel (%p312) target = $region44
      $region43: #{decoder2d_forward.4} parent=39 // pred_region
        %p315 = scmp.lt.s32.totalorder %s23, 1
        %s316 = scalar_select %p315, %s23, 1
        %p317 = scmp.lt.s32.totalorder %s24, 0
        %s318 = scalar_select %p317, %s24, 0
        %s319 = smul.addr %s318, 4
        %s320 = smul.addr %s316, 4
        %s321 = sadd.s32 %s319, %s320
        %s322 = smul.addr %s321, 4
        %s323 = scalar_lea.vmem %s0, %s322
      $region44: #{decoder2d_forward.4} parent=39 // pred_fallthru
        _
      // Predicated region
      $region45: #{decoder2d_forward.4} parent=39 // pred_check
        %p324 = pneg %p78
      $region46: #{decoder2d_forward.4} parent=39 // pred_check_branch
        %326 = sbr.rel (%p324) target = $region48
      $region47: #{decoder2d_forward.4} parent=39 // pred_region
        %p327 = scmp.lt.s32.totalorder %s23, 1
        %s328 = scalar_select %p327, %s23, 1
        %p329 = scmp.lt.s32.totalorder %s24, 0
        %s330 = scalar_select %p329, %s24, 0
        %s331 = smul.addr %s330, 4
        %s332 = smul.addr %s328, 4
        %s333 = sadd.s32 %s331, %s332
        %s334 = smul.addr %s333, 4
        %s335 = scalar_lea.vmem %s1, %s334
      $region48: #{decoder2d_forward.4} parent=39 // pred_fallthru
        _
    $region40: #{decoder2d_forward.4} parent=5 // pred_fallthru
      _
    %p336 = scmp.le.s32.totalorder 1, %s16
    %p337 = scmp.lt.s32.totalorder %s16, 3
    %p338 = pnand %p336, %p337
    %p339 = pneg %p338
    // Predicated region
    $region49: #{decoder2d_forward.4} parent=5 // pred_check
      _
    $region50: #{decoder2d_forward.4} parent=5 // pred_check_branch
      %341 = sbr.rel (%p338) target = $region52
    $region51: #{decoder2d_forward.4} parent=5 // pred_region
      %s342 = ssub.s32 %s16, 1
      %p343 = scmp.lt.s32.totalorder %s25, 1
      %s344 = scalar_select %p343, %s25, 1
      %p345 = scmp.lt.s32.totalorder %s26, 0
      %s346 = scalar_select %p345, %s26, 0
      %s347 = smul.addr %s346, 4
      %s348 = smul.addr %s344, 4
      %s349 = sadd.s32 %s347, %s348
      %s350 = smul.addr %s349, 4
      %s351 = scalar_lea.vmem %s0, %s350
      %p352 = pneg %p56
      %p353 = pneg %p53
      %p354 = scmp.lt.s32.totalorder %s25, 1
      %s355 = scalar_select %p354, %s25, 1
      %p356 = scmp.lt.s32.totalorder %s26, 0
      %s357 = scalar_select %p356, %s26, 0
      %s358 = smul.addr %s357, 4
      %s359 = smul.addr %s355, 4
      %s360 = sadd.s32 %s358, %s359
      %s361 = smul.addr %s360, 4
      %s362 = scalar_lea.vmem %s1, %s361
      %p363 = pneg %p84
      %p364 = pneg %p81
      %p365 = pneg %p105
      %p366 = pneg %p102
      %p367 = pneg %p126
      %p368 = pneg %p123
      %p369 = pneg %p147
      %p370 = pneg %p144
      %p371 = pneg %p168
      %p372 = pneg %p165
      %p373 = scmp.lt.s32.totalorder %s26, 0
      %s374 = scalar_select %p373, %s26, 0
      %s375 = smul.addr %s374, 4
      %s376 = scalar_lea.vmem %s6, %s375
      %p377 = pneg %p194
      %p378 = pneg %p191
      %p379 = pneg %p215
      %p380 = pneg %p212
      %p381 = pneg %p243
      %p382 = pneg %p240
      %p383 = scmp.lt.s32.totalorder %s25, 1
      %s384 = scalar_select %p383, %s25, 1
      %p385 = scmp.lt.s32.totalorder %s26, 0
      %s386 = scalar_select %p385, %s26, 0
      %s387 = smul.addr %s386, 4
      %s388 = smul.addr %s384, 4
      %s389 = sadd.s32 %s387, %s388
      %s390 = smul.addr %s389, 4
      %s391 = scalar_lea.vmem %s8, %s390
      %p392 = pneg %p271
      %p393 = pneg %p268
      %p394 = scmp.lt.s32.totalorder %s25, 1
      %s395 = scalar_select %p394, %s25, 1
      %p396 = scmp.lt.s32.totalorder %s26, 0
      %s397 = scalar_select %p396, %s26, 0
      %s398 = sadd.s32 %s397, %s395
      %s399 = smul.addr %s398, 8
      %s400 = scalar_lea.vmem %s9, %s399
      %p401 = scmp.lt.s32.totalorder %s25, 1
      %s402 = scalar_select %p401, %s25, 1
      %p403 = scmp.lt.s32.totalorder %s26, 0
      %s404 = scalar_select %p403, %s26, 0
      %s405 = smul.addr %s404, 4
      %s406 = smul.addr %s402, 4
      %s407 = sadd.s32 %s405, %s406
      %s408 = smul.addr %s407, 4
      %s409 = scalar_lea.vmem %s0, %s408
      %p410 = scmp.lt.s32.totalorder %s25, 1
      %s411 = scalar_select %p410, %s25, 1
      %p412 = scmp.lt.s32.totalorder %s26, 0
      %s413 = scalar_select %p412, %s26, 0
      %s414 = smul.addr %s413, 4
      %s415 = smul.addr %s411, 4
      %s416 = sadd.s32 %s414, %s415
      %s417 = smul.addr %s416, 4
      %s418 = scalar_lea.vmem %s1, %s417
      %p419 = scmp.lt.s32.totalorder %s26, 0
      %s420 = scalar_select %p419, %s26, 0
      %s421 = smul.addr %s420, 4
      %s422 = scalar_lea.vmem %s6, %s421
      %p423 = scmp.lt.s32.totalorder %s25, 1
      %s424 = scalar_select %p423, %s25, 1
      %p425 = scmp.lt.s32.totalorder %s26, 0
      %s426 = scalar_select %p425, %s26, 0
      %s427 = smul.addr %s426, 4
      %s428 = smul.addr %s424, 4
      %s429 = sadd.s32 %s427, %s428
      %s430 = smul.addr %s429, 4
      %s431 = scalar_lea.vmem %s8, %s430
      %p432 = scmp.lt.s32.totalorder %s25, 1
      %s433 = scalar_select %p432, %s25, 1
      %p434 = scmp.lt.s32.totalorder %s26, 0
      %s435 = scalar_select %p434, %s26, 0
      %s436 = sadd.s32 %s435, %s433
      %s437 = smul.addr %s436, 8
      %s438 = scalar_lea.vmem %s9, %s437
      %v440 = vld [vmem:[%s422] sm:$0xf]
      %v441 = vld [vmem:[%s7] sm:$0x7]
      %v442 = vld [vmem:[%s4] sm:$0xff]
      %v443 = vld [vmem:[%s409] sm:$0xff]
      %v444 = vld [vmem:[%s409 + $0x8] sm:$0xff]
      %v445 = vunpack.c.l.bf16 %v443
      %v446 = vunpack.c.h.bf16 %v443
      %v447 = vunpack.c.l.bf16 %v444
      %v448 = vunpack.c.h.bf16 %v444
      %450 = vset.pattern.permute.xlu0 0
      %451 = vperm.xlu0 %450, %v442
      %v452 = vpop.permute.xlu0 %451
      %v454 = vmul.f32 %v445, %v452
      %v455 = vmul.f32 %v446, %v452
      %v456 = vmul.f32 %v447, %v452
      %v457 = vmul.f32 %v448, %v452
      %458 = vset.pattern.permute.xlu0 1
      %459 = vperm.xlu0 %458, %v442
      %v460 = vpop.permute.xlu0 %459
      %v462 = vadd.f32 %v454, %v460
      %v463 = vadd.f32 %v455, %v460
      %v464 = vadd.f32 %v456, %v460
      %v465 = vadd.f32 %v457, %v460
      %vm466 = vcmp.gt.f32.partialorder %v462, 0.0
      %vm467 = vcmp.gt.f32.partialorder %v463, 0.0
      %vm468 = vcmp.gt.f32.partialorder %v464, 0.0
      %vm469 = vcmp.gt.f32.partialorder %v465, 0.0
      %470 = vset.pattern.permute.xlu0 2
      %471 = vperm.xlu0 %470, %v442
      %v472 = vpop.permute.xlu0 %471
      %v474 = vmul.f32 %v472, %v462
      %v475 = vmul.f32 %v472, %v463
      %v476 = vmul.f32 %v472, %v464
      %v477 = vmul.f32 %v472, %v465
      %v478 = vsel %vm466, %v462, %v474
      %v479 = vsel %vm467, %v463, %v475
      %v480 = vsel %vm468, %v464, %v476
      %v481 = vsel %vm469, %v465, %v477
      %vm482 = vcmp.gt.f32.partialorder %v440, 0.0
      %v483 = vsel %vm482, 1, 0
      %v484 = vlaneseq
      %v485 = vshrl.u32 %v484, 7
      %v486 = vsub.s32 0, %v485
      %v487 = vrot.slane %v483, %v486
      %v488 = vlaneseq
      %v489 = vshrl.u32 %v488, 7
      %v490 = vsub.s32 1, %v489
      %v491 = vrot.slane %v483, %v490
      %v492 = vlaneseq
      %v493 = vshrl.u32 %v492, 7
      %v494 = vsub.s32 2, %v493
      %v495 = vrot.slane %v483, %v494
      %v496 = vlaneseq
      %v497 = vshrl.u32 %v496, 7
      %v498 = vsub.s32 3, %v497
      %v499 = vrot.slane %v483, %v498
      %vm500 = vcmp.eq.s32.totalorder %v487, 1
      %vm501 = vcmp.eq.s32.totalorder %v491, 1
      %vm502 = vcmp.eq.s32.totalorder %v495, 1
      %vm503 = vcmp.eq.s32.totalorder %v499, 1
      %v504 = vsel %vm500, %v478, 0.0
      %v505 = vsel %vm501, %v479, 0.0
      %v506 = vsel %vm502, %v480, 0.0
      %v507 = vsel %vm503, %v481, 0.0
      %v508 = vpack.c.bf16 %v504, %v504
      %v509 = vpack.c.bf16 %v505, %v505
      %v510 = vpack.c.bf16 %v506, %v506
      %v511 = vpack.c.bf16 %v507, %v507
      %v516 = vunpack.c.l.b16 %v508
      %v517 = vunpack.c.l.b16 %v509
      %v518 = vunpack.c.l.b16 %v510
      %v519 = vunpack.c.l.b16 %v511
      %v520 = vpack.c.b16 %v517, %v516
      %v521 = vpack.c.b16 %v519, %v518
      %524 = vst [vmem:[#allocation2] sm:$0xff] %v520
      %525 = vst [vmem:[#allocation2 + $0x8] sm:$0xff] %v521
      %v526 = vld [vmem:[%s2] sm:$0xf]
      %v527 = vld [vmem:[#allocation2] sm:$0xff]
      %v528 = vld [vmem:[#allocation2 + $0x8] sm:$0xff]
      %s529 = scalar_lea.vmem %s2, 4
      %v530 = vld [vmem:[%s529] sm:$0xf]
      %v533 = vunpack.c.l.b16 %v527
      %v534 = vunpack.c.h.b16 %v527
      %v535 = vunpack.c.l.b16 %v528
      %v536 = vunpack.c.h.b16 %v528
      %v537 = vpack.c.b16 %v533, %v533
      %v538 = vpack.c.b16 %v534, %v534
      %v539 = vpack.c.b16 %v535, %v535
      %v540 = vpack.c.b16 %v536, %v536
      %541 = vrot.lane.b32.xlu0 %v537, 18
      %v542 = vpop.permute.xlu0 %541
      %543 = vrot.lane.b32.xlu0 %v538, 18
      %v544 = vpop.permute.xlu0 %543
      %545 = vrot.lane.b32.xlu0 %v539, 18
      %v546 = vpop.permute.xlu0 %545
      %547 = vrot.lane.b32.xlu0 %v540, 18
      %v548 = vpop.permute.xlu0 %547
      %vm549 = vcmask 146432
      %v550 = vsel %vm549, %v542, %v544
      %v551 = vsel %vm549, %v544, %v546
      %v552 = vsel %vm549, %v546, %v548
      %vm553 = vcmask 64512
      %v555 = vsel %vm553, %v530, 0
      %vm557 = vcmask 1043456
      %v559 = vsel %vm557, %v550, 0
      %v562 = vsel %vm557, %v551, 0
      %v565 = vsel %vm557, %v552, 0
      %567 = vmatprep.subr.bf16.mxu0 %v562
      %568 = vmatpush1.bf16.msra.mxu0 %v559
      %569 = vmatprep.subr.bf16.mxu0 0
      %570 = vmatpush1.bf16.msra.mxu0 0
      %571 = vmatprep.subr.bf16.mxu0 0
      %572 = vmatpush1.bf16.msra.mxu0 0
      %573 = vmatprep.subr.bf16.mxu0 0
      %574 = vmatpush1.bf16.msra.mxu0 0
      %575 = vmatprep.subr.bf16.mxu0 0
      %576 = vmatpush1.bf16.msra.mxu0 0
      %577 = vmatprep.subr.bf16.mxu0 0
      %578 = vmatpush1.bf16.msra.mxu0 0
      %579 = vmatprep.subr.bf16.mxu0 0
      %580 = vmatpush1.bf16.msra.mxu0 0
      %581 = vmatprep.subr.bf16.mxu0 0
      %582 = vmatpush1.bf16.msra.mxu0 0
      %583 = vmatprep.subr.bf16.mxu0 0
      %584 = vmatpush1.bf16.msra.mxu0 0
      %585 = vmatprep.subr.bf16.mxu0 0
      %586 = vmatpush1.bf16.msra.mxu0 0
      %587 = vmatprep.subr.bf16.mxu0 0
      %588 = vmatpush1.bf16.msra.mxu0 0
      %589 = vmatprep.subr.bf16.mxu0 0
      %590 = vmatpush1.bf16.msra.mxu0 0
      %591 = vmatprep.subr.bf16.mxu0 0
      %592 = vmatpush1.bf16.msra.mxu0 0
      %593 = vmatprep.subr.bf16.mxu0 0
      %594 = vmatpush1.bf16.msra.mxu0 0
      %595 = vmatprep.subr.bf16.mxu0 0
      %596 = vmatpush1.bf16.msra.mxu0 0
      %597 = vmatprep.subr.bf16.mxu0 0
      %598 = vmatpush1.bf16.msra.mxu0 0
      %599 = vmatprep.mubr.bf16.mxu0 0
      %600 = vmatmul.mubr.bf16.gmra.mrb[0].mxu0 %v555
      %v601 = vpop.f32.mrb[0].mxu0
      %v602 = vadd.f32 0.0, %v601
      %v603 = vpop.f32.mrb[0].mxu0
      %v604 = vadd.f32 0.0, %v603
      %v605 = vpop.f32.mrb[0].mxu0
      %v606 = vpop.f32.mrb[0].mxu0
      %607 = vdwg.mxu0
      %608 = vmatprep.subr.bf16.mxu0 0
      %609 = vmatpush1.bf16.msra.mxu0 %v565
      %610 = vmatprep.subr.bf16.mxu0 0
      %611 = vmatpush1.bf16.msra.mxu0 0
      %612 = vmatprep.subr.bf16.mxu0 0
      %613 = vmatpush1.bf16.msra.mxu0 0
      %614 = vmatprep.subr.bf16.mxu0 0
      %615 = vmatpush1.bf16.msra.mxu0 0
      %616 = vmatprep.subr.bf16.mxu0 0
      %617 = vmatpush1.bf16.msra.mxu0 0
      %618 = vmatprep.subr.bf16.mxu0 0
      %619 = vmatpush1.bf16.msra.mxu0 0
      %620 = vmatprep.subr.bf16.mxu0 0
      %621 = vmatpush1.bf16.msra.mxu0 0
      %622 = vmatprep.subr.bf16.mxu0 0
      %623 = vmatpush1.bf16.msra.mxu0 0
      %624 = vmatprep.subr.bf16.mxu0 0
      %625 = vmatpush1.bf16.msra.mxu0 0
      %626 = vmatprep.subr.bf16.mxu0 0
      %627 = vmatpush1.bf16.msra.mxu0 0
      %628 = vmatprep.subr.bf16.mxu0 0
      %629 = vmatpush1.bf16.msra.mxu0 0
      %630 = vmatprep.subr.bf16.mxu0 0
      %631 = vmatpush1.bf16.msra.mxu0 0
      %632 = vmatprep.subr.bf16.mxu0 0
      %633 = vmatpush1.bf16.msra.mxu0 0
      %634 = vmatprep.subr.bf16.mxu0 0
      %635 = vmatpush1.bf16.msra.mxu0 0
      %636 = vmatprep.subr.bf16.mxu0 0
      %637 = vmatpush1.bf16.msra.mxu0 0
      %638 = vmatprep.subr.bf16.mxu0 0
      %639 = vmatpush1.bf16.msra.mxu0 0
      %640 = vmatprep.mubr.bf16.mxu0 0
      %641 = vmatmul.mubr.bf16.gmra.mrb[0].mxu0 %v555
      %v642 = vpop.f32.mrb[0].mxu0
      %v643 = vadd.f32 0.0, %v642
      %v644 = vpop.f32.mrb[0].mxu0
      %v645 = vpop.f32.mrb[0].mxu0
      %v646 = vpop.f32.mrb[0].mxu0
      %647 = vdwg.mxu0
      %648 = vrot.lane.b32.xlu0 %v537, 19
      %v649 = vpop.permute.xlu0 %648
      %650 = vrot.lane.b32.xlu0 %v538, 19
      %v651 = vpop.permute.xlu0 %650
      %652 = vrot.lane.b32.xlu0 %v539, 19
      %v653 = vpop.permute.xlu0 %652
      %654 = vrot.lane.b32.xlu0 %v540, 19
      %v655 = vpop.permute.xlu0 %654
      %vm656 = vcmask 154624
      %v657 = vsel %vm656, %v649, %v651
      %v658 = vsel %vm656, %v651, %v653
      %v659 = vsel %vm656, %v653, %v655
      %v661 = vsel %vm553, %v526, 0
      %v664 = vsel %vm557, %v657, 0
      %v667 = vsel %vm557, %v658, 0
      %v670 = vsel %vm557, %v659, 0
      %672 = vmatprep.subr.bf16.mxu0 %v667
      %673 = vmatpush1.bf16.msra.mxu0 %v664
      %674 = vmatprep.subr.bf16.mxu0 0
      %675 = vmatpush1.bf16.msra.mxu0 0
      %676 = vmatprep.subr.bf16.mxu0 0
      %677 = vmatpush1.bf16.msra.mxu0 0
      %678 = vmatprep.subr.bf16.mxu0 0
      %679 = vmatpush1.bf16.msra.mxu0 0
      %680 = vmatprep.subr.bf16.mxu0 0
      %681 = vmatpush1.bf16.msra.mxu0 0
      %682 = vmatprep.subr.bf16.mxu0 0
      %683 = vmatpush1.bf16.msra.mxu0 0
      %684 = vmatprep.subr.bf16.mxu0 0
      %685 = vmatpush1.bf16.msra.mxu0 0
      %686 = vmatprep.subr.bf16.mxu0 0
      %687 = vmatpush1.bf16.msra.mxu0 0
      %688 = vmatprep.subr.bf16.mxu0 0
      %689 = vmatpush1.bf16.msra.mxu0 0
      %690 = vmatprep.subr.bf16.mxu0 0
      %691 = vmatpush1.bf16.msra.mxu0 0
      %692 = vmatprep.subr.bf16.mxu0 0
      %693 = vmatpush1.bf16.msra.mxu0 0
      %694 = vmatprep.subr.bf16.mxu0 0
      %695 = vmatpush1.bf16.msra.mxu0 0
      %696 = vmatprep.subr.bf16.mxu0 0
      %697 = vmatpush1.bf16.msra.mxu0 0
      %698 = vmatprep.subr.bf16.mxu0 0
      %699 = vmatpush1.bf16.msra.mxu0 0
      %700 = vmatprep.subr.bf16.mxu0 0
      %701 = vmatpush1.bf16.msra.mxu0 0
      %702 = vmatprep.subr.bf16.mxu0 0
      %703 = vmatpush1.bf16.msra.mxu0 0
      %704 = vmatprep.mubr.bf16.mxu0 0
      %705 = vmatmul.mubr.bf16.gmra.mrb[0].mxu0 %v661
      %v706 = vpop.f32.mrb[0].mxu0
      %v707 = vadd.f32 %v602, %v706
      %v708 = vpop.f32.mrb[0].mxu0
      %v709 = vadd.f32 %v604, %v708
      %v710 = vpop.f32.mrb[0].mxu0
      %v711 = vpop.f32.mrb[0].mxu0
      %712 = vdwg.mxu0
      %713 = vmatprep.subr.bf16.mxu0 0
      %714 = vmatpush1.bf16.msra.mxu0 %v670
      %715 = vmatprep.subr.bf16.mxu0 0
      %716 = vmatpush1.bf16.msra.mxu0 0
      %717 = vmatprep.subr.bf16.mxu0 0
      %718 = vmatpush1.bf16.msra.mxu0 0
      %719 = vmatprep.subr.bf16.mxu0 0
      %720 = vmatpush1.bf16.msra.mxu0 0
      %721 = vmatprep.subr.bf16.mxu0 0
      %722 = vmatpush1.bf16.msra.mxu0 0
      %723 = vmatprep.subr.bf16.mxu0 0
      %724 = vmatpush1.bf16.msra.mxu0 0
      %725 = vmatprep.subr.bf16.mxu0 0
      %726 = vmatpush1.bf16.msra.mxu0 0
      %727 = vmatprep.subr.bf16.mxu0 0
      %728 = vmatpush1.bf16.msra.mxu0 0
      %729 = vmatprep.subr.bf16.mxu0 0
      %730 = vmatpush1.bf16.msra.mxu0 0
      %731 = vmatprep.subr.bf16.mxu0 0
      %732 = vmatpush1.bf16.msra.mxu0 0
      %733 = vmatprep.subr.bf16.mxu0 0
      %734 = vmatpush1.bf16.msra.mxu0 0
      %735 = vmatprep.subr.bf16.mxu0 0
      %736 = vmatpush1.bf16.msra.mxu0 0
      %737 = vmatprep.subr.bf16.mxu0 0
      %738 = vmatpush1.bf16.msra.mxu0 0
      %739 = vmatprep.subr.bf16.mxu0 0
      %740 = vmatpush1.bf16.msra.mxu0 0
      %741 = vmatprep.subr.bf16.mxu0 0
      %742 = vmatpush1.bf16.msra.mxu0 0
      %743 = vmatprep.subr.bf16.mxu0 0
      %744 = vmatpush1.bf16.msra.mxu0 0
      %745 = vmatprep.mubr.bf16.mxu0 0
      %746 = vmatmul.mubr.bf16.gmra.mrb[0].mxu0 %v661
      %v747 = vpop.f32.mrb[0].mxu0
      %v748 = vadd.f32 %v643, %v747
      %v749 = vpop.f32.mrb[0].mxu0
      %v750 = vpop.f32.mrb[0].mxu0
      %v751 = vpop.f32.mrb[0].mxu0
      %752 = vdwg.mxu0
      %s753 = scalar_lea.vmem %s2, 8
      %v754 = vld [vmem:[%s753] sm:$0xf]
      %755 = vrot.lane.b32.xlu0 %v537, 17
      %v756 = vpop.permute.xlu0 %755
      %757 = vrot.lane.b32.xlu0 %v538, 17
      %v758 = vpop.permute.xlu0 %757
      %759 = vrot.lane.b32.xlu0 %v539, 17
      %v760 = vpop.permute.xlu0 %759
      %761 = vrot.lane.b32.xlu0 %v540, 17
      %v762 = vpop.permute.xlu0 %761
      %vm763 = vcmask 138240
      %v764 = vsel %vm763, %v756, %v758
      %v765 = vsel %vm763, %v758, %v760
      %v766 = vsel %vm763, %v760, %v762
      %v768 = vsel %vm553, %v754, 0
      %v771 = vsel %vm557, %v764, 0
      %v774 = vsel %vm557, %v765, 0
      %v777 = vsel %vm557, %v766, 0
      %779 = vmatprep.subr.bf16.mxu0 %v774
      %780 = vmatpush1.bf16.msra.mxu0 %v771
      %781 = vmatprep.subr.bf16.mxu0 0
      %782 = vmatpush1.bf16.msra.mxu0 0
      %783 = vmatprep.subr.bf16.mxu0 0
      %784 = vmatpush1.bf16.msra.mxu0 0
      %785 = vmatprep.subr.bf16.mxu0 0
      %786 = vmatpush1.bf16.msra.mxu0 0
      %787 = vmatprep.subr.bf16.mxu0 0
      %788 = vmatpush1.bf16.msra.mxu0 0
      %789 = vmatprep.subr.bf16.mxu0 0
      %790 = vmatpush1.bf16.msra.mxu0 0
      %791 = vmatprep.subr.bf16.mxu0 0
      %792 = vmatpush1.bf16.msra.mxu0 0
      %793 = vmatprep.subr.bf16.mxu0 0
      %794 = vmatpush1.bf16.msra.mxu0 0
      %795 = vmatprep.subr.bf16.mxu0 0
      %796 = vmatpush1.bf16.msra.mxu0 0
      %797 = vmatprep.subr.bf16.mxu0 0
      %798 = vmatpush1.bf16.msra.mxu0 0
      %799 = vmatprep.subr.bf16.mxu0 0
      %800 = vmatpush1.bf16.msra.mxu0 0
      %801 = vmatprep.subr.bf16.mxu0 0
      %802 = vmatpush1.bf16.msra.mxu0 0
      %803 = vmatprep.subr.bf16.mxu0 0
      %804 = vmatpush1.bf16.msra.mxu0 0
      %805 = vmatprep.subr.bf16.mxu0 0
      %806 = vmatpush1.bf16.msra.mxu0 0
      %807 = vmatprep.subr.bf16.mxu0 0
      %808 = vmatpush1.bf16.msra.mxu0 0
      %809 = vmatprep.subr.bf16.mxu0 0
      %810 = vmatpush1.bf16.msra.mxu0 0
      %811 = vmatprep.mubr.bf16.mxu0 0
      %812 = vmatmul.mubr.bf16.gmra.mrb[0].mxu0 %v768
      %v813 = vpop.f32.mrb[0].mxu0
      %v814 = vadd.f32 0.0, %v813
      %v815 = vpop.f32.mrb[0].mxu0
      %v816 = vadd.f32 0.0, %v815
      %v817 = vpop.f32.mrb[0].mxu0
      %v818 = vpop.f32.mrb[0].mxu0
      %819 = vdwg.mxu0
      %820 = vmatprep.subr.bf16.mxu0 0
      %821 = vmatpush1.bf16.msra.mxu0 %v777
      %822 = vmatprep.subr.bf16.mxu0 0
      %823 = vmatpush1.bf16.msra.mxu0 0
      %824 = vmatprep.subr.bf16.mxu0 0
      %825 = vmatpush1.bf16.msra.mxu0 0
      %826 = vmatprep.subr.bf16.mxu0 0
      %827 = vmatpush1.bf16.msra.mxu0 0
      %828 = vmatprep.subr.bf16.mxu0 0
      %829 = vmatpush1.bf16.msra.mxu0 0
      %830 = vmatprep.subr.bf16.mxu0 0
      %831 = vmatpush1.bf16.msra.mxu0 0
      %832 = vmatprep.subr.bf16.mxu0 0
      %833 = vmatpush1.bf16.msra.mxu0 0
      %834 = vmatprep.subr.bf16.mxu0 0
      %835 = vmatpush1.bf16.msra.mxu0 0
      %836 = vmatprep.subr.bf16.mxu0 0
      %837 = vmatpush1.bf16.msra.mxu0 0
      %838 = vmatprep.subr.bf16.mxu0 0
      %839 = vmatpush1.bf16.msra.mxu0 0
      %840 = vmatprep.subr.bf16.mxu0 0
      %841 = vmatpush1.bf16.msra.mxu0 0
      %842 = vmatprep.subr.bf16.mxu0 0
      %843 = vmatpush1.bf16.msra.mxu0 0
      %844 = vmatprep.subr.bf16.mxu0 0
      %845 = vmatpush1.bf16.msra.mxu0 0
      %846 = vmatprep.subr.bf16.mxu0 0
      %847 = vmatpush1.bf16.msra.mxu0 0
      %848 = vmatprep.subr.bf16.mxu0 0
      %849 = vmatpush1.bf16.msra.mxu0 0
      %850 = vmatprep.subr.bf16.mxu0 0
      %851 = vmatpush1.bf16.msra.mxu0 0
      %852 = vmatprep.mubr.bf16.mxu0 0
      %853 = vmatmul.mubr.bf16.gmra.mrb[0].mxu0 %v768
      %v854 = vpop.f32.mrb[0].mxu0
      %v855 = vadd.f32 0.0, %v854
      %v856 = vpop.f32.mrb[0].mxu0
      %v857 = vpop.f32.mrb[0].mxu0
      %v858 = vpop.f32.mrb[0].mxu0
      %859 = vdwg.mxu0
      %v860 = vadd.f32 %v707, %v814
      %v861 = vadd.f32 %v709, %v816
      %v862 = vadd.f32 %v748, %v855
      %s863 = scalar_lea.vmem %s2, 12
      %v864 = vld [vmem:[%s863] sm:$0xf]
      %865 = vrot.lane.b32.xlu0 %v537, 1
      %v866 = vpop.permute.xlu0 %865
      %867 = vrot.lane.b32.xlu0 %v538, 1
      %v868 = vpop.permute.xlu0 %867
      %869 = vrot.lane.b32.xlu0 %v539, 1
      %v870 = vpop.permute.xlu0 %869
      %871 = vrot.lane.b32.xlu0 %v540, 1
      %v872 = vpop.permute.xlu0 %871
      %vm873 = vcmask 7168
      %v874 = vsel %vm873, %v866, %v868
      %v875 = vsel %vm873, %v868, %v870
      %v876 = vsel %vm873, %v870, %v872
      %v878 = vsel %vm553, %v864, 0
      %v881 = vsel %vm557, %v874, 0
      %v884 = vsel %vm557, %v875, 0
      %v887 = vsel %vm557, %v876, 0
      %889 = vmatprep.subr.bf16.mxu0 %v884
      %890 = vmatpush1.bf16.msra.mxu0 %v881
      %891 = vmatprep.subr.bf16.mxu0 0
      %892 = vmatpush1.bf16.msra.mxu0 0
      %893 = vmatprep.subr.bf16.mxu0 0
      %894 = vmatpush1.bf16.msra.mxu0 0
      %895 = vmatprep.subr.bf16.mxu0 0
      %896 = vmatpush1.bf16.msra.mxu0 0
      %897 = vmatprep.subr.bf16.mxu0 0
      %898 = vmatpush1.bf16.msra.mxu0 0
      %899 = vmatprep.subr.bf16.mxu0 0
      %900 = vmatpush1.bf16.msra.mxu0 0
      %901 = vmatprep.subr.bf16.mxu0 0
      %902 = vmatpush1.bf16.msra.mxu0 0
      %903 = vmatprep.subr.bf16.mxu0 0
      %904 = vmatpush1.bf16.msra.mxu0 0
      %905 = vmatprep.subr.bf16.mxu0 0
      %906 = vmatpush1.bf16.msra.mxu0 0
      %907 = vmatprep.subr.bf16.mxu0 0
      %908 = vmatpush1.bf16.msra.mxu0 0
      %909 = vmatprep.subr.bf16.mxu0 0
      %910 = vmatpush1.bf16.msra.mxu0 0
      %911 = vmatprep.subr.bf16.mxu0 0
      %912 = vmatpush1.bf16.msra.mxu0 0
      %913 = vmatprep.subr.bf16.mxu0 0
      %914 = vmatpush1.bf16.msra.mxu0 0
      %915 = vmatprep.subr.bf16.mxu0 0
      %916 = vmatpush1.bf16.msra.mxu0 0
      %917 = vmatprep.subr.bf16.mxu0 0
      %918 = vmatpush1.bf16.msra.mxu0 0
      %919 = vmatprep.subr.bf16.mxu0 0
      %920 = vmatpush1.bf16.msra.mxu0 0
      %921 = vmatprep.mubr.bf16.mxu0 0
      %922 = vmatmul.mubr.bf16.gmra.mrb[0].mxu0 %v878
      %v923 = vpop.f32.mrb[0].mxu0
      %v924 = vadd.f32 0.0, %v923
      %v925 = vpop.f32.mrb[0].mxu0
      %v926 = vadd.f32 0.0, %v925
      %v927 = vpop.f32.mrb[0].mxu0
      %v928 = vpop.f32.mrb[0].mxu0
      %929 = vdwg.mxu0
      %930 = vmatprep.subr.bf16.mxu0 0
      %931 = vmatpush1.bf16.msra.mxu0 %v887
      %932 = vmatprep.subr.bf16.mxu0 0
      %933 = vmatpush1.bf16.msra.mxu0 0
      %934 = vmatprep.subr.bf16.mxu0 0
      %935 = vmatpush1.bf16.msra.mxu0 0
      %936 = vmatprep.subr.bf16.mxu0 0
      %937 = vmatpush1.bf16.msra.mxu0 0
      %938 = vmatprep.subr.bf16.mxu0 0
      %939 = vmatpush1.bf16.msra.mxu0 0
      %940 = vmatprep.subr.bf16.mxu0 0
      %941 = vmatpush1.bf16.msra.mxu0 0
      %942 = vmatprep.subr.bf16.mxu0 0
      %943 = vmatpush1.bf16.msra.mxu0 0
      %944 = vmatprep.subr.bf16.mxu0 0
      %945 = vmatpush1.bf16.msra.mxu0 0
      %946 = vmatprep.subr.bf16.mxu0 0
      %947 = vmatpush1.bf16.msra.mxu0 0
      %948 = vmatprep.subr.bf16.mxu0 0
      %949 = vmatpush1.bf16.msra.mxu0 0
      %950 = vmatprep.subr.bf16.mxu0 0
      %951 = vmatpush1.bf16.msra.mxu0 0
      %952 = vmatprep.subr.bf16.mxu0 0
      %953 = vmatpush1.bf16.msra.mxu0 0
      %954 = vmatprep.subr.bf16.mxu0 0
      %955 = vmatpush1.bf16.msra.mxu0 0
      %956 = vmatprep.subr.bf16.mxu0 0
      %957 = vmatpush1.bf16.msra.mxu0 0
      %958 = vmatprep.subr.bf16.mxu0 0
      %959 = vmatpush1.bf16.msra.mxu0 0
      %960 = vmatprep.subr.bf16.mxu0 0
      %961 = vmatpush1.bf16.msra.mxu0 0
      %962 = vmatprep.mubr.bf16.mxu0 0
      %963 = vmatmul.mubr.bf16.gmra.mrb[0].mxu0 %v878
      %v964 = vpop.f32.mrb[0].mxu0
      %v965 = vadd.f32 0.0, %v964
      %v966 = vpop.f32.mrb[0].mxu0
      %v967 = vpop.f32.mrb[0].mxu0
      %v968 = vpop.f32.mrb[0].mxu0
      %969 = vdwg.mxu0
      %v970 = vadd.f32 %v860, %v924
      %v971 = vadd.f32 %v861, %v926
      %v972 = vadd.f32 %v862, %v965
      %s973 = scalar_lea.vmem %s2, 16
      %v974 = vld [vmem:[%s973] sm:$0xf]
      %v975 = vld [vmem:[#allocation2 + $0x4] sm:$0xff]
      %v976 = vld [vmem:[#allocation2 + $0xc] sm:$0xf]
      %v979 = vunpack.c.l.b16 %v975
      %v980 = vunpack.c.h.b16 %v975
      %v981 = vunpack.c.l.b16 %v976
      %v982 = vpack.c.b16 %v979, %v979
      %v983 = vpack.c.b16 %v980, %v980
      %v984 = vpack.c.b16 %v981, %v981
      %v986 = vsel %vm553, %v974, 0
      %v989 = vsel %vm557, %v982, 0
      %v992 = vsel %vm557, %v983, 0
      %v995 = vsel %vm557, %v984, 0
      %997 = vmatprep.subr.bf16.mxu0 %v992
      %998 = vmatpush1.bf16.msra.mxu0 %v989
      %999 = vmatprep.subr.bf16.mxu0 0
      %1000 = vmatpush1.bf16.msra.mxu0 0
      %1001 = vmatprep.subr.bf16.mxu0 0
      %1002 = vmatpush1.bf16.msra.mxu0 0
      %1003 = vmatprep.subr.bf16.mxu0 0
      %1004 = vmatpush1.bf16.msra.mxu0 0
      %1005 = vmatprep.subr.bf16.mxu0 0
      %1006 = vmatpush1.bf16.msra.mxu0 0
      %1007 = vmatprep.subr.bf16.mxu0 0
      %1008 = vmatpush1.bf16.msra.mxu0 0
      %1009 = vmatprep.subr.bf16.mxu0 0
      %1010 = vmatpush1.bf16.msra.mxu0 0
      %1011 = vmatprep.subr.bf16.mxu0 0
      %1012 = vmatpush1.bf16.msra.mxu0 0
      %1013 = vmatprep.subr.bf16.mxu0 0
      %1014 = vmatpush1.bf16.msra.mxu0 0
      %1015 = vmatprep.subr.bf16.mxu0 0
      %1016 = vmatpush1.bf16.msra.mxu0 0
      %1017 = vmatprep.subr.bf16.mxu0 0
      %1018 = vmatpush1.bf16.msra.mxu0 0
      %1019 = vmatprep.subr.bf16.mxu0 0
      %1020 = vmatpush1.bf16.msra.mxu0 0
      %1021 = vmatprep.subr.bf16.mxu0 0
      %1022 = vmatpush1.bf16.msra.mxu0 0
      %1023 = vmatprep.subr.bf16.mxu0 0
      %1024 = vmatpush1.bf16.msra.mxu0 0
      %1025 = vmatprep.subr.bf16.mxu0 0
      %1026 = vmatpush1.bf16.msra.mxu0 0
      %1027 = vmatprep.subr.bf16.mxu0 0
      %1028 = vmatpush1.bf16.msra.mxu0 0
      %1029 = vmatprep.mubr.bf16.mxu0 0
      %1030 = vmatmul.mubr.bf16.gmra.mrb[0].mxu0 %v986
      %v1031 = vpop.f32.mrb[0].mxu0
      %v1032 = vadd.f32 0.0, %v1031
      %v1033 = vpop.f32.mrb[0].mxu0
      %v1034 = vadd.f32 0.0, %v1033
      %v1035 = vpop.f32.mrb[0].mxu0
      %v1036 = vpop.f32.mrb[0].mxu0
      %1037 = vdwg.mxu0
      %1038 = vmatprep.subr.bf16.mxu0 0
      %1039 = vmatpush1.bf16.msra.mxu0 %v995
      %1040 = vmatprep.subr.bf16.mxu0 0
      %1041 = vmatpush1.bf16.msra.mxu0 0
      %1042 = vmatprep.subr.bf16.mxu0 0
      %1043 = vmatpush1.bf16.msra.mxu0 0
      %1044 = vmatprep.subr.bf16.mxu0 0
      %1045 = vmatpush1.bf16.msra.mxu0 0
      %1046 = vmatprep.subr.bf16.mxu0 0
      %1047 = vmatpush1.bf16.msra.mxu0 0
      %1048 = vmatprep.subr.bf16.mxu0 0
      %1049 = vmatpush1.bf16.msra.mxu0 0
      %1050 = vmatprep.subr.bf16.mxu0 0
      %1051 = vmatpush1.bf16.msra.mxu0 0
      %1052 = vmatprep.subr.bf16.mxu0 0
      %1053 = vmatpush1.bf16.msra.mxu0 0
      %1054 = vmatprep.subr.bf16.mxu0 0
      %1055 = vmatpush1.bf16.msra.mxu0 0
      %1056 = vmatprep.subr.bf16.mxu0 0
      %1057 = vmatpush1.bf16.msra.mxu0 0
      %1058 = vmatprep.subr.bf16.mxu0 0
      %1059 = vmatpush1.bf16.msra.mxu0 0
      %1060 = vmatprep.subr.bf16.mxu0 0
      %1061 = vmatpush1.bf16.msra.mxu0 0
      %1062 = vmatprep.subr.bf16.mxu0 0
      %1063 = vmatpush1.bf16.msra.mxu0 0
      %1064 = vmatprep.subr.bf16.mxu0 0
      %1065 = vmatpush1.bf16.msra.mxu0 0
      %1066 = vmatprep.subr.bf16.mxu0 0
      %1067 = vmatpush1.bf16.msra.mxu0 0
      %1068 = vmatprep.subr.bf16.mxu0 0
      %1069 = vmatpush1.bf16.msra.mxu0 0
      %1070 = vmatprep.mubr.bf16.mxu0 0
      %1071 = vmatmul.mubr.bf16.gmra.mrb[0].mxu0 %v986
      %v1072 = vpop.f32.mrb[0].mxu0
      %v1073 = vadd.f32 0.0, %v1072
      %v1074 = vpop.f32.mrb[0].mxu0
      %v1075 = vpop.f32.mrb[0].mxu0
      %v1076 = vpop.f32.mrb[0].mxu0
      %1077 = vdwg.mxu0
      %v1078 = vadd.f32 %v970, %v1032
      %v1079 = vadd.f32 %v971, %v1034
      %v1080 = vadd.f32 %v972, %v1073
      %s1081 = scalar_lea.vmem %s2, 20
      %v1082 = vld [vmem:[%s1081] sm:$0xf]
      %1083 = vrot.lane.b32.xlu0 %v982, 127
      %v1084 = vpop.permute.xlu0 %1083
      %1085 = vrot.lane.b32.xlu0 %v983, 127
      %v1086 = vpop.permute.xlu0 %1085
      %1087 = vrot.lane.b32.xlu0 %v984, 127
      %v1088 = vpop.permute.xlu0 %1087
      %vm1089 = vcmask 1039360
      %v1090 = vsel %vm1089, %v1084, %v1086
      %v1091 = vsel %vm1089, %v1086, %v1088
      %v1093 = vsel %vm553, %v1082, 0
      %v1096 = vsel %vm557, %v1090, 0
      %v1099 = vsel %vm557, %v1091, 0
      %v1102 = vsel %vm557, %v1088, 0
      %1104 = vmatprep.subr.bf16.mxu0 %v1099
      %1105 = vmatpush1.bf16.msra.mxu0 %v1096
      %1106 = vmatprep.subr.bf16.mxu0 0
      %1107 = vmatpush1.bf16.msra.mxu0 0
      %1108 = vmatprep.subr.bf16.mxu0 0
      %1109 = vmatpush1.bf16.msra.mxu0 0
      %1110 = vmatprep.subr.bf16.mxu0 0
      %1111 = vmatpush1.bf16.msra.mxu0 0
      %1112 = vmatprep.subr.bf16.mxu0 0
      %1113 = vmatpush1.bf16.msra.mxu0 0
      %1114 = vmatprep.subr.bf16.mxu0 0
      %1115 = vmatpush1.bf16.msra.mxu0 0
      %1116 = vmatprep.subr.bf16.mxu0 0
      %1117 = vmatpush1.bf16.msra.mxu0 0
      %1118 = vmatprep.subr.bf16.mxu0 0
      %1119 = vmatpush1.bf16.msra.mxu0 0
      %1120 = vmatprep.subr.bf16.mxu0 0
      %1121 = vmatpush1.bf16.msra.mxu0 0
      %1122 = vmatprep.subr.bf16.mxu0 0
      %1123 = vmatpush1.bf16.msra.mxu0 0
      %1124 = vmatprep.subr.bf16.mxu0 0
      %1125 = vmatpush1.bf16.msra.mxu0 0
      %1126 = vmatprep.subr.bf16.mxu0 0
      %1127 = vmatpush1.bf16.msra.mxu0 0
      %1128 = vmatprep.subr.bf16.mxu0 0
      %1129 = vmatpush1.bf16.msra.mxu0 0
      %1130 = vmatprep.subr.bf16.mxu0 0
      %1131 = vmatpush1.bf16.msra.mxu0 0
      %1132 = vmatprep.subr.bf16.mxu0 0
      %1133 = vmatpush1.bf16.msra.mxu0 0
      %1134 = vmatprep.subr.bf16.mxu0 0
      %1135 = vmatpush1.bf16.msra.mxu0 0
      %1136 = vmatprep.mubr.bf16.mxu0 0
      %1137 = vmatmul.mubr.bf16.gmra.mrb[0].mxu0 %v1093
      %v1138 = vpop.f32.mrb[0].mxu0
      %v1139 = vadd.f32 0.0, %v1138
      %v1140 = vpop.f32.mrb[0].mxu0
      %v1141 = vadd.f32 0.0, %v1140
      %v1142 = vpop.f32.mrb[0].mxu0
      %v1143 = vpop.f32.mrb[0].mxu0
      %1144 = vdwg.mxu0
      %1145 = vmatprep.subr.bf16.mxu0 0
      %1146 = vmatpush1.bf16.msra.mxu0 %v1102
      %1147 = vmatprep.subr.bf16.mxu0 0
      %1148 = vmatpush1.bf16.msra.mxu0 0
      %1149 = vmatprep.subr.bf16.mxu0 0
      %1150 = vmatpush1.bf16.msra.mxu0 0
      %1151 = vmatprep.subr.bf16.mxu0 0
      %1152 = vmatpush1.bf16.msra.mxu0 0
      %1153 = vmatprep.subr.bf16.mxu0 0
      %1154 = vmatpush1.bf16.msra.mxu0 0
      %1155 = vmatprep.subr.bf16.mxu0 0
      %1156 = vmatpush1.bf16.msra.mxu0 0
      %1157 = vmatprep.subr.bf16.mxu0 0
      %1158 = vmatpush1.bf16.msra.mxu0 0
      %1159 = vmatprep.subr.bf16.mxu0 0
      %1160 = vmatpush1.bf16.msra.mxu0 0
      %1161 = vmatprep.subr.bf16.mxu0 0
      %1162 = vmatpush1.bf16.msra.mxu0 0
      %1163 = vmatprep.subr.bf16.mxu0 0
      %1164 = vmatpush1.bf16.msra.mxu0 0
      %1165 = vmatprep.subr.bf16.mxu0 0
      %1166 = vmatpush1.bf16.msra.mxu0 0
      %1167 = vmatprep.subr.bf16.mxu0 0
      %1168 = vmatpush1.bf16.msra.mxu0 0
      %1169 = vmatprep.subr.bf16.mxu0 0
      %1170 = vmatpush1.bf16.msra.mxu0 0
      %1171 = vmatprep.subr.bf16.mxu0 0
      %1172 = vmatpush1.bf16.msra.mxu0 0
      %1173 = vmatprep.subr.bf16.mxu0 0
      %1174 = vmatpush1.bf16.msra.mxu0 0
      %1175 = vmatprep.subr.bf16.mxu0 0
      %1176 = vmatpush1.bf16.msra.mxu0 0
      %1177 = vmatprep.mubr.bf16.mxu0 0
      %1178 = vmatmul.mubr.bf16.gmra.mrb[0].mxu0 %v1093
      %v1179 = vpop.f32.mrb[0].mxu0
      %v1180 = vadd.f32 0.0, %v1179
      %v1181 = vpop.f32.mrb[0].mxu0
      %v1182 = vpop.f32.mrb[0].mxu0
      %v1183 = vpop.f32.mrb[0].mxu0
      %1184 = vdwg.mxu0
      %v1185 = vadd.f32 %v1078, %v1139
      %v1186 = vadd.f32 %v1079, %v1141
      %v1187 = vadd.f32 %v1080, %v1180
      %s1188 = scalar_lea.vmem %s2, 24
      %v1189 = vld [vmem:[%s1188] sm:$0xf]
      %1190 = vrot.lane.b32.xlu0 %v982, 111
      %v1191 = vpop.permute.xlu0 %1190
      %1192 = vrot.lane.b32.xlu0 %v983, 111
      %v1193 = vpop.permute.xlu0 %1192
      %1194 = vrot.lane.b32.xlu0 %v984, 111
      %v1195 = vpop.permute.xlu0 %1194
      %vm1196 = vcmask 908288
      %v1197 = vsel %vm1196, %v1191, %v1193
      %v1198 = vsel %vm1196, %v1193, %v1195
      %v1200 = vsel %vm553, %v1189, 0
      %v1203 = vsel %vm557, %v1197, 0
      %v1206 = vsel %vm557, %v1198, 0
      %v1209 = vsel %vm557, %v1195, 0
      %1211 = vmatprep.subr.bf16.mxu0 %v1206
      %1212 = vmatpush1.bf16.msra.mxu0 %v1203
      %1213 = vmatprep.subr.bf16.mxu0 0
      %1214 = vmatpush1.bf16.msra.mxu0 0
      %1215 = vmatprep.subr.bf16.mxu0 0
      %1216 = vmatpush1.bf16.msra.mxu0 0
      %1217 = vmatprep.subr.bf16.mxu0 0
      %1218 = vmatpush1.bf16.msra.mxu0 0
      %1219 = vmatprep.subr.bf16.mxu0 0
      %1220 = vmatpush1.bf16.msra.mxu0 0
      %1221 = vmatprep.subr.bf16.mxu0 0
      %1222 = vmatpush1.bf16.msra.mxu0 0
      %1223 = vmatprep.subr.bf16.mxu0 0
      %1224 = vmatpush1.bf16.msra.mxu0 0
      %1225 = vmatprep.subr.bf16.mxu0 0
      %1226 = vmatpush1.bf16.msra.mxu0 0
      %1227 = vmatprep.subr.bf16.mxu0 0
      %1228 = vmatpush1.bf16.msra.mxu0 0
      %1229 = vmatprep.subr.bf16.mxu0 0
      %1230 = vmatpush1.bf16.msra.mxu0 0
      %1231 = vmatprep.subr.bf16.mxu0 0
      %1232 = vmatpush1.bf16.msra.mxu0 0
      %1233 = vmatprep.subr.bf16.mxu0 0
      %1234 = vmatpush1.bf16.msra.mxu0 0
      %1235 = vmatprep.subr.bf16.mxu0 0
      %1236 = vmatpush1.bf16.msra.mxu0 0
      %1237 = vmatprep.subr.bf16.mxu0 0
      %1238 = vmatpush1.bf16.msra.mxu0 0
      %1239 = vmatprep.subr.bf16.mxu0 0
      %1240 = vmatpush1.bf16.msra.mxu0 0
      %1241 = vmatprep.subr.bf16.mxu0 0
      %1242 = vmatpush1.bf16.msra.mxu0 0
      %1243 = vmatprep.mubr.bf16.mxu0 0
      %1244 = vmatmul.mubr.bf16.gmra.mrb[0].mxu0 %v1200
      %v1245 = vpop.f32.mrb[0].mxu0
      %v1246 = vadd.f32 0.0, %v1245
      %v1247 = vpop.f32.mrb[0].mxu0
      %v1248 = vadd.f32 0.0, %v1247
      %v1249 = vpop.f32.mrb[0].mxu0
      %v1250 = vpop.f32.mrb[0].mxu0
      %1251 = vdwg.mxu0
      %1252 = vmatprep.subr.bf16.mxu0 0
      %1253 = vmatpush1.bf16.msra.mxu0 %v1209
      %1254 = vmatprep.subr.bf16.mxu0 0
      %1255 = vmatpush1.bf16.msra.mxu0 0
      %1256 = vmatprep.subr.bf16.mxu0 0
      %1257 = vmatpush1.bf16.msra.mxu0 0
      %1258 = vmatprep.subr.bf16.mxu0 0
      %1259 = vmatpush1.bf16.msra.mxu0 0
      %1260 = vmatprep.subr.bf16.mxu0 0
      %1261 = vmatpush1.bf16.msra.mxu0 0
      %1262 = vmatprep.subr.bf16.mxu0 0
      %1263 = vmatpush1.bf16.msra.mxu0 0
      %1264 = vmatprep.subr.bf16.mxu0 0
      %1265 = vmatpush1.bf16.msra.mxu0 0
      %1266 = vmatprep.subr.bf16.mxu0 0
      %1267 = vmatpush1.bf16.msra.mxu0 0
      %1268 = vmatprep.subr.bf16.mxu0 0
      %1269 = vmatpush1.bf16.msra.mxu0 0
      %1270 = vmatprep.subr.bf16.mxu0 0
      %1271 = vmatpush1.bf16.msra.mxu0 0
      %1272 = vmatprep.subr.bf16.mxu0 0
      %1273 = vmatpush1.bf16.msra.mxu0 0
      %1274 = vmatprep.subr.bf16.mxu0 0
      %1275 = vmatpush1.bf16.msra.mxu0 0
      %1276 = vmatprep.subr.bf16.mxu0 0
      %1277 = vmatpush1.bf16.msra.mxu0 0
      %1278 = vmatprep.subr.bf16.mxu0 0
      %1279 = vmatpush1.bf16.msra.mxu0 0
      %1280 = vmatprep.subr.bf16.mxu0 0
      %1281 = vmatpush1.bf16.msra.mxu0 0
      %1282 = vmatprep.subr.bf16.mxu0 0
      %1283 = vmatpush1.bf16.msra.mxu0 0
      %1284 = vmatprep.mubr.bf16.mxu0 0
      %1285 = vmatmul.mubr.bf16.gmra.mrb[0].mxu0 %v1200
      %v1286 = vpop.f32.mrb[0].mxu0
      %v1287 = vadd.f32 0.0, %v1286
      %v1288 = vpop.f32.mrb[0].mxu0
      %v1289 = vpop.f32.mrb[0].mxu0
      %v1290 = vpop.f32.mrb[0].mxu0
      %1291 = vdwg.mxu0
      %v1292 = vadd.f32 %v1185, %v1246
      %v1293 = vadd.f32 %v1186, %v1248
      %v1294 = vadd.f32 %v1187, %v1287
      %s1295 = scalar_lea.vmem %s2, 28
      %v1296 = vld [vmem:[%s1295] sm:$0xf]
      %1297 = vrot.lane.b32.xlu0 %v982, 110
      %v1298 = vpop.permute.xlu0 %1297
      %1299 = vrot.lane.b32.xlu0 %v983, 110
      %v1300 = vpop.permute.xlu0 %1299
      %1301 = vrot.lane.b32.xlu0 %v984, 110
      %v1302 = vpop.permute.xlu0 %1301
      %vm1303 = vcmask 900096
      %v1304 = vsel %vm1303, %v1298, %v1300
      %v1305 = vsel %vm1303, %v1300, %v1302
      %v1307 = vsel %vm553, %v1296, 0
      %v1310 = vsel %vm557, %v1304, 0
      %v1313 = vsel %vm557, %v1305, 0
      %v1316 = vsel %vm557, %v1302, 0
      %1318 = vmatprep.subr.bf16.mxu0 %v1313
      %1319 = vmatpush1.bf16.msra.mxu0 %v1310
      %1320 = vmatprep.subr.bf16.mxu0 0
      %1321 = vmatpush1.bf16.msra.mxu0 0
      %1322 = vmatprep.subr.bf16.mxu0 0
      %1323 = vmatpush1.bf16.msra.mxu0 0
      %1324 = vmatprep.subr.bf16.mxu0 0
      %1325 = vmatpush1.bf16.msra.mxu0 0
      %1326 = vmatprep.subr.bf16.mxu0 0
      %1327 = vmatpush1.bf16.msra.mxu0 0
      %1328 = vmatprep.subr.bf16.mxu0 0
      %1329 = vmatpush1.bf16.msra.mxu0 0
      %1330 = vmatprep.subr.bf16.mxu0 0
      %1331 = vmatpush1.bf16.msra.mxu0 0
      %1332 = vmatprep.subr.bf16.mxu0 0
      %1333 = vmatpush1.bf16.msra.mxu0 0
      %1334 = vmatprep.subr.bf16.mxu0 0
      %1335 = vmatpush1.bf16.msra.mxu0 0
      %1336 = vmatprep.subr.bf16.mxu0 0
      %1337 = vmatpush1.bf16.msra.mxu0 0
      %1338 = vmatprep.subr.bf16.mxu0 0
      %1339 = vmatpush1.bf16.msra.mxu0 0
      %1340 = vmatprep.subr.bf16.mxu0 0
      %1341 = vmatpush1.bf16.msra.mxu0 0
      %1342 = vmatprep.subr.bf16.mxu0 0
      %1343 = vmatpush1.bf16.msra.mxu0 0
      %1344 = vmatprep.subr.bf16.mxu0 0
      %1345 = vmatpush1.bf16.msra.mxu0 0
      %1346 = vmatprep.subr.bf16.mxu0 0
      %1347 = vmatpush1.bf16.msra.mxu0 0
      %1348 = vmatprep.subr.bf16.mxu0 0
      %1349 = vmatpush1.bf16.msra.mxu0 0
      %1350 = vmatprep.mubr.bf16.mxu0 0
      %1351 = vmatmul.mubr.bf16.gmra.mrb[0].mxu0 %v1307
      %v1352 = vpop.f32.mrb[0].mxu0
      %v1353 = vadd.f32 0.0, %v1352
      %v1354 = vpop.f32.mrb[0].mxu0
      %v1355 = vadd.f32 0.0, %v1354
      %v1356 = vpop.f32.mrb[0].mxu0
      %v1357 = vpop.f32.mrb[0].mxu0
      %1358 = vdwg.mxu0
      %1359 = vmatprep.subr.bf16.mxu0 0
      %1360 = vmatpush1.bf16.msra.mxu0 %v1316
      %1361 = vmatprep.subr.bf16.mxu0 0
      %1362 = vmatpush1.bf16.msra.mxu0 0
      %1363 = vmatprep.subr.bf16.mxu0 0
      %1364 = vmatpush1.bf16.msra.mxu0 0
      %1365 = vmatprep.subr.bf16.mxu0 0
      %1366 = vmatpush1.bf16.msra.mxu0 0
      %1367 = vmatprep.subr.bf16.mxu0 0
      %1368 = vmatpush1.bf16.msra.mxu0 0
      %1369 = vmatprep.subr.bf16.mxu0 0
      %1370 = vmatpush1.bf16.msra.mxu0 0
      %1371 = vmatprep.subr.bf16.mxu0 0
      %1372 = vmatpush1.bf16.msra.mxu0 0
      %1373 = vmatprep.subr.bf16.mxu0 0
      %1374 = vmatpush1.bf16.msra.mxu0 0
      %1375 = vmatprep.subr.bf16.mxu0 0
      %1376 = vmatpush1.bf16.msra.mxu0 0
      %1377 = vmatprep.subr.bf16.mxu0 0
      %1378 = vmatpush1.bf16.msra.mxu0 0
      %1379 = vmatprep.subr.bf16.mxu0 0
      %1380 = vmatpush1.bf16.msra.mxu0 0
      %1381 = vmatprep.subr.bf16.mxu0 0
      %1382 = vmatpush1.bf16.msra.mxu0 0
      %1383 = vmatprep.subr.bf16.mxu0 0
      %1384 = vmatpush1.bf16.msra.mxu0 0
      %1385 = vmatprep.subr.bf16.mxu0 0
      %1386 = vmatpush1.bf16.msra.mxu0 0
      %1387 = vmatprep.subr.bf16.mxu0 0
      %1388 = vmatpush1.bf16.msra.mxu0 0
      %1389 = vmatprep.subr.bf16.mxu0 0
      %1390 = vmatpush1.bf16.msra.mxu0 0
      %1391 = vmatprep.mubr.bf16.mxu0 0
      %1392 = vmatmul.mubr.bf16.gmra.mrb[0].mxu0 %v1307
      %v1393 = vpop.f32.mrb[0].mxu0
      %v1394 = vadd.f32 0.0, %v1393
      %v1395 = vpop.f32.mrb[0].mxu0
      %v1396 = vpop.f32.mrb[0].mxu0
      %v1397 = vpop.f32.mrb[0].mxu0
      %1398 = vdwg.mxu0
      %v1399 = vadd.f32 %v1292, %v1353
      %v1400 = vadd.f32 %v1293, %v1355
      %v1401 = vadd.f32 %v1294, %v1394
      %s1402 = scalar_lea.vmem %s2, 32
      %v1403 = vld [vmem:[%s1402] sm:$0xf]
      %1404 = vrot.lane.b32.xlu0 %v982, 109
      %v1405 = vpop.permute.xlu0 %1404
      %1406 = vrot.lane.b32.xlu0 %v983, 109
      %v1407 = vpop.permute.xlu0 %1406
      %1408 = vrot.lane.b32.xlu0 %v984, 109
      %v1409 = vpop.permute.xlu0 %1408
      %vm1410 = vcmask 891904
      %v1411 = vsel %vm1410, %v1405, %v1407
      %v1412 = vsel %vm1410, %v1407, %v1409
      %v1414 = vsel %vm553, %v1403, 0
      %v1417 = vsel %vm557, %v1411, 0
      %v1420 = vsel %vm557, %v1412, 0
      %v1423 = vsel %vm557, %v1409, 0
      %1425 = vmatprep.subr.bf16.mxu0 %v1420
      %1426 = vmatpush1.bf16.msra.mxu0 %v1417
      %1427 = vmatprep.subr.bf16.mxu0 0
      %1428 = vmatpush1.bf16.msra.mxu0 0
      %1429 = vmatprep.subr.bf16.mxu0 0
      %1430 = vmatpush1.bf16.msra.mxu0 0
      %1431 = vmatprep.subr.bf16.mxu0 0
      %1432 = vmatpush1.bf16.msra.mxu0 0
      %1433 = vmatprep.subr.bf16.mxu0 0
      %1434 = vmatpush1.bf16.msra.mxu0 0
      %1435 = vmatprep.subr.bf16.mxu0 0
      %1436 = vmatpush1.bf16.msra.mxu0 0
      %1437 = vmatprep.subr.bf16.mxu0 0
      %1438 = vmatpush1.bf16.msra.mxu0 0
      %1439 = vmatprep.subr.bf16.mxu0 0
      %1440 = vmatpush1.bf16.msra.mxu0 0
      %1441 = vmatprep.subr.bf16.mxu0 0
      %1442 = vmatpush1.bf16.msra.mxu0 0
      %1443 = vmatprep.subr.bf16.mxu0 0
      %1444 = vmatpush1.bf16.msra.mxu0 0
      %1445 = vmatprep.subr.bf16.mxu0 0
      %1446 = vmatpush1.bf16.msra.mxu0 0
      %1447 = vmatprep.subr.bf16.mxu0 0
      %1448 = vmatpush1.bf16.msra.mxu0 0
      %1449 = vmatprep.subr.bf16.mxu0 0
      %1450 = vmatpush1.bf16.msra.mxu0 0
      %1451 = vmatprep.subr.bf16.mxu0 0
      %1452 = vmatpush1.bf16.msra.mxu0 0
      %1453 = vmatprep.subr.bf16.mxu0 0
      %1454 = vmatpush1.bf16.msra.mxu0 0
      %1455 = vmatprep.subr.bf16.mxu0 0
      %1456 = vmatpush1.bf16.msra.mxu0 0
      %1457 = vmatprep.mubr.bf16.mxu0 0
      %1458 = vmatmul.mubr.bf16.gmra.mrb[0].mxu0 %v1414
      %v1459 = vpop.f32.mrb[0].mxu0
      %v1460 = vadd.f32 0.0, %v1459
      %v1461 = vpop.f32.mrb[0].mxu0
      %v1462 = vadd.f32 0.0, %v1461
      %v1463 = vpop.f32.mrb[0].mxu0
      %v1464 = vpop.f32.mrb[0].mxu0
      %1465 = vdwg.mxu0
      %1466 = vmatprep.subr.bf16.mxu0 0
      %1467 = vmatpush1.bf16.msra.mxu0 %v1423
      %1468 = vmatprep.subr.bf16.mxu0 0
      %1469 = vmatpush1.bf16.msra.mxu0 0
      %1470 = vmatprep.subr.bf16.mxu0 0
      %1471 = vmatpush1.bf16.msra.mxu0 0
      %1472 = vmatprep.subr.bf16.mxu0 0
      %1473 = vmatpush1.bf16.msra.mxu0 0
      %1474 = vmatprep.subr.bf16.mxu0 0
      %1475 = vmatpush1.bf16.msra.mxu0 0
      %1476 = vmatprep.subr.bf16.mxu0 0
      %1477 = vmatpush1.bf16.msra.mxu0 0
      %1478 = vmatprep.subr.bf16.mxu0 0
      %1479 = vmatpush1.bf16.msra.mxu0 0
      %1480 = vmatprep.subr.bf16.mxu0 0
      %1481 = vmatpush1.bf16.msra.mxu0 0
      %1482 = vmatprep.subr.bf16.mxu0 0
      %1483 = vmatpush1.bf16.msra.mxu0 0
      %1484 = vmatprep.subr.bf16.mxu0 0
      %1485 = vmatpush1.bf16.msra.mxu0 0
      %1486 = vmatprep.subr.bf16.mxu0 0
      %1487 = vmatpush1.bf16.msra.mxu0 0
      %1488 = vmatprep.subr.bf16.mxu0 0
      %1489 = vmatpush1.bf16.msra.mxu0 0
      %1490 = vmatprep.subr.bf16.mxu0 0
      %1491 = vmatpush1.bf16.msra.mxu0 0
      %1492 = vmatprep.subr.bf16.mxu0 0
      %1493 = vmatpush1.bf16.msra.mxu0 0
      %1494 = vmatprep.subr.bf16.mxu0 0
      %1495 = vmatpush1.bf16.msra.mxu0 0
      %1496 = vmatprep.subr.bf16.mxu0 0
      %1497 = vmatpush1.bf16.msra.mxu0 0
      %1498 = vmatprep.mubr.bf16.mxu0 0
      %1499 = vmatmul.mubr.bf16.gmra.mrb[0].mxu0 %v1414
      %v1500 = vpop.f32.mrb[0].mxu0
      %v1501 = vadd.f32 0.0, %v1500
      %v1502 = vpop.f32.mrb[0].mxu0
      %v1503 = vpop.f32.mrb[0].mxu0
      %v1504 = vpop.f32.mrb[0].mxu0
      %1505 = vdwg.mxu0
      %v1506 = vadd.f32 %v1399, %v1460
      %v1507 = vadd.f32 %v1400, %v1462
      %v1508 = vadd.f32 %v1401, %v1501
      %v1509 = vld [vmem:[%s5] sm:$0xff]
      %v1510 = vld [vmem:[%s418] sm:$0xff]
      %v1511 = vld [vmem:[%s418 + $0x8] sm:$0xff]
      %v1512 = vunpack.c.l.bf16 %v1510
      %v1513 = vunpack.c.h.bf16 %v1510
      %v1514 = vunpack.c.l.bf16 %v1511
      %v1515 = vunpack.c.h.bf16 %v1511
      %1517 = vset.pattern.permute.xlu0 0
      %1518 = vperm.xlu0 %1517, %v1509
      %v1519 = vpop.permute.xlu0 %1518
      %v1521 = vmul.f32 %v1512, %v1519
      %v1522 = vmul.f32 %v1513, %v1519
      %v1523 = vmul.f32 %v1514, %v1519
      %v1524 = vmul.f32 %v1515, %v1519
      %1525 = vset.pattern.permute.xlu0 1
      %1526 = vperm.xlu0 %1525, %v1509
      %v1527 = vpop.permute.xlu0 %1526
      %v1529 = vadd.f32 %v1521, %v1527
      %v1530 = vadd.f32 %v1522, %v1527
      %v1531 = vadd.f32 %v1523, %v1527
      %v1532 = vadd.f32 %v1524, %v1527
      %vm1533 = vcmp.gt.f32.partialorder %v1529, 0.0
      %vm1534 = vcmp.gt.f32.partialorder %v1530, 0.0
      %vm1535 = vcmp.gt.f32.partialorder %v1531, 0.0
      %vm1536 = vcmp.gt.f32.partialorder %v1532, 0.0
      %1537 = vset.pattern.permute.xlu0 2
      %1538 = vperm.xlu0 %1537, %v1509
      %v1539 = vpop.permute.xlu0 %1538
      %v1541 = vmul.f32 %v1539, %v1529
      %v1542 = vmul.f32 %v1539, %v1530
      %v1543 = vmul.f32 %v1539, %v1531
      %v1544 = vmul.f32 %v1539, %v1532
      %v1545 = vsel %vm1533, %v1529, %v1541
      %v1546 = vsel %vm1534, %v1530, %v1542
      %v1547 = vsel %vm1535, %v1531, %v1543
      %v1548 = vsel %vm1536, %v1532, %v1544
      %v1549 = vsel %vm500, %v1545, 0.0
      %v1550 = vsel %vm501, %v1546, 0.0
      %v1551 = vsel %vm502, %v1547, 0.0
      %v1552 = vsel %vm503, %v1548, 0.0
      %v1553 = vpack.c.bf16 %v1549, %v1549
      %v1554 = vpack.c.bf16 %v1550, %v1550
      %v1555 = vpack.c.bf16 %v1551, %v1551
      %v1556 = vpack.c.bf16 %v1552, %v1552
      %v1561 = vunpack.c.l.b16 %v1553
      %v1562 = vunpack.c.l.b16 %v1554
      %v1563 = vunpack.c.l.b16 %v1555
      %v1564 = vunpack.c.l.b16 %v1556
      %v1565 = vpack.c.b16 %v1562, %v1561
      %v1566 = vpack.c.b16 %v1564, %v1563
      %1569 = vst [vmem:[#allocation3] sm:$0xff] %v1565
      %1570 = vst [vmem:[#allocation3 + $0x8] sm:$0xff] %v1566
      %v1571 = vld [vmem:[%s3] sm:$0xf]
      %v1572 = vld [vmem:[#allocation3] sm:$0xff]
      %v1573 = vld [vmem:[#allocation3 + $0x8] sm:$0xff]
      %v1576 = vunpack.c.l.b16 %v1572
      %v1577 = vunpack.c.h.b16 %v1572
      %v1578 = vunpack.c.l.b16 %v1573
      %v1579 = vunpack.c.h.b16 %v1573
      %v1580 = vpack.c.b16 %v1576, %v1576
      %v1581 = vpack.c.b16 %v1577, %v1577
      %v1582 = vpack.c.b16 %v1578, %v1578
      %v1583 = vpack.c.b16 %v1579, %v1579
      %1584 = vrot.lane.b32.xlu0 %v1580, 19
      %v1585 = vpop.permute.xlu0 %1584
      %1586 = vrot.lane.b32.xlu0 %v1581, 19
      %v1587 = vpop.permute.xlu0 %1586
      %1588 = vrot.lane.b32.xlu0 %v1582, 19
      %v1589 = vpop.permute.xlu0 %1588
      %1590 = vrot.lane.b32.xlu0 %v1583, 19
      %v1591 = vpop.permute.xlu0 %1590
      %v1592 = vsel %vm656, %v1585, %v1587
      %v1593 = vsel %vm656, %v1587, %v1589
      %v1594 = vsel %vm656, %v1589, %v1591
      %v1596 = vsel %vm553, %v1571, 0
      %v1599 = vsel %vm557, %v1592, 0
      %v1602 = vsel %vm557, %v1593, 0
      %v1605 = vsel %vm557, %v1594, 0
      %1607 = vmatprep.subr.bf16.mxu0 %v1602
      %1608 = vmatpush1.bf16.msra.mxu0 %v1599
      %1609 = vmatprep.subr.bf16.mxu0 0
      %1610 = vmatpush1.bf16.msra.mxu0 0
      %1611 = vmatprep.subr.bf16.mxu0 0
      %1612 = vmatpush1.bf16.msra.mxu0 0
      %1613 = vmatprep.subr.bf16.mxu0 0
      %1614 = vmatpush1.bf16.msra.mxu0 0
      %1615 = vmatprep.subr.bf16.mxu0 0
      %1616 = vmatpush1.bf16.msra.mxu0 0
      %1617 = vmatprep.subr.bf16.mxu0 0
      %1618 = vmatpush1.bf16.msra.mxu0 0
      %1619 = vmatprep.subr.bf16.mxu0 0
      %1620 = vmatpush1.bf16.msra.mxu0 0
      %1621 = vmatprep.subr.bf16.mxu0 0
      %1622 = vmatpush1.bf16.msra.mxu0 0
      %1623 = vmatprep.subr.bf16.mxu0 0
      %1624 = vmatpush1.bf16.msra.mxu0 0
      %1625 = vmatprep.subr.bf16.mxu0 0
      %1626 = vmatpush1.bf16.msra.mxu0 0
      %1627 = vmatprep.subr.bf16.mxu0 0
      %1628 = vmatpush1.bf16.msra.mxu0 0
      %1629 = vmatprep.subr.bf16.mxu0 0
      %1630 = vmatpush1.bf16.msra.mxu0 0
      %1631 = vmatprep.subr.bf16.mxu0 0
      %1632 = vmatpush1.bf16.msra.mxu0 0
      %1633 = vmatprep.subr.bf16.mxu0 0
      %1634 = vmatpush1.bf16.msra.mxu0 0
      %1635 = vmatprep.subr.bf16.mxu0 0
      %1636 = vmatpush1.bf16.msra.mxu0 0
      %1637 = vmatprep.subr.bf16.mxu0 0
      %1638 = vmatpush1.bf16.msra.mxu0 0
      %1639 = vmatprep.mubr.bf16.mxu0 0
      %1640 = vmatmul.mubr.bf16.gmra.mrb[0].mxu0 %v1596
      %v1641 = vpop.f32.mrb[0].mxu0
      %v1642 = vadd.f32 0.0, %v1641
      %v1643 = vpop.f32.mrb[0].mxu0
      %v1644 = vadd.f32 0.0, %v1643
      %v1645 = vpop.f32.mrb[0].mxu0
      %v1646 = vpop.f32.mrb[0].mxu0
      %1647 = vdwg.mxu0
      %1648 = vmatprep.subr.bf16.mxu0 0
      %1649 = vmatpush1.bf16.msra.mxu0 %v1605
      %1650 = vmatprep.subr.bf16.mxu0 0
      %1651 = vmatpush1.bf16.msra.mxu0 0
      %1652 = vmatprep.subr.bf16.mxu0 0
      %1653 = vmatpush1.bf16.msra.mxu0 0
      %1654 = vmatprep.subr.bf16.mxu0 0
      %1655 = vmatpush1.bf16.msra.mxu0 0
      %1656 = vmatprep.subr.bf16.mxu0 0
      %1657 = vmatpush1.bf16.msra.mxu0 0
      %1658 = vmatprep.subr.bf16.mxu0 0
      %1659 = vmatpush1.bf16.msra.mxu0 0
      %1660 = vmatprep.subr.bf16.mxu0 0
      %1661 = vmatpush1.bf16.msra.mxu0 0
      %1662 = vmatprep.subr.bf16.mxu0 0
      %1663 = vmatpush1.bf16.msra.mxu0 0
      %1664 = vmatprep.subr.bf16.mxu0 0
      %1665 = vmatpush1.bf16.msra.mxu0 0
      %1666 = vmatprep.subr.bf16.mxu0 0
      %1667 = vmatpush1.bf16.msra.mxu0 0
      %1668 = vmatprep.subr.bf16.mxu0 0
      %1669 = vmatpush1.bf16.msra.mxu0 0
      %1670 = vmatprep.subr.bf16.mxu0 0
      %1671 = vmatpush1.bf16.msra.mxu0 0
      %1672 = vmatprep.subr.bf16.mxu0 0
      %1673 = vmatpush1.bf16.msra.mxu0 0
      %1674 = vmatprep.subr.bf16.mxu0 0
      %1675 = vmatpush1.bf16.msra.mxu0 0
      %1676 = vmatprep.subr.bf16.mxu0 0
      %1677 = vmatpush1.bf16.msra.mxu0 0
      %1678 = vmatprep.subr.bf16.mxu0 0
      %1679 = vmatpush1.bf16.msra.mxu0 0
      %1680 = vmatprep.mubr.bf16.mxu0 0
      %1681 = vmatmul.mubr.bf16.gmra.mrb[0].mxu0 %v1596
      %v1682 = vpop.f32.mrb[0].mxu0
      %v1683 = vadd.f32 0.0, %v1682
      %v1684 = vpop.f32.mrb[0].mxu0
      %v1685 = vpop.f32.mrb[0].mxu0
      %v1686 = vpop.f32.mrb[0].mxu0
      %1687 = vdwg.mxu0
      %v1688 = vadd.f32 %v1506, %v1642
      %v1689 = vadd.f32 %v1507, %v1644
      %v1690 = vadd.f32 %v1508, %v1683
      %s1691 = scalar_lea.vmem %s3, 4
      %v1692 = vld [vmem:[%s1691] sm:$0xf]
      %1693 = vrot.lane.b32.xlu0 %v1580, 18
      %v1694 = vpop.permute.xlu0 %1693
      %1695 = vrot.lane.b32.xlu0 %v1581, 18
      %v1696 = vpop.permute.xlu0 %1695
      %1697 = vrot.lane.b32.xlu0 %v1582, 18
      %v1698 = vpop.permute.xlu0 %1697
      %1699 = vrot.lane.b32.xlu0 %v1583, 18
      %v1700 = vpop.permute.xlu0 %1699
      %v1701 = vsel %vm549, %v1694, %v1696
      %v1702 = vsel %vm549, %v1696, %v1698
      %v1703 = vsel %vm549, %v1698, %v1700
      %v1705 = vsel %vm553, %v1692, 0
      %v1708 = vsel %vm557, %v1701, 0
      %v1711 = vsel %vm557, %v1702, 0
      %v1714 = vsel %vm557, %v1703, 0
      %1716 = vmatprep.subr.bf16.mxu0 %v1711
      %1717 = vmatpush1.bf16.msra.mxu0 %v1708
      %1718 = vmatprep.subr.bf16.mxu0 0
      %1719 = vmatpush1.bf16.msra.mxu0 0
      %1720 = vmatprep.subr.bf16.mxu0 0
      %1721 = vmatpush1.bf16.msra.mxu0 0
      %1722 = vmatprep.subr.bf16.mxu0 0
      %1723 = vmatpush1.bf16.msra.mxu0 0
      %1724 = vmatprep.subr.bf16.mxu0 0
      %1725 = vmatpush1.bf16.msra.mxu0 0
      %1726 = vmatprep.subr.bf16.mxu0 0
      %1727 = vmatpush1.bf16.msra.mxu0 0
      %1728 = vmatprep.subr.bf16.mxu0 0
      %1729 = vmatpush1.bf16.msra.mxu0 0
      %1730 = vmatprep.subr.bf16.mxu0 0
      %1731 = vmatpush1.bf16.msra.mxu0 0
      %1732 = vmatprep.subr.bf16.mxu0 0
      %1733 = vmatpush1.bf16.msra.mxu0 0
      %1734 = vmatprep.subr.bf16.mxu0 0
      %1735 = vmatpush1.bf16.msra.mxu0 0
      %1736 = vmatprep.subr.bf16.mxu0 0
      %1737 = vmatpush1.bf16.msra.mxu0 0
      %1738 = vmatprep.subr.bf16.mxu0 0
      %1739 = vmatpush1.bf16.msra.mxu0 0
      %1740 = vmatprep.subr.bf16.mxu0 0
      %1741 = vmatpush1.bf16.msra.mxu0 0
      %1742 = vmatprep.subr.bf16.mxu0 0
      %1743 = vmatpush1.bf16.msra.mxu0 0
      %1744 = vmatprep.subr.bf16.mxu0 0
      %1745 = vmatpush1.bf16.msra.mxu0 0
      %1746 = vmatprep.subr.bf16.mxu0 0
      %1747 = vmatpush1.bf16.msra.mxu0 0
      %1748 = vmatprep.mubr.bf16.mxu0 0
      %1749 = vmatmul.mubr.bf16.gmra.mrb[0].mxu0 %v1705
      %v1750 = vpop.f32.mrb[0].mxu0
      %v1751 = vadd.f32 0.0, %v1750
      %v1752 = vpop.f32.mrb[0].mxu0
      %v1753 = vadd.f32 0.0, %v1752
      %v1754 = vpop.f32.mrb[0].mxu0
      %v1755 = vpop.f32.mrb[0].mxu0
      %1756 = vdwg.mxu0
      %1757 = vmatprep.subr.bf16.mxu0 0
      %1758 = vmatpush1.bf16.msra.mxu0 %v1714
      %1759 = vmatprep.subr.bf16.mxu0 0
      %1760 = vmatpush1.bf16.msra.mxu0 0
      %1761 = vmatprep.subr.bf16.mxu0 0
      %1762 = vmatpush1.bf16.msra.mxu0 0
      %1763 = vmatprep.subr.bf16.mxu0 0
      %1764 = vmatpush1.bf16.msra.mxu0 0
      %1765 = vmatprep.subr.bf16.mxu0 0
      %1766 = vmatpush1.bf16.msra.mxu0 0
      %1767 = vmatprep.subr.bf16.mxu0 0
      %1768 = vmatpush1.bf16.msra.mxu0 0
      %1769 = vmatprep.subr.bf16.mxu0 0
      %1770 = vmatpush1.bf16.msra.mxu0 0
      %1771 = vmatprep.subr.bf16.mxu0 0
      %1772 = vmatpush1.bf16.msra.mxu0 0
      %1773 = vmatprep.subr.bf16.mxu0 0
      %1774 = vmatpush1.bf16.msra.mxu0 0
      %1775 = vmatprep.subr.bf16.mxu0 0
      %1776 = vmatpush1.bf16.msra.mxu0 0
      %1777 = vmatprep.subr.bf16.mxu0 0
      %1778 = vmatpush1.bf16.msra.mxu0 0
      %1779 = vmatprep.subr.bf16.mxu0 0
      %1780 = vmatpush1.bf16.msra.mxu0 0
      %1781 = vmatprep.subr.bf16.mxu0 0
      %1782 = vmatpush1.bf16.msra.mxu0 0
      %1783 = vmatprep.subr.bf16.mxu0 0
      %1784 = vmatpush1.bf16.msra.mxu0 0
      %1785 = vmatprep.subr.bf16.mxu0 0
      %1786 = vmatpush1.bf16.msra.mxu0 0
      %1787 = vmatprep.subr.bf16.mxu0 0
      %1788 = vmatpush1.bf16.msra.mxu0 0
      %1789 = vmatprep.mubr.bf16.mxu0 0
      %1790 = vmatmul.mubr.bf16.gmra.mrb[0].mxu0 %v1705
      %v1791 = vpop.f32.mrb[0].mxu0
      %v1792 = vadd.f32 0.0, %v1791
      %v1793 = vpop.f32.mrb[0].mxu0
      %v1794 = vpop.f32.mrb[0].mxu0
      %v1795 = vpop.f32.mrb[0].mxu0
      %1796 = vdwg.mxu0
      %v1797 = vadd.f32 %v1688, %v1751
      %v1798 = vadd.f32 %v1689, %v1753
      %v1799 = vadd.f32 %v1690, %v1792
      %s1800 = scalar_lea.vmem %s3, 8
      %v1801 = vld [vmem:[%s1800] sm:$0xf]
      %1802 = vrot.lane.b32.xlu0 %v1580, 17
      %v1803 = vpop.permute.xlu0 %1802
      %1804 = vrot.lane.b32.xlu0 %v1581, 17
      %v1805 = vpop.permute.xlu0 %1804
      %1806 = vrot.lane.b32.xlu0 %v1582, 17
      %v1807 = vpop.permute.xlu0 %1806
      %1808 = vrot.lane.b32.xlu0 %v1583, 17
      %v1809 = vpop.permute.xlu0 %1808
      %v1810 = vsel %vm763, %v1803, %v1805
      %v1811 = vsel %vm763, %v1805, %v1807
      %v1812 = vsel %vm763, %v1807, %v1809
      %v1814 = vsel %vm553, %v1801, 0
      %v1817 = vsel %vm557, %v1810, 0
      %v1820 = vsel %vm557, %v1811, 0
      %v1823 = vsel %vm557, %v1812, 0
      %1825 = vmatprep.subr.bf16.mxu0 %v1820
      %1826 = vmatpush1.bf16.msra.mxu0 %v1817
      %1827 = vmatprep.subr.bf16.mxu0 0
      %1828 = vmatpush1.bf16.msra.mxu0 0
      %1829 = vmatprep.subr.bf16.mxu0 0
      %1830 = vmatpush1.bf16.msra.mxu0 0
      %1831 = vmatprep.subr.bf16.mxu0 0
      %1832 = vmatpush1.bf16.msra.mxu0 0
      %1833 = vmatprep.subr.bf16.mxu0 0
      %1834 = vmatpush1.bf16.msra.mxu0 0
      %1835 = vmatprep.subr.bf16.mxu0 0
      %1836 = vmatpush1.bf16.msra.mxu0 0
      %1837 = vmatprep.subr.bf16.mxu0 0
      %1838 = vmatpush1.bf16.msra.mxu0 0
      %1839 = vmatprep.subr.bf16.mxu0 0
      %1840 = vmatpush1.bf16.msra.mxu0 0
      %1841 = vmatprep.subr.bf16.mxu0 0
      %1842 = vmatpush1.bf16.msra.mxu0 0
      %1843 = vmatprep.subr.bf16.mxu0 0
      %1844 = vmatpush1.bf16.msra.mxu0 0
      %1845 = vmatprep.subr.bf16.mxu0 0
      %1846 = vmatpush1.bf16.msra.mxu0 0
      %1847 = vmatprep.subr.bf16.mxu0 0
      %1848 = vmatpush1.bf16.msra.mxu0 0
      %1849 = vmatprep.subr.bf16.mxu0 0
      %1850 = vmatpush1.bf16.msra.mxu0 0
      %1851 = vmatprep.subr.bf16.mxu0 0
      %1852 = vmatpush1.bf16.msra.mxu0 0
      %1853 = vmatprep.subr.bf16.mxu0 0
      %1854 = vmatpush1.bf16.msra.mxu0 0
      %1855 = vmatprep.subr.bf16.mxu0 0
      %1856 = vmatpush1.bf16.msra.mxu0 0
      %1857 = vmatprep.mubr.bf16.mxu0 0
      %1858 = vmatmul.mubr.bf16.gmra.mrb[0].mxu0 %v1814
      %v1859 = vpop.f32.mrb[0].mxu0
      %v1860 = vadd.f32 0.0, %v1859
      %v1861 = vpop.f32.mrb[0].mxu0
      %v1862 = vadd.f32 0.0, %v1861
      %v1863 = vpop.f32.mrb[0].mxu0
      %v1864 = vpop.f32.mrb[0].mxu0
      %1865 = vdwg.mxu0
      %1866 = vmatprep.subr.bf16.mxu0 0
      %1867 = vmatpush1.bf16.msra.mxu0 %v1823
      %1868 = vmatprep.subr.bf16.mxu0 0
      %1869 = vmatpush1.bf16.msra.mxu0 0
      %1870 = vmatprep.subr.bf16.mxu0 0
      %1871 = vmatpush1.bf16.msra.mxu0 0
      %1872 = vmatprep.subr.bf16.mxu0 0
      %1873 = vmatpush1.bf16.msra.mxu0 0
      %1874 = vmatprep.subr.bf16.mxu0 0
      %1875 = vmatpush1.bf16.msra.mxu0 0
      %1876 = vmatprep.subr.bf16.mxu0 0
      %1877 = vmatpush1.bf16.msra.mxu0 0
      %1878 = vmatprep.subr.bf16.mxu0 0
      %1879 = vmatpush1.bf16.msra.mxu0 0
      %1880 = vmatprep.subr.bf16.mxu0 0
      %1881 = vmatpush1.bf16.msra.mxu0 0
      %1882 = vmatprep.subr.bf16.mxu0 0
      %1883 = vmatpush1.bf16.msra.mxu0 0
      %1884 = vmatprep.subr.bf16.mxu0 0
      %1885 = vmatpush1.bf16.msra.mxu0 0
      %1886 = vmatprep.subr.bf16.mxu0 0
      %1887 = vmatpush1.bf16.msra.mxu0 0
      %1888 = vmatprep.subr.bf16.mxu0 0
      %1889 = vmatpush1.bf16.msra.mxu0 0
      %1890 = vmatprep.subr.bf16.mxu0 0
      %1891 = vmatpush1.bf16.msra.mxu0 0
      %1892 = vmatprep.subr.bf16.mxu0 0
      %1893 = vmatpush1.bf16.msra.mxu0 0
      %1894 = vmatprep.subr.bf16.mxu0 0
      %1895 = vmatpush1.bf16.msra.mxu0 0
      %1896 = vmatprep.subr.bf16.mxu0 0
      %1897 = vmatpush1.bf16.msra.mxu0 0
      %1898 = vmatprep.mubr.bf16.mxu0 0
      %1899 = vmatmul.mubr.bf16.gmra.mrb[0].mxu0 %v1814
      %v1900 = vpop.f32.mrb[0].mxu0
      %v1901 = vadd.f32 0.0, %v1900
      %v1902 = vpop.f32.mrb[0].mxu0
      %v1903 = vpop.f32.mrb[0].mxu0
      %v1904 = vpop.f32.mrb[0].mxu0
      %1905 = vdwg.mxu0
      %v1906 = vadd.f32 %v1797, %v1860
      %v1907 = vadd.f32 %v1798, %v1862
      %v1908 = vadd.f32 %v1799, %v1901
      %s1909 = scalar_lea.vmem %s3, 12
      %v1910 = vld [vmem:[%s1909] sm:$0xf]
      %1911 = vrot.lane.b32.xlu0 %v1580, 1
      %v1912 = vpop.permute.xlu0 %1911
      %1913 = vrot.lane.b32.xlu0 %v1581, 1
      %v1914 = vpop.permute.xlu0 %1913
      %1915 = vrot.lane.b32.xlu0 %v1582, 1
      %v1916 = vpop.permute.xlu0 %1915
      %1917 = vrot.lane.b32.xlu0 %v1583, 1
      %v1918 = vpop.permute.xlu0 %1917
      %v1919 = vsel %vm873, %v1912, %v1914
      %v1920 = vsel %vm873, %v1914, %v1916
      %v1921 = vsel %vm873, %v1916, %v1918
      %v1923 = vsel %vm553, %v1910, 0
      %v1926 = vsel %vm557, %v1919, 0
      %v1929 = vsel %vm557, %v1920, 0
      %v1932 = vsel %vm557, %v1921, 0
      %1934 = vmatprep.subr.bf16.mxu0 %v1929
      %1935 = vmatpush1.bf16.msra.mxu0 %v1926
      %1936 = vmatprep.subr.bf16.mxu0 0
      %1937 = vmatpush1.bf16.msra.mxu0 0
      %1938 = vmatprep.subr.bf16.mxu0 0
      %1939 = vmatpush1.bf16.msra.mxu0 0
      %1940 = vmatprep.subr.bf16.mxu0 0
      %1941 = vmatpush1.bf16.msra.mxu0 0
      %1942 = vmatprep.subr.bf16.mxu0 0
      %1943 = vmatpush1.bf16.msra.mxu0 0
      %1944 = vmatprep.subr.bf16.mxu0 0
      %1945 = vmatpush1.bf16.msra.mxu0 0
      %1946 = vmatprep.subr.bf16.mxu0 0
      %1947 = vmatpush1.bf16.msra.mxu0 0
      %1948 = vmatprep.subr.bf16.mxu0 0
      %1949 = vmatpush1.bf16.msra.mxu0 0
      %1950 = vmatprep.subr.bf16.mxu0 0
      %1951 = vmatpush1.bf16.msra.mxu0 0
      %1952 = vmatprep.subr.bf16.mxu0 0
      %1953 = vmatpush1.bf16.msra.mxu0 0
      %1954 = vmatprep.subr.bf16.mxu0 0
      %1955 = vmatpush1.bf16.msra.mxu0 0
      %1956 = vmatprep.subr.bf16.mxu0 0
      %1957 = vmatpush1.bf16.msra.mxu0 0
      %1958 = vmatprep.subr.bf16.mxu0 0
      %1959 = vmatpush1.bf16.msra.mxu0 0
      %1960 = vmatprep.subr.bf16.mxu0 0
      %1961 = vmatpush1.bf16.msra.mxu0 0
      %1962 = vmatprep.subr.bf16.mxu0 0
      %1963 = vmatpush1.bf16.msra.mxu0 0
      %1964 = vmatprep.subr.bf16.mxu0 0
      %1965 = vmatpush1.bf16.msra.mxu0 0
      %1966 = vmatprep.mubr.bf16.mxu0 0
      %1967 = vmatmul.mubr.bf16.gmra.mrb[0].mxu0 %v1923
      %v1968 = vpop.f32.mrb[0].mxu0
      %v1969 = vadd.f32 0.0, %v1968
      %v1970 = vpop.f32.mrb[0].mxu0
      %v1971 = vadd.f32 0.0, %v1970
      %v1972 = vpop.f32.mrb[0].mxu0
      %v1973 = vpop.f32.mrb[0].mxu0
      %1974 = vdwg.mxu0
      %1975 = vmatprep.subr.bf16.mxu0 0
      %1976 = vmatpush1.bf16.msra.mxu0 %v1932
      %1977 = vmatprep.subr.bf16.mxu0 0
      %1978 = vmatpush1.bf16.msra.mxu0 0
      %1979 = vmatprep.subr.bf16.mxu0 0
      %1980 = vmatpush1.bf16.msra.mxu0 0
      %1981 = vmatprep.subr.bf16.mxu0 0
      %1982 = vmatpush1.bf16.msra.mxu0 0
      %1983 = vmatprep.subr.bf16.mxu0 0
      %1984 = vmatpush1.bf16.msra.mxu0 0
      %1985 = vmatprep.subr.bf16.mxu0 0
      %1986 = vmatpush1.bf16.msra.mxu0 0
      %1987 = vmatprep.subr.bf16.mxu0 0
      %1988 = vmatpush1.bf16.msra.mxu0 0
      %1989 = vmatprep.subr.bf16.mxu0 0
      %1990 = vmatpush1.bf16.msra.mxu0 0
      %1991 = vmatprep.subr.bf16.mxu0 0
      %1992 = vmatpush1.bf16.msra.mxu0 0
      %1993 = vmatprep.subr.bf16.mxu0 0
      %1994 = vmatpush1.bf16.msra.mxu0 0
      %1995 = vmatprep.subr.bf16.mxu0 0
      %1996 = vmatpush1.bf16.msra.mxu0 0
      %1997 = vmatprep.subr.bf16.mxu0 0
      %1998 = vmatpush1.bf16.msra.mxu0 0
      %1999 = vmatprep.subr.bf16.mxu0 0
      %2000 = vmatpush1.bf16.msra.mxu0 0
      %2001 = vmatprep.subr.bf16.mxu0 0
      %2002 = vmatpush1.bf16.msra.mxu0 0
      %2003 = vmatprep.subr.bf16.mxu0 0
      %2004 = vmatpush1.bf16.msra.mxu0 0
      %2005 = vmatprep.subr.bf16.mxu0 0
      %2006 = vmatpush1.bf16.msra.mxu0 0
      %2007 = vmatprep.mubr.bf16.mxu0 0
      %2008 = vmatmul.mubr.bf16.gmra.mrb[0].mxu0 %v1923
      %v2009 = vpop.f32.mrb[0].mxu0
      %v2010 = vadd.f32 0.0, %v2009
      %v2011 = vpop.f32.mrb[0].mxu0
      %v2012 = vpop.f32.mrb[0].mxu0
      %v2013 = vpop.f32.mrb[0].mxu0
      %2014 = vdwg.mxu0
      %v2015 = vadd.f32 %v1906, %v1969
      %v2016 = vadd.f32 %v1907, %v1971
      %v2017 = vadd.f32 %v1908, %v2010
      %s2018 = scalar_lea.vmem %s3, 16
      %v2019 = vld [vmem:[%s2018] sm:$0xf]
      %v2020 = vld [vmem:[#allocation3 + $0x4] sm:$0xff]
      %v2021 = vld [vmem:[#allocation3 + $0xc] sm:$0xf]
      %v2024 = vunpack.c.l.b16 %v2020
      %v2025 = vunpack.c.h.b16 %v2020
      %v2026 = vunpack.c.l.b16 %v2021
      %v2027 = vpack.c.b16 %v2024, %v2024
      %v2028 = vpack.c.b16 %v2025, %v2025
      %v2029 = vpack.c.b16 %v2026, %v2026
      %v2031 = vsel %vm553, %v2019, 0
      %v2034 = vsel %vm557, %v2027, 0
      %v2037 = vsel %vm557, %v2028, 0
      %v2040 = vsel %vm557, %v2029, 0
      %2042 = vmatprep.subr.bf16.mxu0 %v2037
      %2043 = vmatpush1.bf16.msra.mxu0 %v2034
      %2044 = vmatprep.subr.bf16.mxu0 0
      %2045 = vmatpush1.bf16.msra.mxu0 0
      %2046 = vmatprep.subr.bf16.mxu0 0
      %2047 = vmatpush1.bf16.msra.mxu0 0
      %2048 = vmatprep.subr.bf16.mxu0 0
      %2049 = vmatpush1.bf16.msra.mxu0 0
      %2050 = vmatprep.subr.bf16.mxu0 0
      %2051 = vmatpush1.bf16.msra.mxu0 0
      %2052 = vmatprep.subr.bf16.mxu0 0
      %2053 = vmatpush1.bf16.msra.mxu0 0
      %2054 = vmatprep.subr.bf16.mxu0 0
      %2055 = vmatpush1.bf16.msra.mxu0 0
      %2056 = vmatprep.subr.bf16.mxu0 0
      %2057 = vmatpush1.bf16.msra.mxu0 0
      %2058 = vmatprep.subr.bf16.mxu0 0
      %2059 = vmatpush1.bf16.msra.mxu0 0
      %2060 = vmatprep.subr.bf16.mxu0 0
      %2061 = vmatpush1.bf16.msra.mxu0 0
      %2062 = vmatprep.subr.bf16.mxu0 0
      %2063 = vmatpush1.bf16.msra.mxu0 0
      %2064 = vmatprep.subr.bf16.mxu0 0
      %2065 = vmatpush1.bf16.msra.mxu0 0
      %2066 = vmatprep.subr.bf16.mxu0 0
      %2067 = vmatpush1.bf16.msra.mxu0 0
      %2068 = vmatprep.subr.bf16.mxu0 0
      %2069 = vmatpush1.bf16.msra.mxu0 0
      %2070 = vmatprep.subr.bf16.mxu0 0
      %2071 = vmatpush1.bf16.msra.mxu0 0
      %2072 = vmatprep.subr.bf16.mxu0 0
      %2073 = vmatpush1.bf16.msra.mxu0 0
      %2074 = vmatprep.mubr.bf16.mxu0 0
      %2075 = vmatmul.mubr.bf16.gmra.mrb[0].mxu0 %v2031
      %v2076 = vpop.f32.mrb[0].mxu0
      %v2077 = vadd.f32 0.0, %v2076
      %v2078 = vpop.f32.mrb[0].mxu0
      %v2079 = vadd.f32 0.0, %v2078
      %v2080 = vpop.f32.mrb[0].mxu0
      %v2081 = vpop.f32.mrb[0].mxu0
      %2082 = vdwg.mxu0
      %2083 = vmatprep.subr.bf16.mxu0 0
      %2084 = vmatpush1.bf16.msra.mxu0 %v2040
      %2085 = vmatprep.subr.bf16.mxu0 0
      %2086 = vmatpush1.bf16.msra.mxu0 0
      %2087 = vmatprep.subr.bf16.mxu0 0
      %2088 = vmatpush1.bf16.msra.mxu0 0
      %2089 = vmatprep.subr.bf16.mxu0 0
      %2090 = vmatpush1.bf16.msra.mxu0 0
      %2091 = vmatprep.subr.bf16.mxu0 0
      %2092 = vmatpush1.bf16.msra.mxu0 0
      %2093 = vmatprep.subr.bf16.mxu0 0
      %2094 = vmatpush1.bf16.msra.mxu0 0
      %2095 = vmatprep.subr.bf16.mxu0 0
      %2096 = vmatpush1.bf16.msra.mxu0 0
      %2097 = vmatprep.subr.bf16.mxu0 0
      %2098 = vmatpush1.bf16.msra.mxu0 0
      %2099 = vmatprep.subr.bf16.mxu0 0
      %2100 = vmatpush1.bf16.msra.mxu0 0
      %2101 = vmatprep.subr.bf16.mxu0 0
      %2102 = vmatpush1.bf16.msra.mxu0 0
      %2103 = vmatprep.subr.bf16.mxu0 0
      %2104 = vmatpush1.bf16.msra.mxu0 0
      %2105 = vmatprep.subr.bf16.mxu0 0
      %2106 = vmatpush1.bf16.msra.mxu0 0
      %2107 = vmatprep.subr.bf16.mxu0 0
      %2108 = vmatpush1.bf16.msra.mxu0 0
      %2109 = vmatprep.subr.bf16.mxu0 0
      %2110 = vmatpush1.bf16.msra.mxu0 0
      %2111 = vmatprep.subr.bf16.mxu0 0
      %2112 = vmatpush1.bf16.msra.mxu0 0
      %2113 = vmatprep.subr.bf16.mxu0 0
      %2114 = vmatpush1.bf16.msra.mxu0 0
      %2115 = vmatprep.mubr.bf16.mxu0 0
      %2116 = vmatmul.mubr.bf16.gmra.mrb[0].mxu0 %v2031
      %v2117 = vpop.f32.mrb[0].mxu0
      %v2118 = vadd.f32 0.0, %v2117
      %v2119 = vpop.f32.mrb[0].mxu0
      %v2120 = vpop.f32.mrb[0].mxu0
      %v2121 = vpop.f32.mrb[0].mxu0
      %2122 = vdwg.mxu0
      %v2123 = vadd.f32 %v2015, %v2077
      %v2124 = vadd.f32 %v2016, %v2079
      %v2125 = vadd.f32 %v2017, %v2118
      %s2126 = scalar_lea.vmem %s3, 20
      %v2127 = vld [vmem:[%s2126] sm:$0xf]
      %2128 = vrot.lane.b32.xlu0 %v2027, 127
      %v2129 = vpop.permute.xlu0 %2128
      %2130 = vrot.lane.b32.xlu0 %v2028, 127
      %v2131 = vpop.permute.xlu0 %2130
      %2132 = vrot.lane.b32.xlu0 %v2029, 127
      %v2133 = vpop.permute.xlu0 %2132
      %v2134 = vsel %vm1089, %v2129, %v2131
      %v2135 = vsel %vm1089, %v2131, %v2133
      %v2137 = vsel %vm553, %v2127, 0
      %v2140 = vsel %vm557, %v2134, 0
      %v2143 = vsel %vm557, %v2135, 0
      %v2146 = vsel %vm557, %v2133, 0
      %2148 = vmatprep.subr.bf16.mxu0 %v2143
      %2149 = vmatpush1.bf16.msra.mxu0 %v2140
      %2150 = vmatprep.subr.bf16.mxu0 0
      %2151 = vmatpush1.bf16.msra.mxu0 0
      %2152 = vmatprep.subr.bf16.mxu0 0
      %2153 = vmatpush1.bf16.msra.mxu0 0
      %2154 = vmatprep.subr.bf16.mxu0 0
      %2155 = vmatpush1.bf16.msra.mxu0 0
      %2156 = vmatprep.subr.bf16.mxu0 0
      %2157 = vmatpush1.bf16.msra.mxu0 0
      %2158 = vmatprep.subr.bf16.mxu0 0
      %2159 = vmatpush1.bf16.msra.mxu0 0
      %2160 = vmatprep.subr.bf16.mxu0 0
      %2161 = vmatpush1.bf16.msra.mxu0 0
      %2162 = vmatprep.subr.bf16.mxu0 0
      %2163 = vmatpush1.bf16.msra.mxu0 0
      %2164 = vmatprep.subr.bf16.mxu0 0
      %2165 = vmatpush1.bf16.msra.mxu0 0
      %2166 = vmatprep.subr.bf16.mxu0 0
      %2167 = vmatpush1.bf16.msra.mxu0 0
      %2168 = vmatprep.subr.bf16.mxu0 0
      %2169 = vmatpush1.bf16.msra.mxu0 0
      %2170 = vmatprep.subr.bf16.mxu0 0
      %2171 = vmatpush1.bf16.msra.mxu0 0
      %2172 = vmatprep.subr.bf16.mxu0 0
      %2173 = vmatpush1.bf16.msra.mxu0 0
      %2174 = vmatprep.subr.bf16.mxu0 0
      %2175 = vmatpush1.bf16.msra.mxu0 0
      %2176 = vmatprep.subr.bf16.mxu0 0
      %2177 = vmatpush1.bf16.msra.mxu0 0
      %2178 = vmatprep.subr.bf16.mxu0 0
      %2179 = vmatpush1.bf16.msra.mxu0 0
      %2180 = vmatprep.mubr.bf16.mxu0 0
      %2181 = vmatmul.mubr.bf16.gmra.mrb[0].mxu0 %v2137
      %v2182 = vpop.f32.mrb[0].mxu0
      %v2183 = vadd.f32 0.0, %v2182
      %v2184 = vpop.f32.mrb[0].mxu0
      %v2185 = vadd.f32 0.0, %v2184
      %v2186 = vpop.f32.mrb[0].mxu0
      %v2187 = vpop.f32.mrb[0].mxu0
      %2188 = vdwg.mxu0
      %2189 = vmatprep.subr.bf16.mxu0 0
      %2190 = vmatpush1.bf16.msra.mxu0 %v2146
      %2191 = vmatprep.subr.bf16.mxu0 0
      %2192 = vmatpush1.bf16.msra.mxu0 0
      %2193 = vmatprep.subr.bf16.mxu0 0
      %2194 = vmatpush1.bf16.msra.mxu0 0
      %2195 = vmatprep.subr.bf16.mxu0 0
      %2196 = vmatpush1.bf16.msra.mxu0 0
      %2197 = vmatprep.subr.bf16.mxu0 0
      %2198 = vmatpush1.bf16.msra.mxu0 0
      %2199 = vmatprep.subr.bf16.mxu0 0
      %2200 = vmatpush1.bf16.msra.mxu0 0
      %2201 = vmatprep.subr.bf16.mxu0 0
      %2202 = vmatpush1.bf16.msra.mxu0 0
      %2203 = vmatprep.subr.bf16.mxu0 0
      %2204 = vmatpush1.bf16.msra.mxu0 0
      %2205 = vmatprep.subr.bf16.mxu0 0
      %2206 = vmatpush1.bf16.msra.mxu0 0
      %2207 = vmatprep.subr.bf16.mxu0 0
      %2208 = vmatpush1.bf16.msra.mxu0 0
      %2209 = vmatprep.subr.bf16.mxu0 0
      %2210 = vmatpush1.bf16.msra.mxu0 0
      %2211 = vmatprep.subr.bf16.mxu0 0
      %2212 = vmatpush1.bf16.msra.mxu0 0
      %2213 = vmatprep.subr.bf16.mxu0 0
      %2214 = vmatpush1.bf16.msra.mxu0 0
      %2215 = vmatprep.subr.bf16.mxu0 0
      %2216 = vmatpush1.bf16.msra.mxu0 0
      %2217 = vmatprep.subr.bf16.mxu0 0
      %2218 = vmatpush1.bf16.msra.mxu0 0
      %2219 = vmatprep.subr.bf16.mxu0 0
      %2220 = vmatpush1.bf16.msra.mxu0 0
      %2221 = vmatprep.mubr.bf16.mxu0 0
      %2222 = vmatmul.mubr.bf16.gmra.mrb[0].mxu0 %v2137
      %v2223 = vpop.f32.mrb[0].mxu0
      %v2224 = vadd.f32 0.0, %v2223
      %v2225 = vpop.f32.mrb[0].mxu0
      %v2226 = vpop.f32.mrb[0].mxu0
      %v2227 = vpop.f32.mrb[0].mxu0
      %2228 = vdwg.mxu0
      %v2229 = vadd.f32 %v2123, %v2183
      %v2230 = vadd.f32 %v2124, %v2185
      %v2231 = vadd.f32 %v2125, %v2224
      %s2232 = scalar_lea.vmem %s3, 24
      %v2233 = vld [vmem:[%s2232] sm:$0xf]
      %2234 = vrot.lane.b32.xlu0 %v2027, 111
      %v2235 = vpop.permute.xlu0 %2234
      %2236 = vrot.lane.b32.xlu0 %v2028, 111
      %v2237 = vpop.permute.xlu0 %2236
      %2238 = vrot.lane.b32.xlu0 %v2029, 111
      %v2239 = vpop.permute.xlu0 %2238
      %v2240 = vsel %vm1196, %v2235, %v2237
      %v2241 = vsel %vm1196, %v2237, %v2239
      %v2243 = vsel %vm553, %v2233, 0
      %v2246 = vsel %vm557, %v2240, 0
      %v2249 = vsel %vm557, %v2241, 0
      %v2252 = vsel %vm557, %v2239, 0
      %2254 = vmatprep.subr.bf16.mxu0 %v2249
      %2255 = vmatpush1.bf16.msra.mxu0 %v2246
      %2256 = vmatprep.subr.bf16.mxu0 0
      %2257 = vmatpush1.bf16.msra.mxu0 0
      %2258 = vmatprep.subr.bf16.mxu0 0
      %2259 = vmatpush1.bf16.msra.mxu0 0
      %2260 = vmatprep.subr.bf16.mxu0 0
      %2261 = vmatpush1.bf16.msra.mxu0 0
      %2262 = vmatprep.subr.bf16.mxu0 0
      %2263 = vmatpush1.bf16.msra.mxu0 0
      %2264 = vmatprep.subr.bf16.mxu0 0
      %2265 = vmatpush1.bf16.msra.mxu0 0
      %2266 = vmatprep.subr.bf16.mxu0 0
      %2267 = vmatpush1.bf16.msra.mxu0 0
      %2268 = vmatprep.subr.bf16.mxu0 0
      %2269 = vmatpush1.bf16.msra.mxu0 0
      %2270 = vmatprep.subr.bf16.mxu0 0
      %2271 = vmatpush1.bf16.msra.mxu0 0
      %2272 = vmatprep.subr.bf16.mxu0 0
      %2273 = vmatpush1.bf16.msra.mxu0 0
      %2274 = vmatprep.subr.bf16.mxu0 0
      %2275 = vmatpush1.bf16.msra.mxu0 0
      %2276 = vmatprep.subr.bf16.mxu0 0
      %2277 = vmatpush1.bf16.msra.mxu0 0
      %2278 = vmatprep.subr.bf16.mxu0 0
      %2279 = vmatpush1.bf16.msra.mxu0 0
      %2280 = vmatprep.subr.bf16.mxu0 0
      %2281 = vmatpush1.bf16.msra.mxu0 0
      %2282 = vmatprep.subr.bf16.mxu0 0
      %2283 = vmatpush1.bf16.msra.mxu0 0
      %2284 = vmatprep.subr.bf16.mxu0 0
      %2285 = vmatpush1.bf16.msra.mxu0 0
      %2286 = vmatprep.mubr.bf16.mxu0 0
      %2287 = vmatmul.mubr.bf16.gmra.mrb[0].mxu0 %v2243
      %v2288 = vpop.f32.mrb[0].mxu0
      %v2289 = vadd.f32 0.0, %v2288
      %v2290 = vpop.f32.mrb[0].mxu0
      %v2291 = vadd.f32 0.0, %v2290
      %v2292 = vpop.f32.mrb[0].mxu0
      %v2293 = vpop.f32.mrb[0].mxu0
      %2294 = vdwg.mxu0
      %2295 = vmatprep.subr.bf16.mxu0 0
      %2296 = vmatpush1.bf16.msra.mxu0 %v2252
      %2297 = vmatprep.subr.bf16.mxu0 0
      %2298 = vmatpush1.bf16.msra.mxu0 0
      %2299 = vmatprep.subr.bf16.mxu0 0
      %2300 = vmatpush1.bf16.msra.mxu0 0
      %2301 = vmatprep.subr.bf16.mxu0 0
      %2302 = vmatpush1.bf16.msra.mxu0 0
      %2303 = vmatprep.subr.bf16.mxu0 0
      %2304 = vmatpush1.bf16.msra.mxu0 0
      %2305 = vmatprep.subr.bf16.mxu0 0
      %2306 = vmatpush1.bf16.msra.mxu0 0
      %2307 = vmatprep.subr.bf16.mxu0 0
      %2308 = vmatpush1.bf16.msra.mxu0 0
      %2309 = vmatprep.subr.bf16.mxu0 0
      %2310 = vmatpush1.bf16.msra.mxu0 0
      %2311 = vmatprep.subr.bf16.mxu0 0
      %2312 = vmatpush1.bf16.msra.mxu0 0
      %2313 = vmatprep.subr.bf16.mxu0 0
      %2314 = vmatpush1.bf16.msra.mxu0 0
      %2315 = vmatprep.subr.bf16.mxu0 0
      %2316 = vmatpush1.bf16.msra.mxu0 0
      %2317 = vmatprep.subr.bf16.mxu0 0
      %2318 = vmatpush1.bf16.msra.mxu0 0
      %2319 = vmatprep.subr.bf16.mxu0 0
      %2320 = vmatpush1.bf16.msra.mxu0 0
      %2321 = vmatprep.subr.bf16.mxu0 0
      %2322 = vmatpush1.bf16.msra.mxu0 0
      %2323 = vmatprep.subr.bf16.mxu0 0
      %2324 = vmatpush1.bf16.msra.mxu0 0
      %2325 = vmatprep.subr.bf16.mxu0 0
      %2326 = vmatpush1.bf16.msra.mxu0 0
      %2327 = vmatprep.mubr.bf16.mxu0 0
      %2328 = vmatmul.mubr.bf16.gmra.mrb[0].mxu0 %v2243
      %v2329 = vpop.f32.mrb[0].mxu0
      %v2330 = vadd.f32 0.0, %v2329
      %v2331 = vpop.f32.mrb[0].mxu0
      %v2332 = vpop.f32.mrb[0].mxu0
      %v2333 = vpop.f32.mrb[0].mxu0
      %2334 = vdwg.mxu0
      %v2335 = vadd.f32 %v2229, %v2289
      %v2336 = vadd.f32 %v2230, %v2291
      %v2337 = vadd.f32 %v2231, %v2330
      %s2338 = scalar_lea.vmem %s3, 28
      %v2339 = vld [vmem:[%s2338] sm:$0xf]
      %2340 = vrot.lane.b32.xlu0 %v2027, 110
      %v2341 = vpop.permute.xlu0 %2340
      %2342 = vrot.lane.b32.xlu0 %v2028, 110
      %v2343 = vpop.permute.xlu0 %2342
      %2344 = vrot.lane.b32.xlu0 %v2029, 110
      %v2345 = vpop.permute.xlu0 %2344
      %v2346 = vsel %vm1303, %v2341, %v2343
      %v2347 = vsel %vm1303, %v2343, %v2345
      %v2349 = vsel %vm553, %v2339, 0
      %v2352 = vsel %vm557, %v2346, 0
      %v2355 = vsel %vm557, %v2347, 0
      %v2358 = vsel %vm557, %v2345, 0
      %2360 = vmatprep.subr.bf16.mxu0 %v2355
      %2361 = vmatpush1.bf16.msra.mxu0 %v2352
      %2362 = vmatprep.subr.bf16.mxu0 0
      %2363 = vmatpush1.bf16.msra.mxu0 0
      %2364 = vmatprep.subr.bf16.mxu0 0
      %2365 = vmatpush1.bf16.msra.mxu0 0
      %2366 = vmatprep.subr.bf16.mxu0 0
      %2367 = vmatpush1.bf16.msra.mxu0 0
      %2368 = vmatprep.subr.bf16.mxu0 0
      %2369 = vmatpush1.bf16.msra.mxu0 0
      %2370 = vmatprep.subr.bf16.mxu0 0
      %2371 = vmatpush1.bf16.msra.mxu0 0
      %2372 = vmatprep.subr.bf16.mxu0 0
      %2373 = vmatpush1.bf16.msra.mxu0 0
      %2374 = vmatprep.subr.bf16.mxu0 0
      %2375 = vmatpush1.bf16.msra.mxu0 0
      %2376 = vmatprep.subr.bf16.mxu0 0
      %2377 = vmatpush1.bf16.msra.mxu0 0
      %2378 = vmatprep.subr.bf16.mxu0 0
      %2379 = vmatpush1.bf16.msra.mxu0 0
      %2380 = vmatprep.subr.bf16.mxu0 0
      %2381 = vmatpush1.bf16.msra.mxu0 0
      %2382 = vmatprep.subr.bf16.mxu0 0
      %2383 = vmatpush1.bf16.msra.mxu0 0
      %2384 = vmatprep.subr.bf16.mxu0 0
      %2385 = vmatpush1.bf16.msra.mxu0 0
      %2386 = vmatprep.subr.bf16.mxu0 0
      %2387 = vmatpush1.bf16.msra.mxu0 0
      %2388 = vmatprep.subr.bf16.mxu0 0
      %2389 = vmatpush1.bf16.msra.mxu0 0
      %2390 = vmatprep.subr.bf16.mxu0 0
      %2391 = vmatpush1.bf16.msra.mxu0 0
      %2392 = vmatprep.mubr.bf16.mxu0 0
      %2393 = vmatmul.mubr.bf16.gmra.mrb[0].mxu0 %v2349
      %v2394 = vpop.f32.mrb[0].mxu0
      %v2395 = vadd.f32 0.0, %v2394
      %v2396 = vpop.f32.mrb[0].mxu0
      %v2397 = vadd.f32 0.0, %v2396
      %v2398 = vpop.f32.mrb[0].mxu0
      %v2399 = vpop.f32.mrb[0].mxu0
      %2400 = vdwg.mxu0
      %2401 = vmatprep.subr.bf16.mxu0 0
      %2402 = vmatpush1.bf16.msra.mxu0 %v2358
      %2403 = vmatprep.subr.bf16.mxu0 0
      %2404 = vmatpush1.bf16.msra.mxu0 0
      %2405 = vmatprep.subr.bf16.mxu0 0
      %2406 = vmatpush1.bf16.msra.mxu0 0
      %2407 = vmatprep.subr.bf16.mxu0 0
      %2408 = vmatpush1.bf16.msra.mxu0 0
      %2409 = vmatprep.subr.bf16.mxu0 0
      %2410 = vmatpush1.bf16.msra.mxu0 0
      %2411 = vmatprep.subr.bf16.mxu0 0
      %2412 = vmatpush1.bf16.msra.mxu0 0
      %2413 = vmatprep.subr.bf16.mxu0 0
      %2414 = vmatpush1.bf16.msra.mxu0 0
      %2415 = vmatprep.subr.bf16.mxu0 0
      %2416 = vmatpush1.bf16.msra.mxu0 0
      %2417 = vmatprep.subr.bf16.mxu0 0
      %2418 = vmatpush1.bf16.msra.mxu0 0
      %2419 = vmatprep.subr.bf16.mxu0 0
      %2420 = vmatpush1.bf16.msra.mxu0 0
      %2421 = vmatprep.subr.bf16.mxu0 0
      %2422 = vmatpush1.bf16.msra.mxu0 0
      %2423 = vmatprep.subr.bf16.mxu0 0
      %2424 = vmatpush1.bf16.msra.mxu0 0
      %2425 = vmatprep.subr.bf16.mxu0 0
      %2426 = vmatpush1.bf16.msra.mxu0 0
      %2427 = vmatprep.subr.bf16.mxu0 0
      %2428 = vmatpush1.bf16.msra.mxu0 0
      %2429 = vmatprep.subr.bf16.mxu0 0
      %2430 = vmatpush1.bf16.msra.mxu0 0
      %2431 = vmatprep.subr.bf16.mxu0 0
      %2432 = vmatpush1.bf16.msra.mxu0 0
      %2433 = vmatprep.mubr.bf16.mxu0 0
      %2434 = vmatmul.mubr.bf16.gmra.mrb[0].mxu0 %v2349
      %v2435 = vpop.f32.mrb[0].mxu0
      %v2436 = vadd.f32 0.0, %v2435
      %v2437 = vpop.f32.mrb[0].mxu0
      %v2438 = vpop.f32.mrb[0].mxu0
      %v2439 = vpop.f32.mrb[0].mxu0
      %2440 = vdwg.mxu0
      %v2441 = vadd.f32 %v2335, %v2395
      %v2442 = vadd.f32 %v2336, %v2397
      %v2443 = vadd.f32 %v2337, %v2436
      %s2444 = scalar_lea.vmem %s3, 32
      %v2445 = vld [vmem:[%s2444] sm:$0xf]
      %2446 = vrot.lane.b32.xlu0 %v2027, 109
      %v2447 = vpop.permute.xlu0 %2446
      %2448 = vrot.lane.b32.xlu0 %v2028, 109
      %v2449 = vpop.permute.xlu0 %2448
      %2450 = vrot.lane.b32.xlu0 %v2029, 109
      %v2451 = vpop.permute.xlu0 %2450
      %v2452 = vsel %vm1410, %v2447, %v2449
      %v2453 = vsel %vm1410, %v2449, %v2451
      %v2455 = vsel %vm553, %v2445, 0
      %v2458 = vsel %vm557, %v2452, 0
      %v2461 = vsel %vm557, %v2453, 0
      %v2464 = vsel %vm557, %v2451, 0
      %2466 = vmatprep.subr.bf16.mxu0 %v2461
      %2467 = vmatpush1.bf16.msra.mxu0 %v2458
      %2468 = vmatprep.subr.bf16.mxu0 0
      %2469 = vmatpush1.bf16.msra.mxu0 0
      %2470 = vmatprep.subr.bf16.mxu0 0
      %2471 = vmatpush1.bf16.msra.mxu0 0
      %2472 = vmatprep.subr.bf16.mxu0 0
      %2473 = vmatpush1.bf16.msra.mxu0 0
      %2474 = vmatprep.subr.bf16.mxu0 0
      %2475 = vmatpush1.bf16.msra.mxu0 0
      %2476 = vmatprep.subr.bf16.mxu0 0
      %2477 = vmatpush1.bf16.msra.mxu0 0
      %2478 = vmatprep.subr.bf16.mxu0 0
      %2479 = vmatpush1.bf16.msra.mxu0 0
      %2480 = vmatprep.subr.bf16.mxu0 0
      %2481 = vmatpush1.bf16.msra.mxu0 0
      %2482 = vmatprep.subr.bf16.mxu0 0
      %2483 = vmatpush1.bf16.msra.mxu0 0
      %2484 = vmatprep.subr.bf16.mxu0 0
      %2485 = vmatpush1.bf16.msra.mxu0 0
      %2486 = vmatprep.subr.bf16.mxu0 0
      %2487 = vmatpush1.bf16.msra.mxu0 0
      %2488 = vmatprep.subr.bf16.mxu0 0
      %2489 = vmatpush1.bf16.msra.mxu0 0
      %2490 = vmatprep.subr.bf16.mxu0 0
      %2491 = vmatpush1.bf16.msra.mxu0 0
      %2492 = vmatprep.subr.bf16.mxu0 0
      %2493 = vmatpush1.bf16.msra.mxu0 0
      %2494 = vmatprep.subr.bf16.mxu0 0
      %2495 = vmatpush1.bf16.msra.mxu0 0
      %2496 = vmatprep.subr.bf16.mxu0 0
      %2497 = vmatpush1.bf16.msra.mxu0 0
      %2498 = vmatprep.mubr.bf16.mxu0 0
      %2499 = vmatmul.mubr.bf16.gmra.mrb[0].mxu0 %v2455
      %v2500 = vpop.f32.mrb[0].mxu0
      %v2501 = vadd.f32 0.0, %v2500
      %v2502 = vpop.f32.mrb[0].mxu0
      %v2503 = vadd.f32 0.0, %v2502
      %v2504 = vpop.f32.mrb[0].mxu0
      %v2505 = vpop.f32.mrb[0].mxu0
      %2506 = vdwg.mxu0
      %2507 = vmatprep.subr.bf16.mxu0 0
      %2508 = vmatpush1.bf16.msra.mxu0 %v2464
      %2509 = vmatprep.subr.bf16.mxu0 0
      %2510 = vmatpush1.bf16.msra.mxu0 0
      %2511 = vmatprep.subr.bf16.mxu0 0
      %2512 = vmatpush1.bf16.msra.mxu0 0
      %2513 = vmatprep.subr.bf16.mxu0 0
      %2514 = vmatpush1.bf16.msra.mxu0 0
      %2515 = vmatprep.subr.bf16.mxu0 0
      %2516 = vmatpush1.bf16.msra.mxu0 0
      %2517 = vmatprep.subr.bf16.mxu0 0
      %2518 = vmatpush1.bf16.msra.mxu0 0
      %2519 = vmatprep.subr.bf16.mxu0 0
      %2520 = vmatpush1.bf16.msra.mxu0 0
      %2521 = vmatprep.subr.bf16.mxu0 0
      %2522 = vmatpush1.bf16.msra.mxu0 0
      %2523 = vmatprep.subr.bf16.mxu0 0
      %2524 = vmatpush1.bf16.msra.mxu0 0
      %2525 = vmatprep.subr.bf16.mxu0 0
      %2526 = vmatpush1.bf16.msra.mxu0 0
      %2527 = vmatprep.subr.bf16.mxu0 0
      %2528 = vmatpush1.bf16.msra.mxu0 0
      %2529 = vmatprep.subr.bf16.mxu0 0
      %2530 = vmatpush1.bf16.msra.mxu0 0
      %2531 = vmatprep.subr.bf16.mxu0 0
      %2532 = vmatpush1.bf16.msra.mxu0 0
      %2533 = vmatprep.subr.bf16.mxu0 0
      %2534 = vmatpush1.bf16.msra.mxu0 0
      %2535 = vmatprep.subr.bf16.mxu0 0
      %2536 = vmatpush1.bf16.msra.mxu0 0
      %2537 = vmatprep.subr.bf16.mxu0 0
      %2538 = vmatpush1.bf16.msra.mxu0 0
      %2539 = vmatprep.mubr.bf16.mxu0 0
      %2540 = vmatmul.mubr.bf16.gmra.mrb[0].mxu0 %v2455
      %v2541 = vpop.f32.mrb[0].mxu0
      %v2542 = vadd.f32 0.0, %v2541
      %v2543 = vpop.f32.mrb[0].mxu0
      %v2544 = vpop.f32.mrb[0].mxu0
      %v2545 = vpop.f32.mrb[0].mxu0
      %2546 = vdwg.mxu0
      %v2547 = vadd.f32 %v2441, %v2501
      %v2548 = vadd.f32 %v2442, %v2503
      %v2549 = vadd.f32 %v2443, %v2542
      %2550 = vst [vmem:[%s431] sm:$0xff] 0
      %2551 = vst [vmem:[%s431 + $0x8] sm:$0xff] 0
      %v2552 = vpack.c.bf16 %v2547, %v2547
      %v2553 = vpack.c.bf16 %v2548, %v2548
      %v2554 = vpack.c.bf16 %v2549, %v2549
      %v2558 = vunpack.c.l.b16 %v2552
      %v2559 = vunpack.c.l.b16 %v2553
      %v2560 = vunpack.c.l.b16 %v2554
      %v2561 = vpack.c.b16 %v2559, %v2558
      %v2562 = vpack.c.b16 %v2560, %v2560
      %2565 = vst [vmem:[%s431 + $0x4] sm:$0xff] %v2561
      %vm2566 = vcmask 257024
      %2567 = vst.msk [vmem:[%s431 + $0xc] sm:$0xf] %vm2566, %v2562
      %v2569 = vlaneseq
      %v2570 = vshrl.u32 %v2569, 7
      %v2571 = vsub.s32 0, %v2570
      %v2572 = vrot.slane %v441, %v2571
      %v2573 = vlaneseq
      %v2574 = vshrl.u32 %v2573, 7
      %v2575 = vsub.s32 1, %v2574
      %v2576 = vrot.slane %v441, %v2575
      %v2577 = vlaneseq
      %v2578 = vshrl.u32 %v2577, 7
      %v2579 = vsub.s32 2, %v2578
      %v2580 = vrot.slane %v441, %v2579
      %v2584 = vmul.f32 %v2547, %v2572
      %v2585 = vmul.f32 %v2548, %v2576
      %v2586 = vmul.f32 %v2549, %v2580
      %v2587 = vadd.f32 %v2584, %v2585
      %vm2588 = vcmask 261120
      %v2589 = vsel %vm2588, %v2586, 0.0
      %v2590 = vadd.f32 %v2587, %v2589
      %2591 = vadd.xlane.f32.xlu0 %v2590
      %v2592 = vpop.xlane.xlu0 %2591
      %v2593 = vmul.f32 %v2584, %v2547
      %v2594 = vmul.f32 %v2585, %v2548
      %v2595 = vmul.f32 %v2586, %v2549
      %v2596 = vadd.f32 %v2593, %v2594
      %v2597 = vsel %vm2588, %v2595, 0.0
      %v2598 = vadd.f32 %v2596, %v2597
      %2599 = vadd.xlane.f32.xlu0 %v2598
      %v2600 = vpop.xlane.xlu0 %2599
      %vm2601 = vcmask 7168
      %v2602 = vsel %vm2601, %v2592, %v2600
      %vm2603 = vcmask 15360
      %2604 = vst.msk [vmem:[%s438] sm:$0xff] %vm2603, %v2602
      %p2605 = scmp.lt.s32.totalorder %s25, 1
      %s2606 = scalar_select %p2605, %s25, 1
      %p2607 = scmp.lt.s32.totalorder %s26, 0
      %s2608 = scalar_select %p2607, %s26, 0
      %s2609 = smul.addr %s2608, 4
      %s2610 = smul.addr %s2606, 4
      %s2611 = sadd.s32 %s2609, %s2610
      %s2612 = smul.addr %s2611, 4
      %s2613 = scalar_lea.vmem %s8, %s2612
      %p2614 = scmp.lt.s32.totalorder %s25, 1
      %s2615 = scalar_select %p2614, %s25, 1
      %p2616 = scmp.lt.s32.totalorder %s26, 0
      %s2617 = scalar_select %p2616, %s26, 0
      %s2618 = sadd.s32 %s2617, %s2615
      %s2619 = smul.addr %s2618, 8
      %s2620 = scalar_lea.vmem %s9, %s2619
      // Predicated region
      $region53: #{decoder2d_forward.4} parent=51 // pred_check
        %p2621 = pneg %p240
      $region54: #{decoder2d_forward.4} parent=51 // pred_check_branch
        %2623 = sbr.rel (%p2621) target = $region56
      $region55: #{decoder2d_forward.4} parent=51 // pred_region
        _
      $region56: #{decoder2d_forward.4} parent=51 // pred_fallthru
        _
      // Predicated region
      $region57: #{decoder2d_forward.4} parent=51 // pred_check
        %p2624 = pneg %p268
      $region58: #{decoder2d_forward.4} parent=51 // pred_check_branch
        %2626 = sbr.rel (%p2624) target = $region60
      $region59: #{decoder2d_forward.4} parent=51 // pred_region
        _
      $region60: #{decoder2d_forward.4} parent=51 // pred_fallthru
        _
    $region52: #{decoder2d_forward.4} parent=5 // pred_fallthru
      _
    %p2627 = scmp.le.s32.totalorder 2, %s16
    // Predicated region
    $region61: #{decoder2d_forward.4} parent=5 // pred_check
      %p2628 = pneg %p2627
    $region62: #{decoder2d_forward.4} parent=5 // pred_check_branch
      %2630 = sbr.rel (%p2628) target = $region64
    $region63: #{decoder2d_forward.4} parent=5 // pred_region
      %s2631 = ssub.s32 %s16, 2
      // Predicated region
      $region65: #{decoder2d_forward.4} parent=63 // pred_check
        %p2632 = pneg %p246
      $region66: #{decoder2d_forward.4} parent=63 // pred_check_branch
        %2634 = sbr.rel (%p2632) target = $region68
      $region67: #{decoder2d_forward.4} parent=63 // pred_region
        %p2635 = scmp.lt.s32.totalorder %s27, 1
        %s2636 = scalar_select %p2635, %s27, 1
        %p2637 = scmp.lt.s32.totalorder %s28, 0
        %s2638 = scalar_select %p2637, %s28, 0
        %s2639 = smul.addr %s2638, 4
        %s2640 = smul.addr %s2636, 4
        %s2641 = sadd.s32 %s2639, %s2640
        %s2642 = smul.addr %s2641, 4
        %s2643 = scalar_lea.vmem %s8, %s2642
      $region68: #{decoder2d_forward.4} parent=63 // pred_fallthru
        _
      // Predicated region
      $region69: #{decoder2d_forward.4} parent=63 // pred_check
        %p2644 = pneg %p274
      $region70: #{decoder2d_forward.4} parent=63 // pred_check_branch
        %2646 = sbr.rel (%p2644) target = $region72
      $region71: #{decoder2d_forward.4} parent=63 // pred_region
        %p2647 = scmp.lt.s32.totalorder %s27, 1
        %s2648 = scalar_select %p2647, %s27, 1
        %p2649 = scmp.lt.s32.totalorder %s28, 0
        %s2650 = scalar_select %p2649, %s28, 0
        %s2651 = sadd.s32 %s2650, %s2648
        %s2652 = smul.addr %s2651, 8
        %s2653 = scalar_lea.vmem %s9, %s2652
      $region72: #{decoder2d_forward.4} parent=63 // pred_fallthru
        _
    $region64: #{decoder2d_forward.4} parent=5 // pred_fallthru
      _
  $region6: #{decoder2d_forward.4} parent=0 // loop_footer
    %s20 = sadd.s32 1, %s16
  $region7: #{decoder2d_forward.4} parent=0 // loop_footer_branch
    %15 = sbr.rel target = $region3
  $region8: #{decoder2d_forward.4} parent=0 // loop_exit
    _

</llo_original>
